<compile_context>
chip_gen: v6e
topology: v6e:2x2x1
jax: 0.10.0
libtpu: 0.0.40
codegen_flags: <defaults>
</compile_context>

<pallas_src>
import functools

import jax
import jax.numpy as jnp
from jax.experimental import pallas as pl
from jax.experimental.pallas import tpu as pltpu


V, M = 25, 2          # joints, persons (fixed by the conv4 kernel size)
VM = V * M            # 50
VMP = 64              # V*M padded to 64 -> batch(2) * 64 = 128 lanes (lane-dense)
G1, G2 = 8, 4         # conv1 / conv2 output frames per banded-weight group


def _geometry(c_in, t):
    """Static (Python int) temporal geometry, including group padding."""
    del c_in  # geometry is channel-independent; kept for signature clarity
    t1 = (t - 10) // 3 + 1            # conv1: k=10, s=3
    t2 = (t1 - 10) // 5 + 1           # conv2: k=10, s=5
    t3 = (t2 - 5) // 2 + 1            # conv4: k=5,  s=2
    n_g2 = -(-t2 // G2)               # conv2 groups (ceil)
    t2_pad = n_g2 * G2
    t1_need = 5 * (t2_pad - 1) + 10   # act1 frames read by the padded conv2
    n_g1 = -(-max(t1, t1_need) // G1) # conv1 groups (ceil)
    t1_pad = n_g1 * G1
    t_pad = 3 * (t1_pad - 1) + 10     # x frames read by the padded conv1
    return dict(t1=t1, t2=t2, t3=t3, n_g1=n_g1, n_g2=n_g2,
                t1_pad=t1_pad, t2_pad=t2_pad, t_pad=t_pad)


# ----------------------------------------------------------------------------
# Kernel A: conv1 + ReLU + conv2 + ReLU (banded group matmuls, VMEM resident)
# ----------------------------------------------------------------------------
def _conv12_kernel(x0_ref, w1_ref, b1_ref, w2_ref, b2_ref, o_ref, act1_ref,
                   *, c_in, n_g1, n_g2, n_batch):
    """Layouts (f32):
         x0_ref  : (t_pad*c_in, n_batch*VMP)  rows=(t, c_in), lanes=(n, v*m)+pad
         act1_ref: (8*t1_pad,   n_batch*VMP)  rows=(t1, c1)
         o_ref   : (n_batch, t2_pad*16, VMP)  rows=(t2, c2)
       Group slab offsets (24*c_in*g and 160*g) are multiples of 8, so every
       window load / store is sublane-tile aligned."""
    w1 = w1_ref[...]                       # (8*G1, 31*c_in) banded weight
    b1 = b1_ref[...]                       # (8*G1, 1)
    slab1 = 31 * c_in                      # 3c*(G1-1) + 10c
    step1 = 24 * c_in                      # 3c*G1 -> multiple of 8
    for g in range(n_g1):                  # conv1: 8 output frames per dot
        win = x0_ref[step1 * g: step1 * g + slab1, :]
        y = jnp.dot(w1, win, preferred_element_type=jnp.float32) + b1
        act1_ref[64 * g: 64 * g + 64, :] = jnp.maximum(y, 0.0)

    w2 = w2_ref[...]                       # (16*G2, 200) banded weight
    b2 = b2_ref[...]                       # (16*G2, 1)
    for g in range(n_g2):                  # conv2: 4 output frames per dot
        win = act1_ref[160 * g: 160 * g + 200, :]
        y = jnp.dot(w2, win, preferred_element_type=jnp.float32) + b2
        y = jnp.maximum(y, 0.0)            # (64, 128): rows=(frame, c2)
        for nn in range(n_batch):
            # Per-sample split so the HBM row-major order is already the layout
            # conv4 wants (a free reshape in the wrapper, no transpose).
            o_ref[nn, 64 * g: 64 * g + 64, :] = y[:, nn * VMP:(nn + 1) * VMP]


# ----------------------------------------------------------------------------
# Kernel B: conv4 + ReLU + fc1 + ReLU + BatchNorm1d + fc2 + softmax
# ----------------------------------------------------------------------------
def _conv4_head_kernel(x2_ref, w4_ref, b4_ref, fc1w_ref, fc1b_ref,
                       g_ref, bt_ref, fc2w_ref, fc2b_ref, o_ref, col_ref,
                       *, t3_out, n_batch):
    """x2_ref : (n_batch, t2_pad*16*VMP) -- per-sample lanes ordered (t2, c2, vmp).
       col_ref: (8*t3_out, 5*16*VMP) VMEM im2col; block t3 holds the n_batch
       valid rows at an 8-aligned offset (the spare rows are never read)."""
    chunk = 16 * VMP                                   # 1024 lanes per conv2 frame
    kwin = 5 * chunk                                   # conv4 receptive field (5120)
    for i in range(t3_out):                            # 7 aligned (n,5120) copies
        col_ref[8 * i: 8 * i + n_batch, :] = \
            x2_ref[:, 2 * chunk * i: 2 * chunk * i + kwin]

    # Single conv4 matmul: w4 streams through the MXU exactly once.
    y = jnp.dot(col_ref[...], w4_ref[...], preferred_element_type=jnp.float32)
    y = jnp.maximum(y + b4_ref[...], 0.0)              # (8*t3_out, 32)

    # Flatten + fc1 folded as static row-slice dots (rows 8i..8i+n = frame i).
    fc1w = fc1w_ref[...]                               # (32*t3_out, 90), rows=(t3, c4)
    acc = None
    for i in range(t3_out):
        part = jnp.dot(y[8 * i: 8 * i + n_batch, :],
                       fc1w[32 * i: 32 * i + 32, :],
                       preferred_element_type=jnp.float32)
        acc = part if acc is None else acc + part
    z = jnp.maximum(acc + fc1b_ref[...], 0.0)          # (n_batch, 90)

    # BatchNorm1d -- PyTorch default (train-mode) forward: batch stats, biased var.
    # TODO(synk): eval-mode BatchNorm (running_mean/running_var) not implemented.
    mean = jnp.mean(z, axis=0, keepdims=True)
    var = jnp.mean((z - mean) ** 2, axis=0, keepdims=True)
    z = (z - mean) * jax.lax.rsqrt(var + 1e-5)
    z = z * g_ref[...] + bt_ref[...]

    logits = jnp.dot(z, fc2w_ref[...], preferred_element_type=jnp.float32)
    logits = logits + fc2b_ref[...]                    # (n_batch, num_classes)
    # .squeeze(1) is a no-op for num_classes > 1 (asserted in the wrapper).
    mx = jnp.max(logits, axis=1, keepdims=True)
    e = jnp.exp(logits - mx)
    s = jnp.sum(e, axis=1, keepdims=True)
    r = pl.reciprocal(s, approx=True)                  # EUP reciprocal
    r = r * (2.0 - s * r)                              # one Newton step -> f32 accurate
    o_ref[...] = e * r


# ----------------------------------------------------------------------------
# Parameters + one-time kernel-layout preparation (hoisted out of the forward)
# ----------------------------------------------------------------------------
def init_params(key, in_channels, num_classes):
    ks = jax.random.split(key, 8)
    rnd = lambda k, shape, s: (s * jax.random.normal(k, shape)).astype(jnp.float32)
    return dict(
        conv1_w=rnd(ks[0], (8, in_channels, 10, 1, 1), 0.1),
        conv1_b=rnd(ks[1], (8,), 0.05),
        conv2_w=rnd(ks[2], (16, 8, 10, 1, 1), 0.1),
        conv2_b=rnd(ks[3], (16,), 0.05),
        conv4_w=rnd(ks[4], (32, 16, 5, V, M), 0.02),
        conv4_b=rnd(ks[5], (32,), 0.05),
        # (in_features=224, out_features=90); rows in PyTorch flatten order (c4, t3).
        # NOTE: a real checkpoint's fc1.weight is (90, 224) -> transpose it first.
        fc1_w=rnd(ks[6], (224, 90), 0.05),
        fc1_b=jnp.zeros((1, 90), jnp.float32),
        bn5_gamma=jnp.ones((1, 90), jnp.float32),
        bn5_beta=jnp.zeros((1, 90), jnp.float32),
        fc2_w=rnd(ks[7], (90, num_classes), 0.05),
        fc2_b=jnp.zeros((1, num_classes), jnp.float32),
    )


def _banded(w, group, stride):
    """Stack `group` copies of `w` as row blocks, each shifted `stride` columns."""
    c_out, win = w.shape
    width = stride * (group - 1) + win
    blk = jnp.zeros((group * c_out, width), w.dtype)
    for i in range(group):
        blk = blk.at[i * c_out:(i + 1) * c_out, stride * i: stride * i + win].set(w)
    return blk


def prepare_params(params):
    """One-time weight relayout into kernel-ready form (call once, outside jit)."""
    c = params["conv1_w"].shape[1]
    w1 = jnp.transpose(params["conv1_w"][:, :, :, 0, 0], (0, 2, 1)).reshape(8, 10 * c)
    w2 = jnp.transpose(params["conv2_w"][:, :, :, 0, 0], (0, 2, 1)).reshape(16, 80)
    w4 = jnp.transpose(params["conv4_w"], (2, 1, 3, 4, 0)).reshape(5, 16, VM, 32)
    w4 = jnp.pad(w4, ((0, 0), (0, 0), (0, VMP - VM), (0, 0))).reshape(5 * 16 * VMP, 32)
    t3 = params["fc1_w"].shape[0] // 32
    # fc1 rows reordered from PyTorch flatten (c4, t3) to our (t3, c4) feature order.
    fc1_w = params["fc1_w"].reshape(32, t3, 90).transpose(1, 0, 2).reshape(32 * t3, 90)
    return dict(
        w1_blk=_banded(w1, G1, 3 * c),                              # (64, 31c)
        b1_blk=jnp.tile(params["conv1_b"], G1).reshape(8 * G1, 1),
        w2_blk=_banded(w2, G2, 40),                                 # (64, 200)
        b2_blk=jnp.tile(params["conv2_b"], G2).reshape(16 * G2, 1),
        w4=w4,
        b4=params["conv4_b"].reshape(1, 32),
        fc1_w=fc1_w,
        fc1_b=params["fc1_b"],
        bn5_gamma=params["bn5_gamma"],
        bn5_beta=params["bn5_beta"],
        fc2_w=params["fc2_w"],
        fc2_b=params["fc2_b"],
    )


# ----------------------------------------------------------------------------
# Forward (jit this): x0 layout prep + two pallas_calls, nothing else
# ----------------------------------------------------------------------------
def cnn3d_forward(prep, x):
    x = x.astype(jnp.float32)
    n, c, t, v, m = x.shape
    assert (v, m) == (V, M), "conv4 kernel (5,25,2) requires V=25, M=2"
    geo = _geometry(c, t)
    t2, t3 = geo["t2"], geo["t3"]
    t1_pad, t2_pad, t_pad = geo["t1_pad"], geo["t2_pad"], geo["t_pad"]
    assert 32 * t3 == prep["fc1_w"].shape[0], "fc1 expects 224 = 32*7 input features"
    num_classes = prep["fc2_w"].shape[1]
    assert num_classes > 1, ".squeeze(1) semantics only preserved for num_classes > 1"
    lanes = n * VMP

    # Activation layout prep: rows=(t, c), lanes=(n, v*m padded to 64).  Temporal
    # zero-padding to t_pad makes every conv1/conv2 group a full group; the
    # phantom frames it creates are computed but never read downstream.
    x0 = jnp.transpose(x, (2, 1, 0, 3, 4)).reshape(t, c, n, VM)
    x0 = jnp.pad(x0, ((0, t_pad - t), (0, 0), (0, 0), (0, VMP - VM)))
    x0 = x0.reshape(t_pad * c, lanes)

    full = lambda *shape: pl.BlockSpec(shape, lambda i, _s=len(shape): (0,) * _s)

    kernel_a = functools.partial(_conv12_kernel, c_in=c, n_g1=geo["n_g1"],
                                 n_g2=geo["n_g2"], n_batch=n)
    act2 = pl.pallas_call(
        kernel_a,
        out_shape=jax.ShapeDtypeStruct((n, t2_pad * 16, VMP), jnp.float32),
        grid=(1,),
        in_specs=[full(t_pad * c, lanes), full(8 * G1, 31 * c), full(8 * G1, 1),
                  full(16 * G2, 200), full(16 * G2, 1)],
        out_specs=full(n, t2_pad * 16, VMP),
        scratch_shapes=[pltpu.VMEM((8 * t1_pad, lanes), jnp.float32)],
    )(x0, prep["w1_blk"], prep["b1_blk"], prep["w2_blk"], prep["b2_blk"])

    # Free row-major reshape (no data movement): per-sample lanes become
    # (t2, c2, vmp) = exactly the conv4 contraction order.
    x2 = act2.reshape(n, t2_pad * 16 * VMP)

    kernel_b = functools.partial(_conv4_head_kernel, t3_out=t3, n_batch=n)
    out = pl.pallas_call(
        kernel_b,
        out_shape=jax.ShapeDtypeStruct((n, num_classes), jnp.float32),
        grid=(1,),
        in_specs=[full(n, t2_pad * 16 * VMP), full(5 * 16 * VMP, 32), full(1, 32),
                  full(32 * t3, 90), full(1, 90), full(1, 90), full(1, 90),
                  full(90, num_classes), full(1, num_classes)],
        out_specs=full(n, num_classes),
        scratch_shapes=[pltpu.VMEM((8 * t3, 5 * 16 * VMP), jnp.float32)],
    )(x2, prep["w4"], prep["b4"], prep["fc1_w"], prep["fc1_b"],
      prep["bn5_gamma"], prep["bn5_beta"], prep["fc2_w"], prep["fc2_b"])
    return out


if __name__ == "__main__":
    in_channels, num_classes = 3, 10
    N, T = 2, 277      # T chosen so the conv stack yields the 224 fc1 input features
    x = jax.random.normal(jax.random.PRNGKey(0), (N, in_channels, T, V, M),
                          dtype=jnp.float32)
    params = init_params(jax.random.PRNGKey(42), in_channels, num_classes)
    prep = prepare_params(params)          # one-time weight relayout (outside jit)

    fwd = jax.jit(cnn3d_forward)
    out = jax.block_until_ready(fwd(prep, x))
    assert out.shape == (N, num_classes)
    assert bool(jnp.all(jnp.abs(jnp.sum(out, axis=1) - 1.0) < 1e-4))
    assert bool(jnp.all(jnp.isfinite(out)))
    print("KERNEL_OK")
</pallas_src>

<mosaic_0001>
module attributes {stable_mosaic.version = 11 : i64} {
  func.func @_conv12_kernel(%arg0: i32, %arg1: memref<1029x128xf32, #tpu.memory_space<vmem>>, %arg2: memref<64x93xf32, #tpu.memory_space<vmem>>, %arg3: memref<64x1xf32, #tpu.memory_space<vmem>>, %arg4: memref<64x200xf32, #tpu.memory_space<vmem>>, %arg5: memref<64x1xf32, #tpu.memory_space<vmem>>, %arg6: memref<2x320x64xf32, #tpu.memory_space<vmem>>, %arg7: memref<896x128xf32, #tpu.memory_space<vmem>>) attributes {dimension_semantics = [#tpu.dimension_semantics<arbitrary>], iteration_bounds = array<i64: 1>, scalar_prefetch = 0 : i64, scratch_operands = 1 : i64, tpu.core_type = #tpu.core_type<tc>, window_params = [{pipeline_mode = #tpu.pipeline_mode<synchronous>, transform_indices = @transform_0, window_bounds = array<i64: 1029, 128>}, {pipeline_mode = #tpu.pipeline_mode<synchronous>, transform_indices = @transform_1, window_bounds = array<i64: 64, 93>}, {pipeline_mode = #tpu.pipeline_mode<synchronous>, transform_indices = @transform_2, window_bounds = array<i64: 64, 1>}, {pipeline_mode = #tpu.pipeline_mode<synchronous>, transform_indices = @transform_3, window_bounds = array<i64: 64, 200>}, {pipeline_mode = #tpu.pipeline_mode<synchronous>, transform_indices = @transform_4, window_bounds = array<i64: 64, 1>}, {pipeline_mode = #tpu.pipeline_mode<synchronous>, transform_indices = @transform_5, window_bounds = array<i64: 2, 320, 64>}]} {
    %c0 = arith.constant 0 : index
    %c0_0 = arith.constant 0 : index
    %0 = vector.load %arg2[%c0, %c0_0] : memref<64x93xf32, #tpu.memory_space<vmem>>, vector<64x93xf32>
    %c0_1 = arith.constant 0 : index
    %c0_2 = arith.constant 0 : index
    %1 = vector.load %arg3[%c0_1, %c0_2] : memref<64x1xf32, #tpu.memory_space<vmem>>, vector<64x1xf32>
    %c0_3 = arith.constant 0 : index
    %c0_4 = arith.constant 0 : index
    %2 = vector.load %arg1[%c0_3, %c0_4] : memref<1029x128xf32, #tpu.memory_space<vmem>>, vector<93x128xf32>
    %cst = arith.constant dense<0.000000e+00> : vector<64x128xf32>
    %3 = tpu.matmul %0, %2, %cst {dimension_numbers = #tpu.dot_dimension_numbers<[1], [0], [0], [1], [0, 0, 1, 1], [], []>} : vector<64x93xf32>, vector<93x128xf32>, vector<64x128xf32> -> vector<64x128xf32>
    %4 = vector.broadcast %1 : vector<64x1xf32> to vector<64x128xf32>
    %5 = arith.addf %3, %4 : vector<64x128xf32>
    %cst_5 = arith.constant 0.000000e+00 : f32
    %6 = vector.broadcast %cst_5 : f32 to vector<64x128xf32>
    %7 = arith.maximumf %5, %6 : vector<64x128xf32>
    %c0_6 = arith.constant 0 : index
    %c0_7 = arith.constant 0 : index
    %8 = vector.load %arg7[%c0_6, %c0_7] : memref<896x128xf32, #tpu.memory_space<vmem>>, vector<64x128xf32>
    tpu.vector_store %arg7[%c0_6, %c0_7], %7 {strides = array<i32>} : memref<896x128xf32, #tpu.memory_space<vmem>>, vector<64x128xf32>,
    %c72 = arith.constant 72 : index
    %c0_8 = arith.constant 0 : index
    %9 = vector.load %arg1[%c72, %c0_8] : memref<1029x128xf32, #tpu.memory_space<vmem>>, vector<93x128xf32>
    %cst_9 = arith.constant dense<0.000000e+00> : vector<64x128xf32>
    %10 = tpu.matmul %0, %9, %cst_9 {dimension_numbers = #tpu.dot_dimension_numbers<[1], [0], [0], [1], [0, 0, 1, 1], [], []>} : vector<64x93xf32>, vector<93x128xf32>, vector<64x128xf32> -> vector<64x128xf32>
    %11 = vector.broadcast %1 : vector<64x1xf32> to vector<64x128xf32>
    %12 = arith.addf %10, %11 : vector<64x128xf32>
    %cst_10 = arith.constant 0.000000e+00 : f32
    %13 = vector.broadcast %cst_10 : f32 to vector<64x128xf32>
    %14 = arith.maximumf %12, %13 : vector<64x128xf32>
    %c64 = arith.constant 64 : index
    %c0_11 = arith.constant 0 : index
    %15 = vector.load %arg7[%c64, %c0_11] : memref<896x128xf32, #tpu.memory_space<vmem>>, vector<64x128xf32>
    tpu.vector_store %arg7[%c64, %c0_11], %14 {strides = array<i32>} : memref<896x128xf32, #tpu.memory_space<vmem>>, vector<64x128xf32>,
    %c144 = arith.constant 144 : index
    %c0_12 = arith.constant 0 : index
    %16 = vector.load %arg1[%c144, %c0_12] : memref<1029x128xf32, #tpu.memory_space<vmem>>, vector<93x128xf32>
    %cst_13 = arith.constant dense<0.000000e+00> : vector<64x128xf32>
    %17 = tpu.matmul %0, %16, %cst_13 {dimension_numbers = #tpu.dot_dimension_numbers<[1], [0], [0], [1], [0, 0, 1, 1], [], []>} : vector<64x93xf32>, vector<93x128xf32>, vector<64x128xf32> -> vector<64x128xf32>
    %18 = vector.broadcast %1 : vector<64x1xf32> to vector<64x128xf32>
    %19 = arith.addf %17, %18 : vector<64x128xf32>
    %cst_14 = arith.constant 0.000000e+00 : f32
    %20 = vector.broadcast %cst_14 : f32 to vector<64x128xf32>
    %21 = arith.maximumf %19, %20 : vector<64x128xf32>
    %c128 = arith.constant 128 : index
    %c0_15 = arith.constant 0 : index
    %22 = vector.load %arg7[%c128, %c0_15] : memref<896x128xf32, #tpu.memory_space<vmem>>, vector<64x128xf32>
    tpu.vector_store %arg7[%c128, %c0_15], %21 {strides = array<i32>} : memref<896x128xf32, #tpu.memory_space<vmem>>, vector<64x128xf32>,
    %c216 = arith.constant 216 : index
    %c0_16 = arith.constant 0 : index
    %23 = vector.load %arg1[%c216, %c0_16] : memref<1029x128xf32, #tpu.memory_space<vmem>>, vector<93x128xf32>
    %cst_17 = arith.constant dense<0.000000e+00> : vector<64x128xf32>
    %24 = tpu.matmul %0, %23, %cst_17 {dimension_numbers = #tpu.dot_dimension_numbers<[1], [0], [0], [1], [0, 0, 1, 1], [], []>} : vector<64x93xf32>, vector<93x128xf32>, vector<64x128xf32> -> vector<64x128xf32>
    %25 = vector.broadcast %1 : vector<64x1xf32> to vector<64x128xf32>
    %26 = arith.addf %24, %25 : vector<64x128xf32>
    %cst_18 = arith.constant 0.000000e+00 : f32
    %27 = vector.broadcast %cst_18 : f32 to vector<64x128xf32>
    %28 = arith.maximumf %26, %27 : vector<64x128xf32>
    %c192 = arith.constant 192 : index
    %c0_19 = arith.constant 0 : index
    %29 = vector.load %arg7[%c192, %c0_19] : memref<896x128xf32, #tpu.memory_space<vmem>>, vector<64x128xf32>
    tpu.vector_store %arg7[%c192, %c0_19], %28 {strides = array<i32>} : memref<896x128xf32, #tpu.memory_space<vmem>>, vector<64x128xf32>,
    %c288 = arith.constant 288 : index
    %c0_20 = arith.constant 0 : index
    %30 = vector.load %arg1[%c288, %c0_20] : memref<1029x128xf32, #tpu.memory_space<vmem>>, vector<93x128xf32>
    %cst_21 = arith.constant dense<0.000000e+00> : vector<64x128xf32>
    %31 = tpu.matmul %0, %30, %cst_21 {dimension_numbers = #tpu.dot_dimension_numbers<[1], [0], [0], [1], [0, 0, 1, 1], [], []>} : vector<64x93xf32>, vector<93x128xf32>, vector<64x128xf32> -> vector<64x128xf32>
    %32 = vector.broadcast %1 : vector<64x1xf32> to vector<64x128xf32>
    %33 = arith.addf %31, %32 : vector<64x128xf32>
    %cst_22 = arith.constant 0.000000e+00 : f32
    %34 = vector.broadcast %cst_22 : f32 to vector<64x128xf32>
    %35 = arith.maximumf %33, %34 : vector<64x128xf32>
    %c256 = arith.constant 256 : index
    %c0_23 = arith.constant 0 : index
    %36 = vector.load %arg7[%c256, %c0_23] : memref<896x128xf32, #tpu.memory_space<vmem>>, vector<64x128xf32>
    tpu.vector_store %arg7[%c256, %c0_23], %35 {strides = array<i32>} : memref<896x128xf32, #tpu.memory_space<vmem>>, vector<64x128xf32>,
    %c360 = arith.constant 360 : index
    %c0_24 = arith.constant 0 : index
    %37 = vector.load %arg1[%c360, %c0_24] : memref<1029x128xf32, #tpu.memory_space<vmem>>, vector<93x128xf32>
    %cst_25 = arith.constant dense<0.000000e+00> : vector<64x128xf32>
    %38 = tpu.matmul %0, %37, %cst_25 {dimension_numbers = #tpu.dot_dimension_numbers<[1], [0], [0], [1], [0, 0, 1, 1], [], []>} : vector<64x93xf32>, vector<93x128xf32>, vector<64x128xf32> -> vector<64x128xf32>
    %39 = vector.broadcast %1 : vector<64x1xf32> to vector<64x128xf32>
    %40 = arith.addf %38, %39 : vector<64x128xf32>
    %cst_26 = arith.constant 0.000000e+00 : f32
    %41 = vector.broadcast %cst_26 : f32 to vector<64x128xf32>
    %42 = arith.maximumf %40, %41 : vector<64x128xf32>
    %c320 = arith.constant 320 : index
    %c0_27 = arith.constant 0 : index
    %43 = vector.load %arg7[%c320, %c0_27] : memref<896x128xf32, #tpu.memory_space<vmem>>, vector<64x128xf32>
    tpu.vector_store %arg7[%c320, %c0_27], %42 {strides = array<i32>} : memref<896x128xf32, #tpu.memory_space<vmem>>, vector<64x128xf32>,
    %c432 = arith.constant 432 : index
    %c0_28 = arith.constant 0 : index
    %44 = vector.load %arg1[%c432, %c0_28] : memref<1029x128xf32, #tpu.memory_space<vmem>>, vector<93x128xf32>
    %cst_29 = arith.constant dense<0.000000e+00> : vector<64x128xf32>
    %45 = tpu.matmul %0, %44, %cst_29 {dimension_numbers = #tpu.dot_dimension_numbers<[1], [0], [0], [1], [0, 0, 1, 1], [], []>} : vector<64x93xf32>, vector<93x128xf32>, vector<64x128xf32> -> vector<64x128xf32>
    %46 = vector.broadcast %1 : vector<64x1xf32> to vector<64x128xf32>
    %47 = arith.addf %45, %46 : vector<64x128xf32>
    %cst_30 = arith.constant 0.000000e+00 : f32
    %48 = vector.broadcast %cst_30 : f32 to vector<64x128xf32>
    %49 = arith.maximumf %47, %48 : vector<64x128xf32>
    %c384 = arith.constant 384 : index
    %c0_31 = arith.constant 0 : index
    %50 = vector.load %arg7[%c384, %c0_31] : memref<896x128xf32, #tpu.memory_space<vmem>>, vector<64x128xf32>
    tpu.vector_store %arg7[%c384, %c0_31], %49 {strides = array<i32>} : memref<896x128xf32, #tpu.memory_space<vmem>>, vector<64x128xf32>,
    %c504 = arith.constant 504 : index
    %c0_32 = arith.constant 0 : index
    %51 = vector.load %arg1[%c504, %c0_32] : memref<1029x128xf32, #tpu.memory_space<vmem>>, vector<93x128xf32>
    %cst_33 = arith.constant dense<0.000000e+00> : vector<64x128xf32>
    %52 = tpu.matmul %0, %51, %cst_33 {dimension_numbers = #tpu.dot_dimension_numbers<[1], [0], [0], [1], [0, 0, 1, 1], [], []>} : vector<64x93xf32>, vector<93x128xf32>, vector<64x128xf32> -> vector<64x128xf32>
    %53 = vector.broadcast %1 : vector<64x1xf32> to vector<64x128xf32>
    %54 = arith.addf %52, %53 : vector<64x128xf32>
    %cst_34 = arith.constant 0.000000e+00 : f32
    %55 = vector.broadcast %cst_34 : f32 to vector<64x128xf32>
    %56 = arith.maximumf %54, %55 : vector<64x128xf32>
    %c448 = arith.constant 448 : index
    %c0_35 = arith.constant 0 : index
    %57 = vector.load %arg7[%c448, %c0_35] : memref<896x128xf32, #tpu.memory_space<vmem>>, vector<64x128xf32>
    tpu.vector_store %arg7[%c448, %c0_35], %56 {strides = array<i32>} : memref<896x128xf32, #tpu.memory_space<vmem>>, vector<64x128xf32>,
    %c576 = arith.constant 576 : index
    %c0_36 = arith.constant 0 : index
    %58 = vector.load %arg1[%c576, %c0_36] : memref<1029x128xf32, #tpu.memory_space<vmem>>, vector<93x128xf32>
    %cst_37 = arith.constant dense<0.000000e+00> : vector<64x128xf32>
    %59 = tpu.matmul %0, %58, %cst_37 {dimension_numbers = #tpu.dot_dimension_numbers<[1], [0], [0], [1], [0, 0, 1, 1], [], []>} : vector<64x93xf32>, vector<93x128xf32>, vector<64x128xf32> -> vector<64x128xf32>
    %60 = vector.broadcast %1 : vector<64x1xf32> to vector<64x128xf32>
    %61 = arith.addf %59, %60 : vector<64x128xf32>
    %cst_38 = arith.constant 0.000000e+00 : f32
    %62 = vector.broadcast %cst_38 : f32 to vector<64x128xf32>
    %63 = arith.maximumf %61, %62 : vector<64x128xf32>
    %c512 = arith.constant 512 : index
    %c0_39 = arith.constant 0 : index
    %64 = vector.load %arg7[%c512, %c0_39] : memref<896x128xf32, #tpu.memory_space<vmem>>, vector<64x128xf32>
    tpu.vector_store %arg7[%c512, %c0_39], %63 {strides = array<i32>} : memref<896x128xf32, #tpu.memory_space<vmem>>, vector<64x128xf32>,
    %c648 = arith.constant 648 : index
    %c0_40 = arith.constant 0 : index
    %65 = vector.load %arg1[%c648, %c0_40] : memref<1029x128xf32, #tpu.memory_space<vmem>>, vector<93x128xf32>
    %cst_41 = arith.constant dense<0.000000e+00> : vector<64x128xf32>
    %66 = tpu.matmul %0, %65, %cst_41 {dimension_numbers = #tpu.dot_dimension_numbers<[1], [0], [0], [1], [0, 0, 1, 1], [], []>} : vector<64x93xf32>, vector<93x128xf32>, vector<64x128xf32> -> vector<64x128xf32>
    %67 = vector.broadcast %1 : vector<64x1xf32> to vector<64x128xf32>
    %68 = arith.addf %66, %67 : vector<64x128xf32>
    %cst_42 = arith.constant 0.000000e+00 : f32
    %69 = vector.broadcast %cst_42 : f32 to vector<64x128xf32>
    %70 = arith.maximumf %68, %69 : vector<64x128xf32>
    %c576_43 = arith.constant 576 : index
    %c0_44 = arith.constant 0 : index
    %71 = vector.load %arg7[%c576_43, %c0_44] : memref<896x128xf32, #tpu.memory_space<vmem>>, vector<64x128xf32>
    tpu.vector_store %arg7[%c576_43, %c0_44], %70 {strides = array<i32>} : memref<896x128xf32, #tpu.memory_space<vmem>>, vector<64x128xf32>,
    %c720 = arith.constant 720 : index
    %c0_45 = arith.constant 0 : index
    %72 = vector.load %arg1[%c720, %c0_45] : memref<1029x128xf32, #tpu.memory_space<vmem>>, vector<93x128xf32>
    %cst_46 = arith.constant dense<0.000000e+00> : vector<64x128xf32>
    %73 = tpu.matmul %0, %72, %cst_46 {dimension_numbers = #tpu.dot_dimension_numbers<[1], [0], [0], [1], [0, 0, 1, 1], [], []>} : vector<64x93xf32>, vector<93x128xf32>, vector<64x128xf32> -> vector<64x128xf32>
    %74 = vector.broadcast %1 : vector<64x1xf32> to vector<64x128xf32>
    %75 = arith.addf %73, %74 : vector<64x128xf32>
    %cst_47 = arith.constant 0.000000e+00 : f32
    %76 = vector.broadcast %cst_47 : f32 to vector<64x128xf32>
    %77 = arith.maximumf %75, %76 : vector<64x128xf32>
    %c640 = arith.constant 640 : index
    %c0_48 = arith.constant 0 : index
    %78 = vector.load %arg7[%c640, %c0_48] : memref<896x128xf32, #tpu.memory_space<vmem>>, vector<64x128xf32>
    tpu.vector_store %arg7[%c640, %c0_48], %77 {strides = array<i32>} : memref<896x128xf32, #tpu.memory_space<vmem>>, vector<64x128xf32>,
    %c792 = arith.constant 792 : index
    %c0_49 = arith.constant 0 : index
    %79 = vector.load %arg1[%c792, %c0_49] : memref<1029x128xf32, #tpu.memory_space<vmem>>, vector<93x128xf32>
    %cst_50 = arith.constant dense<0.000000e+00> : vector<64x128xf32>
    %80 = tpu.matmul %0, %79, %cst_50 {dimension_numbers = #tpu.dot_dimension_numbers<[1], [0], [0], [1], [0, 0, 1, 1], [], []>} : vector<64x93xf32>, vector<93x128xf32>, vector<64x128xf32> -> vector<64x128xf32>
    %81 = vector.broadcast %1 : vector<64x1xf32> to vector<64x128xf32>
    %82 = arith.addf %80, %81 : vector<64x128xf32>
    %cst_51 = arith.constant 0.000000e+00 : f32
    %83 = vector.broadcast %cst_51 : f32 to vector<64x128xf32>
    %84 = arith.maximumf %82, %83 : vector<64x128xf32>
    %c704 = arith.constant 704 : index
    %c0_52 = arith.constant 0 : index
    %85 = vector.load %arg7[%c704, %c0_52] : memref<896x128xf32, #tpu.memory_space<vmem>>, vector<64x128xf32>
    tpu.vector_store %arg7[%c704, %c0_52], %84 {strides = array<i32>} : memref<896x128xf32, #tpu.memory_space<vmem>>, vector<64x128xf32>,
    %c864 = arith.constant 864 : index
    %c0_53 = arith.constant 0 : index
    %86 = vector.load %arg1[%c864, %c0_53] : memref<1029x128xf32, #tpu.memory_space<vmem>>, vector<93x128xf32>
    %cst_54 = arith.constant dense<0.000000e+00> : vector<64x128xf32>
    %87 = tpu.matmul %0, %86, %cst_54 {dimension_numbers = #tpu.dot_dimension_numbers<[1], [0], [0], [1], [0, 0, 1, 1], [], []>} : vector<64x93xf32>, vector<93x128xf32>, vector<64x128xf32> -> vector<64x128xf32>
    %88 = vector.broadcast %1 : vector<64x1xf32> to vector<64x128xf32>
    %89 = arith.addf %87, %88 : vector<64x128xf32>
    %cst_55 = arith.constant 0.000000e+00 : f32
    %90 = vector.broadcast %cst_55 : f32 to vector<64x128xf32>
    %91 = arith.maximumf %89, %90 : vector<64x128xf32>
    %c768 = arith.constant 768 : index
    %c0_56 = arith.constant 0 : index
    %92 = vector.load %arg7[%c768, %c0_56] : memref<896x128xf32, #tpu.memory_space<vmem>>, vector<64x128xf32>
    tpu.vector_store %arg7[%c768, %c0_56], %91 {strides = array<i32>} : memref<896x128xf32, #tpu.memory_space<vmem>>, vector<64x128xf32>,
    %c936 = arith.constant 936 : index
    %c0_57 = arith.constant 0 : index
    %93 = vector.load %arg1[%c936, %c0_57] : memref<1029x128xf32, #tpu.memory_space<vmem>>, vector<93x128xf32>
    %cst_58 = arith.constant dense<0.000000e+00> : vector<64x128xf32>
    %94 = tpu.matmul %0, %93, %cst_58 {dimension_numbers = #tpu.dot_dimension_numbers<[1], [0], [0], [1], [0, 0, 1, 1], [], []>} : vector<64x93xf32>, vector<93x128xf32>, vector<64x128xf32> -> vector<64x128xf32>
    %95 = vector.broadcast %1 : vector<64x1xf32> to vector<64x128xf32>
    %96 = arith.addf %94, %95 : vector<64x128xf32>
    %cst_59 = arith.constant 0.000000e+00 : f32
    %97 = vector.broadcast %cst_59 : f32 to vector<64x128xf32>
    %98 = arith.maximumf %96, %97 : vector<64x128xf32>
    %c832 = arith.constant 832 : index
    %c0_60 = arith.constant 0 : index
    %99 = vector.load %arg7[%c832, %c0_60] : memref<896x128xf32, #tpu.memory_space<vmem>>, vector<64x128xf32>
    tpu.vector_store %arg7[%c832, %c0_60], %98 {strides = array<i32>} : memref<896x128xf32, #tpu.memory_space<vmem>>, vector<64x128xf32>,
    %c0_61 = arith.constant 0 : index
    %c0_62 = arith.constant 0 : index
    %100 = vector.load %arg4[%c0_61, %c0_62] : memref<64x200xf32, #tpu.memory_space<vmem>>, vector<64x200xf32>
    %c0_63 = arith.constant 0 : index
    %c0_64 = arith.constant 0 : index
    %101 = vector.load %arg5[%c0_63, %c0_64] : memref<64x1xf32, #tpu.memory_space<vmem>>, vector<64x1xf32>
    %c0_65 = arith.constant 0 : index
    %c0_66 = arith.constant 0 : index
    %102 = vector.load %arg7[%c0_65, %c0_66] : memref<896x128xf32, #tpu.memory_space<vmem>>, vector<200x128xf32>
    %cst_67 = arith.constant dense<0.000000e+00> : vector<64x128xf32>
    %103 = tpu.matmul %100, %102, %cst_67 {dimension_numbers = #tpu.dot_dimension_numbers<[1], [0], [0], [1], [0, 0, 1, 1], [], []>} : vector<64x200xf32>, vector<200x128xf32>, vector<64x128xf32> -> vector<64x128xf32>
    %104 = vector.broadcast %101 : vector<64x1xf32> to vector<64x128xf32>
    %105 = arith.addf %103, %104 : vector<64x128xf32>
    %cst_68 = arith.constant 0.000000e+00 : f32
    %106 = vector.broadcast %cst_68 : f32 to vector<64x128xf32>
    %107 = arith.maximumf %105, %106 : vector<64x128xf32>
    %108 = vector.extract_strided_slice %107 {offsets = [0, 0], sizes = [64, 64], strides = [1, 1]} : vector<64x128xf32> to vector<64x64xf32>
    %c0_69 = arith.constant 0 : index
    %c0_70 = arith.constant 0 : index
    %c0_71 = arith.constant 0 : index
    %109 = vector.load %arg6[%c0_69, %c0_70, %c0_71] : memref<2x320x64xf32, #tpu.memory_space<vmem>>, vector<1x64x64xf32>
    %110 = vector.shape_cast %109 : vector<1x64x64xf32> to vector<64x64xf32>
    %111 = vector.shape_cast %108 : vector<64x64xf32> to vector<1x64x64xf32>
    tpu.vector_store %arg6[%c0_69, %c0_70, %c0_71], %111 {strides = array<i32>} : memref<2x320x64xf32, #tpu.memory_space<vmem>>, vector<1x64x64xf32>,
    %112 = vector.extract_strided_slice %107 {offsets = [0, 64], sizes = [64, 64], strides = [1, 1]} : vector<64x128xf32> to vector<64x64xf32>
    %c1 = arith.constant 1 : index
    %c0_72 = arith.constant 0 : index
    %c0_73 = arith.constant 0 : index
    %113 = vector.load %arg6[%c1, %c0_72, %c0_73] : memref<2x320x64xf32, #tpu.memory_space<vmem>>, vector<1x64x64xf32>
    %114 = vector.shape_cast %113 : vector<1x64x64xf32> to vector<64x64xf32>
    %115 = vector.shape_cast %112 : vector<64x64xf32> to vector<1x64x64xf32>
    tpu.vector_store %arg6[%c1, %c0_72, %c0_73], %115 {strides = array<i32>} : memref<2x320x64xf32, #tpu.memory_space<vmem>>, vector<1x64x64xf32>,
    %c160 = arith.constant 160 : index
    %c0_74 = arith.constant 0 : index
    %116 = vector.load %arg7[%c160, %c0_74] : memref<896x128xf32, #tpu.memory_space<vmem>>, vector<200x128xf32>
    %cst_75 = arith.constant dense<0.000000e+00> : vector<64x128xf32>
    %117 = tpu.matmul %100, %116, %cst_75 {dimension_numbers = #tpu.dot_dimension_numbers<[1], [0], [0], [1], [0, 0, 1, 1], [], []>} : vector<64x200xf32>, vector<200x128xf32>, vector<64x128xf32> -> vector<64x128xf32>
    %118 = vector.broadcast %101 : vector<64x1xf32> to vector<64x128xf32>
    %119 = arith.addf %117, %118 : vector<64x128xf32>
    %cst_76 = arith.constant 0.000000e+00 : f32
    %120 = vector.broadcast %cst_76 : f32 to vector<64x128xf32>
    %121 = arith.maximumf %119, %120 : vector<64x128xf32>
    %122 = vector.extract_strided_slice %121 {offsets = [0, 0], sizes = [64, 64], strides = [1, 1]} : vector<64x128xf32> to vector<64x64xf32>
    %c0_77 = arith.constant 0 : index
    %c64_78 = arith.constant 64 : index
    %c0_79 = arith.constant 0 : index
    %123 = vector.load %arg6[%c0_77, %c64_78, %c0_79] : memref<2x320x64xf32, #tpu.memory_space<vmem>>, vector<1x64x64xf32>
    %124 = vector.shape_cast %123 : vector<1x64x64xf32> to vector<64x64xf32>
    %125 = vector.shape_cast %122 : vector<64x64xf32> to vector<1x64x64xf32>
    tpu.vector_store %arg6[%c0_77, %c64_78, %c0_79], %125 {strides = array<i32>} : memref<2x320x64xf32, #tpu.memory_space<vmem>>, vector<1x64x64xf32>,
    %126 = vector.extract_strided_slice %121 {offsets = [0, 64], sizes = [64, 64], strides = [1, 1]} : vector<64x128xf32> to vector<64x64xf32>
    %c1_80 = arith.constant 1 : index
    %c64_81 = arith.constant 64 : index
    %c0_82 = arith.constant 0 : index
    %127 = vector.load %arg6[%c1_80, %c64_81, %c0_82] : memref<2x320x64xf32, #tpu.memory_space<vmem>>, vector<1x64x64xf32>
    %128 = vector.shape_cast %127 : vector<1x64x64xf32> to vector<64x64xf32>
    %129 = vector.shape_cast %126 : vector<64x64xf32> to vector<1x64x64xf32>
    tpu.vector_store %arg6[%c1_80, %c64_81, %c0_82], %129 {strides = array<i32>} : memref<2x320x64xf32, #tpu.memory_space<vmem>>, vector<1x64x64xf32>,
    %c320_83 = arith.constant 320 : index
    %c0_84 = arith.constant 0 : index
    %130 = vector.load %arg7[%c320_83, %c0_84] : memref<896x128xf32, #tpu.memory_space<vmem>>, vector<200x128xf32>
    %cst_85 = arith.constant dense<0.000000e+00> : vector<64x128xf32>
    %131 = tpu.matmul %100, %130, %cst_85 {dimension_numbers = #tpu.dot_dimension_numbers<[1], [0], [0], [1], [0, 0, 1, 1], [], []>} : vector<64x200xf32>, vector<200x128xf32>, vector<64x128xf32> -> vector<64x128xf32>
    %132 = vector.broadcast %101 : vector<64x1xf32> to vector<64x128xf32>
    %133 = arith.addf %131, %132 : vector<64x128xf32>
    %cst_86 = arith.constant 0.000000e+00 : f32
    %134 = vector.broadcast %cst_86 : f32 to vector<64x128xf32>
    %135 = arith.maximumf %133, %134 : vector<64x128xf32>
    %136 = vector.extract_strided_slice %135 {offsets = [0, 0], sizes = [64, 64], strides = [1, 1]} : vector<64x128xf32> to vector<64x64xf32>
    %c0_87 = arith.constant 0 : index
    %c128_88 = arith.constant 128 : index
    %c0_89 = arith.constant 0 : index
    %137 = vector.load %arg6[%c0_87, %c128_88, %c0_89] : memref<2x320x64xf32, #tpu.memory_space<vmem>>, vector<1x64x64xf32>
    %138 = vector.shape_cast %137 : vector<1x64x64xf32> to vector<64x64xf32>
    %139 = vector.shape_cast %136 : vector<64x64xf32> to vector<1x64x64xf32>
    tpu.vector_store %arg6[%c0_87, %c128_88, %c0_89], %139 {strides = array<i32>} : memref<2x320x64xf32, #tpu.memory_space<vmem>>, vector<1x64x64xf32>,
    %140 = vector.extract_strided_slice %135 {offsets = [0, 64], sizes = [64, 64], strides = [1, 1]} : vector<64x128xf32> to vector<64x64xf32>
    %c1_90 = arith.constant 1 : index
    %c128_91 = arith.constant 128 : index
    %c0_92 = arith.constant 0 : index
    %141 = vector.load %arg6[%c1_90, %c128_91, %c0_92] : memref<2x320x64xf32, #tpu.memory_space<vmem>>, vector<1x64x64xf32>
    %142 = vector.shape_cast %141 : vector<1x64x64xf32> to vector<64x64xf32>
    %143 = vector.shape_cast %140 : vector<64x64xf32> to vector<1x64x64xf32>
    tpu.vector_store %arg6[%c1_90, %c128_91, %c0_92], %143 {strides = array<i32>} : memref<2x320x64xf32, #tpu.memory_space<vmem>>, vector<1x64x64xf32>,
    %c480 = arith.constant 480 : index
    %c0_93 = arith.constant 0 : index
    %144 = vector.load %arg7[%c480, %c0_93] : memref<896x128xf32, #tpu.memory_space<vmem>>, vector<200x128xf32>
    %cst_94 = arith.constant dense<0.000000e+00> : vector<64x128xf32>
    %145 = tpu.matmul %100, %144, %cst_94 {dimension_numbers = #tpu.dot_dimension_numbers<[1], [0], [0], [1], [0, 0, 1, 1], [], []>} : vector<64x200xf32>, vector<200x128xf32>, vector<64x128xf32> -> vector<64x128xf32>
    %146 = vector.broadcast %101 : vector<64x1xf32> to vector<64x128xf32>
    %147 = arith.addf %145, %146 : vector<64x128xf32>
    %cst_95 = arith.constant 0.000000e+00 : f32
    %148 = vector.broadcast %cst_95 : f32 to vector<64x128xf32>
    %149 = arith.maximumf %147, %148 : vector<64x128xf32>
    %150 = vector.extract_strided_slice %149 {offsets = [0, 0], sizes = [64, 64], strides = [1, 1]} : vector<64x128xf32> to vector<64x64xf32>
    %c0_96 = arith.constant 0 : index
    %c192_97 = arith.constant 192 : index
    %c0_98 = arith.constant 0 : index
    %151 = vector.load %arg6[%c0_96, %c192_97, %c0_98] : memref<2x320x64xf32, #tpu.memory_space<vmem>>, vector<1x64x64xf32>
    %152 = vector.shape_cast %151 : vector<1x64x64xf32> to vector<64x64xf32>
    %153 = vector.shape_cast %150 : vector<64x64xf32> to vector<1x64x64xf32>
    tpu.vector_store %arg6[%c0_96, %c192_97, %c0_98], %153 {strides = array<i32>} : memref<2x320x64xf32, #tpu.memory_space<vmem>>, vector<1x64x64xf32>,
    %154 = vector.extract_strided_slice %149 {offsets = [0, 64], sizes = [64, 64], strides = [1, 1]} : vector<64x128xf32> to vector<64x64xf32>
    %c1_99 = arith.constant 1 : index
    %c192_100 = arith.constant 192 : index
    %c0_101 = arith.constant 0 : index
    %155 = vector.load %arg6[%c1_99, %c192_100, %c0_101] : memref<2x320x64xf32, #tpu.memory_space<vmem>>, vector<1x64x64xf32>
    %156 = vector.shape_cast %155 : vector<1x64x64xf32> to vector<64x64xf32>
    %157 = vector.shape_cast %154 : vector<64x64xf32> to vector<1x64x64xf32>
    tpu.vector_store %arg6[%c1_99, %c192_100, %c0_101], %157 {strides = array<i32>} : memref<2x320x64xf32, #tpu.memory_space<vmem>>, vector<1x64x64xf32>,
    %c640_102 = arith.constant 640 : index
    %c0_103 = arith.constant 0 : index
    %158 = vector.load %arg7[%c640_102, %c0_103] : memref<896x128xf32, #tpu.memory_space<vmem>>, vector<200x128xf32>
    %cst_104 = arith.constant dense<0.000000e+00> : vector<64x128xf32>
    %159 = tpu.matmul %100, %158, %cst_104 {dimension_numbers = #tpu.dot_dimension_numbers<[1], [0], [0], [1], [0, 0, 1, 1], [], []>} : vector<64x200xf32>, vector<200x128xf32>, vector<64x128xf32> -> vector<64x128xf32>
    %160 = vector.broadcast %101 : vector<64x1xf32> to vector<64x128xf32>
    %161 = arith.addf %159, %160 : vector<64x128xf32>
    %cst_105 = arith.constant 0.000000e+00 : f32
    %162 = vector.broadcast %cst_105 : f32 to vector<64x128xf32>
    %163 = arith.maximumf %161, %162 : vector<64x128xf32>
    %164 = vector.extract_strided_slice %163 {offsets = [0, 0], sizes = [64, 64], strides = [1, 1]} : vector<64x128xf32> to vector<64x64xf32>
    %c0_106 = arith.constant 0 : index
    %c256_107 = arith.constant 256 : index
    %c0_108 = arith.constant 0 : index
    %165 = vector.load %arg6[%c0_106, %c256_107, %c0_108] : memref<2x320x64xf32, #tpu.memory_space<vmem>>, vector<1x64x64xf32>
    %166 = vector.shape_cast %165 : vector<1x64x64xf32> to vector<64x64xf32>
    %167 = vector.shape_cast %164 : vector<64x64xf32> to vector<1x64x64xf32>
    tpu.vector_store %arg6[%c0_106, %c256_107, %c0_108], %167 {strides = array<i32>} : memref<2x320x64xf32, #tpu.memory_space<vmem>>, vector<1x64x64xf32>,
    %168 = vector.extract_strided_slice %163 {offsets = [0, 64], sizes = [64, 64], strides = [1, 1]} : vector<64x128xf32> to vector<64x64xf32>
    %c1_109 = arith.constant 1 : index
    %c256_110 = arith.constant 256 : index
    %c0_111 = arith.constant 0 : index
    %169 = vector.load %arg6[%c1_109, %c256_110, %c0_111] : memref<2x320x64xf32, #tpu.memory_space<vmem>>, vector<1x64x64xf32>
    %170 = vector.shape_cast %169 : vector<1x64x64xf32> to vector<64x64xf32>
    %171 = vector.shape_cast %168 : vector<64x64xf32> to vector<1x64x64xf32>
    tpu.vector_store %arg6[%c1_109, %c256_110, %c0_111], %171 {strides = array<i32>} : memref<2x320x64xf32, #tpu.memory_space<vmem>>, vector<1x64x64xf32>,
    return
  }
  func.func @transform_0(%arg0: i32) -> (i32, i32) {
    %c0_i32 = arith.constant 0 : i32
    %c0_i32_0 = arith.constant 0 : i32
    %c0_i32_1 = arith.constant 0 : i32
    return %c0_i32, %c0_i32_0 : i32, i32
  }
  func.func @transform_1(%arg0: i32) -> (i32, i32) {
    %c0_i32 = arith.constant 0 : i32
    %c0_i32_0 = arith.constant 0 : i32
    %c0_i32_1 = arith.constant 0 : i32
    return %c0_i32, %c0_i32_0 : i32, i32
  }
  func.func @transform_2(%arg0: i32) -> (i32, i32) {
    %c0_i32 = arith.constant 0 : i32
    %c0_i32_0 = arith.constant 0 : i32
    %c0_i32_1 = arith.constant 0 : i32
    return %c0_i32, %c0_i32_0 : i32, i32
  }
  func.func @transform_3(%arg0: i32) -> (i32, i32) {
    %c0_i32 = arith.constant 0 : i32
    %c0_i32_0 = arith.constant 0 : i32
    %c0_i32_1 = arith.constant 0 : i32
    return %c0_i32, %c0_i32_0 : i32, i32
  }
  func.func @transform_4(%arg0: i32) -> (i32, i32) {
    %c0_i32 = arith.constant 0 : i32
    %c0_i32_0 = arith.constant 0 : i32
    %c0_i32_1 = arith.constant 0 : i32
    return %c0_i32, %c0_i32_0 : i32, i32
  }
  func.func @transform_5(%arg0: i32) -> (i32, i32, i32) {
    %c0_i32 = arith.constant 0 : i32
    %c0_i32_0 = arith.constant 0 : i32
    %c0_i32_1 = arith.constant 0 : i32
    %c0_i32_2 = arith.constant 0 : i32
    return %c0_i32, %c0_i32_0, %c0_i32_1 : i32, i32, i32
  }
}

module attributes {stable_mosaic.version = 11 : i64} {
  func.func @_conv4_head_kernel(%arg0: i32, %arg1: memref<2x20480xf32, #tpu.memory_space<vmem>>, %arg2: memref<5120x32xf32, #tpu.memory_space<vmem>>, %arg3: memref<1x32xf32, #tpu.memory_space<vmem>>, %arg4: memref<224x90xf32, #tpu.memory_space<vmem>>, %arg5: memref<1x90xf32, #tpu.memory_space<vmem>>, %arg6: memref<1x90xf32, #tpu.memory_space<vmem>>, %arg7: memref<1x90xf32, #tpu.memory_space<vmem>>, %arg8: memref<90x10xf32, #tpu.memory_space<vmem>>, %arg9: memref<1x10xf32, #tpu.memory_space<vmem>>, %arg10: memref<2x10xf32, #tpu.memory_space<vmem>>, %arg11: memref<56x5120xf32, #tpu.memory_space<vmem>>) attributes {dimension_semantics = [#tpu.dimension_semantics<arbitrary>], iteration_bounds = array<i64: 1>, scalar_prefetch = 0 : i64, scratch_operands = 1 : i64, tpu.core_type = #tpu.core_type<tc>, window_params = [{pipeline_mode = #tpu.pipeline_mode<synchronous>, transform_indices = @transform_0, window_bounds = array<i64: 2, 20480>}, {pipeline_mode = #tpu.pipeline_mode<synchronous>, transform_indices = @transform_1, window_bounds = array<i64: 5120, 32>}, {pipeline_mode = #tpu.pipeline_mode<synchronous>, transform_indices = @transform_2, window_bounds = array<i64: 1, 32>}, {pipeline_mode = #tpu.pipeline_mode<synchronous>, transform_indices = @transform_3, window_bounds = array<i64: 224, 90>}, {pipeline_mode = #tpu.pipeline_mode<synchronous>, transform_indices = @transform_4, window_bounds = array<i64: 1, 90>}, {pipeline_mode = #tpu.pipeline_mode<synchronous>, transform_indices = @transform_5, window_bounds = array<i64: 1, 90>}, {pipeline_mode = #tpu.pipeline_mode<synchronous>, transform_indices = @transform_6, window_bounds = array<i64: 1, 90>}, {pipeline_mode = #tpu.pipeline_mode<synchronous>, transform_indices = @transform_7, window_bounds = array<i64: 90, 10>}, {pipeline_mode = #tpu.pipeline_mode<synchronous>, transform_indices = @transform_8, window_bounds = array<i64: 1, 10>}, {pipeline_mode = #tpu.pipeline_mode<synchronous>, transform_indices = @transform_9, window_bounds = array<i64: 2, 10>}]} {
    %c0 = arith.constant 0 : index
    %c0_0 = arith.constant 0 : index
    %0 = vector.load %arg1[%c0, %c0_0] : memref<2x20480xf32, #tpu.memory_space<vmem>>, vector<2x5120xf32>
    %c0_1 = arith.constant 0 : index
    %c0_2 = arith.constant 0 : index
    %1 = vector.load %arg11[%c0_1, %c0_2] : memref<56x5120xf32, #tpu.memory_space<vmem>>, vector<2x5120xf32>
    tpu.vector_store %arg11[%c0_1, %c0_2], %0 {strides = array<i32>} : memref<56x5120xf32, #tpu.memory_space<vmem>>, vector<2x5120xf32>,
    %c0_3 = arith.constant 0 : index
    %c2048 = arith.constant 2048 : index
    %2 = vector.load %arg1[%c0_3, %c2048] : memref<2x20480xf32, #tpu.memory_space<vmem>>, vector<2x5120xf32>
    %c8 = arith.constant 8 : index
    %c0_4 = arith.constant 0 : index
    %3 = vector.load %arg11[%c8, %c0_4] : memref<56x5120xf32, #tpu.memory_space<vmem>>, vector<2x5120xf32>
    tpu.vector_store %arg11[%c8, %c0_4], %2 {strides = array<i32>} : memref<56x5120xf32, #tpu.memory_space<vmem>>, vector<2x5120xf32>,
    %c0_5 = arith.constant 0 : index
    %c4096 = arith.constant 4096 : index
    %4 = vector.load %arg1[%c0_5, %c4096] : memref<2x20480xf32, #tpu.memory_space<vmem>>, vector<2x5120xf32>
    %c16 = arith.constant 16 : index
    %c0_6 = arith.constant 0 : index
    %5 = vector.load %arg11[%c16, %c0_6] : memref<56x5120xf32, #tpu.memory_space<vmem>>, vector<2x5120xf32>
    tpu.vector_store %arg11[%c16, %c0_6], %4 {strides = array<i32>} : memref<56x5120xf32, #tpu.memory_space<vmem>>, vector<2x5120xf32>,
    %c0_7 = arith.constant 0 : index
    %c6144 = arith.constant 6144 : index
    %6 = vector.load %arg1[%c0_7, %c6144] : memref<2x20480xf32, #tpu.memory_space<vmem>>, vector<2x5120xf32>
    %c24 = arith.constant 24 : index
    %c0_8 = arith.constant 0 : index
    %7 = vector.load %arg11[%c24, %c0_8] : memref<56x5120xf32, #tpu.memory_space<vmem>>, vector<2x5120xf32>
    tpu.vector_store %arg11[%c24, %c0_8], %6 {strides = array<i32>} : memref<56x5120xf32, #tpu.memory_space<vmem>>, vector<2x5120xf32>,
    %c0_9 = arith.constant 0 : index
    %c8192 = arith.constant 8192 : index
    %8 = vector.load %arg1[%c0_9, %c8192] : memref<2x20480xf32, #tpu.memory_space<vmem>>, vector<2x5120xf32>
    %c32 = arith.constant 32 : index
    %c0_10 = arith.constant 0 : index
    %9 = vector.load %arg11[%c32, %c0_10] : memref<56x5120xf32, #tpu.memory_space<vmem>>, vector<2x5120xf32>
    tpu.vector_store %arg11[%c32, %c0_10], %8 {strides = array<i32>} : memref<56x5120xf32, #tpu.memory_space<vmem>>, vector<2x5120xf32>,
    %c0_11 = arith.constant 0 : index
    %c10240 = arith.constant 10240 : index
    %10 = vector.load %arg1[%c0_11, %c10240] : memref<2x20480xf32, #tpu.memory_space<vmem>>, vector<2x5120xf32>
    %c40 = arith.constant 40 : index
    %c0_12 = arith.constant 0 : index
    %11 = vector.load %arg11[%c40, %c0_12] : memref<56x5120xf32, #tpu.memory_space<vmem>>, vector<2x5120xf32>
    tpu.vector_store %arg11[%c40, %c0_12], %10 {strides = array<i32>} : memref<56x5120xf32, #tpu.memory_space<vmem>>, vector<2x5120xf32>,
    %c0_13 = arith.constant 0 : index
    %c12288 = arith.constant 12288 : index
    %12 = vector.load %arg1[%c0_13, %c12288] : memref<2x20480xf32, #tpu.memory_space<vmem>>, vector<2x5120xf32>
    %c48 = arith.constant 48 : index
    %c0_14 = arith.constant 0 : index
    %13 = vector.load %arg11[%c48, %c0_14] : memref<56x5120xf32, #tpu.memory_space<vmem>>, vector<2x5120xf32>
    tpu.vector_store %arg11[%c48, %c0_14], %12 {strides = array<i32>} : memref<56x5120xf32, #tpu.memory_space<vmem>>, vector<2x5120xf32>,
    %c0_15 = arith.constant 0 : index
    %c0_16 = arith.constant 0 : index
    %14 = vector.load %arg11[%c0_15, %c0_16] : memref<56x5120xf32, #tpu.memory_space<vmem>>, vector<56x5120xf32>
    %c0_17 = arith.constant 0 : index
    %c0_18 = arith.constant 0 : index
    %15 = vector.load %arg2[%c0_17, %c0_18] : memref<5120x32xf32, #tpu.memory_space<vmem>>, vector<5120x32xf32>
    %cst = arith.constant dense<0.000000e+00> : vector<56x32xf32>
    %16 = tpu.matmul %14, %15, %cst {dimension_numbers = #tpu.dot_dimension_numbers<[1], [0], [0], [1], [0, 0, 1, 1], [], []>} : vector<56x5120xf32>, vector<5120x32xf32>, vector<56x32xf32> -> vector<56x32xf32>
    %c0_19 = arith.constant 0 : index
    %c0_20 = arith.constant 0 : index
    %17 = vector.load %arg3[%c0_19, %c0_20] : memref<1x32xf32, #tpu.memory_space<vmem>>, vector<1x32xf32>
    %18 = vector.broadcast %17 : vector<1x32xf32> to vector<56x32xf32>
    %19 = arith.addf %16, %18 : vector<56x32xf32>
    %cst_21 = arith.constant 0.000000e+00 : f32
    %20 = vector.broadcast %cst_21 : f32 to vector<56x32xf32>
    %21 = arith.maximumf %19, %20 : vector<56x32xf32>
    %c0_22 = arith.constant 0 : index
    %c0_23 = arith.constant 0 : index
    %22 = vector.load %arg4[%c0_22, %c0_23] : memref<224x90xf32, #tpu.memory_space<vmem>>, vector<224x90xf32>
    %23 = vector.extract_strided_slice %21 {offsets = [0, 0], sizes = [2, 32], strides = [1, 1]} : vector<56x32xf32> to vector<2x32xf32>
    %24 = vector.extract_strided_slice %22 {offsets = [0, 0], sizes = [32, 90], strides = [1, 1]} : vector<224x90xf32> to vector<32x90xf32>
    %cst_24 = arith.constant dense<0.000000e+00> : vector<2x90xf32>
    %25 = tpu.matmul %23, %24, %cst_24 {dimension_numbers = #tpu.dot_dimension_numbers<[1], [0], [0], [1], [0, 0, 1, 1], [], []>} : vector<2x32xf32>, vector<32x90xf32>, vector<2x90xf32> -> vector<2x90xf32>
    %26 = vector.extract_strided_slice %21 {offsets = [8, 0], sizes = [2, 32], strides = [1, 1]} : vector<56x32xf32> to vector<2x32xf32>
    %27 = vector.extract_strided_slice %22 {offsets = [32, 0], sizes = [32, 90], strides = [1, 1]} : vector<224x90xf32> to vector<32x90xf32>
    %cst_25 = arith.constant dense<0.000000e+00> : vector<2x90xf32>
    %28 = tpu.matmul %26, %27, %cst_25 {dimension_numbers = #tpu.dot_dimension_numbers<[1], [0], [0], [1], [0, 0, 1, 1], [], []>} : vector<2x32xf32>, vector<32x90xf32>, vector<2x90xf32> -> vector<2x90xf32>
    %29 = arith.addf %25, %28 : vector<2x90xf32>
    %30 = vector.extract_strided_slice %21 {offsets = [16, 0], sizes = [2, 32], strides = [1, 1]} : vector<56x32xf32> to vector<2x32xf32>
    %31 = vector.extract_strided_slice %22 {offsets = [64, 0], sizes = [32, 90], strides = [1, 1]} : vector<224x90xf32> to vector<32x90xf32>
    %cst_26 = arith.constant dense<0.000000e+00> : vector<2x90xf32>
    %32 = tpu.matmul %30, %31, %cst_26 {dimension_numbers = #tpu.dot_dimension_numbers<[1], [0], [0], [1], [0, 0, 1, 1], [], []>} : vector<2x32xf32>, vector<32x90xf32>, vector<2x90xf32> -> vector<2x90xf32>
    %33 = arith.addf %29, %32 : vector<2x90xf32>
    %34 = vector.extract_strided_slice %21 {offsets = [24, 0], sizes = [2, 32], strides = [1, 1]} : vector<56x32xf32> to vector<2x32xf32>
    %35 = vector.extract_strided_slice %22 {offsets = [96, 0], sizes = [32, 90], strides = [1, 1]} : vector<224x90xf32> to vector<32x90xf32>
    %cst_27 = arith.constant dense<0.000000e+00> : vector<2x90xf32>
    %36 = tpu.matmul %34, %35, %cst_27 {dimension_numbers = #tpu.dot_dimension_numbers<[1], [0], [0], [1], [0, 0, 1, 1], [], []>} : vector<2x32xf32>, vector<32x90xf32>, vector<2x90xf32> -> vector<2x90xf32>
    %37 = arith.addf %33, %36 : vector<2x90xf32>
    %38 = vector.extract_strided_slice %21 {offsets = [32, 0], sizes = [2, 32], strides = [1, 1]} : vector<56x32xf32> to vector<2x32xf32>
    %39 = vector.extract_strided_slice %22 {offsets = [128, 0], sizes = [32, 90], strides = [1, 1]} : vector<224x90xf32> to vector<32x90xf32>
    %cst_28 = arith.constant dense<0.000000e+00> : vector<2x90xf32>
    %40 = tpu.matmul %38, %39, %cst_28 {dimension_numbers = #tpu.dot_dimension_numbers<[1], [0], [0], [1], [0, 0, 1, 1], [], []>} : vector<2x32xf32>, vector<32x90xf32>, vector<2x90xf32> -> vector<2x90xf32>
    %41 = arith.addf %37, %40 : vector<2x90xf32>
    %42 = vector.extract_strided_slice %21 {offsets = [40, 0], sizes = [2, 32], strides = [1, 1]} : vector<56x32xf32> to vector<2x32xf32>
    %43 = vector.extract_strided_slice %22 {offsets = [160, 0], sizes = [32, 90], strides = [1, 1]} : vector<224x90xf32> to vector<32x90xf32>
    %cst_29 = arith.constant dense<0.000000e+00> : vector<2x90xf32>
    %44 = tpu.matmul %42, %43, %cst_29 {dimension_numbers = #tpu.dot_dimension_numbers<[1], [0], [0], [1], [0, 0, 1, 1], [], []>} : vector<2x32xf32>, vector<32x90xf32>, vector<2x90xf32> -> vector<2x90xf32>
    %45 = arith.addf %41, %44 : vector<2x90xf32>
    %46 = vector.extract_strided_slice %21 {offsets = [48, 0], sizes = [2, 32], strides = [1, 1]} : vector<56x32xf32> to vector<2x32xf32>
    %47 = vector.extract_strided_slice %22 {offsets = [192, 0], sizes = [32, 90], strides = [1, 1]} : vector<224x90xf32> to vector<32x90xf32>
    %cst_30 = arith.constant dense<0.000000e+00> : vector<2x90xf32>
    %48 = tpu.matmul %46, %47, %cst_30 {dimension_numbers = #tpu.dot_dimension_numbers<[1], [0], [0], [1], [0, 0, 1, 1], [], []>} : vector<2x32xf32>, vector<32x90xf32>, vector<2x90xf32> -> vector<2x90xf32>
    %49 = arith.addf %45, %48 : vector<2x90xf32>
    %c0_31 = arith.constant 0 : index
    %c0_32 = arith.constant 0 : index
    %50 = vector.load %arg5[%c0_31, %c0_32] : memref<1x90xf32, #tpu.memory_space<vmem>>, vector<1x90xf32>
    %51 = vector.broadcast %50 : vector<1x90xf32> to vector<2x90xf32>
    %52 = arith.addf %49, %51 : vector<2x90xf32>
    %cst_33 = arith.constant 0.000000e+00 : f32
    %53 = vector.broadcast %cst_33 : f32 to vector<2x90xf32>
    %54 = arith.maximumf %52, %53 : vector<2x90xf32>
    %cst_34 = arith.constant dense<0.000000e+00> : vector<90xf32>
    %55 = vector.multi_reduction <add>, %54, %cst_34 [0] : vector<2x90xf32> to vector<90xf32>
    %56 = vector.shape_cast %55 : vector<90xf32> to vector<1x90xf32>
    %cst_35 = arith.constant 2.000000e+00 : f32
    %57 = vector.broadcast %cst_35 : f32 to vector<1x90xf32>
    %58 = arith.divf %56, %57 : vector<1x90xf32>
    %59 = vector.broadcast %58 : vector<1x90xf32> to vector<2x90xf32>
    %60 = arith.subf %54, %59 : vector<2x90xf32>
    %61 = arith.mulf %60, %60 : vector<2x90xf32>
    %cst_36 = arith.constant dense<0.000000e+00> : vector<90xf32>
    %62 = vector.multi_reduction <add>, %61, %cst_36 [0] : vector<2x90xf32> to vector<90xf32>
    %63 = vector.shape_cast %62 : vector<90xf32> to vector<1x90xf32>
    %cst_37 = arith.constant 2.000000e+00 : f32
    %64 = vector.broadcast %cst_37 : f32 to vector<1x90xf32>
    %65 = arith.divf %63, %64 : vector<1x90xf32>
    %66 = vector.broadcast %58 : vector<1x90xf32> to vector<2x90xf32>
    %67 = arith.subf %54, %66 : vector<2x90xf32>
    %cst_38 = arith.constant 9.99999974E-6 : f32
    %68 = vector.broadcast %cst_38 : f32 to vector<1x90xf32>
    %69 = arith.addf %65, %68 : vector<1x90xf32>
    %70 = math.rsqrt %69 : vector<1x90xf32>
    %71 = vector.broadcast %70 : vector<1x90xf32> to vector<2x90xf32>
    %72 = arith.mulf %67, %71 : vector<2x90xf32>
    %c0_39 = arith.constant 0 : index
    %c0_40 = arith.constant 0 : index
    %73 = vector.load %arg6[%c0_39, %c0_40] : memref<1x90xf32, #tpu.memory_space<vmem>>, vector<1x90xf32>
    %74 = vector.broadcast %73 : vector<1x90xf32> to vector<2x90xf32>
    %75 = arith.mulf %72, %74 : vector<2x90xf32>
    %c0_41 = arith.constant 0 : index
    %c0_42 = arith.constant 0 : index
    %76 = vector.load %arg7[%c0_41, %c0_42] : memref<1x90xf32, #tpu.memory_space<vmem>>, vector<1x90xf32>
    %77 = vector.broadcast %76 : vector<1x90xf32> to vector<2x90xf32>
    %78 = arith.addf %75, %77 : vector<2x90xf32>
    %c0_43 = arith.constant 0 : index
    %c0_44 = arith.constant 0 : index
    %79 = vector.load %arg8[%c0_43, %c0_44] : memref<90x10xf32, #tpu.memory_space<vmem>>, vector<90x10xf32>
    %cst_45 = arith.constant dense<0.000000e+00> : vector<2x10xf32>
    %80 = tpu.matmul %78, %79, %cst_45 {dimension_numbers = #tpu.dot_dimension_numbers<[1], [0], [0], [1], [0, 0, 1, 1], [], []>} : vector<2x90xf32>, vector<90x10xf32>, vector<2x10xf32> -> vector<2x10xf32>
    %c0_46 = arith.constant 0 : index
    %c0_47 = arith.constant 0 : index
    %81 = vector.load %arg9[%c0_46, %c0_47] : memref<1x10xf32, #tpu.memory_space<vmem>>, vector<1x10xf32>
    %82 = vector.broadcast %81 : vector<1x10xf32> to vector<2x10xf32>
    %83 = arith.addf %80, %82 : vector<2x10xf32>
    %cst_48 = arith.constant dense<0xFF800000> : vector<2xf32>
    %84 = vector.multi_reduction <maximumf>, %83, %cst_48 [1] : vector<2x10xf32> to vector<2xf32>
    %85 = vector.shape_cast %84 : vector<2xf32> to vector<2x1xf32>
    %86 = vector.broadcast %85 : vector<2x1xf32> to vector<2x10xf32>
    %87 = arith.subf %83, %86 : vector<2x10xf32>
    %88 = math.exp %87 : vector<2x10xf32>
    %cst_49 = arith.constant dense<0.000000e+00> : vector<2xf32>
    %89 = vector.multi_reduction <add>, %88, %cst_49 [1] : vector<2x10xf32> to vector<2xf32>
    %90 = vector.shape_cast %89 : vector<2xf32> to vector<2x1xf32>
    %91 = tpu.reciprocal %90 {approx = true} : vector<2x1xf32> -> vector<2x1xf32>
    %92 = arith.mulf %90, %91 : vector<2x1xf32>
    %cst_50 = arith.constant 2.000000e+00 : f32
    %93 = vector.broadcast %cst_50 : f32 to vector<2x1xf32>
    %94 = arith.subf %93, %92 : vector<2x1xf32>
    %95 = arith.mulf %91, %94 : vector<2x1xf32>
    %96 = vector.broadcast %95 : vector<2x1xf32> to vector<2x10xf32>
    %97 = arith.mulf %88, %96 : vector<2x10xf32>
    %c0_51 = arith.constant 0 : index
    %c0_52 = arith.constant 0 : index
    %98 = vector.load %arg10[%c0_51, %c0_52] : memref<2x10xf32, #tpu.memory_space<vmem>>, vector<2x10xf32>
    tpu.vector_store %arg10[%c0_51, %c0_52], %97 {strides = array<i32>} : memref<2x10xf32, #tpu.memory_space<vmem>>, vector<2x10xf32>,
    return
  }
  func.func @transform_0(%arg0: i32) -> (i32, i32) {
    %c0_i32 = arith.constant 0 : i32
    %c0_i32_0 = arith.constant 0 : i32
    %c0_i32_1 = arith.constant 0 : i32
    return %c0_i32, %c0_i32_0 : i32, i32
  }
  func.func @transform_1(%arg0: i32) -> (i32, i32) {
    %c0_i32 = arith.constant 0 : i32
    %c0_i32_0 = arith.constant 0 : i32
    %c0_i32_1 = arith.constant 0 : i32
    return %c0_i32, %c0_i32_0 : i32, i32
  }
  func.func @transform_2(%arg0: i32) -> (i32, i32) {
    %c0_i32 = arith.constant 0 : i32
    %c0_i32_0 = arith.constant 0 : i32
    %c0_i32_1 = arith.constant 0 : i32
    return %c0_i32, %c0_i32_0 : i32, i32
  }
  func.func @transform_3(%arg0: i32) -> (i32, i32) {
    %c0_i32 = arith.constant 0 : i32
    %c0_i32_0 = arith.constant 0 : i32
    %c0_i32_1 = arith.constant 0 : i32
    return %c0_i32, %c0_i32_0 : i32, i32
  }
  func.func @transform_4(%arg0: i32) -> (i32, i32) {
    %c0_i32 = arith.constant 0 : i32
    %c0_i32_0 = arith.constant 0 : i32
    %c0_i32_1 = arith.constant 0 : i32
    return %c0_i32, %c0_i32_0 : i32, i32
  }
  func.func @transform_5(%arg0: i32) -> (i32, i32) {
    %c0_i32 = arith.constant 0 : i32
    %c0_i32_0 = arith.constant 0 : i32
    %c0_i32_1 = arith.constant 0 : i32
    return %c0_i32, %c0_i32_0 : i32, i32
  }
  func.func @transform_6(%arg0: i32) -> (i32, i32) {
    %c0_i32 = arith.constant 0 : i32
    %c0_i32_0 = arith.constant 0 : i32
    %c0_i32_1 = arith.constant 0 : i32
    return %c0_i32, %c0_i32_0 : i32, i32
  }
  func.func @transform_7(%arg0: i32) -> (i32, i32) {
    %c0_i32 = arith.constant 0 : i32
    %c0_i32_0 = arith.constant 0 : i32
    %c0_i32_1 = arith.constant 0 : i32
    return %c0_i32, %c0_i32_0 : i32, i32
  }
  func.func @transform_8(%arg0: i32) -> (i32, i32) {
    %c0_i32 = arith.constant 0 : i32
    %c0_i32_0 = arith.constant 0 : i32
    %c0_i32_1 = arith.constant 0 : i32
    return %c0_i32, %c0_i32_0 : i32, i32
  }
  func.func @transform_9(%arg0: i32) -> (i32, i32) {
    %c0_i32 = arith.constant 0 : i32
    %c0_i32_0 = arith.constant 0 : i32
    %c0_i32_1 = arith.constant 0 : i32
    return %c0_i32, %c0_i32_0 : i32, i32
  }
}

</mosaic_0001>

<llo_original>
// kernel: cnn3d_forward.2
$region0: #{cnn3d_forward.2}
  #allocation0 [shape = 'u32[]', space=smem, size = 0x4, offset = 0x4, fixed_abs, tag = 'smem constant byte address 0x4 - core index']
  #allocation1 [shape = 'u32[144,128]{1,0:T(1,128)}', space=vmem, size = 0x12000, scoped, tag = 'internal scratch']
  #allocation2 [shape = 'f32[896,128]{1,0:T(8,128)}', space=vmem, size = 0x70000, scoped, tag = 'scratch operand']
  %s0 = inlined_call_operand.vmem [shape: f32[1029,128], index: 0, kind: input, shape index: {}]
  %s1 = inlined_call_operand.vmem [shape: f32[64,93], index: 1, kind: input, shape index: {}]
  %s2 = inlined_call_operand.vmem [shape: f32[64,1], index: 2, kind: input, shape index: {}]
  %s3 = inlined_call_operand.vmem [shape: f32[64,200], index: 3, kind: input, shape index: {}]
  %s4 = inlined_call_operand.vmem [shape: f32[64,1], index: 4, kind: input, shape index: {}]
  %s5 = inlined_call_operand.vmem [shape: f32[2,320,64], index: 5, kind: output, shape index: {}]
  %s6 = sld [smem:[#allocation0]]
  $region30: #{cnn3d_forward.2} parent=0
    _
  %s8 = ssub.s32 1, %s6
  %s9 = scalar_select 0, %s8, %s6
  // Predicated region
  $region2: #{cnn3d_forward.2} parent=0 // pred_check
    _
  $region3: #{cnn3d_forward.2} parent=0 // pred_check_branch
    %11 = sbr.rel (0) target = $region5
  $region4: #{cnn3d_forward.2} parent=0 // pred_region
    _
  $region5: #{cnn3d_forward.2} parent=0 // pred_fallthru
    _
  // Predicated region
  $region6: #{cnn3d_forward.2} parent=0 // pred_check
    _
  $region7: #{cnn3d_forward.2} parent=0 // pred_check_branch
    %13 = sbr.rel (0) target = $region9
  $region8: #{cnn3d_forward.2} parent=0 // pred_region
    _
  $region9: #{cnn3d_forward.2} parent=0 // pred_fallthru
    _
  // Predicated region
  $region10: #{cnn3d_forward.2} parent=0 // pred_check
    _
  $region11: #{cnn3d_forward.2} parent=0 // pred_check_branch
    %15 = sbr.rel (0) target = $region13
  $region12: #{cnn3d_forward.2} parent=0 // pred_region
    _
  $region13: #{cnn3d_forward.2} parent=0 // pred_fallthru
    _
  // Predicated region
  $region14: #{cnn3d_forward.2} parent=0 // pred_check
    _
  $region15: #{cnn3d_forward.2} parent=0 // pred_check_branch
    %17 = sbr.rel (0) target = $region17
  $region16: #{cnn3d_forward.2} parent=0 // pred_region
    _
  $region17: #{cnn3d_forward.2} parent=0 // pred_fallthru
    _
  // Predicated region
  $region18: #{cnn3d_forward.2} parent=0 // pred_check
    _
  $region19: #{cnn3d_forward.2} parent=0 // pred_check_branch
    %19 = sbr.rel (0) target = $region21
  $region20: #{cnn3d_forward.2} parent=0 // pred_region
    _
  $region21: #{cnn3d_forward.2} parent=0 // pred_fallthru
    _
  %v20 = vld [vmem:[%s1] sm:$0xff]
  %v21 = vld [vmem:[%s1 + $0x8] sm:$0xff]
  %v22 = vld [vmem:[%s1 + $0x10] sm:$0xff]
  %v23 = vld [vmem:[%s1 + $0x18] sm:$0xff]
  %v24 = vld [vmem:[%s1 + $0x20] sm:$0xff]
  %v25 = vld [vmem:[%s1 + $0x28] sm:$0xff]
  %v26 = vld [vmem:[%s1 + $0x30] sm:$0xff]
  %v27 = vld [vmem:[%s1 + $0x38] sm:$0xff]
  %v28 = vld [vmem:[%s2] sm:$0xff]
  %v29 = vld [vmem:[%s2 + $0x8] sm:$0xff]
  %v30 = vld [vmem:[%s2 + $0x10] sm:$0xff]
  %v31 = vld [vmem:[%s2 + $0x18] sm:$0xff]
  %v32 = vld [vmem:[%s2 + $0x20] sm:$0xff]
  %v33 = vld [vmem:[%s2 + $0x28] sm:$0xff]
  %v34 = vld [vmem:[%s2 + $0x30] sm:$0xff]
  %v35 = vld [vmem:[%s2 + $0x38] sm:$0xff]
  %v36 = vld [vmem:[%s0] sm:$0xff]
  %v37 = vld [vmem:[%s0 + $0x8] sm:$0xff]
  %v38 = vld [vmem:[%s0 + $0x10] sm:$0xff]
  %v39 = vld [vmem:[%s0 + $0x18] sm:$0xff]
  %v40 = vld [vmem:[%s0 + $0x20] sm:$0xff]
  %v41 = vld [vmem:[%s0 + $0x28] sm:$0xff]
  %v42 = vld [vmem:[%s0 + $0x30] sm:$0xff]
  %v43 = vld [vmem:[%s0 + $0x38] sm:$0xff]
  %v44 = vld [vmem:[%s0 + $0x40] sm:$0xff]
  %v45 = vld [vmem:[%s0 + $0x48] sm:$0xff]
  %v46 = vld [vmem:[%s0 + $0x50] sm:$0xff]
  %v47 = vld [vmem:[%s0 + $0x58] sm:$0x1f]
  %49 = vset.pattern.permute.xlu0 0
  %50 = vperm.xlu0 %49, %v28
  %v51 = vpop.permute.xlu0 %50
  %54 = vset.pattern.permute.xlu0 0
  %55 = vperm.xlu0 %54, %v29
  %v56 = vpop.permute.xlu0 %55
  %59 = vset.pattern.permute.xlu0 0
  %60 = vperm.xlu0 %59, %v30
  %v61 = vpop.permute.xlu0 %60
  %64 = vset.pattern.permute.xlu0 0
  %65 = vperm.xlu0 %64, %v31
  %v66 = vpop.permute.xlu0 %65
  %69 = vset.pattern.permute.xlu0 0
  %70 = vperm.xlu0 %69, %v32
  %v71 = vpop.permute.xlu0 %70
  %74 = vset.pattern.permute.xlu0 0
  %75 = vperm.xlu0 %74, %v33
  %v76 = vpop.permute.xlu0 %75
  %79 = vset.pattern.permute.xlu0 0
  %80 = vperm.xlu0 %79, %v34
  %v81 = vpop.permute.xlu0 %80
  %84 = vset.pattern.permute.xlu0 0
  %85 = vperm.xlu0 %84, %v35
  %v86 = vpop.permute.xlu0 %85
  %vm88 = vcmask 760832
  %v90 = vsel %vm88, %v20, 0
  %v93 = vsel %vm88, %v21, 0
  %v96 = vsel %vm88, %v22, 0
  %v99 = vsel %vm88, %v23, 0
  %v102 = vsel %vm88, %v24, 0
  %v105 = vsel %vm88, %v25, 0
  %v108 = vsel %vm88, %v26, 0
  %v111 = vsel %vm88, %v27, 0
  %vm113 = vcmask 1044480
  %v115 = vsel %vm113, %v47, 0
  %117 = vmatprep.subr.mxu0 0.0
  %118 = vmatpush1.msra.mxu0 0.0
  %119 = vmatprep.subr.mxu0 0.0
  %120 = vmatpush1.msra.mxu0 0.0
  %121 = vmatprep.subr.mxu0 0.0
  %122 = vmatpush1.msra.mxu0 0.0
  %123 = vmatprep.subr.mxu0 0.0
  %124 = vmatpush1.msra.mxu0 0.0
  %125 = vmatprep.subr.mxu0 0.0
  %126 = vmatpush1.msra.mxu0 %v115
  %127 = vmatprep.subr.mxu0 0.0
  %128 = vmatpush1.msra.mxu0 %v46
  %129 = vmatprep.subr.mxu0 0.0
  %130 = vmatpush1.msra.mxu0 %v45
  %131 = vmatprep.subr.mxu0 0.0
  %132 = vmatpush1.msra.mxu0 %v44
  %133 = vmatprep.subr.mxu0 0.0
  %134 = vmatpush1.msra.mxu0 %v43
  %135 = vmatprep.subr.mxu0 0.0
  %136 = vmatpush1.msra.mxu0 %v42
  %137 = vmatprep.subr.mxu0 0.0
  %138 = vmatpush1.msra.mxu0 %v41
  %139 = vmatprep.subr.mxu0 0.0
  %140 = vmatpush1.msra.mxu0 %v40
  %141 = vmatprep.subr.mxu0 0.0
  %142 = vmatpush1.msra.mxu0 %v39
  %143 = vmatprep.subr.mxu0 0.0
  %144 = vmatpush1.msra.mxu0 %v38
  %145 = vmatprep.subr.mxu0 0.0
  %146 = vmatpush1.msra.mxu0 %v37
  %147 = vmatprep.subr.mxu0 0.0
  %148 = vmatpush1.msra.mxu0 %v36
  %149 = vmatprep.subr.mxu0 0.0
  %150 = vmatpush2.msra.mxu0 0.0
  %151 = vmatprep.subr.mxu0 0.0
  %152 = vmatpush2.msra.mxu0 0.0
  %153 = vmatprep.subr.mxu0 0.0
  %154 = vmatpush2.msra.mxu0 0.0
  %155 = vmatprep.subr.mxu0 0.0
  %156 = vmatpush2.msra.mxu0 0.0
  %157 = vmatprep.subr.mxu0 0.0
  %158 = vmatpush2.msra.mxu0 0.0
  %159 = vmatprep.subr.mxu0 0.0
  %160 = vmatpush2.msra.mxu0 0.0
  %161 = vmatprep.subr.mxu0 0.0
  %162 = vmatpush2.msra.mxu0 0.0
  %163 = vmatprep.subr.mxu0 0.0
  %164 = vmatpush2.msra.mxu0 0.0
  %165 = vmatprep.subr.mxu0 0.0
  %166 = vmatpush2.msra.mxu0 0.0
  %167 = vmatprep.subr.mxu0 0.0
  %168 = vmatpush2.msra.mxu0 0.0
  %169 = vmatprep.subr.mxu0 0.0
  %170 = vmatpush2.msra.mxu0 0.0
  %171 = vmatprep.subr.mxu0 0.0
  %172 = vmatpush2.msra.mxu0 0.0
  %173 = vmatprep.subr.mxu0 0.0
  %174 = vmatpush2.msra.mxu0 0.0
  %175 = vmatprep.subr.mxu0 0.0
  %176 = vmatpush2.msra.mxu0 0.0
  %177 = vmatprep.subr.mxu0 0.0
  %178 = vmatpush2.msra.mxu0 0.0
  %179 = vmatprep.subr.mxu0 0.0
  %180 = vmatpush2.msra.mxu0 0.0
  %181 = vmatprep.mubr.f32.mxu0 0.0
  %182 = vmatmul.mubr.f32.gmra.mxu0 %v90
  %v183 = vpop.f32.mrf.mxu0
  %v184 = vadd.f32 %v51, %v183
  %v185 = vpop.f32.mrf.mxu0
  %186 = vmatprep.mubr.f32.mxu0 0.0
  %187 = vmatmul.mubr.f32.gmra.mxu0 %v93
  %v188 = vpop.f32.mrf.mxu0
  %v189 = vadd.f32 %v56, %v188
  %v190 = vpop.f32.mrf.mxu0
  %191 = vmatprep.mubr.f32.mxu0 0.0
  %192 = vmatmul.mubr.f32.gmra.mxu0 %v96
  %v193 = vpop.f32.mrf.mxu0
  %v194 = vadd.f32 %v61, %v193
  %v195 = vpop.f32.mrf.mxu0
  %196 = vmatprep.mubr.f32.mxu0 0.0
  %197 = vmatmul.mubr.f32.gmra.mxu0 %v99
  %v198 = vpop.f32.mrf.mxu0
  %v199 = vadd.f32 %v66, %v198
  %v200 = vpop.f32.mrf.mxu0
  %201 = vmatprep.mubr.f32.mxu0 0.0
  %202 = vmatmul.mubr.f32.gmra.mxu0 %v102
  %v203 = vpop.f32.mrf.mxu0
  %v204 = vadd.f32 %v71, %v203
  %v205 = vpop.f32.mrf.mxu0
  %206 = vmatprep.mubr.f32.mxu0 0.0
  %207 = vmatmul.mubr.f32.gmra.mxu0 %v105
  %v208 = vpop.f32.mrf.mxu0
  %v209 = vadd.f32 %v76, %v208
  %v210 = vpop.f32.mrf.mxu0
  %211 = vmatprep.mubr.f32.mxu0 0.0
  %212 = vmatmul.mubr.f32.gmra.mxu0 %v108
  %v213 = vpop.f32.mrf.mxu0
  %v214 = vadd.f32 %v81, %v213
  %v215 = vpop.f32.mrf.mxu0
  %216 = vmatprep.mubr.f32.mxu0 0.0
  %217 = vmatmul.mubr.f32.gmra.mxu0 %v111
  %v218 = vpop.f32.mrf.mxu0
  %v219 = vadd.f32 %v86, %v218
  %v220 = vpop.f32.mrf.mxu0
  %221 = vdwg.mxu0
  %v222 = vmax.f32 %v184, 0.0
  %v223 = vmax.f32 %v189, 0.0
  %v224 = vmax.f32 %v194, 0.0
  %v225 = vmax.f32 %v199, 0.0
  %v226 = vmax.f32 %v204, 0.0
  %v227 = vmax.f32 %v209, 0.0
  %v228 = vmax.f32 %v214, 0.0
  %v229 = vmax.f32 %v219, 0.0
  %230 = vst [vmem:[#allocation2] sm:$0xff] %v222
  %231 = vst [vmem:[#allocation2 + $0x8] sm:$0xff] %v223
  %232 = vst [vmem:[#allocation2 + $0x10] sm:$0xff] %v224
  %233 = vst [vmem:[#allocation2 + $0x18] sm:$0xff] %v225
  %234 = vst [vmem:[#allocation2 + $0x20] sm:$0xff] %v226
  %235 = vst [vmem:[#allocation2 + $0x28] sm:$0xff] %v227
  %236 = vst [vmem:[#allocation2 + $0x30] sm:$0xff] %v228
  %237 = vst [vmem:[#allocation2 + $0x38] sm:$0xff] %v229
  %v238 = vld [vmem:[%s0 + $0x48] sm:$0xff]
  %v239 = vld [vmem:[%s0 + $0x50] sm:$0xff]
  %v240 = vld [vmem:[%s0 + $0x58] sm:$0xff]
  %v241 = vld [vmem:[%s0 + $0x60] sm:$0xff]
  %v242 = vld [vmem:[%s0 + $0x68] sm:$0xff]
  %v243 = vld [vmem:[%s0 + $0x70] sm:$0xff]
  %v244 = vld [vmem:[%s0 + $0x78] sm:$0xff]
  %v245 = vld [vmem:[%s0 + $0x80] sm:$0xff]
  %v246 = vld [vmem:[%s0 + $0x88] sm:$0xff]
  %v247 = vld [vmem:[%s0 + $0x90] sm:$0xff]
  %v248 = vld [vmem:[%s0 + $0x98] sm:$0xff]
  %v249 = vld [vmem:[%s0 + $0xa0] sm:$0x1f]
  %v251 = vsel %vm113, %v249, 0
  %253 = vmatprep.subr.mxu0 0.0
  %254 = vmatpush1.msra.mxu0 0.0
  %255 = vmatprep.subr.mxu0 0.0
  %256 = vmatpush1.msra.mxu0 0.0
  %257 = vmatprep.subr.mxu0 0.0
  %258 = vmatpush1.msra.mxu0 0.0
  %259 = vmatprep.subr.mxu0 0.0
  %260 = vmatpush1.msra.mxu0 0.0
  %261 = vmatprep.subr.mxu0 0.0
  %262 = vmatpush1.msra.mxu0 %v251
  %263 = vmatprep.subr.mxu0 0.0
  %264 = vmatpush1.msra.mxu0 %v248
  %265 = vmatprep.subr.mxu0 0.0
  %266 = vmatpush1.msra.mxu0 %v247
  %267 = vmatprep.subr.mxu0 0.0
  %268 = vmatpush1.msra.mxu0 %v246
  %269 = vmatprep.subr.mxu0 0.0
  %270 = vmatpush1.msra.mxu0 %v245
  %271 = vmatprep.subr.mxu0 0.0
  %272 = vmatpush1.msra.mxu0 %v244
  %273 = vmatprep.subr.mxu0 0.0
  %274 = vmatpush1.msra.mxu0 %v243
  %275 = vmatprep.subr.mxu0 0.0
  %276 = vmatpush1.msra.mxu0 %v242
  %277 = vmatprep.subr.mxu0 0.0
  %278 = vmatpush1.msra.mxu0 %v241
  %279 = vmatprep.subr.mxu0 0.0
  %280 = vmatpush1.msra.mxu0 %v240
  %281 = vmatprep.subr.mxu0 0.0
  %282 = vmatpush1.msra.mxu0 %v239
  %283 = vmatprep.subr.mxu0 0.0
  %284 = vmatpush1.msra.mxu0 %v238
  %285 = vmatprep.subr.mxu0 0.0
  %286 = vmatpush2.msra.mxu0 0.0
  %287 = vmatprep.subr.mxu0 0.0
  %288 = vmatpush2.msra.mxu0 0.0
  %289 = vmatprep.subr.mxu0 0.0
  %290 = vmatpush2.msra.mxu0 0.0
  %291 = vmatprep.subr.mxu0 0.0
  %292 = vmatpush2.msra.mxu0 0.0
  %293 = vmatprep.subr.mxu0 0.0
  %294 = vmatpush2.msra.mxu0 0.0
  %295 = vmatprep.subr.mxu0 0.0
  %296 = vmatpush2.msra.mxu0 0.0
  %297 = vmatprep.subr.mxu0 0.0
  %298 = vmatpush2.msra.mxu0 0.0
  %299 = vmatprep.subr.mxu0 0.0
  %300 = vmatpush2.msra.mxu0 0.0
  %301 = vmatprep.subr.mxu0 0.0
  %302 = vmatpush2.msra.mxu0 0.0
  %303 = vmatprep.subr.mxu0 0.0
  %304 = vmatpush2.msra.mxu0 0.0
  %305 = vmatprep.subr.mxu0 0.0
  %306 = vmatpush2.msra.mxu0 0.0
  %307 = vmatprep.subr.mxu0 0.0
  %308 = vmatpush2.msra.mxu0 0.0
  %309 = vmatprep.subr.mxu0 0.0
  %310 = vmatpush2.msra.mxu0 0.0
  %311 = vmatprep.subr.mxu0 0.0
  %312 = vmatpush2.msra.mxu0 0.0
  %313 = vmatprep.subr.mxu0 0.0
  %314 = vmatpush2.msra.mxu0 0.0
  %315 = vmatprep.subr.mxu0 0.0
  %316 = vmatpush2.msra.mxu0 0.0
  %317 = vmatprep.mubr.f32.mxu0 0.0
  %318 = vmatmul.mubr.f32.gmra.mxu0 %v90
  %v319 = vpop.f32.mrf.mxu0
  %v320 = vadd.f32 %v51, %v319
  %v321 = vpop.f32.mrf.mxu0
  %322 = vmatprep.mubr.f32.mxu0 0.0
  %323 = vmatmul.mubr.f32.gmra.mxu0 %v93
  %v324 = vpop.f32.mrf.mxu0
  %v325 = vadd.f32 %v56, %v324
  %v326 = vpop.f32.mrf.mxu0
  %327 = vmatprep.mubr.f32.mxu0 0.0
  %328 = vmatmul.mubr.f32.gmra.mxu0 %v96
  %v329 = vpop.f32.mrf.mxu0
  %v330 = vadd.f32 %v61, %v329
  %v331 = vpop.f32.mrf.mxu0
  %332 = vmatprep.mubr.f32.mxu0 0.0
  %333 = vmatmul.mubr.f32.gmra.mxu0 %v99
  %v334 = vpop.f32.mrf.mxu0
  %v335 = vadd.f32 %v66, %v334
  %v336 = vpop.f32.mrf.mxu0
  %337 = vmatprep.mubr.f32.mxu0 0.0
  %338 = vmatmul.mubr.f32.gmra.mxu0 %v102
  %v339 = vpop.f32.mrf.mxu0
  %v340 = vadd.f32 %v71, %v339
  %v341 = vpop.f32.mrf.mxu0
  %342 = vmatprep.mubr.f32.mxu0 0.0
  %343 = vmatmul.mubr.f32.gmra.mxu0 %v105
  %v344 = vpop.f32.mrf.mxu0
  %v345 = vadd.f32 %v76, %v344
  %v346 = vpop.f32.mrf.mxu0
  %347 = vmatprep.mubr.f32.mxu0 0.0
  %348 = vmatmul.mubr.f32.gmra.mxu0 %v108
  %v349 = vpop.f32.mrf.mxu0
  %v350 = vadd.f32 %v81, %v349
  %v351 = vpop.f32.mrf.mxu0
  %352 = vmatprep.mubr.f32.mxu0 0.0
  %353 = vmatmul.mubr.f32.gmra.mxu0 %v111
  %v354 = vpop.f32.mrf.mxu0
  %v355 = vadd.f32 %v86, %v354
  %v356 = vpop.f32.mrf.mxu0
  %357 = vdwg.mxu0
  %v358 = vmax.f32 %v320, 0.0
  %v359 = vmax.f32 %v325, 0.0
  %v360 = vmax.f32 %v330, 0.0
  %v361 = vmax.f32 %v335, 0.0
  %v362 = vmax.f32 %v340, 0.0
  %v363 = vmax.f32 %v345, 0.0
  %v364 = vmax.f32 %v350, 0.0
  %v365 = vmax.f32 %v355, 0.0
  %366 = vst [vmem:[#allocation2 + $0x40] sm:$0xff] %v358
  %367 = vst [vmem:[#allocation2 + $0x48] sm:$0xff] %v359
  %368 = vst [vmem:[#allocation2 + $0x50] sm:$0xff] %v360
  %369 = vst [vmem:[#allocation2 + $0x58] sm:$0xff] %v361
  %370 = vst [vmem:[#allocation2 + $0x60] sm:$0xff] %v362
  %371 = vst [vmem:[#allocation2 + $0x68] sm:$0xff] %v363
  %372 = vst [vmem:[#allocation2 + $0x70] sm:$0xff] %v364
  %373 = vst [vmem:[#allocation2 + $0x78] sm:$0xff] %v365
  %v374 = vld [vmem:[%s0 + $0x90] sm:$0xff]
  %v375 = vld [vmem:[%s0 + $0x98] sm:$0xff]
  %v376 = vld [vmem:[%s0 + $0xa0] sm:$0xff]
  %v377 = vld [vmem:[%s0 + $0xa8] sm:$0xff]
  %v378 = vld [vmem:[%s0 + $0xb0] sm:$0xff]
  %v379 = vld [vmem:[%s0 + $0xb8] sm:$0xff]
  %v380 = vld [vmem:[%s0 + $0xc0] sm:$0xff]
  %v381 = vld [vmem:[%s0 + $0xc8] sm:$0xff]
  %v382 = vld [vmem:[%s0 + $0xd0] sm:$0xff]
  %v383 = vld [vmem:[%s0 + $0xd8] sm:$0xff]
  %v384 = vld [vmem:[%s0 + $0xe0] sm:$0xff]
  %v385 = vld [vmem:[%s0 + $0xe8] sm:$0x1f]
  %v387 = vsel %vm113, %v385, 0
  %389 = vmatprep.subr.mxu0 0.0
  %390 = vmatpush1.msra.mxu0 0.0
  %391 = vmatprep.subr.mxu0 0.0
  %392 = vmatpush1.msra.mxu0 0.0
  %393 = vmatprep.subr.mxu0 0.0
  %394 = vmatpush1.msra.mxu0 0.0
  %395 = vmatprep.subr.mxu0 0.0
  %396 = vmatpush1.msra.mxu0 0.0
  %397 = vmatprep.subr.mxu0 0.0
  %398 = vmatpush1.msra.mxu0 %v387
  %399 = vmatprep.subr.mxu0 0.0
  %400 = vmatpush1.msra.mxu0 %v384
  %401 = vmatprep.subr.mxu0 0.0
  %402 = vmatpush1.msra.mxu0 %v383
  %403 = vmatprep.subr.mxu0 0.0
  %404 = vmatpush1.msra.mxu0 %v382
  %405 = vmatprep.subr.mxu0 0.0
  %406 = vmatpush1.msra.mxu0 %v381
  %407 = vmatprep.subr.mxu0 0.0
  %408 = vmatpush1.msra.mxu0 %v380
  %409 = vmatprep.subr.mxu0 0.0
  %410 = vmatpush1.msra.mxu0 %v379
  %411 = vmatprep.subr.mxu0 0.0
  %412 = vmatpush1.msra.mxu0 %v378
  %413 = vmatprep.subr.mxu0 0.0
  %414 = vmatpush1.msra.mxu0 %v377
  %415 = vmatprep.subr.mxu0 0.0
  %416 = vmatpush1.msra.mxu0 %v376
  %417 = vmatprep.subr.mxu0 0.0
  %418 = vmatpush1.msra.mxu0 %v375
  %419 = vmatprep.subr.mxu0 0.0
  %420 = vmatpush1.msra.mxu0 %v374
  %421 = vmatprep.subr.mxu0 0.0
  %422 = vmatpush2.msra.mxu0 0.0
  %423 = vmatprep.subr.mxu0 0.0
  %424 = vmatpush2.msra.mxu0 0.0
  %425 = vmatprep.subr.mxu0 0.0
  %426 = vmatpush2.msra.mxu0 0.0
  %427 = vmatprep.subr.mxu0 0.0
  %428 = vmatpush2.msra.mxu0 0.0
  %429 = vmatprep.subr.mxu0 0.0
  %430 = vmatpush2.msra.mxu0 0.0
  %431 = vmatprep.subr.mxu0 0.0
  %432 = vmatpush2.msra.mxu0 0.0
  %433 = vmatprep.subr.mxu0 0.0
  %434 = vmatpush2.msra.mxu0 0.0
  %435 = vmatprep.subr.mxu0 0.0
  %436 = vmatpush2.msra.mxu0 0.0
  %437 = vmatprep.subr.mxu0 0.0
  %438 = vmatpush2.msra.mxu0 0.0
  %439 = vmatprep.subr.mxu0 0.0
  %440 = vmatpush2.msra.mxu0 0.0
  %441 = vmatprep.subr.mxu0 0.0
  %442 = vmatpush2.msra.mxu0 0.0
  %443 = vmatprep.subr.mxu0 0.0
  %444 = vmatpush2.msra.mxu0 0.0
  %445 = vmatprep.subr.mxu0 0.0
  %446 = vmatpush2.msra.mxu0 0.0
  %447 = vmatprep.subr.mxu0 0.0
  %448 = vmatpush2.msra.mxu0 0.0
  %449 = vmatprep.subr.mxu0 0.0
  %450 = vmatpush2.msra.mxu0 0.0
  %451 = vmatprep.subr.mxu0 0.0
  %452 = vmatpush2.msra.mxu0 0.0
  %453 = vmatprep.mubr.f32.mxu0 0.0
  %454 = vmatmul.mubr.f32.gmra.mxu0 %v90
  %v455 = vpop.f32.mrf.mxu0
  %v456 = vadd.f32 %v51, %v455
  %v457 = vpop.f32.mrf.mxu0
  %458 = vmatprep.mubr.f32.mxu0 0.0
  %459 = vmatmul.mubr.f32.gmra.mxu0 %v93
  %v460 = vpop.f32.mrf.mxu0
  %v461 = vadd.f32 %v56, %v460
  %v462 = vpop.f32.mrf.mxu0
  %463 = vmatprep.mubr.f32.mxu0 0.0
  %464 = vmatmul.mubr.f32.gmra.mxu0 %v96
  %v465 = vpop.f32.mrf.mxu0
  %v466 = vadd.f32 %v61, %v465
  %v467 = vpop.f32.mrf.mxu0
  %468 = vmatprep.mubr.f32.mxu0 0.0
  %469 = vmatmul.mubr.f32.gmra.mxu0 %v99
  %v470 = vpop.f32.mrf.mxu0
  %v471 = vadd.f32 %v66, %v470
  %v472 = vpop.f32.mrf.mxu0
  %473 = vmatprep.mubr.f32.mxu0 0.0
  %474 = vmatmul.mubr.f32.gmra.mxu0 %v102
  %v475 = vpop.f32.mrf.mxu0
  %v476 = vadd.f32 %v71, %v475
  %v477 = vpop.f32.mrf.mxu0
  %478 = vmatprep.mubr.f32.mxu0 0.0
  %479 = vmatmul.mubr.f32.gmra.mxu0 %v105
  %v480 = vpop.f32.mrf.mxu0
  %v481 = vadd.f32 %v76, %v480
  %v482 = vpop.f32.mrf.mxu0
  %483 = vmatprep.mubr.f32.mxu0 0.0
  %484 = vmatmul.mubr.f32.gmra.mxu0 %v108
  %v485 = vpop.f32.mrf.mxu0
  %v486 = vadd.f32 %v81, %v485
  %v487 = vpop.f32.mrf.mxu0
  %488 = vmatprep.mubr.f32.mxu0 0.0
  %489 = vmatmul.mubr.f32.gmra.mxu0 %v111
  %v490 = vpop.f32.mrf.mxu0
  %v491 = vadd.f32 %v86, %v490
  %v492 = vpop.f32.mrf.mxu0
  %493 = vdwg.mxu0
  %v494 = vmax.f32 %v456, 0.0
  %v495 = vmax.f32 %v461, 0.0
  %v496 = vmax.f32 %v466, 0.0
  %v497 = vmax.f32 %v471, 0.0
  %v498 = vmax.f32 %v476, 0.0
  %v499 = vmax.f32 %v481, 0.0
  %v500 = vmax.f32 %v486, 0.0
  %v501 = vmax.f32 %v491, 0.0
  %502 = vst [vmem:[#allocation2 + $0x80] sm:$0xff] %v494
  %503 = vst [vmem:[#allocation2 + $0x88] sm:$0xff] %v495
  %504 = vst [vmem:[#allocation2 + $0x90] sm:$0xff] %v496
  %505 = vst [vmem:[#allocation2 + $0x98] sm:$0xff] %v497
  %506 = vst [vmem:[#allocation2 + $0xa0] sm:$0xff] %v498
  %507 = vst [vmem:[#allocation2 + $0xa8] sm:$0xff] %v499
  %508 = vst [vmem:[#allocation2 + $0xb0] sm:$0xff] %v500
  %509 = vst [vmem:[#allocation2 + $0xb8] sm:$0xff] %v501
  %v510 = vld [vmem:[%s0 + $0xd8] sm:$0xff]
  %v511 = vld [vmem:[%s0 + $0xe0] sm:$0xff]
  %v512 = vld [vmem:[%s0 + $0xe8] sm:$0xff]
  %v513 = vld [vmem:[%s0 + $0xf0] sm:$0xff]
  %v514 = vld [vmem:[%s0 + $0xf8] sm:$0xff]
  %v515 = vld [vmem:[%s0 + $0x100] sm:$0xff]
  %v516 = vld [vmem:[%s0 + $0x108] sm:$0xff]
  %v517 = vld [vmem:[%s0 + $0x110] sm:$0xff]
  %v518 = vld [vmem:[%s0 + $0x118] sm:$0xff]
  %v519 = vld [vmem:[%s0 + $0x120] sm:$0xff]
  %v520 = vld [vmem:[%s0 + $0x128] sm:$0xff]
  %v521 = vld [vmem:[%s0 + $0x130] sm:$0x1f]
  %v523 = vsel %vm113, %v521, 0
  %525 = vmatprep.subr.mxu0 0.0
  %526 = vmatpush1.msra.mxu0 0.0
  %527 = vmatprep.subr.mxu0 0.0
  %528 = vmatpush1.msra.mxu0 0.0
  %529 = vmatprep.subr.mxu0 0.0
  %530 = vmatpush1.msra.mxu0 0.0
  %531 = vmatprep.subr.mxu0 0.0
  %532 = vmatpush1.msra.mxu0 0.0
  %533 = vmatprep.subr.mxu0 0.0
  %534 = vmatpush1.msra.mxu0 %v523
  %535 = vmatprep.subr.mxu0 0.0
  %536 = vmatpush1.msra.mxu0 %v520
  %537 = vmatprep.subr.mxu0 0.0
  %538 = vmatpush1.msra.mxu0 %v519
  %539 = vmatprep.subr.mxu0 0.0
  %540 = vmatpush1.msra.mxu0 %v518
  %541 = vmatprep.subr.mxu0 0.0
  %542 = vmatpush1.msra.mxu0 %v517
  %543 = vmatprep.subr.mxu0 0.0
  %544 = vmatpush1.msra.mxu0 %v516
  %545 = vmatprep.subr.mxu0 0.0
  %546 = vmatpush1.msra.mxu0 %v515
  %547 = vmatprep.subr.mxu0 0.0
  %548 = vmatpush1.msra.mxu0 %v514
  %549 = vmatprep.subr.mxu0 0.0
  %550 = vmatpush1.msra.mxu0 %v513
  %551 = vmatprep.subr.mxu0 0.0
  %552 = vmatpush1.msra.mxu0 %v512
  %553 = vmatprep.subr.mxu0 0.0
  %554 = vmatpush1.msra.mxu0 %v511
  %555 = vmatprep.subr.mxu0 0.0
  %556 = vmatpush1.msra.mxu0 %v510
  %557 = vmatprep.subr.mxu0 0.0
  %558 = vmatpush2.msra.mxu0 0.0
  %559 = vmatprep.subr.mxu0 0.0
  %560 = vmatpush2.msra.mxu0 0.0
  %561 = vmatprep.subr.mxu0 0.0
  %562 = vmatpush2.msra.mxu0 0.0
  %563 = vmatprep.subr.mxu0 0.0
  %564 = vmatpush2.msra.mxu0 0.0
  %565 = vmatprep.subr.mxu0 0.0
  %566 = vmatpush2.msra.mxu0 0.0
  %567 = vmatprep.subr.mxu0 0.0
  %568 = vmatpush2.msra.mxu0 0.0
  %569 = vmatprep.subr.mxu0 0.0
  %570 = vmatpush2.msra.mxu0 0.0
  %571 = vmatprep.subr.mxu0 0.0
  %572 = vmatpush2.msra.mxu0 0.0
  %573 = vmatprep.subr.mxu0 0.0
  %574 = vmatpush2.msra.mxu0 0.0
  %575 = vmatprep.subr.mxu0 0.0
  %576 = vmatpush2.msra.mxu0 0.0
  %577 = vmatprep.subr.mxu0 0.0
  %578 = vmatpush2.msra.mxu0 0.0
  %579 = vmatprep.subr.mxu0 0.0
  %580 = vmatpush2.msra.mxu0 0.0
  %581 = vmatprep.subr.mxu0 0.0
  %582 = vmatpush2.msra.mxu0 0.0
  %583 = vmatprep.subr.mxu0 0.0
  %584 = vmatpush2.msra.mxu0 0.0
  %585 = vmatprep.subr.mxu0 0.0
  %586 = vmatpush2.msra.mxu0 0.0
  %587 = vmatprep.subr.mxu0 0.0
  %588 = vmatpush2.msra.mxu0 0.0
  %589 = vmatprep.mubr.f32.mxu0 0.0
  %590 = vmatmul.mubr.f32.gmra.mxu0 %v90
  %v591 = vpop.f32.mrf.mxu0
  %v592 = vadd.f32 %v51, %v591
  %v593 = vpop.f32.mrf.mxu0
  %594 = vmatprep.mubr.f32.mxu0 0.0
  %595 = vmatmul.mubr.f32.gmra.mxu0 %v93
  %v596 = vpop.f32.mrf.mxu0
  %v597 = vadd.f32 %v56, %v596
  %v598 = vpop.f32.mrf.mxu0
  %599 = vmatprep.mubr.f32.mxu0 0.0
  %600 = vmatmul.mubr.f32.gmra.mxu0 %v96
  %v601 = vpop.f32.mrf.mxu0
  %v602 = vadd.f32 %v61, %v601
  %v603 = vpop.f32.mrf.mxu0
  %604 = vmatprep.mubr.f32.mxu0 0.0
  %605 = vmatmul.mubr.f32.gmra.mxu0 %v99
  %v606 = vpop.f32.mrf.mxu0
  %v607 = vadd.f32 %v66, %v606
  %v608 = vpop.f32.mrf.mxu0
  %609 = vmatprep.mubr.f32.mxu0 0.0
  %610 = vmatmul.mubr.f32.gmra.mxu0 %v102
  %v611 = vpop.f32.mrf.mxu0
  %v612 = vadd.f32 %v71, %v611
  %v613 = vpop.f32.mrf.mxu0
  %614 = vmatprep.mubr.f32.mxu0 0.0
  %615 = vmatmul.mubr.f32.gmra.mxu0 %v105
  %v616 = vpop.f32.mrf.mxu0
  %v617 = vadd.f32 %v76, %v616
  %v618 = vpop.f32.mrf.mxu0
  %619 = vmatprep.mubr.f32.mxu0 0.0
  %620 = vmatmul.mubr.f32.gmra.mxu0 %v108
  %v621 = vpop.f32.mrf.mxu0
  %v622 = vadd.f32 %v81, %v621
  %v623 = vpop.f32.mrf.mxu0
  %624 = vmatprep.mubr.f32.mxu0 0.0
  %625 = vmatmul.mubr.f32.gmra.mxu0 %v111
  %v626 = vpop.f32.mrf.mxu0
  %v627 = vadd.f32 %v86, %v626
  %v628 = vpop.f32.mrf.mxu0
  %629 = vdwg.mxu0
  %v630 = vmax.f32 %v592, 0.0
  %v631 = vmax.f32 %v597, 0.0
  %v632 = vmax.f32 %v602, 0.0
  %v633 = vmax.f32 %v607, 0.0
  %v634 = vmax.f32 %v612, 0.0
  %v635 = vmax.f32 %v617, 0.0
  %v636 = vmax.f32 %v622, 0.0
  %v637 = vmax.f32 %v627, 0.0
  %638 = vst [vmem:[#allocation2 + $0xc0] sm:$0xff] %v630
  %639 = vst [vmem:[#allocation2 + $0xc8] sm:$0xff] %v631
  %640 = vst [vmem:[#allocation2 + $0xd0] sm:$0xff] %v632
  %641 = vst [vmem:[#allocation2 + $0xd8] sm:$0xff] %v633
  %642 = vst [vmem:[#allocation2 + $0xe0] sm:$0xff] %v634
  %643 = vst [vmem:[#allocation2 + $0xe8] sm:$0xff] %v635
  %644 = vst [vmem:[#allocation2 + $0xf0] sm:$0xff] %v636
  %645 = vst [vmem:[#allocation2 + $0xf8] sm:$0xff] %v637
  %v646 = vld [vmem:[%s0 + $0x120] sm:$0xff]
  %v647 = vld [vmem:[%s0 + $0x128] sm:$0xff]
  %v648 = vld [vmem:[%s0 + $0x130] sm:$0xff]
  %v649 = vld [vmem:[%s0 + $0x138] sm:$0xff]
  %v650 = vld [vmem:[%s0 + $0x140] sm:$0xff]
  %v651 = vld [vmem:[%s0 + $0x148] sm:$0xff]
  %v652 = vld [vmem:[%s0 + $0x150] sm:$0xff]
  %v653 = vld [vmem:[%s0 + $0x158] sm:$0xff]
  %v654 = vld [vmem:[%s0 + $0x160] sm:$0xff]
  %v655 = vld [vmem:[%s0 + $0x168] sm:$0xff]
  %v656 = vld [vmem:[%s0 + $0x170] sm:$0xff]
  %v657 = vld [vmem:[%s0 + $0x178] sm:$0x1f]
  %v659 = vsel %vm113, %v657, 0
  %661 = vmatprep.subr.mxu0 0.0
  %662 = vmatpush1.msra.mxu0 0.0
  %663 = vmatprep.subr.mxu0 0.0
  %664 = vmatpush1.msra.mxu0 0.0
  %665 = vmatprep.subr.mxu0 0.0
  %666 = vmatpush1.msra.mxu0 0.0
  %667 = vmatprep.subr.mxu0 0.0
  %668 = vmatpush1.msra.mxu0 0.0
  %669 = vmatprep.subr.mxu0 0.0
  %670 = vmatpush1.msra.mxu0 %v659
  %671 = vmatprep.subr.mxu0 0.0
  %672 = vmatpush1.msra.mxu0 %v656
  %673 = vmatprep.subr.mxu0 0.0
  %674 = vmatpush1.msra.mxu0 %v655
  %675 = vmatprep.subr.mxu0 0.0
  %676 = vmatpush1.msra.mxu0 %v654
  %677 = vmatprep.subr.mxu0 0.0
  %678 = vmatpush1.msra.mxu0 %v653
  %679 = vmatprep.subr.mxu0 0.0
  %680 = vmatpush1.msra.mxu0 %v652
  %681 = vmatprep.subr.mxu0 0.0
  %682 = vmatpush1.msra.mxu0 %v651
  %683 = vmatprep.subr.mxu0 0.0
  %684 = vmatpush1.msra.mxu0 %v650
  %685 = vmatprep.subr.mxu0 0.0
  %686 = vmatpush1.msra.mxu0 %v649
  %687 = vmatprep.subr.mxu0 0.0
  %688 = vmatpush1.msra.mxu0 %v648
  %689 = vmatprep.subr.mxu0 0.0
  %690 = vmatpush1.msra.mxu0 %v647
  %691 = vmatprep.subr.mxu0 0.0
  %692 = vmatpush1.msra.mxu0 %v646
  %693 = vmatprep.subr.mxu0 0.0
  %694 = vmatpush2.msra.mxu0 0.0
  %695 = vmatprep.subr.mxu0 0.0
  %696 = vmatpush2.msra.mxu0 0.0
  %697 = vmatprep.subr.mxu0 0.0
  %698 = vmatpush2.msra.mxu0 0.0
  %699 = vmatprep.subr.mxu0 0.0
  %700 = vmatpush2.msra.mxu0 0.0
  %701 = vmatprep.subr.mxu0 0.0
  %702 = vmatpush2.msra.mxu0 0.0
  %703 = vmatprep.subr.mxu0 0.0
  %704 = vmatpush2.msra.mxu0 0.0
  %705 = vmatprep.subr.mxu0 0.0
  %706 = vmatpush2.msra.mxu0 0.0
  %707 = vmatprep.subr.mxu0 0.0
  %708 = vmatpush2.msra.mxu0 0.0
  %709 = vmatprep.subr.mxu0 0.0
  %710 = vmatpush2.msra.mxu0 0.0
  %711 = vmatprep.subr.mxu0 0.0
  %712 = vmatpush2.msra.mxu0 0.0
  %713 = vmatprep.subr.mxu0 0.0
  %714 = vmatpush2.msra.mxu0 0.0
  %715 = vmatprep.subr.mxu0 0.0
  %716 = vmatpush2.msra.mxu0 0.0
  %717 = vmatprep.subr.mxu0 0.0
  %718 = vmatpush2.msra.mxu0 0.0
  %719 = vmatprep.subr.mxu0 0.0
  %720 = vmatpush2.msra.mxu0 0.0
  %721 = vmatprep.subr.mxu0 0.0
  %722 = vmatpush2.msra.mxu0 0.0
  %723 = vmatprep.subr.mxu0 0.0
  %724 = vmatpush2.msra.mxu0 0.0
  %725 = vmatprep.mubr.f32.mxu0 0.0
  %726 = vmatmul.mubr.f32.gmra.mxu0 %v90
  %v727 = vpop.f32.mrf.mxu0
  %v728 = vadd.f32 %v51, %v727
  %v729 = vpop.f32.mrf.mxu0
  %730 = vmatprep.mubr.f32.mxu0 0.0
  %731 = vmatmul.mubr.f32.gmra.mxu0 %v93
  %v732 = vpop.f32.mrf.mxu0
  %v733 = vadd.f32 %v56, %v732
  %v734 = vpop.f32.mrf.mxu0
  %735 = vmatprep.mubr.f32.mxu0 0.0
  %736 = vmatmul.mubr.f32.gmra.mxu0 %v96
  %v737 = vpop.f32.mrf.mxu0
  %v738 = vadd.f32 %v61, %v737
  %v739 = vpop.f32.mrf.mxu0
  %740 = vmatprep.mubr.f32.mxu0 0.0
  %741 = vmatmul.mubr.f32.gmra.mxu0 %v99
  %v742 = vpop.f32.mrf.mxu0
  %v743 = vadd.f32 %v66, %v742
  %v744 = vpop.f32.mrf.mxu0
  %745 = vmatprep.mubr.f32.mxu0 0.0
  %746 = vmatmul.mubr.f32.gmra.mxu0 %v102
  %v747 = vpop.f32.mrf.mxu0
  %v748 = vadd.f32 %v71, %v747
  %v749 = vpop.f32.mrf.mxu0
  %750 = vmatprep.mubr.f32.mxu0 0.0
  %751 = vmatmul.mubr.f32.gmra.mxu0 %v105
  %v752 = vpop.f32.mrf.mxu0
  %v753 = vadd.f32 %v76, %v752
  %v754 = vpop.f32.mrf.mxu0
  %755 = vmatprep.mubr.f32.mxu0 0.0
  %756 = vmatmul.mubr.f32.gmra.mxu0 %v108
  %v757 = vpop.f32.mrf.mxu0
  %v758 = vadd.f32 %v81, %v757
  %v759 = vpop.f32.mrf.mxu0
  %760 = vmatprep.mubr.f32.mxu0 0.0
  %761 = vmatmul.mubr.f32.gmra.mxu0 %v111
  %v762 = vpop.f32.mrf.mxu0
  %v763 = vadd.f32 %v86, %v762
  %v764 = vpop.f32.mrf.mxu0
  %765 = vdwg.mxu0
  %v766 = vmax.f32 %v728, 0.0
  %v767 = vmax.f32 %v733, 0.0
  %v768 = vmax.f32 %v738, 0.0
  %v769 = vmax.f32 %v743, 0.0
  %v770 = vmax.f32 %v748, 0.0
  %v771 = vmax.f32 %v753, 0.0
  %v772 = vmax.f32 %v758, 0.0
  %v773 = vmax.f32 %v763, 0.0
  %774 = vst [vmem:[#allocation2 + $0x100] sm:$0xff] %v766
  %775 = vst [vmem:[#allocation2 + $0x108] sm:$0xff] %v767
  %776 = vst [vmem:[#allocation2 + $0x110] sm:$0xff] %v768
  %777 = vst [vmem:[#allocation2 + $0x118] sm:$0xff] %v769
  %778 = vst [vmem:[#allocation2 + $0x120] sm:$0xff] %v770
  %779 = vst [vmem:[#allocation2 + $0x128] sm:$0xff] %v771
  %780 = vst [vmem:[#allocation2 + $0x130] sm:$0xff] %v772
  %781 = vst [vmem:[#allocation2 + $0x138] sm:$0xff] %v773
  %v782 = vld [vmem:[%s0 + $0x168] sm:$0xff]
  %v783 = vld [vmem:[%s0 + $0x170] sm:$0xff]
  %v784 = vld [vmem:[%s0 + $0x178] sm:$0xff]
  %v785 = vld [vmem:[%s0 + $0x180] sm:$0xff]
  %v786 = vld [vmem:[%s0 + $0x188] sm:$0xff]
  %v787 = vld [vmem:[%s0 + $0x190] sm:$0xff]
  %v788 = vld [vmem:[%s0 + $0x198] sm:$0xff]
  %v789 = vld [vmem:[%s0 + $0x1a0] sm:$0xff]
  %v790 = vld [vmem:[%s0 + $0x1a8] sm:$0xff]
  %v791 = vld [vmem:[%s0 + $0x1b0] sm:$0xff]
  %v792 = vld [vmem:[%s0 + $0x1b8] sm:$0xff]
  %v793 = vld [vmem:[%s0 + $0x1c0] sm:$0x1f]
  %v795 = vsel %vm113, %v793, 0
  %797 = vmatprep.subr.mxu0 0.0
  %798 = vmatpush1.msra.mxu0 0.0
  %799 = vmatprep.subr.mxu0 0.0
  %800 = vmatpush1.msra.mxu0 0.0
  %801 = vmatprep.subr.mxu0 0.0
  %802 = vmatpush1.msra.mxu0 0.0
  %803 = vmatprep.subr.mxu0 0.0
  %804 = vmatpush1.msra.mxu0 0.0
  %805 = vmatprep.subr.mxu0 0.0
  %806 = vmatpush1.msra.mxu0 %v795
  %807 = vmatprep.subr.mxu0 0.0
  %808 = vmatpush1.msra.mxu0 %v792
  %809 = vmatprep.subr.mxu0 0.0
  %810 = vmatpush1.msra.mxu0 %v791
  %811 = vmatprep.subr.mxu0 0.0
  %812 = vmatpush1.msra.mxu0 %v790
  %813 = vmatprep.subr.mxu0 0.0
  %814 = vmatpush1.msra.mxu0 %v789
  %815 = vmatprep.subr.mxu0 0.0
  %816 = vmatpush1.msra.mxu0 %v788
  %817 = vmatprep.subr.mxu0 0.0
  %818 = vmatpush1.msra.mxu0 %v787
  %819 = vmatprep.subr.mxu0 0.0
  %820 = vmatpush1.msra.mxu0 %v786
  %821 = vmatprep.subr.mxu0 0.0
  %822 = vmatpush1.msra.mxu0 %v785
  %823 = vmatprep.subr.mxu0 0.0
  %824 = vmatpush1.msra.mxu0 %v784
  %825 = vmatprep.subr.mxu0 0.0
  %826 = vmatpush1.msra.mxu0 %v783
  %827 = vmatprep.subr.mxu0 0.0
  %828 = vmatpush1.msra.mxu0 %v782
  %829 = vmatprep.subr.mxu0 0.0
  %830 = vmatpush2.msra.mxu0 0.0
  %831 = vmatprep.subr.mxu0 0.0
  %832 = vmatpush2.msra.mxu0 0.0
  %833 = vmatprep.subr.mxu0 0.0
  %834 = vmatpush2.msra.mxu0 0.0
  %835 = vmatprep.subr.mxu0 0.0
  %836 = vmatpush2.msra.mxu0 0.0
  %837 = vmatprep.subr.mxu0 0.0
  %838 = vmatpush2.msra.mxu0 0.0
  %839 = vmatprep.subr.mxu0 0.0
  %840 = vmatpush2.msra.mxu0 0.0
  %841 = vmatprep.subr.mxu0 0.0
  %842 = vmatpush2.msra.mxu0 0.0
  %843 = vmatprep.subr.mxu0 0.0
  %844 = vmatpush2.msra.mxu0 0.0
  %845 = vmatprep.subr.mxu0 0.0
  %846 = vmatpush2.msra.mxu0 0.0
  %847 = vmatprep.subr.mxu0 0.0
  %848 = vmatpush2.msra.mxu0 0.0
  %849 = vmatprep.subr.mxu0 0.0
  %850 = vmatpush2.msra.mxu0 0.0
  %851 = vmatprep.subr.mxu0 0.0
  %852 = vmatpush2.msra.mxu0 0.0
  %853 = vmatprep.subr.mxu0 0.0
  %854 = vmatpush2.msra.mxu0 0.0
  %855 = vmatprep.subr.mxu0 0.0
  %856 = vmatpush2.msra.mxu0 0.0
  %857 = vmatprep.subr.mxu0 0.0
  %858 = vmatpush2.msra.mxu0 0.0
  %859 = vmatprep.subr.mxu0 0.0
  %860 = vmatpush2.msra.mxu0 0.0
  %861 = vmatprep.mubr.f32.mxu0 0.0
  %862 = vmatmul.mubr.f32.gmra.mxu0 %v90
  %v863 = vpop.f32.mrf.mxu0
  %v864 = vadd.f32 %v51, %v863
  %v865 = vpop.f32.mrf.mxu0
  %866 = vmatprep.mubr.f32.mxu0 0.0
  %867 = vmatmul.mubr.f32.gmra.mxu0 %v93
  %v868 = vpop.f32.mrf.mxu0
  %v869 = vadd.f32 %v56, %v868
  %v870 = vpop.f32.mrf.mxu0
  %871 = vmatprep.mubr.f32.mxu0 0.0
  %872 = vmatmul.mubr.f32.gmra.mxu0 %v96
  %v873 = vpop.f32.mrf.mxu0
  %v874 = vadd.f32 %v61, %v873
  %v875 = vpop.f32.mrf.mxu0
  %876 = vmatprep.mubr.f32.mxu0 0.0
  %877 = vmatmul.mubr.f32.gmra.mxu0 %v99
  %v878 = vpop.f32.mrf.mxu0
  %v879 = vadd.f32 %v66, %v878
  %v880 = vpop.f32.mrf.mxu0
  %881 = vmatprep.mubr.f32.mxu0 0.0
  %882 = vmatmul.mubr.f32.gmra.mxu0 %v102
  %v883 = vpop.f32.mrf.mxu0
  %v884 = vadd.f32 %v71, %v883
  %v885 = vpop.f32.mrf.mxu0
  %886 = vmatprep.mubr.f32.mxu0 0.0
  %887 = vmatmul.mubr.f32.gmra.mxu0 %v105
  %v888 = vpop.f32.mrf.mxu0
  %v889 = vadd.f32 %v76, %v888
  %v890 = vpop.f32.mrf.mxu0
  %891 = vmatprep.mubr.f32.mxu0 0.0
  %892 = vmatmul.mubr.f32.gmra.mxu0 %v108
  %v893 = vpop.f32.mrf.mxu0
  %v894 = vadd.f32 %v81, %v893
  %v895 = vpop.f32.mrf.mxu0
  %896 = vmatprep.mubr.f32.mxu0 0.0
  %897 = vmatmul.mubr.f32.gmra.mxu0 %v111
  %v898 = vpop.f32.mrf.mxu0
  %v899 = vadd.f32 %v86, %v898
  %v900 = vpop.f32.mrf.mxu0
  %901 = vdwg.mxu0
  %v902 = vmax.f32 %v864, 0.0
  %v903 = vmax.f32 %v869, 0.0
  %v904 = vmax.f32 %v874, 0.0
  %v905 = vmax.f32 %v879, 0.0
  %v906 = vmax.f32 %v884, 0.0
  %v907 = vmax.f32 %v889, 0.0
  %v908 = vmax.f32 %v894, 0.0
  %v909 = vmax.f32 %v899, 0.0
  %910 = vst [vmem:[#allocation2 + $0x140] sm:$0xff] %v902
  %911 = vst [vmem:[#allocation2 + $0x148] sm:$0xff] %v903
  %912 = vst [vmem:[#allocation2 + $0x150] sm:$0xff] %v904
  %913 = vst [vmem:[#allocation2 + $0x158] sm:$0xff] %v905
  %914 = vst [vmem:[#allocation2 + $0x160] sm:$0xff] %v906
  %915 = vst [vmem:[#allocation2 + $0x168] sm:$0xff] %v907
  %916 = vst [vmem:[#allocation2 + $0x170] sm:$0xff] %v908
  %917 = vst [vmem:[#allocation2 + $0x178] sm:$0xff] %v909
  %v918 = vld [vmem:[%s0 + $0x1b0] sm:$0xff]
  %v919 = vld [vmem:[%s0 + $0x1b8] sm:$0xff]
  %v920 = vld [vmem:[%s0 + $0x1c0] sm:$0xff]
  %v921 = vld [vmem:[%s0 + $0x1c8] sm:$0xff]
  %v922 = vld [vmem:[%s0 + $0x1d0] sm:$0xff]
  %v923 = vld [vmem:[%s0 + $0x1d8] sm:$0xff]
  %v924 = vld [vmem:[%s0 + $0x1e0] sm:$0xff]
  %v925 = vld [vmem:[%s0 + $0x1e8] sm:$0xff]
  %v926 = vld [vmem:[%s0 + $0x1f0] sm:$0xff]
  %v927 = vld [vmem:[%s0 + $0x1f8] sm:$0xff]
  %v928 = vld [vmem:[%s0 + $0x200] sm:$0xff]
  %v929 = vld [vmem:[%s0 + $0x208] sm:$0x1f]
  %v931 = vsel %vm113, %v929, 0
  %933 = vmatprep.subr.mxu0 0.0
  %934 = vmatpush1.msra.mxu0 0.0
  %935 = vmatprep.subr.mxu0 0.0
  %936 = vmatpush1.msra.mxu0 0.0
  %937 = vmatprep.subr.mxu0 0.0
  %938 = vmatpush1.msra.mxu0 0.0
  %939 = vmatprep.subr.mxu0 0.0
  %940 = vmatpush1.msra.mxu0 0.0
  %941 = vmatprep.subr.mxu0 0.0
  %942 = vmatpush1.msra.mxu0 %v931
  %943 = vmatprep.subr.mxu0 0.0
  %944 = vmatpush1.msra.mxu0 %v928
  %945 = vmatprep.subr.mxu0 0.0
  %946 = vmatpush1.msra.mxu0 %v927
  %947 = vmatprep.subr.mxu0 0.0
  %948 = vmatpush1.msra.mxu0 %v926
  %949 = vmatprep.subr.mxu0 0.0
  %950 = vmatpush1.msra.mxu0 %v925
  %951 = vmatprep.subr.mxu0 0.0
  %952 = vmatpush1.msra.mxu0 %v924
  %953 = vmatprep.subr.mxu0 0.0
  %954 = vmatpush1.msra.mxu0 %v923
  %955 = vmatprep.subr.mxu0 0.0
  %956 = vmatpush1.msra.mxu0 %v922
  %957 = vmatprep.subr.mxu0 0.0
  %958 = vmatpush1.msra.mxu0 %v921
  %959 = vmatprep.subr.mxu0 0.0
  %960 = vmatpush1.msra.mxu0 %v920
  %961 = vmatprep.subr.mxu0 0.0
  %962 = vmatpush1.msra.mxu0 %v919
  %963 = vmatprep.subr.mxu0 0.0
  %964 = vmatpush1.msra.mxu0 %v918
  %965 = vmatprep.subr.mxu0 0.0
  %966 = vmatpush2.msra.mxu0 0.0
  %967 = vmatprep.subr.mxu0 0.0
  %968 = vmatpush2.msra.mxu0 0.0
  %969 = vmatprep.subr.mxu0 0.0
  %970 = vmatpush2.msra.mxu0 0.0
  %971 = vmatprep.subr.mxu0 0.0
  %972 = vmatpush2.msra.mxu0 0.0
  %973 = vmatprep.subr.mxu0 0.0
  %974 = vmatpush2.msra.mxu0 0.0
  %975 = vmatprep.subr.mxu0 0.0
  %976 = vmatpush2.msra.mxu0 0.0
  %977 = vmatprep.subr.mxu0 0.0
  %978 = vmatpush2.msra.mxu0 0.0
  %979 = vmatprep.subr.mxu0 0.0
  %980 = vmatpush2.msra.mxu0 0.0
  %981 = vmatprep.subr.mxu0 0.0
  %982 = vmatpush2.msra.mxu0 0.0
  %983 = vmatprep.subr.mxu0 0.0
  %984 = vmatpush2.msra.mxu0 0.0
  %985 = vmatprep.subr.mxu0 0.0
  %986 = vmatpush2.msra.mxu0 0.0
  %987 = vmatprep.subr.mxu0 0.0
  %988 = vmatpush2.msra.mxu0 0.0
  %989 = vmatprep.subr.mxu0 0.0
  %990 = vmatpush2.msra.mxu0 0.0
  %991 = vmatprep.subr.mxu0 0.0
  %992 = vmatpush2.msra.mxu0 0.0
  %993 = vmatprep.subr.mxu0 0.0
  %994 = vmatpush2.msra.mxu0 0.0
  %995 = vmatprep.subr.mxu0 0.0
  %996 = vmatpush2.msra.mxu0 0.0
  %997 = vmatprep.mubr.f32.mxu0 0.0
  %998 = vmatmul.mubr.f32.gmra.mxu0 %v90
  %v999 = vpop.f32.mrf.mxu0
  %v1000 = vadd.f32 %v51, %v999
  %v1001 = vpop.f32.mrf.mxu0
  %1002 = vmatprep.mubr.f32.mxu0 0.0
  %1003 = vmatmul.mubr.f32.gmra.mxu0 %v93
  %v1004 = vpop.f32.mrf.mxu0
  %v1005 = vadd.f32 %v56, %v1004
  %v1006 = vpop.f32.mrf.mxu0
  %1007 = vmatprep.mubr.f32.mxu0 0.0
  %1008 = vmatmul.mubr.f32.gmra.mxu0 %v96
  %v1009 = vpop.f32.mrf.mxu0
  %v1010 = vadd.f32 %v61, %v1009
  %v1011 = vpop.f32.mrf.mxu0
  %1012 = vmatprep.mubr.f32.mxu0 0.0
  %1013 = vmatmul.mubr.f32.gmra.mxu0 %v99
  %v1014 = vpop.f32.mrf.mxu0
  %v1015 = vadd.f32 %v66, %v1014
  %v1016 = vpop.f32.mrf.mxu0
  %1017 = vmatprep.mubr.f32.mxu0 0.0
  %1018 = vmatmul.mubr.f32.gmra.mxu0 %v102
  %v1019 = vpop.f32.mrf.mxu0
  %v1020 = vadd.f32 %v71, %v1019
  %v1021 = vpop.f32.mrf.mxu0
  %1022 = vmatprep.mubr.f32.mxu0 0.0
  %1023 = vmatmul.mubr.f32.gmra.mxu0 %v105
  %v1024 = vpop.f32.mrf.mxu0
  %v1025 = vadd.f32 %v76, %v1024
  %v1026 = vpop.f32.mrf.mxu0
  %1027 = vmatprep.mubr.f32.mxu0 0.0
  %1028 = vmatmul.mubr.f32.gmra.mxu0 %v108
  %v1029 = vpop.f32.mrf.mxu0
  %v1030 = vadd.f32 %v81, %v1029
  %v1031 = vpop.f32.mrf.mxu0
  %1032 = vmatprep.mubr.f32.mxu0 0.0
  %1033 = vmatmul.mubr.f32.gmra.mxu0 %v111
  %v1034 = vpop.f32.mrf.mxu0
  %v1035 = vadd.f32 %v86, %v1034
  %v1036 = vpop.f32.mrf.mxu0
  %1037 = vdwg.mxu0
  %v1038 = vmax.f32 %v1000, 0.0
  %v1039 = vmax.f32 %v1005, 0.0
  %v1040 = vmax.f32 %v1010, 0.0
  %v1041 = vmax.f32 %v1015, 0.0
  %v1042 = vmax.f32 %v1020, 0.0
  %v1043 = vmax.f32 %v1025, 0.0
  %v1044 = vmax.f32 %v1030, 0.0
  %v1045 = vmax.f32 %v1035, 0.0
  %1046 = vst [vmem:[#allocation2 + $0x180] sm:$0xff] %v1038
  %1047 = vst [vmem:[#allocation2 + $0x188] sm:$0xff] %v1039
  %1048 = vst [vmem:[#allocation2 + $0x190] sm:$0xff] %v1040
  %1049 = vst [vmem:[#allocation2 + $0x198] sm:$0xff] %v1041
  %1050 = vst [vmem:[#allocation2 + $0x1a0] sm:$0xff] %v1042
  %1051 = vst [vmem:[#allocation2 + $0x1a8] sm:$0xff] %v1043
  %1052 = vst [vmem:[#allocation2 + $0x1b0] sm:$0xff] %v1044
  %1053 = vst [vmem:[#allocation2 + $0x1b8] sm:$0xff] %v1045
  %v1054 = vld [vmem:[%s0 + $0x1f8] sm:$0xff]
  %v1055 = vld [vmem:[%s0 + $0x200] sm:$0xff]
  %v1056 = vld [vmem:[%s0 + $0x208] sm:$0xff]
  %v1057 = vld [vmem:[%s0 + $0x210] sm:$0xff]
  %v1058 = vld [vmem:[%s0 + $0x218] sm:$0xff]
  %v1059 = vld [vmem:[%s0 + $0x220] sm:$0xff]
  %v1060 = vld [vmem:[%s0 + $0x228] sm:$0xff]
  %v1061 = vld [vmem:[%s0 + $0x230] sm:$0xff]
  %v1062 = vld [vmem:[%s0 + $0x238] sm:$0xff]
  %v1063 = vld [vmem:[%s0 + $0x240] sm:$0xff]
  %v1064 = vld [vmem:[%s0 + $0x248] sm:$0xff]
  %v1065 = vld [vmem:[%s0 + $0x250] sm:$0x1f]
  %v1067 = vsel %vm113, %v1065, 0
  %1069 = vmatprep.subr.mxu0 0.0
  %1070 = vmatpush1.msra.mxu0 0.0
  %1071 = vmatprep.subr.mxu0 0.0
  %1072 = vmatpush1.msra.mxu0 0.0
  %1073 = vmatprep.subr.mxu0 0.0
  %1074 = vmatpush1.msra.mxu0 0.0
  %1075 = vmatprep.subr.mxu0 0.0
  %1076 = vmatpush1.msra.mxu0 0.0
  %1077 = vmatprep.subr.mxu0 0.0
  %1078 = vmatpush1.msra.mxu0 %v1067
  %1079 = vmatprep.subr.mxu0 0.0
  %1080 = vmatpush1.msra.mxu0 %v1064
  %1081 = vmatprep.subr.mxu0 0.0
  %1082 = vmatpush1.msra.mxu0 %v1063
  %1083 = vmatprep.subr.mxu0 0.0
  %1084 = vmatpush1.msra.mxu0 %v1062
  %1085 = vmatprep.subr.mxu0 0.0
  %1086 = vmatpush1.msra.mxu0 %v1061
  %1087 = vmatprep.subr.mxu0 0.0
  %1088 = vmatpush1.msra.mxu0 %v1060
  %1089 = vmatprep.subr.mxu0 0.0
  %1090 = vmatpush1.msra.mxu0 %v1059
  %1091 = vmatprep.subr.mxu0 0.0
  %1092 = vmatpush1.msra.mxu0 %v1058
  %1093 = vmatprep.subr.mxu0 0.0
  %1094 = vmatpush1.msra.mxu0 %v1057
  %1095 = vmatprep.subr.mxu0 0.0
  %1096 = vmatpush1.msra.mxu0 %v1056
  %1097 = vmatprep.subr.mxu0 0.0
  %1098 = vmatpush1.msra.mxu0 %v1055
  %1099 = vmatprep.subr.mxu0 0.0
  %1100 = vmatpush1.msra.mxu0 %v1054
  %1101 = vmatprep.subr.mxu0 0.0
  %1102 = vmatpush2.msra.mxu0 0.0
  %1103 = vmatprep.subr.mxu0 0.0
  %1104 = vmatpush2.msra.mxu0 0.0
  %1105 = vmatprep.subr.mxu0 0.0
  %1106 = vmatpush2.msra.mxu0 0.0
  %1107 = vmatprep.subr.mxu0 0.0
  %1108 = vmatpush2.msra.mxu0 0.0
  %1109 = vmatprep.subr.mxu0 0.0
  %1110 = vmatpush2.msra.mxu0 0.0
  %1111 = vmatprep.subr.mxu0 0.0
  %1112 = vmatpush2.msra.mxu0 0.0
  %1113 = vmatprep.subr.mxu0 0.0
  %1114 = vmatpush2.msra.mxu0 0.0
  %1115 = vmatprep.subr.mxu0 0.0
  %1116 = vmatpush2.msra.mxu0 0.0
  %1117 = vmatprep.subr.mxu0 0.0
  %1118 = vmatpush2.msra.mxu0 0.0
  %1119 = vmatprep.subr.mxu0 0.0
  %1120 = vmatpush2.msra.mxu0 0.0
  %1121 = vmatprep.subr.mxu0 0.0
  %1122 = vmatpush2.msra.mxu0 0.0
  %1123 = vmatprep.subr.mxu0 0.0
  %1124 = vmatpush2.msra.mxu0 0.0
  %1125 = vmatprep.subr.mxu0 0.0
  %1126 = vmatpush2.msra.mxu0 0.0
  %1127 = vmatprep.subr.mxu0 0.0
  %1128 = vmatpush2.msra.mxu0 0.0
  %1129 = vmatprep.subr.mxu0 0.0
  %1130 = vmatpush2.msra.mxu0 0.0
  %1131 = vmatprep.subr.mxu0 0.0
  %1132 = vmatpush2.msra.mxu0 0.0
  %1133 = vmatprep.mubr.f32.mxu0 0.0
  %1134 = vmatmul.mubr.f32.gmra.mxu0 %v90
  %v1135 = vpop.f32.mrf.mxu0
  %v1136 = vadd.f32 %v51, %v1135
  %v1137 = vpop.f32.mrf.mxu0
  %1138 = vmatprep.mubr.f32.mxu0 0.0
  %1139 = vmatmul.mubr.f32.gmra.mxu0 %v93
  %v1140 = vpop.f32.mrf.mxu0
  %v1141 = vadd.f32 %v56, %v1140
  %v1142 = vpop.f32.mrf.mxu0
  %1143 = vmatprep.mubr.f32.mxu0 0.0
  %1144 = vmatmul.mubr.f32.gmra.mxu0 %v96
  %v1145 = vpop.f32.mrf.mxu0
  %v1146 = vadd.f32 %v61, %v1145
  %v1147 = vpop.f32.mrf.mxu0
  %1148 = vmatprep.mubr.f32.mxu0 0.0
  %1149 = vmatmul.mubr.f32.gmra.mxu0 %v99
  %v1150 = vpop.f32.mrf.mxu0
  %v1151 = vadd.f32 %v66, %v1150
  %v1152 = vpop.f32.mrf.mxu0
  %1153 = vmatprep.mubr.f32.mxu0 0.0
  %1154 = vmatmul.mubr.f32.gmra.mxu0 %v102
  %v1155 = vpop.f32.mrf.mxu0
  %v1156 = vadd.f32 %v71, %v1155
  %v1157 = vpop.f32.mrf.mxu0
  %1158 = vmatprep.mubr.f32.mxu0 0.0
  %1159 = vmatmul.mubr.f32.gmra.mxu0 %v105
  %v1160 = vpop.f32.mrf.mxu0
  %v1161 = vadd.f32 %v76, %v1160
  %v1162 = vpop.f32.mrf.mxu0
  %1163 = vmatprep.mubr.f32.mxu0 0.0
  %1164 = vmatmul.mubr.f32.gmra.mxu0 %v108
  %v1165 = vpop.f32.mrf.mxu0
  %v1166 = vadd.f32 %v81, %v1165
  %v1167 = vpop.f32.mrf.mxu0
  %1168 = vmatprep.mubr.f32.mxu0 0.0
  %1169 = vmatmul.mubr.f32.gmra.mxu0 %v111
  %v1170 = vpop.f32.mrf.mxu0
  %v1171 = vadd.f32 %v86, %v1170
  %v1172 = vpop.f32.mrf.mxu0
  %1173 = vdwg.mxu0
  %v1174 = vmax.f32 %v1136, 0.0
  %v1175 = vmax.f32 %v1141, 0.0
  %v1176 = vmax.f32 %v1146, 0.0
  %v1177 = vmax.f32 %v1151, 0.0
  %v1178 = vmax.f32 %v1156, 0.0
  %v1179 = vmax.f32 %v1161, 0.0
  %v1180 = vmax.f32 %v1166, 0.0
  %v1181 = vmax.f32 %v1171, 0.0
  %1182 = vst [vmem:[#allocation2 + $0x1c0] sm:$0xff] %v1174
  %1183 = vst [vmem:[#allocation2 + $0x1c8] sm:$0xff] %v1175
  %1184 = vst [vmem:[#allocation2 + $0x1d0] sm:$0xff] %v1176
  %1185 = vst [vmem:[#allocation2 + $0x1d8] sm:$0xff] %v1177
  %1186 = vst [vmem:[#allocation2 + $0x1e0] sm:$0xff] %v1178
  %1187 = vst [vmem:[#allocation2 + $0x1e8] sm:$0xff] %v1179
  %1188 = vst [vmem:[#allocation2 + $0x1f0] sm:$0xff] %v1180
  %1189 = vst [vmem:[#allocation2 + $0x1f8] sm:$0xff] %v1181
  %v1190 = vld [vmem:[%s0 + $0x240] sm:$0xff]
  %v1191 = vld [vmem:[%s0 + $0x248] sm:$0xff]
  %v1192 = vld [vmem:[%s0 + $0x250] sm:$0xff]
  %v1193 = vld [vmem:[%s0 + $0x258] sm:$0xff]
  %v1194 = vld [vmem:[%s0 + $0x260] sm:$0xff]
  %v1195 = vld [vmem:[%s0 + $0x268] sm:$0xff]
  %v1196 = vld [vmem:[%s0 + $0x270] sm:$0xff]
  %v1197 = vld [vmem:[%s0 + $0x278] sm:$0xff]
  %v1198 = vld [vmem:[%s0 + $0x280] sm:$0xff]
  %v1199 = vld [vmem:[%s0 + $0x288] sm:$0xff]
  %v1200 = vld [vmem:[%s0 + $0x290] sm:$0xff]
  %v1201 = vld [vmem:[%s0 + $0x298] sm:$0x1f]
  %v1203 = vsel %vm113, %v1201, 0
  %1205 = vmatprep.subr.mxu0 0.0
  %1206 = vmatpush1.msra.mxu0 0.0
  %1207 = vmatprep.subr.mxu0 0.0
  %1208 = vmatpush1.msra.mxu0 0.0
  %1209 = vmatprep.subr.mxu0 0.0
  %1210 = vmatpush1.msra.mxu0 0.0
  %1211 = vmatprep.subr.mxu0 0.0
  %1212 = vmatpush1.msra.mxu0 0.0
  %1213 = vmatprep.subr.mxu0 0.0
  %1214 = vmatpush1.msra.mxu0 %v1203
  %1215 = vmatprep.subr.mxu0 0.0
  %1216 = vmatpush1.msra.mxu0 %v1200
  %1217 = vmatprep.subr.mxu0 0.0
  %1218 = vmatpush1.msra.mxu0 %v1199
  %1219 = vmatprep.subr.mxu0 0.0
  %1220 = vmatpush1.msra.mxu0 %v1198
  %1221 = vmatprep.subr.mxu0 0.0
  %1222 = vmatpush1.msra.mxu0 %v1197
  %1223 = vmatprep.subr.mxu0 0.0
  %1224 = vmatpush1.msra.mxu0 %v1196
  %1225 = vmatprep.subr.mxu0 0.0
  %1226 = vmatpush1.msra.mxu0 %v1195
  %1227 = vmatprep.subr.mxu0 0.0
  %1228 = vmatpush1.msra.mxu0 %v1194
  %1229 = vmatprep.subr.mxu0 0.0
  %1230 = vmatpush1.msra.mxu0 %v1193
  %1231 = vmatprep.subr.mxu0 0.0
  %1232 = vmatpush1.msra.mxu0 %v1192
  %1233 = vmatprep.subr.mxu0 0.0
  %1234 = vmatpush1.msra.mxu0 %v1191
  %1235 = vmatprep.subr.mxu0 0.0
  %1236 = vmatpush1.msra.mxu0 %v1190
  %1237 = vmatprep.subr.mxu0 0.0
  %1238 = vmatpush2.msra.mxu0 0.0
  %1239 = vmatprep.subr.mxu0 0.0
  %1240 = vmatpush2.msra.mxu0 0.0
  %1241 = vmatprep.subr.mxu0 0.0
  %1242 = vmatpush2.msra.mxu0 0.0
  %1243 = vmatprep.subr.mxu0 0.0
  %1244 = vmatpush2.msra.mxu0 0.0
  %1245 = vmatprep.subr.mxu0 0.0
  %1246 = vmatpush2.msra.mxu0 0.0
  %1247 = vmatprep.subr.mxu0 0.0
  %1248 = vmatpush2.msra.mxu0 0.0
  %1249 = vmatprep.subr.mxu0 0.0
  %1250 = vmatpush2.msra.mxu0 0.0
  %1251 = vmatprep.subr.mxu0 0.0
  %1252 = vmatpush2.msra.mxu0 0.0
  %1253 = vmatprep.subr.mxu0 0.0
  %1254 = vmatpush2.msra.mxu0 0.0
  %1255 = vmatprep.subr.mxu0 0.0
  %1256 = vmatpush2.msra.mxu0 0.0
  %1257 = vmatprep.subr.mxu0 0.0
  %1258 = vmatpush2.msra.mxu0 0.0
  %1259 = vmatprep.subr.mxu0 0.0
  %1260 = vmatpush2.msra.mxu0 0.0
  %1261 = vmatprep.subr.mxu0 0.0
  %1262 = vmatpush2.msra.mxu0 0.0
  %1263 = vmatprep.subr.mxu0 0.0
  %1264 = vmatpush2.msra.mxu0 0.0
  %1265 = vmatprep.subr.mxu0 0.0
  %1266 = vmatpush2.msra.mxu0 0.0
  %1267 = vmatprep.subr.mxu0 0.0
  %1268 = vmatpush2.msra.mxu0 0.0
  %1269 = vmatprep.mubr.f32.mxu0 0.0
  %1270 = vmatmul.mubr.f32.gmra.mxu0 %v90
  %v1271 = vpop.f32.mrf.mxu0
  %v1272 = vadd.f32 %v51, %v1271
  %v1273 = vpop.f32.mrf.mxu0
  %1274 = vmatprep.mubr.f32.mxu0 0.0
  %1275 = vmatmul.mubr.f32.gmra.mxu0 %v93
  %v1276 = vpop.f32.mrf.mxu0
  %v1277 = vadd.f32 %v56, %v1276
  %v1278 = vpop.f32.mrf.mxu0
  %1279 = vmatprep.mubr.f32.mxu0 0.0
  %1280 = vmatmul.mubr.f32.gmra.mxu0 %v96
  %v1281 = vpop.f32.mrf.mxu0
  %v1282 = vadd.f32 %v61, %v1281
  %v1283 = vpop.f32.mrf.mxu0
  %1284 = vmatprep.mubr.f32.mxu0 0.0
  %1285 = vmatmul.mubr.f32.gmra.mxu0 %v99
  %v1286 = vpop.f32.mrf.mxu0
  %v1287 = vadd.f32 %v66, %v1286
  %v1288 = vpop.f32.mrf.mxu0
  %1289 = vmatprep.mubr.f32.mxu0 0.0
  %1290 = vmatmul.mubr.f32.gmra.mxu0 %v102
  %v1291 = vpop.f32.mrf.mxu0
  %v1292 = vadd.f32 %v71, %v1291
  %v1293 = vpop.f32.mrf.mxu0
  %1294 = vmatprep.mubr.f32.mxu0 0.0
  %1295 = vmatmul.mubr.f32.gmra.mxu0 %v105
  %v1296 = vpop.f32.mrf.mxu0
  %v1297 = vadd.f32 %v76, %v1296
  %v1298 = vpop.f32.mrf.mxu0
  %1299 = vmatprep.mubr.f32.mxu0 0.0
  %1300 = vmatmul.mubr.f32.gmra.mxu0 %v108
  %v1301 = vpop.f32.mrf.mxu0
  %v1302 = vadd.f32 %v81, %v1301
  %v1303 = vpop.f32.mrf.mxu0
  %1304 = vmatprep.mubr.f32.mxu0 0.0
  %1305 = vmatmul.mubr.f32.gmra.mxu0 %v111
  %v1306 = vpop.f32.mrf.mxu0
  %v1307 = vadd.f32 %v86, %v1306
  %v1308 = vpop.f32.mrf.mxu0
  %1309 = vdwg.mxu0
  %v1310 = vmax.f32 %v1272, 0.0
  %v1311 = vmax.f32 %v1277, 0.0
  %v1312 = vmax.f32 %v1282, 0.0
  %v1313 = vmax.f32 %v1287, 0.0
  %v1314 = vmax.f32 %v1292, 0.0
  %v1315 = vmax.f32 %v1297, 0.0
  %v1316 = vmax.f32 %v1302, 0.0
  %v1317 = vmax.f32 %v1307, 0.0
  %1318 = vst [vmem:[#allocation2 + $0x200] sm:$0xff] %v1310
  %1319 = vst [vmem:[#allocation2 + $0x208] sm:$0xff] %v1311
  %1320 = vst [vmem:[#allocation2 + $0x210] sm:$0xff] %v1312
  %1321 = vst [vmem:[#allocation2 + $0x218] sm:$0xff] %v1313
  %1322 = vst [vmem:[#allocation2 + $0x220] sm:$0xff] %v1314
  %1323 = vst [vmem:[#allocation2 + $0x228] sm:$0xff] %v1315
  %1324 = vst [vmem:[#allocation2 + $0x230] sm:$0xff] %v1316
  %1325 = vst [vmem:[#allocation2 + $0x238] sm:$0xff] %v1317
  %v1326 = vld [vmem:[%s0 + $0x288] sm:$0xff]
  %v1327 = vld [vmem:[%s0 + $0x290] sm:$0xff]
  %v1328 = vld [vmem:[%s0 + $0x298] sm:$0xff]
  %v1329 = vld [vmem:[%s0 + $0x2a0] sm:$0xff]
  %v1330 = vld [vmem:[%s0 + $0x2a8] sm:$0xff]
  %v1331 = vld [vmem:[%s0 + $0x2b0] sm:$0xff]
  %v1332 = vld [vmem:[%s0 + $0x2b8] sm:$0xff]
  %v1333 = vld [vmem:[%s0 + $0x2c0] sm:$0xff]
  %v1334 = vld [vmem:[%s0 + $0x2c8] sm:$0xff]
  %v1335 = vld [vmem:[%s0 + $0x2d0] sm:$0xff]
  %v1336 = vld [vmem:[%s0 + $0x2d8] sm:$0xff]
  %v1337 = vld [vmem:[%s0 + $0x2e0] sm:$0x1f]
  %v1339 = vsel %vm113, %v1337, 0
  %1341 = vmatprep.subr.mxu0 0.0
  %1342 = vmatpush1.msra.mxu0 0.0
  %1343 = vmatprep.subr.mxu0 0.0
  %1344 = vmatpush1.msra.mxu0 0.0
  %1345 = vmatprep.subr.mxu0 0.0
  %1346 = vmatpush1.msra.mxu0 0.0
  %1347 = vmatprep.subr.mxu0 0.0
  %1348 = vmatpush1.msra.mxu0 0.0
  %1349 = vmatprep.subr.mxu0 0.0
  %1350 = vmatpush1.msra.mxu0 %v1339
  %1351 = vmatprep.subr.mxu0 0.0
  %1352 = vmatpush1.msra.mxu0 %v1336
  %1353 = vmatprep.subr.mxu0 0.0
  %1354 = vmatpush1.msra.mxu0 %v1335
  %1355 = vmatprep.subr.mxu0 0.0
  %1356 = vmatpush1.msra.mxu0 %v1334
  %1357 = vmatprep.subr.mxu0 0.0
  %1358 = vmatpush1.msra.mxu0 %v1333
  %1359 = vmatprep.subr.mxu0 0.0
  %1360 = vmatpush1.msra.mxu0 %v1332
  %1361 = vmatprep.subr.mxu0 0.0
  %1362 = vmatpush1.msra.mxu0 %v1331
  %1363 = vmatprep.subr.mxu0 0.0
  %1364 = vmatpush1.msra.mxu0 %v1330
  %1365 = vmatprep.subr.mxu0 0.0
  %1366 = vmatpush1.msra.mxu0 %v1329
  %1367 = vmatprep.subr.mxu0 0.0
  %1368 = vmatpush1.msra.mxu0 %v1328
  %1369 = vmatprep.subr.mxu0 0.0
  %1370 = vmatpush1.msra.mxu0 %v1327
  %1371 = vmatprep.subr.mxu0 0.0
  %1372 = vmatpush1.msra.mxu0 %v1326
  %1373 = vmatprep.subr.mxu0 0.0
  %1374 = vmatpush2.msra.mxu0 0.0
  %1375 = vmatprep.subr.mxu0 0.0
  %1376 = vmatpush2.msra.mxu0 0.0
  %1377 = vmatprep.subr.mxu0 0.0
  %1378 = vmatpush2.msra.mxu0 0.0
  %1379 = vmatprep.subr.mxu0 0.0
  %1380 = vmatpush2.msra.mxu0 0.0
  %1381 = vmatprep.subr.mxu0 0.0
  %1382 = vmatpush2.msra.mxu0 0.0
  %1383 = vmatprep.subr.mxu0 0.0
  %1384 = vmatpush2.msra.mxu0 0.0
  %1385 = vmatprep.subr.mxu0 0.0
  %1386 = vmatpush2.msra.mxu0 0.0
  %1387 = vmatprep.subr.mxu0 0.0
  %1388 = vmatpush2.msra.mxu0 0.0
  %1389 = vmatprep.subr.mxu0 0.0
  %1390 = vmatpush2.msra.mxu0 0.0
  %1391 = vmatprep.subr.mxu0 0.0
  %1392 = vmatpush2.msra.mxu0 0.0
  %1393 = vmatprep.subr.mxu0 0.0
  %1394 = vmatpush2.msra.mxu0 0.0
  %1395 = vmatprep.subr.mxu0 0.0
  %1396 = vmatpush2.msra.mxu0 0.0
  %1397 = vmatprep.subr.mxu0 0.0
  %1398 = vmatpush2.msra.mxu0 0.0
  %1399 = vmatprep.subr.mxu0 0.0
  %1400 = vmatpush2.msra.mxu0 0.0
  %1401 = vmatprep.subr.mxu0 0.0
  %1402 = vmatpush2.msra.mxu0 0.0
  %1403 = vmatprep.subr.mxu0 0.0
  %1404 = vmatpush2.msra.mxu0 0.0
  %1405 = vmatprep.mubr.f32.mxu0 0.0
  %1406 = vmatmul.mubr.f32.gmra.mxu0 %v90
  %v1407 = vpop.f32.mrf.mxu0
  %v1408 = vadd.f32 %v51, %v1407
  %v1409 = vpop.f32.mrf.mxu0
  %1410 = vmatprep.mubr.f32.mxu0 0.0
  %1411 = vmatmul.mubr.f32.gmra.mxu0 %v93
  %v1412 = vpop.f32.mrf.mxu0
  %v1413 = vadd.f32 %v56, %v1412
  %v1414 = vpop.f32.mrf.mxu0
  %1415 = vmatprep.mubr.f32.mxu0 0.0
  %1416 = vmatmul.mubr.f32.gmra.mxu0 %v96
  %v1417 = vpop.f32.mrf.mxu0
  %v1418 = vadd.f32 %v61, %v1417
  %v1419 = vpop.f32.mrf.mxu0
  %1420 = vmatprep.mubr.f32.mxu0 0.0
  %1421 = vmatmul.mubr.f32.gmra.mxu0 %v99
  %v1422 = vpop.f32.mrf.mxu0
  %v1423 = vadd.f32 %v66, %v1422
  %v1424 = vpop.f32.mrf.mxu0
  %1425 = vmatprep.mubr.f32.mxu0 0.0
  %1426 = vmatmul.mubr.f32.gmra.mxu0 %v102
  %v1427 = vpop.f32.mrf.mxu0
  %v1428 = vadd.f32 %v71, %v1427
  %v1429 = vpop.f32.mrf.mxu0
  %1430 = vmatprep.mubr.f32.mxu0 0.0
  %1431 = vmatmul.mubr.f32.gmra.mxu0 %v105
  %v1432 = vpop.f32.mrf.mxu0
  %v1433 = vadd.f32 %v76, %v1432
  %v1434 = vpop.f32.mrf.mxu0
  %1435 = vmatprep.mubr.f32.mxu0 0.0
  %1436 = vmatmul.mubr.f32.gmra.mxu0 %v108
  %v1437 = vpop.f32.mrf.mxu0
  %v1438 = vadd.f32 %v81, %v1437
  %v1439 = vpop.f32.mrf.mxu0
  %1440 = vmatprep.mubr.f32.mxu0 0.0
  %1441 = vmatmul.mubr.f32.gmra.mxu0 %v111
  %v1442 = vpop.f32.mrf.mxu0
  %v1443 = vadd.f32 %v86, %v1442
  %v1444 = vpop.f32.mrf.mxu0
  %1445 = vdwg.mxu0
  %v1446 = vmax.f32 %v1408, 0.0
  %v1447 = vmax.f32 %v1413, 0.0
  %v1448 = vmax.f32 %v1418, 0.0
  %v1449 = vmax.f32 %v1423, 0.0
  %v1450 = vmax.f32 %v1428, 0.0
  %v1451 = vmax.f32 %v1433, 0.0
  %v1452 = vmax.f32 %v1438, 0.0
  %v1453 = vmax.f32 %v1443, 0.0
  %1454 = vst [vmem:[#allocation2 + $0x240] sm:$0xff] %v1446
  %1455 = vst [vmem:[#allocation2 + $0x248] sm:$0xff] %v1447
  %1456 = vst [vmem:[#allocation2 + $0x250] sm:$0xff] %v1448
  %1457 = vst [vmem:[#allocation2 + $0x258] sm:$0xff] %v1449
  %1458 = vst [vmem:[#allocation2 + $0x260] sm:$0xff] %v1450
  %1459 = vst [vmem:[#allocation2 + $0x268] sm:$0xff] %v1451
  %1460 = vst [vmem:[#allocation2 + $0x270] sm:$0xff] %v1452
  %1461 = vst [vmem:[#allocation2 + $0x278] sm:$0xff] %v1453
  %v1462 = vld [vmem:[%s0 + $0x2d0] sm:$0xff]
  %v1463 = vld [vmem:[%s0 + $0x2d8] sm:$0xff]
  %v1464 = vld [vmem:[%s0 + $0x2e0] sm:$0xff]
  %v1465 = vld [vmem:[%s0 + $0x2e8] sm:$0xff]
  %v1466 = vld [vmem:[%s0 + $0x2f0] sm:$0xff]
  %v1467 = vld [vmem:[%s0 + $0x2f8] sm:$0xff]
  %v1468 = vld [vmem:[%s0 + $0x300] sm:$0xff]
  %v1469 = vld [vmem:[%s0 + $0x308] sm:$0xff]
  %v1470 = vld [vmem:[%s0 + $0x310] sm:$0xff]
  %v1471 = vld [vmem:[%s0 + $0x318] sm:$0xff]
  %v1472 = vld [vmem:[%s0 + $0x320] sm:$0xff]
  %v1473 = vld [vmem:[%s0 + $0x328] sm:$0x1f]
  %v1475 = vsel %vm113, %v1473, 0
  %1477 = vmatprep.subr.mxu0 0.0
  %1478 = vmatpush1.msra.mxu0 0.0
  %1479 = vmatprep.subr.mxu0 0.0
  %1480 = vmatpush1.msra.mxu0 0.0
  %1481 = vmatprep.subr.mxu0 0.0
  %1482 = vmatpush1.msra.mxu0 0.0
  %1483 = vmatprep.subr.mxu0 0.0
  %1484 = vmatpush1.msra.mxu0 0.0
  %1485 = vmatprep.subr.mxu0 0.0
  %1486 = vmatpush1.msra.mxu0 %v1475
  %1487 = vmatprep.subr.mxu0 0.0
  %1488 = vmatpush1.msra.mxu0 %v1472
  %1489 = vmatprep.subr.mxu0 0.0
  %1490 = vmatpush1.msra.mxu0 %v1471
  %1491 = vmatprep.subr.mxu0 0.0
  %1492 = vmatpush1.msra.mxu0 %v1470
  %1493 = vmatprep.subr.mxu0 0.0
  %1494 = vmatpush1.msra.mxu0 %v1469
  %1495 = vmatprep.subr.mxu0 0.0
  %1496 = vmatpush1.msra.mxu0 %v1468
  %1497 = vmatprep.subr.mxu0 0.0
  %1498 = vmatpush1.msra.mxu0 %v1467
  %1499 = vmatprep.subr.mxu0 0.0
  %1500 = vmatpush1.msra.mxu0 %v1466
  %1501 = vmatprep.subr.mxu0 0.0
  %1502 = vmatpush1.msra.mxu0 %v1465
  %1503 = vmatprep.subr.mxu0 0.0
  %1504 = vmatpush1.msra.mxu0 %v1464
  %1505 = vmatprep.subr.mxu0 0.0
  %1506 = vmatpush1.msra.mxu0 %v1463
  %1507 = vmatprep.subr.mxu0 0.0
  %1508 = vmatpush1.msra.mxu0 %v1462
  %1509 = vmatprep.subr.mxu0 0.0
  %1510 = vmatpush2.msra.mxu0 0.0
  %1511 = vmatprep.subr.mxu0 0.0
  %1512 = vmatpush2.msra.mxu0 0.0
  %1513 = vmatprep.subr.mxu0 0.0
  %1514 = vmatpush2.msra.mxu0 0.0
  %1515 = vmatprep.subr.mxu0 0.0
  %1516 = vmatpush2.msra.mxu0 0.0
  %1517 = vmatprep.subr.mxu0 0.0
  %1518 = vmatpush2.msra.mxu0 0.0
  %1519 = vmatprep.subr.mxu0 0.0
  %1520 = vmatpush2.msra.mxu0 0.0
  %1521 = vmatprep.subr.mxu0 0.0
  %1522 = vmatpush2.msra.mxu0 0.0
  %1523 = vmatprep.subr.mxu0 0.0
  %1524 = vmatpush2.msra.mxu0 0.0
  %1525 = vmatprep.subr.mxu0 0.0
  %1526 = vmatpush2.msra.mxu0 0.0
  %1527 = vmatprep.subr.mxu0 0.0
  %1528 = vmatpush2.msra.mxu0 0.0
  %1529 = vmatprep.subr.mxu0 0.0
  %1530 = vmatpush2.msra.mxu0 0.0
  %1531 = vmatprep.subr.mxu0 0.0
  %1532 = vmatpush2.msra.mxu0 0.0
  %1533 = vmatprep.subr.mxu0 0.0
  %1534 = vmatpush2.msra.mxu0 0.0
  %1535 = vmatprep.subr.mxu0 0.0
  %1536 = vmatpush2.msra.mxu0 0.0
  %1537 = vmatprep.subr.mxu0 0.0
  %1538 = vmatpush2.msra.mxu0 0.0
  %1539 = vmatprep.subr.mxu0 0.0
  %1540 = vmatpush2.msra.mxu0 0.0
  %1541 = vmatprep.mubr.f32.mxu0 0.0
  %1542 = vmatmul.mubr.f32.gmra.mxu0 %v90
  %v1543 = vpop.f32.mrf.mxu0
  %v1544 = vadd.f32 %v51, %v1543
  %v1545 = vpop.f32.mrf.mxu0
  %1546 = vmatprep.mubr.f32.mxu0 0.0
  %1547 = vmatmul.mubr.f32.gmra.mxu0 %v93
  %v1548 = vpop.f32.mrf.mxu0
  %v1549 = vadd.f32 %v56, %v1548
  %v1550 = vpop.f32.mrf.mxu0
  %1551 = vmatprep.mubr.f32.mxu0 0.0
  %1552 = vmatmul.mubr.f32.gmra.mxu0 %v96
  %v1553 = vpop.f32.mrf.mxu0
  %v1554 = vadd.f32 %v61, %v1553
  %v1555 = vpop.f32.mrf.mxu0
  %1556 = vmatprep.mubr.f32.mxu0 0.0
  %1557 = vmatmul.mubr.f32.gmra.mxu0 %v99
  %v1558 = vpop.f32.mrf.mxu0
  %v1559 = vadd.f32 %v66, %v1558
  %v1560 = vpop.f32.mrf.mxu0
  %1561 = vmatprep.mubr.f32.mxu0 0.0
  %1562 = vmatmul.mubr.f32.gmra.mxu0 %v102
  %v1563 = vpop.f32.mrf.mxu0
  %v1564 = vadd.f32 %v71, %v1563
  %v1565 = vpop.f32.mrf.mxu0
  %1566 = vmatprep.mubr.f32.mxu0 0.0
  %1567 = vmatmul.mubr.f32.gmra.mxu0 %v105
  %v1568 = vpop.f32.mrf.mxu0
  %v1569 = vadd.f32 %v76, %v1568
  %v1570 = vpop.f32.mrf.mxu0
  %1571 = vmatprep.mubr.f32.mxu0 0.0
  %1572 = vmatmul.mubr.f32.gmra.mxu0 %v108
  %v1573 = vpop.f32.mrf.mxu0
  %v1574 = vadd.f32 %v81, %v1573
  %v1575 = vpop.f32.mrf.mxu0
  %1576 = vmatprep.mubr.f32.mxu0 0.0
  %1577 = vmatmul.mubr.f32.gmra.mxu0 %v111
  %v1578 = vpop.f32.mrf.mxu0
  %v1579 = vadd.f32 %v86, %v1578
  %v1580 = vpop.f32.mrf.mxu0
  %1581 = vdwg.mxu0
  %v1582 = vmax.f32 %v1544, 0.0
  %v1583 = vmax.f32 %v1549, 0.0
  %v1584 = vmax.f32 %v1554, 0.0
  %v1585 = vmax.f32 %v1559, 0.0
  %v1586 = vmax.f32 %v1564, 0.0
  %v1587 = vmax.f32 %v1569, 0.0
  %v1588 = vmax.f32 %v1574, 0.0
  %v1589 = vmax.f32 %v1579, 0.0
  %1590 = vst [vmem:[#allocation2 + $0x280] sm:$0xff] %v1582
  %1591 = vst [vmem:[#allocation2 + $0x288] sm:$0xff] %v1583
  %1592 = vst [vmem:[#allocation2 + $0x290] sm:$0xff] %v1584
  %1593 = vst [vmem:[#allocation2 + $0x298] sm:$0xff] %v1585
  %1594 = vst [vmem:[#allocation2 + $0x2a0] sm:$0xff] %v1586
  %1595 = vst [vmem:[#allocation2 + $0x2a8] sm:$0xff] %v1587
  %1596 = vst [vmem:[#allocation2 + $0x2b0] sm:$0xff] %v1588
  %1597 = vst [vmem:[#allocation2 + $0x2b8] sm:$0xff] %v1589
  %v1598 = vld [vmem:[%s0 + $0x318] sm:$0xff]
  %v1599 = vld [vmem:[%s0 + $0x320] sm:$0xff]
  %v1600 = vld [vmem:[%s0 + $0x328] sm:$0xff]
  %v1601 = vld [vmem:[%s0 + $0x330] sm:$0xff]
  %v1602 = vld [vmem:[%s0 + $0x338] sm:$0xff]
  %v1603 = vld [vmem:[%s0 + $0x340] sm:$0xff]
  %v1604 = vld [vmem:[%s0 + $0x348] sm:$0xff]
  %v1605 = vld [vmem:[%s0 + $0x350] sm:$0xff]
  %v1606 = vld [vmem:[%s0 + $0x358] sm:$0xff]
  %v1607 = vld [vmem:[%s0 + $0x360] sm:$0xff]
  %v1608 = vld [vmem:[%s0 + $0x368] sm:$0xff]
  %v1609 = vld [vmem:[%s0 + $0x370] sm:$0x1f]
  %v1611 = vsel %vm113, %v1609, 0
  %1613 = vmatprep.subr.mxu0 0.0
  %1614 = vmatpush1.msra.mxu0 0.0
  %1615 = vmatprep.subr.mxu0 0.0
  %1616 = vmatpush1.msra.mxu0 0.0
  %1617 = vmatprep.subr.mxu0 0.0
  %1618 = vmatpush1.msra.mxu0 0.0
  %1619 = vmatprep.subr.mxu0 0.0
  %1620 = vmatpush1.msra.mxu0 0.0
  %1621 = vmatprep.subr.mxu0 0.0
  %1622 = vmatpush1.msra.mxu0 %v1611
  %1623 = vmatprep.subr.mxu0 0.0
  %1624 = vmatpush1.msra.mxu0 %v1608
  %1625 = vmatprep.subr.mxu0 0.0
  %1626 = vmatpush1.msra.mxu0 %v1607
  %1627 = vmatprep.subr.mxu0 0.0
  %1628 = vmatpush1.msra.mxu0 %v1606
  %1629 = vmatprep.subr.mxu0 0.0
  %1630 = vmatpush1.msra.mxu0 %v1605
  %1631 = vmatprep.subr.mxu0 0.0
  %1632 = vmatpush1.msra.mxu0 %v1604
  %1633 = vmatprep.subr.mxu0 0.0
  %1634 = vmatpush1.msra.mxu0 %v1603
  %1635 = vmatprep.subr.mxu0 0.0
  %1636 = vmatpush1.msra.mxu0 %v1602
  %1637 = vmatprep.subr.mxu0 0.0
  %1638 = vmatpush1.msra.mxu0 %v1601
  %1639 = vmatprep.subr.mxu0 0.0
  %1640 = vmatpush1.msra.mxu0 %v1600
  %1641 = vmatprep.subr.mxu0 0.0
  %1642 = vmatpush1.msra.mxu0 %v1599
  %1643 = vmatprep.subr.mxu0 0.0
  %1644 = vmatpush1.msra.mxu0 %v1598
  %1645 = vmatprep.subr.mxu0 0.0
  %1646 = vmatpush2.msra.mxu0 0.0
  %1647 = vmatprep.subr.mxu0 0.0
  %1648 = vmatpush2.msra.mxu0 0.0
  %1649 = vmatprep.subr.mxu0 0.0
  %1650 = vmatpush2.msra.mxu0 0.0
  %1651 = vmatprep.subr.mxu0 0.0
  %1652 = vmatpush2.msra.mxu0 0.0
  %1653 = vmatprep.subr.mxu0 0.0
  %1654 = vmatpush2.msra.mxu0 0.0
  %1655 = vmatprep.subr.mxu0 0.0
  %1656 = vmatpush2.msra.mxu0 0.0
  %1657 = vmatprep.subr.mxu0 0.0
  %1658 = vmatpush2.msra.mxu0 0.0
  %1659 = vmatprep.subr.mxu0 0.0
  %1660 = vmatpush2.msra.mxu0 0.0
  %1661 = vmatprep.subr.mxu0 0.0
  %1662 = vmatpush2.msra.mxu0 0.0
  %1663 = vmatprep.subr.mxu0 0.0
  %1664 = vmatpush2.msra.mxu0 0.0
  %1665 = vmatprep.subr.mxu0 0.0
  %1666 = vmatpush2.msra.mxu0 0.0
  %1667 = vmatprep.subr.mxu0 0.0
  %1668 = vmatpush2.msra.mxu0 0.0
  %1669 = vmatprep.subr.mxu0 0.0
  %1670 = vmatpush2.msra.mxu0 0.0
  %1671 = vmatprep.subr.mxu0 0.0
  %1672 = vmatpush2.msra.mxu0 0.0
  %1673 = vmatprep.subr.mxu0 0.0
  %1674 = vmatpush2.msra.mxu0 0.0
  %1675 = vmatprep.subr.mxu0 0.0
  %1676 = vmatpush2.msra.mxu0 0.0
  %1677 = vmatprep.mubr.f32.mxu0 0.0
  %1678 = vmatmul.mubr.f32.gmra.mxu0 %v90
  %v1679 = vpop.f32.mrf.mxu0
  %v1680 = vadd.f32 %v51, %v1679
  %v1681 = vpop.f32.mrf.mxu0
  %1682 = vmatprep.mubr.f32.mxu0 0.0
  %1683 = vmatmul.mubr.f32.gmra.mxu0 %v93
  %v1684 = vpop.f32.mrf.mxu0
  %v1685 = vadd.f32 %v56, %v1684
  %v1686 = vpop.f32.mrf.mxu0
  %1687 = vmatprep.mubr.f32.mxu0 0.0
  %1688 = vmatmul.mubr.f32.gmra.mxu0 %v96
  %v1689 = vpop.f32.mrf.mxu0
  %v1690 = vadd.f32 %v61, %v1689
  %v1691 = vpop.f32.mrf.mxu0
  %1692 = vmatprep.mubr.f32.mxu0 0.0
  %1693 = vmatmul.mubr.f32.gmra.mxu0 %v99
  %v1694 = vpop.f32.mrf.mxu0
  %v1695 = vadd.f32 %v66, %v1694
  %v1696 = vpop.f32.mrf.mxu0
  %1697 = vmatprep.mubr.f32.mxu0 0.0
  %1698 = vmatmul.mubr.f32.gmra.mxu0 %v102
  %v1699 = vpop.f32.mrf.mxu0
  %v1700 = vadd.f32 %v71, %v1699
  %v1701 = vpop.f32.mrf.mxu0
  %1702 = vmatprep.mubr.f32.mxu0 0.0
  %1703 = vmatmul.mubr.f32.gmra.mxu0 %v105
  %v1704 = vpop.f32.mrf.mxu0
  %v1705 = vadd.f32 %v76, %v1704
  %v1706 = vpop.f32.mrf.mxu0
  %1707 = vmatprep.mubr.f32.mxu0 0.0
  %1708 = vmatmul.mubr.f32.gmra.mxu0 %v108
  %v1709 = vpop.f32.mrf.mxu0
  %v1710 = vadd.f32 %v81, %v1709
  %v1711 = vpop.f32.mrf.mxu0
  %1712 = vmatprep.mubr.f32.mxu0 0.0
  %1713 = vmatmul.mubr.f32.gmra.mxu0 %v111
  %v1714 = vpop.f32.mrf.mxu0
  %v1715 = vadd.f32 %v86, %v1714
  %v1716 = vpop.f32.mrf.mxu0
  %1717 = vdwg.mxu0
  %v1718 = vmax.f32 %v1680, 0.0
  %v1719 = vmax.f32 %v1685, 0.0
  %v1720 = vmax.f32 %v1690, 0.0
  %v1721 = vmax.f32 %v1695, 0.0
  %v1722 = vmax.f32 %v1700, 0.0
  %v1723 = vmax.f32 %v1705, 0.0
  %v1724 = vmax.f32 %v1710, 0.0
  %v1725 = vmax.f32 %v1715, 0.0
  %1726 = vst [vmem:[#allocation2 + $0x2c0] sm:$0xff] %v1718
  %1727 = vst [vmem:[#allocation2 + $0x2c8] sm:$0xff] %v1719
  %1728 = vst [vmem:[#allocation2 + $0x2d0] sm:$0xff] %v1720
  %1729 = vst [vmem:[#allocation2 + $0x2d8] sm:$0xff] %v1721
  %1730 = vst [vmem:[#allocation2 + $0x2e0] sm:$0xff] %v1722
  %1731 = vst [vmem:[#allocation2 + $0x2e8] sm:$0xff] %v1723
  %1732 = vst [vmem:[#allocation2 + $0x2f0] sm:$0xff] %v1724
  %1733 = vst [vmem:[#allocation2 + $0x2f8] sm:$0xff] %v1725
  %v1734 = vld [vmem:[%s0 + $0x360] sm:$0xff]
  %v1735 = vld [vmem:[%s0 + $0x368] sm:$0xff]
  %v1736 = vld [vmem:[%s0 + $0x370] sm:$0xff]
  %v1737 = vld [vmem:[%s0 + $0x378] sm:$0xff]
  %v1738 = vld [vmem:[%s0 + $0x380] sm:$0xff]
  %v1739 = vld [vmem:[%s0 + $0x388] sm:$0xff]
  %v1740 = vld [vmem:[%s0 + $0x390] sm:$0xff]
  %v1741 = vld [vmem:[%s0 + $0x398] sm:$0xff]
  %v1742 = vld [vmem:[%s0 + $0x3a0] sm:$0xff]
  %v1743 = vld [vmem:[%s0 + $0x3a8] sm:$0xff]
  %v1744 = vld [vmem:[%s0 + $0x3b0] sm:$0xff]
  %v1745 = vld [vmem:[%s0 + $0x3b8] sm:$0x1f]
  %v1747 = vsel %vm113, %v1745, 0
  %1749 = vmatprep.subr.mxu0 0.0
  %1750 = vmatpush1.msra.mxu0 0.0
  %1751 = vmatprep.subr.mxu0 0.0
  %1752 = vmatpush1.msra.mxu0 0.0
  %1753 = vmatprep.subr.mxu0 0.0
  %1754 = vmatpush1.msra.mxu0 0.0
  %1755 = vmatprep.subr.mxu0 0.0
  %1756 = vmatpush1.msra.mxu0 0.0
  %1757 = vmatprep.subr.mxu0 0.0
  %1758 = vmatpush1.msra.mxu0 %v1747
  %1759 = vmatprep.subr.mxu0 0.0
  %1760 = vmatpush1.msra.mxu0 %v1744
  %1761 = vmatprep.subr.mxu0 0.0
  %1762 = vmatpush1.msra.mxu0 %v1743
  %1763 = vmatprep.subr.mxu0 0.0
  %1764 = vmatpush1.msra.mxu0 %v1742
  %1765 = vmatprep.subr.mxu0 0.0
  %1766 = vmatpush1.msra.mxu0 %v1741
  %1767 = vmatprep.subr.mxu0 0.0
  %1768 = vmatpush1.msra.mxu0 %v1740
  %1769 = vmatprep.subr.mxu0 0.0
  %1770 = vmatpush1.msra.mxu0 %v1739
  %1771 = vmatprep.subr.mxu0 0.0
  %1772 = vmatpush1.msra.mxu0 %v1738
  %1773 = vmatprep.subr.mxu0 0.0
  %1774 = vmatpush1.msra.mxu0 %v1737
  %1775 = vmatprep.subr.mxu0 0.0
  %1776 = vmatpush1.msra.mxu0 %v1736
  %1777 = vmatprep.subr.mxu0 0.0
  %1778 = vmatpush1.msra.mxu0 %v1735
  %1779 = vmatprep.subr.mxu0 0.0
  %1780 = vmatpush1.msra.mxu0 %v1734
  %1781 = vmatprep.subr.mxu0 0.0
  %1782 = vmatpush2.msra.mxu0 0.0
  %1783 = vmatprep.subr.mxu0 0.0
  %1784 = vmatpush2.msra.mxu0 0.0
  %1785 = vmatprep.subr.mxu0 0.0
  %1786 = vmatpush2.msra.mxu0 0.0
  %1787 = vmatprep.subr.mxu0 0.0
  %1788 = vmatpush2.msra.mxu0 0.0
  %1789 = vmatprep.subr.mxu0 0.0
  %1790 = vmatpush2.msra.mxu0 0.0
  %1791 = vmatprep.subr.mxu0 0.0
  %1792 = vmatpush2.msra.mxu0 0.0
  %1793 = vmatprep.subr.mxu0 0.0
  %1794 = vmatpush2.msra.mxu0 0.0
  %1795 = vmatprep.subr.mxu0 0.0
  %1796 = vmatpush2.msra.mxu0 0.0
  %1797 = vmatprep.subr.mxu0 0.0
  %1798 = vmatpush2.msra.mxu0 0.0
  %1799 = vmatprep.subr.mxu0 0.0
  %1800 = vmatpush2.msra.mxu0 0.0
  %1801 = vmatprep.subr.mxu0 0.0
  %1802 = vmatpush2.msra.mxu0 0.0
  %1803 = vmatprep.subr.mxu0 0.0
  %1804 = vmatpush2.msra.mxu0 0.0
  %1805 = vmatprep.subr.mxu0 0.0
  %1806 = vmatpush2.msra.mxu0 0.0
  %1807 = vmatprep.subr.mxu0 0.0
  %1808 = vmatpush2.msra.mxu0 0.0
  %1809 = vmatprep.subr.mxu0 0.0
  %1810 = vmatpush2.msra.mxu0 0.0
  %1811 = vmatprep.subr.mxu0 0.0
  %1812 = vmatpush2.msra.mxu0 0.0
  %1813 = vmatprep.mubr.f32.mxu0 0.0
  %1814 = vmatmul.mubr.f32.gmra.mxu0 %v90
  %v1815 = vpop.f32.mrf.mxu0
  %v1816 = vadd.f32 %v51, %v1815
  %v1817 = vpop.f32.mrf.mxu0
  %1818 = vmatprep.mubr.f32.mxu0 0.0
  %1819 = vmatmul.mubr.f32.gmra.mxu0 %v93
  %v1820 = vpop.f32.mrf.mxu0
  %v1821 = vadd.f32 %v56, %v1820
  %v1822 = vpop.f32.mrf.mxu0
  %1823 = vmatprep.mubr.f32.mxu0 0.0
  %1824 = vmatmul.mubr.f32.gmra.mxu0 %v96
  %v1825 = vpop.f32.mrf.mxu0
  %v1826 = vadd.f32 %v61, %v1825
  %v1827 = vpop.f32.mrf.mxu0
  %1828 = vmatprep.mubr.f32.mxu0 0.0
  %1829 = vmatmul.mubr.f32.gmra.mxu0 %v99
  %v1830 = vpop.f32.mrf.mxu0
  %v1831 = vadd.f32 %v66, %v1830
  %v1832 = vpop.f32.mrf.mxu0
  %1833 = vmatprep.mubr.f32.mxu0 0.0
  %1834 = vmatmul.mubr.f32.gmra.mxu0 %v102
  %v1835 = vpop.f32.mrf.mxu0
  %v1836 = vadd.f32 %v71, %v1835
  %v1837 = vpop.f32.mrf.mxu0
  %1838 = vmatprep.mubr.f32.mxu0 0.0
  %1839 = vmatmul.mubr.f32.gmra.mxu0 %v105
  %v1840 = vpop.f32.mrf.mxu0
  %v1841 = vadd.f32 %v76, %v1840
  %v1842 = vpop.f32.mrf.mxu0
  %1843 = vmatprep.mubr.f32.mxu0 0.0
  %1844 = vmatmul.mubr.f32.gmra.mxu0 %v108
  %v1845 = vpop.f32.mrf.mxu0
  %v1846 = vadd.f32 %v81, %v1845
  %v1847 = vpop.f32.mrf.mxu0
  %1848 = vmatprep.mubr.f32.mxu0 0.0
  %1849 = vmatmul.mubr.f32.gmra.mxu0 %v111
  %v1850 = vpop.f32.mrf.mxu0
  %v1851 = vadd.f32 %v86, %v1850
  %v1852 = vpop.f32.mrf.mxu0
  %1853 = vdwg.mxu0
  %v1854 = vmax.f32 %v1816, 0.0
  %v1855 = vmax.f32 %v1821, 0.0
  %v1856 = vmax.f32 %v1826, 0.0
  %v1857 = vmax.f32 %v1831, 0.0
  %v1858 = vmax.f32 %v1836, 0.0
  %v1859 = vmax.f32 %v1841, 0.0
  %v1860 = vmax.f32 %v1846, 0.0
  %v1861 = vmax.f32 %v1851, 0.0
  %1862 = vst [vmem:[#allocation2 + $0x300] sm:$0xff] %v1854
  %1863 = vst [vmem:[#allocation2 + $0x308] sm:$0xff] %v1855
  %1864 = vst [vmem:[#allocation2 + $0x310] sm:$0xff] %v1856
  %1865 = vst [vmem:[#allocation2 + $0x318] sm:$0xff] %v1857
  %1866 = vst [vmem:[#allocation2 + $0x320] sm:$0xff] %v1858
  %1867 = vst [vmem:[#allocation2 + $0x328] sm:$0xff] %v1859
  %1868 = vst [vmem:[#allocation2 + $0x330] sm:$0xff] %v1860
  %1869 = vst [vmem:[#allocation2 + $0x338] sm:$0xff] %v1861
  %v1870 = vld [vmem:[%s0 + $0x3a8] sm:$0xff]
  %v1871 = vld [vmem:[%s0 + $0x3b0] sm:$0xff]
  %v1872 = vld [vmem:[%s0 + $0x3b8] sm:$0xff]
  %v1873 = vld [vmem:[%s0 + $0x3c0] sm:$0xff]
  %v1874 = vld [vmem:[%s0 + $0x3c8] sm:$0xff]
  %v1875 = vld [vmem:[%s0 + $0x3d0] sm:$0xff]
  %v1876 = vld [vmem:[%s0 + $0x3d8] sm:$0xff]
  %v1877 = vld [vmem:[%s0 + $0x3e0] sm:$0xff]
  %v1878 = vld [vmem:[%s0 + $0x3e8] sm:$0xff]
  %v1879 = vld [vmem:[%s0 + $0x3f0] sm:$0xff]
  %v1880 = vld [vmem:[%s0 + $0x3f8] sm:$0xff]
  %v1881 = vld [vmem:[%s0 + $0x400] sm:$0x1f]
  %v1883 = vsel %vm113, %v1881, 0
  %1885 = vmatprep.subr.mxu0 0.0
  %1886 = vmatpush1.msra.mxu0 0.0
  %1887 = vmatprep.subr.mxu0 0.0
  %1888 = vmatpush1.msra.mxu0 0.0
  %1889 = vmatprep.subr.mxu0 0.0
  %1890 = vmatpush1.msra.mxu0 0.0
  %1891 = vmatprep.subr.mxu0 0.0
  %1892 = vmatpush1.msra.mxu0 0.0
  %1893 = vmatprep.subr.mxu0 0.0
  %1894 = vmatpush1.msra.mxu0 %v1883
  %1895 = vmatprep.subr.mxu0 0.0
  %1896 = vmatpush1.msra.mxu0 %v1880
  %1897 = vmatprep.subr.mxu0 0.0
  %1898 = vmatpush1.msra.mxu0 %v1879
  %1899 = vmatprep.subr.mxu0 0.0
  %1900 = vmatpush1.msra.mxu0 %v1878
  %1901 = vmatprep.subr.mxu0 0.0
  %1902 = vmatpush1.msra.mxu0 %v1877
  %1903 = vmatprep.subr.mxu0 0.0
  %1904 = vmatpush1.msra.mxu0 %v1876
  %1905 = vmatprep.subr.mxu0 0.0
  %1906 = vmatpush1.msra.mxu0 %v1875
  %1907 = vmatprep.subr.mxu0 0.0
  %1908 = vmatpush1.msra.mxu0 %v1874
  %1909 = vmatprep.subr.mxu0 0.0
  %1910 = vmatpush1.msra.mxu0 %v1873
  %1911 = vmatprep.subr.mxu0 0.0
  %1912 = vmatpush1.msra.mxu0 %v1872
  %1913 = vmatprep.subr.mxu0 0.0
  %1914 = vmatpush1.msra.mxu0 %v1871
  %1915 = vmatprep.subr.mxu0 0.0
  %1916 = vmatpush1.msra.mxu0 %v1870
  %1917 = vmatprep.subr.mxu0 0.0
  %1918 = vmatpush2.msra.mxu0 0.0
  %1919 = vmatprep.subr.mxu0 0.0
  %1920 = vmatpush2.msra.mxu0 0.0
  %1921 = vmatprep.subr.mxu0 0.0
  %1922 = vmatpush2.msra.mxu0 0.0
  %1923 = vmatprep.subr.mxu0 0.0
  %1924 = vmatpush2.msra.mxu0 0.0
  %1925 = vmatprep.subr.mxu0 0.0
  %1926 = vmatpush2.msra.mxu0 0.0
  %1927 = vmatprep.subr.mxu0 0.0
  %1928 = vmatpush2.msra.mxu0 0.0
  %1929 = vmatprep.subr.mxu0 0.0
  %1930 = vmatpush2.msra.mxu0 0.0
  %1931 = vmatprep.subr.mxu0 0.0
  %1932 = vmatpush2.msra.mxu0 0.0
  %1933 = vmatprep.subr.mxu0 0.0
  %1934 = vmatpush2.msra.mxu0 0.0
  %1935 = vmatprep.subr.mxu0 0.0
  %1936 = vmatpush2.msra.mxu0 0.0
  %1937 = vmatprep.subr.mxu0 0.0
  %1938 = vmatpush2.msra.mxu0 0.0
  %1939 = vmatprep.subr.mxu0 0.0
  %1940 = vmatpush2.msra.mxu0 0.0
  %1941 = vmatprep.subr.mxu0 0.0
  %1942 = vmatpush2.msra.mxu0 0.0
  %1943 = vmatprep.subr.mxu0 0.0
  %1944 = vmatpush2.msra.mxu0 0.0
  %1945 = vmatprep.subr.mxu0 0.0
  %1946 = vmatpush2.msra.mxu0 0.0
  %1947 = vmatprep.subr.mxu0 0.0
  %1948 = vmatpush2.msra.mxu0 0.0
  %1949 = vmatprep.mubr.f32.mxu0 0.0
  %1950 = vmatmul.mubr.f32.gmra.mxu0 %v90
  %v1951 = vpop.f32.mrf.mxu0
  %v1952 = vadd.f32 %v51, %v1951
  %v1953 = vpop.f32.mrf.mxu0
  %1954 = vmatprep.mubr.f32.mxu0 0.0
  %1955 = vmatmul.mubr.f32.gmra.mxu0 %v93
  %v1956 = vpop.f32.mrf.mxu0
  %v1957 = vadd.f32 %v56, %v1956
  %v1958 = vpop.f32.mrf.mxu0
  %1959 = vmatprep.mubr.f32.mxu0 0.0
  %1960 = vmatmul.mubr.f32.gmra.mxu0 %v96
  %v1961 = vpop.f32.mrf.mxu0
  %v1962 = vadd.f32 %v61, %v1961
  %v1963 = vpop.f32.mrf.mxu0
  %1964 = vmatprep.mubr.f32.mxu0 0.0
  %1965 = vmatmul.mubr.f32.gmra.mxu0 %v99
  %v1966 = vpop.f32.mrf.mxu0
  %v1967 = vadd.f32 %v66, %v1966
  %v1968 = vpop.f32.mrf.mxu0
  %1969 = vmatprep.mubr.f32.mxu0 0.0
  %1970 = vmatmul.mubr.f32.gmra.mxu0 %v102
  %v1971 = vpop.f32.mrf.mxu0
  %v1972 = vadd.f32 %v71, %v1971
  %v1973 = vpop.f32.mrf.mxu0
  %1974 = vmatprep.mubr.f32.mxu0 0.0
  %1975 = vmatmul.mubr.f32.gmra.mxu0 %v105
  %v1976 = vpop.f32.mrf.mxu0
  %v1977 = vadd.f32 %v76, %v1976
  %v1978 = vpop.f32.mrf.mxu0
  %1979 = vmatprep.mubr.f32.mxu0 0.0
  %1980 = vmatmul.mubr.f32.gmra.mxu0 %v108
  %v1981 = vpop.f32.mrf.mxu0
  %v1982 = vadd.f32 %v81, %v1981
  %v1983 = vpop.f32.mrf.mxu0
  %1984 = vmatprep.mubr.f32.mxu0 0.0
  %1985 = vmatmul.mubr.f32.gmra.mxu0 %v111
  %v1986 = vpop.f32.mrf.mxu0
  %v1987 = vadd.f32 %v86, %v1986
  %v1988 = vpop.f32.mrf.mxu0
  %1989 = vdwg.mxu0
  %v1990 = vmax.f32 %v1952, 0.0
  %v1991 = vmax.f32 %v1957, 0.0
  %v1992 = vmax.f32 %v1962, 0.0
  %v1993 = vmax.f32 %v1967, 0.0
  %v1994 = vmax.f32 %v1972, 0.0
  %v1995 = vmax.f32 %v1977, 0.0
  %v1996 = vmax.f32 %v1982, 0.0
  %v1997 = vmax.f32 %v1987, 0.0
  %1998 = vst [vmem:[#allocation2 + $0x340] sm:$0xff] %v1990
  %1999 = vst [vmem:[#allocation2 + $0x348] sm:$0xff] %v1991
  %2000 = vst [vmem:[#allocation2 + $0x350] sm:$0xff] %v1992
  %2001 = vst [vmem:[#allocation2 + $0x358] sm:$0xff] %v1993
  %2002 = vst [vmem:[#allocation2 + $0x360] sm:$0xff] %v1994
  %2003 = vst [vmem:[#allocation2 + $0x368] sm:$0xff] %v1995
  %2004 = vst [vmem:[#allocation2 + $0x370] sm:$0xff] %v1996
  %2005 = vst [vmem:[#allocation2 + $0x378] sm:$0xff] %v1997
  %v2006 = vld [vmem:[%s3] sm:$0xff]
  %v2007 = vld [vmem:[%s3 + $0x8] sm:$0xff]
  %v2008 = vld [vmem:[%s3 + $0x10] sm:$0xff]
  %v2009 = vld [vmem:[%s3 + $0x18] sm:$0xff]
  %v2010 = vld [vmem:[%s3 + $0x20] sm:$0xff]
  %v2011 = vld [vmem:[%s3 + $0x28] sm:$0xff]
  %v2012 = vld [vmem:[%s3 + $0x30] sm:$0xff]
  %v2013 = vld [vmem:[%s3 + $0x38] sm:$0xff]
  %v2014 = vld [vmem:[%s3 + $0x40] sm:$0xff]
  %v2015 = vld [vmem:[%s3 + $0x48] sm:$0xff]
  %v2016 = vld [vmem:[%s3 + $0x50] sm:$0xff]
  %v2017 = vld [vmem:[%s3 + $0x58] sm:$0xff]
  %v2018 = vld [vmem:[%s3 + $0x60] sm:$0xff]
  %v2019 = vld [vmem:[%s3 + $0x68] sm:$0xff]
  %v2020 = vld [vmem:[%s3 + $0x70] sm:$0xff]
  %v2021 = vld [vmem:[%s3 + $0x78] sm:$0xff]
  %v2022 = vld [vmem:[%s4] sm:$0xff]
  %v2023 = vld [vmem:[%s4 + $0x8] sm:$0xff]
  %v2024 = vld [vmem:[%s4 + $0x10] sm:$0xff]
  %v2025 = vld [vmem:[%s4 + $0x18] sm:$0xff]
  %v2026 = vld [vmem:[%s4 + $0x20] sm:$0xff]
  %v2027 = vld [vmem:[%s4 + $0x28] sm:$0xff]
  %v2028 = vld [vmem:[%s4 + $0x30] sm:$0xff]
  %v2029 = vld [vmem:[%s4 + $0x38] sm:$0xff]
  %v2030 = vld [vmem:[#allocation2] sm:$0xff]
  %v2031 = vld [vmem:[#allocation2 + $0x8] sm:$0xff]
  %v2032 = vld [vmem:[#allocation2 + $0x10] sm:$0xff]
  %v2033 = vld [vmem:[#allocation2 + $0x18] sm:$0xff]
  %v2034 = vld [vmem:[#allocation2 + $0x20] sm:$0xff]
  %v2035 = vld [vmem:[#allocation2 + $0x28] sm:$0xff]
  %v2036 = vld [vmem:[#allocation2 + $0x30] sm:$0xff]
  %v2037 = vld [vmem:[#allocation2 + $0x38] sm:$0xff]
  %v2038 = vld [vmem:[#allocation2 + $0x40] sm:$0xff]
  %v2039 = vld [vmem:[#allocation2 + $0x48] sm:$0xff]
  %v2040 = vld [vmem:[#allocation2 + $0x50] sm:$0xff]
  %v2041 = vld [vmem:[#allocation2 + $0x58] sm:$0xff]
  %v2042 = vld [vmem:[#allocation2 + $0x60] sm:$0xff]
  %v2043 = vld [vmem:[#allocation2 + $0x68] sm:$0xff]
  %v2044 = vld [vmem:[#allocation2 + $0x70] sm:$0xff]
  %v2045 = vld [vmem:[#allocation2 + $0x78] sm:$0xff]
  %v2046 = vld [vmem:[#allocation2 + $0x80] sm:$0xff]
  %v2047 = vld [vmem:[#allocation2 + $0x88] sm:$0xff]
  %v2048 = vld [vmem:[#allocation2 + $0x90] sm:$0xff]
  %v2049 = vld [vmem:[#allocation2 + $0x98] sm:$0xff]
  %v2050 = vld [vmem:[#allocation2 + $0xa0] sm:$0xff]
  %v2051 = vld [vmem:[#allocation2 + $0xa8] sm:$0xff]
  %v2052 = vld [vmem:[#allocation2 + $0xb0] sm:$0xff]
  %v2053 = vld [vmem:[#allocation2 + $0xb8] sm:$0xff]
  %v2054 = vld [vmem:[#allocation2 + $0xc0] sm:$0xff]
  %2056 = vset.pattern.permute.xlu0 0
  %2057 = vperm.xlu0 %2056, %v2022
  %v2058 = vpop.permute.xlu0 %2057
  %2061 = vset.pattern.permute.xlu0 0
  %2062 = vperm.xlu0 %2061, %v2023
  %v2063 = vpop.permute.xlu0 %2062
  %2066 = vset.pattern.permute.xlu0 0
  %2067 = vperm.xlu0 %2066, %v2024
  %v2068 = vpop.permute.xlu0 %2067
  %2071 = vset.pattern.permute.xlu0 0
  %2072 = vperm.xlu0 %2071, %v2025
  %v2073 = vpop.permute.xlu0 %2072
  %2076 = vset.pattern.permute.xlu0 0
  %2077 = vperm.xlu0 %2076, %v2026
  %v2078 = vpop.permute.xlu0 %2077
  %2081 = vset.pattern.permute.xlu0 0
  %2082 = vperm.xlu0 %2081, %v2027
  %v2083 = vpop.permute.xlu0 %2082
  %2086 = vset.pattern.permute.xlu0 0
  %2087 = vperm.xlu0 %2086, %v2028
  %v2088 = vpop.permute.xlu0 %2087
  %2091 = vset.pattern.permute.xlu0 0
  %2092 = vperm.xlu0 %2091, %v2029
  %v2093 = vpop.permute.xlu0 %2092
  %vm2095 = vcmask 588800
  %v2097 = vsel %vm2095, %v2007, 0
  %v2100 = vsel %vm2095, %v2009, 0
  %v2103 = vsel %vm2095, %v2011, 0
  %v2106 = vsel %vm2095, %v2013, 0
  %v2109 = vsel %vm2095, %v2015, 0
  %v2112 = vsel %vm2095, %v2017, 0
  %v2115 = vsel %vm2095, %v2019, 0
  %v2118 = vsel %vm2095, %v2021, 0
  %2120 = vmatprep.subr.mxu0 0.0
  %2121 = vmatpush1.msra.mxu0 %v2045
  %2122 = vmatprep.subr.mxu0 0.0
  %2123 = vmatpush1.msra.mxu0 %v2044
  %2124 = vmatprep.subr.mxu0 0.0
  %2125 = vmatpush1.msra.mxu0 %v2043
  %2126 = vmatprep.subr.mxu0 0.0
  %2127 = vmatpush1.msra.mxu0 %v2042
  %2128 = vmatprep.subr.mxu0 0.0
  %2129 = vmatpush1.msra.mxu0 %v2041
  %2130 = vmatprep.subr.mxu0 0.0
  %2131 = vmatpush1.msra.mxu0 %v2040
  %2132 = vmatprep.subr.mxu0 0.0
  %2133 = vmatpush1.msra.mxu0 %v2039
  %2134 = vmatprep.subr.mxu0 0.0
  %2135 = vmatpush1.msra.mxu0 %v2038
  %2136 = vmatprep.subr.mxu0 0.0
  %2137 = vmatpush1.msra.mxu0 %v2037
  %2138 = vmatprep.subr.mxu0 0.0
  %2139 = vmatpush1.msra.mxu0 %v2036
  %2140 = vmatprep.subr.mxu0 0.0
  %2141 = vmatpush1.msra.mxu0 %v2035
  %2142 = vmatprep.subr.mxu0 0.0
  %2143 = vmatpush1.msra.mxu0 %v2034
  %2144 = vmatprep.subr.mxu0 0.0
  %2145 = vmatpush1.msra.mxu0 %v2033
  %2146 = vmatprep.subr.mxu0 0.0
  %2147 = vmatpush1.msra.mxu0 %v2032
  %2148 = vmatprep.subr.mxu0 0.0
  %2149 = vmatpush1.msra.mxu0 %v2031
  %2150 = vmatprep.subr.mxu0 0.0
  %2151 = vmatpush1.msra.mxu0 %v2030
  %2152 = vmatprep.subr.mxu0 0.0
  %2153 = vmatpush2.msra.mxu0 0.0
  %2154 = vmatprep.subr.mxu0 0.0
  %2155 = vmatpush2.msra.mxu0 0.0
  %2156 = vmatprep.subr.mxu0 0.0
  %2157 = vmatpush2.msra.mxu0 0.0
  %2158 = vmatprep.subr.mxu0 0.0
  %2159 = vmatpush2.msra.mxu0 0.0
  %2160 = vmatprep.subr.mxu0 0.0
  %2161 = vmatpush2.msra.mxu0 0.0
  %2162 = vmatprep.subr.mxu0 0.0
  %2163 = vmatpush2.msra.mxu0 0.0
  %2164 = vmatprep.subr.mxu0 0.0
  %2165 = vmatpush2.msra.mxu0 0.0
  %2166 = vmatprep.subr.mxu0 0.0
  %2167 = vmatpush2.msra.mxu0 %v2054
  %2168 = vmatprep.subr.mxu0 0.0
  %2169 = vmatpush2.msra.mxu0 %v2053
  %2170 = vmatprep.subr.mxu0 0.0
  %2171 = vmatpush2.msra.mxu0 %v2052
  %2172 = vmatprep.subr.mxu0 0.0
  %2173 = vmatpush2.msra.mxu0 %v2051
  %2174 = vmatprep.subr.mxu0 0.0
  %2175 = vmatpush2.msra.mxu0 %v2050
  %2176 = vmatprep.subr.mxu0 0.0
  %2177 = vmatpush2.msra.mxu0 %v2049
  %2178 = vmatprep.subr.mxu0 0.0
  %2179 = vmatpush2.msra.mxu0 %v2048
  %2180 = vmatprep.subr.mxu0 0.0
  %2181 = vmatpush2.msra.mxu0 %v2047
  %2182 = vmatprep.subr.mxu0 0.0
  %2183 = vmatpush2.msra.mxu0 %v2046
  %2184 = vmatprep.mubr.f32.mxu0 %v2097
  %2185 = vmatmul.mubr.f32.gmra.mxu0 %v2006
  %v2186 = vpop.f32.mrf.mxu0
  %v2187 = vadd.f32 %v2058, %v2186
  %v2188 = vpop.f32.mrf.mxu0
  %2189 = vmatprep.mubr.f32.mxu0 %v2100
  %2190 = vmatmul.mubr.f32.gmra.mxu0 %v2008
  %v2191 = vpop.f32.mrf.mxu0
  %v2192 = vadd.f32 %v2063, %v2191
  %v2193 = vpop.f32.mrf.mxu0
  %2194 = vmatprep.mubr.f32.mxu0 %v2103
  %2195 = vmatmul.mubr.f32.gmra.mxu0 %v2010
  %v2196 = vpop.f32.mrf.mxu0
  %v2197 = vadd.f32 %v2068, %v2196
  %v2198 = vpop.f32.mrf.mxu0
  %2199 = vmatprep.mubr.f32.mxu0 %v2106
  %2200 = vmatmul.mubr.f32.gmra.mxu0 %v2012
  %v2201 = vpop.f32.mrf.mxu0
  %v2202 = vadd.f32 %v2073, %v2201
  %v2203 = vpop.f32.mrf.mxu0
  %2204 = vmatprep.mubr.f32.mxu0 %v2109
  %2205 = vmatmul.mubr.f32.gmra.mxu0 %v2014
  %v2206 = vpop.f32.mrf.mxu0
  %v2207 = vadd.f32 %v2078, %v2206
  %v2208 = vpop.f32.mrf.mxu0
  %2209 = vmatprep.mubr.f32.mxu0 %v2112
  %2210 = vmatmul.mubr.f32.gmra.mxu0 %v2016
  %v2211 = vpop.f32.mrf.mxu0
  %v2212 = vadd.f32 %v2083, %v2211
  %v2213 = vpop.f32.mrf.mxu0
  %2214 = vmatprep.mubr.f32.mxu0 %v2115
  %2215 = vmatmul.mubr.f32.gmra.mxu0 %v2018
  %v2216 = vpop.f32.mrf.mxu0
  %v2217 = vadd.f32 %v2088, %v2216
  %v2218 = vpop.f32.mrf.mxu0
  %2219 = vmatprep.mubr.f32.mxu0 %v2118
  %2220 = vmatmul.mubr.f32.gmra.mxu0 %v2020
  %v2221 = vpop.f32.mrf.mxu0
  %v2222 = vadd.f32 %v2093, %v2221
  %v2223 = vpop.f32.mrf.mxu0
  %2224 = vdwg.mxu0
  %v2225 = vmax.f32 %v2187, 0.0
  %v2226 = vmax.f32 %v2192, 0.0
  %v2227 = vmax.f32 %v2197, 0.0
  %v2228 = vmax.f32 %v2202, 0.0
  %v2229 = vmax.f32 %v2207, 0.0
  %v2230 = vmax.f32 %v2212, 0.0
  %v2231 = vmax.f32 %v2217, 0.0
  %v2232 = vmax.f32 %v2222, 0.0
  %vm2233 = vcmask 523264
  %2234 = vst.msk [vmem:[%s5] sm:$0xff] %vm2233, %v2225
  %2235 = vst.msk [vmem:[%s5 + $0x8] sm:$0xff] %vm2233, %v2226
  %2236 = vst.msk [vmem:[%s5 + $0x10] sm:$0xff] %vm2233, %v2227
  %2237 = vst.msk [vmem:[%s5 + $0x18] sm:$0xff] %vm2233, %v2228
  %2238 = vst.msk [vmem:[%s5 + $0x20] sm:$0xff] %vm2233, %v2229
  %2239 = vst.msk [vmem:[%s5 + $0x28] sm:$0xff] %vm2233, %v2230
  %2240 = vst.msk [vmem:[%s5 + $0x30] sm:$0xff] %vm2233, %v2231
  %2241 = vst.msk [vmem:[%s5 + $0x38] sm:$0xff] %vm2233, %v2232
  %2250 = vrot.lane.b32.xlu0 %v2225, 64
  %v2251 = vpop.permute.xlu0 %2250
  %2252 = vrot.lane.b32.xlu0 %v2226, 64
  %v2253 = vpop.permute.xlu0 %2252
  %2254 = vrot.lane.b32.xlu0 %v2227, 64
  %v2255 = vpop.permute.xlu0 %2254
  %2256 = vrot.lane.b32.xlu0 %v2228, 64
  %v2257 = vpop.permute.xlu0 %2256
  %2258 = vrot.lane.b32.xlu0 %v2229, 64
  %v2259 = vpop.permute.xlu0 %2258
  %2260 = vrot.lane.b32.xlu0 %v2230, 64
  %v2261 = vpop.permute.xlu0 %2260
  %2262 = vrot.lane.b32.xlu0 %v2231, 64
  %v2263 = vpop.permute.xlu0 %2262
  %2264 = vrot.lane.b32.xlu0 %v2232, 64
  %v2265 = vpop.permute.xlu0 %2264
  %s2274 = scalar_lea.vmem %s5, 320
  %2275 = vst.msk [vmem:[%s2274] sm:$0xff] %vm2233, %v2251
  %2276 = vst.msk [vmem:[%s2274 + $0x8] sm:$0xff] %vm2233, %v2253
  %2277 = vst.msk [vmem:[%s2274 + $0x10] sm:$0xff] %vm2233, %v2255
  %2278 = vst.msk [vmem:[%s2274 + $0x18] sm:$0xff] %vm2233, %v2257
  %2279 = vst.msk [vmem:[%s2274 + $0x20] sm:$0xff] %vm2233, %v2259
  %2280 = vst.msk [vmem:[%s2274 + $0x28] sm:$0xff] %vm2233, %v2261
  %2281 = vst.msk [vmem:[%s2274 + $0x30] sm:$0xff] %vm2233, %v2263
  %2282 = vst.msk [vmem:[%s2274 + $0x38] sm:$0xff] %vm2233, %v2265
  %v2283 = vld [vmem:[#allocation2 + $0xa0] sm:$0xff]
  %v2284 = vld [vmem:[#allocation2 + $0xa8] sm:$0xff]
  %v2285 = vld [vmem:[#allocation2 + $0xb0] sm:$0xff]
  %v2286 = vld [vmem:[#allocation2 + $0xb8] sm:$0xff]
  %v2287 = vld [vmem:[#allocation2 + $0xc0] sm:$0xff]
  %v2288 = vld [vmem:[#allocation2 + $0xc8] sm:$0xff]
  %v2289 = vld [vmem:[#allocation2 + $0xd0] sm:$0xff]
  %v2290 = vld [vmem:[#allocation2 + $0xd8] sm:$0xff]
  %v2291 = vld [vmem:[#allocation2 + $0xe0] sm:$0xff]
  %v2292 = vld [vmem:[#allocation2 + $0xe8] sm:$0xff]
  %v2293 = vld [vmem:[#allocation2 + $0xf0] sm:$0xff]
  %v2294 = vld [vmem:[#allocation2 + $0xf8] sm:$0xff]
  %v2295 = vld [vmem:[#allocation2 + $0x100] sm:$0xff]
  %v2296 = vld [vmem:[#allocation2 + $0x108] sm:$0xff]
  %v2297 = vld [vmem:[#allocation2 + $0x110] sm:$0xff]
  %v2298 = vld [vmem:[#allocation2 + $0x118] sm:$0xff]
  %v2299 = vld [vmem:[#allocation2 + $0x120] sm:$0xff]
  %v2300 = vld [vmem:[#allocation2 + $0x128] sm:$0xff]
  %v2301 = vld [vmem:[#allocation2 + $0x130] sm:$0xff]
  %v2302 = vld [vmem:[#allocation2 + $0x138] sm:$0xff]
  %v2303 = vld [vmem:[#allocation2 + $0x140] sm:$0xff]
  %v2304 = vld [vmem:[#allocation2 + $0x148] sm:$0xff]
  %v2305 = vld [vmem:[#allocation2 + $0x150] sm:$0xff]
  %v2306 = vld [vmem:[#allocation2 + $0x158] sm:$0xff]
  %v2307 = vld [vmem:[#allocation2 + $0x160] sm:$0xff]
  %2308 = vmatprep.subr.mxu0 0.0
  %2309 = vmatpush1.msra.mxu0 %v2298
  %2310 = vmatprep.subr.mxu0 0.0
  %2311 = vmatpush1.msra.mxu0 %v2297
  %2312 = vmatprep.subr.mxu0 0.0
  %2313 = vmatpush1.msra.mxu0 %v2296
  %2314 = vmatprep.subr.mxu0 0.0
  %2315 = vmatpush1.msra.mxu0 %v2295
  %2316 = vmatprep.subr.mxu0 0.0
  %2317 = vmatpush1.msra.mxu0 %v2294
  %2318 = vmatprep.subr.mxu0 0.0
  %2319 = vmatpush1.msra.mxu0 %v2293
  %2320 = vmatprep.subr.mxu0 0.0
  %2321 = vmatpush1.msra.mxu0 %v2292
  %2322 = vmatprep.subr.mxu0 0.0
  %2323 = vmatpush1.msra.mxu0 %v2291
  %2324 = vmatprep.subr.mxu0 0.0
  %2325 = vmatpush1.msra.mxu0 %v2290
  %2326 = vmatprep.subr.mxu0 0.0
  %2327 = vmatpush1.msra.mxu0 %v2289
  %2328 = vmatprep.subr.mxu0 0.0
  %2329 = vmatpush1.msra.mxu0 %v2288
  %2330 = vmatprep.subr.mxu0 0.0
  %2331 = vmatpush1.msra.mxu0 %v2287
  %2332 = vmatprep.subr.mxu0 0.0
  %2333 = vmatpush1.msra.mxu0 %v2286
  %2334 = vmatprep.subr.mxu0 0.0
  %2335 = vmatpush1.msra.mxu0 %v2285
  %2336 = vmatprep.subr.mxu0 0.0
  %2337 = vmatpush1.msra.mxu0 %v2284
  %2338 = vmatprep.subr.mxu0 0.0
  %2339 = vmatpush1.msra.mxu0 %v2283
  %2340 = vmatprep.subr.mxu0 0.0
  %2341 = vmatpush2.msra.mxu0 0.0
  %2342 = vmatprep.subr.mxu0 0.0
  %2343 = vmatpush2.msra.mxu0 0.0
  %2344 = vmatprep.subr.mxu0 0.0
  %2345 = vmatpush2.msra.mxu0 0.0
  %2346 = vmatprep.subr.mxu0 0.0
  %2347 = vmatpush2.msra.mxu0 0.0
  %2348 = vmatprep.subr.mxu0 0.0
  %2349 = vmatpush2.msra.mxu0 0.0
  %2350 = vmatprep.subr.mxu0 0.0
  %2351 = vmatpush2.msra.mxu0 0.0
  %2352 = vmatprep.subr.mxu0 0.0
  %2353 = vmatpush2.msra.mxu0 0.0
  %2354 = vmatprep.subr.mxu0 0.0
  %2355 = vmatpush2.msra.mxu0 %v2307
  %2356 = vmatprep.subr.mxu0 0.0
  %2357 = vmatpush2.msra.mxu0 %v2306
  %2358 = vmatprep.subr.mxu0 0.0
  %2359 = vmatpush2.msra.mxu0 %v2305
  %2360 = vmatprep.subr.mxu0 0.0
  %2361 = vmatpush2.msra.mxu0 %v2304
  %2362 = vmatprep.subr.mxu0 0.0
  %2363 = vmatpush2.msra.mxu0 %v2303
  %2364 = vmatprep.subr.mxu0 0.0
  %2365 = vmatpush2.msra.mxu0 %v2302
  %2366 = vmatprep.subr.mxu0 0.0
  %2367 = vmatpush2.msra.mxu0 %v2301
  %2368 = vmatprep.subr.mxu0 0.0
  %2369 = vmatpush2.msra.mxu0 %v2300
  %2370 = vmatprep.subr.mxu0 0.0
  %2371 = vmatpush2.msra.mxu0 %v2299
  %2372 = vmatprep.mubr.f32.mxu0 %v2097
  %2373 = vmatmul.mubr.f32.gmra.mxu0 %v2006
  %v2374 = vpop.f32.mrf.mxu0
  %v2375 = vadd.f32 %v2058, %v2374
  %v2376 = vpop.f32.mrf.mxu0
  %2377 = vmatprep.mubr.f32.mxu0 %v2100
  %2378 = vmatmul.mubr.f32.gmra.mxu0 %v2008
  %v2379 = vpop.f32.mrf.mxu0
  %v2380 = vadd.f32 %v2063, %v2379
  %v2381 = vpop.f32.mrf.mxu0
  %2382 = vmatprep.mubr.f32.mxu0 %v2103
  %2383 = vmatmul.mubr.f32.gmra.mxu0 %v2010
  %v2384 = vpop.f32.mrf.mxu0
  %v2385 = vadd.f32 %v2068, %v2384
  %v2386 = vpop.f32.mrf.mxu0
  %2387 = vmatprep.mubr.f32.mxu0 %v2106
  %2388 = vmatmul.mubr.f32.gmra.mxu0 %v2012
  %v2389 = vpop.f32.mrf.mxu0
  %v2390 = vadd.f32 %v2073, %v2389
  %v2391 = vpop.f32.mrf.mxu0
  %2392 = vmatprep.mubr.f32.mxu0 %v2109
  %2393 = vmatmul.mubr.f32.gmra.mxu0 %v2014
  %v2394 = vpop.f32.mrf.mxu0
  %v2395 = vadd.f32 %v2078, %v2394
  %v2396 = vpop.f32.mrf.mxu0
  %2397 = vmatprep.mubr.f32.mxu0 %v2112
  %2398 = vmatmul.mubr.f32.gmra.mxu0 %v2016
  %v2399 = vpop.f32.mrf.mxu0
  %v2400 = vadd.f32 %v2083, %v2399
  %v2401 = vpop.f32.mrf.mxu0
  %2402 = vmatprep.mubr.f32.mxu0 %v2115
  %2403 = vmatmul.mubr.f32.gmra.mxu0 %v2018
  %v2404 = vpop.f32.mrf.mxu0
  %v2405 = vadd.f32 %v2088, %v2404
  %v2406 = vpop.f32.mrf.mxu0
  %2407 = vmatprep.mubr.f32.mxu0 %v2118
  %2408 = vmatmul.mubr.f32.gmra.mxu0 %v2020
  %v2409 = vpop.f32.mrf.mxu0
  %v2410 = vadd.f32 %v2093, %v2409
  %v2411 = vpop.f32.mrf.mxu0
  %2412 = vdwg.mxu0
  %v2413 = vmax.f32 %v2375, 0.0
  %v2414 = vmax.f32 %v2380, 0.0
  %v2415 = vmax.f32 %v2385, 0.0
  %v2416 = vmax.f32 %v2390, 0.0
  %v2417 = vmax.f32 %v2395, 0.0
  %v2418 = vmax.f32 %v2400, 0.0
  %v2419 = vmax.f32 %v2405, 0.0
  %v2420 = vmax.f32 %v2410, 0.0
  %2421 = vst.msk [vmem:[%s5 + $0x40] sm:$0xff] %vm2233, %v2413
  %2422 = vst.msk [vmem:[%s5 + $0x48] sm:$0xff] %vm2233, %v2414
  %2423 = vst.msk [vmem:[%s5 + $0x50] sm:$0xff] %vm2233, %v2415
  %2424 = vst.msk [vmem:[%s5 + $0x58] sm:$0xff] %vm2233, %v2416
  %2425 = vst.msk [vmem:[%s5 + $0x60] sm:$0xff] %vm2233, %v2417
  %2426 = vst.msk [vmem:[%s5 + $0x68] sm:$0xff] %vm2233, %v2418
  %2427 = vst.msk [vmem:[%s5 + $0x70] sm:$0xff] %vm2233, %v2419
  %2428 = vst.msk [vmem:[%s5 + $0x78] sm:$0xff] %vm2233, %v2420
  %2437 = vrot.lane.b32.xlu0 %v2413, 64
  %v2438 = vpop.permute.xlu0 %2437
  %2439 = vrot.lane.b32.xlu0 %v2414, 64
  %v2440 = vpop.permute.xlu0 %2439
  %2441 = vrot.lane.b32.xlu0 %v2415, 64
  %v2442 = vpop.permute.xlu0 %2441
  %2443 = vrot.lane.b32.xlu0 %v2416, 64
  %v2444 = vpop.permute.xlu0 %2443
  %2445 = vrot.lane.b32.xlu0 %v2417, 64
  %v2446 = vpop.permute.xlu0 %2445
  %2447 = vrot.lane.b32.xlu0 %v2418, 64
  %v2448 = vpop.permute.xlu0 %2447
  %2449 = vrot.lane.b32.xlu0 %v2419, 64
  %v2450 = vpop.permute.xlu0 %2449
  %2451 = vrot.lane.b32.xlu0 %v2420, 64
  %v2452 = vpop.permute.xlu0 %2451
  %2461 = vst.msk [vmem:[%s2274 + $0x40] sm:$0xff] %vm2233, %v2438
  %2462 = vst.msk [vmem:[%s2274 + $0x48] sm:$0xff] %vm2233, %v2440
  %2463 = vst.msk [vmem:[%s2274 + $0x50] sm:$0xff] %vm2233, %v2442
  %2464 = vst.msk [vmem:[%s2274 + $0x58] sm:$0xff] %vm2233, %v2444
  %2465 = vst.msk [vmem:[%s2274 + $0x60] sm:$0xff] %vm2233, %v2446
  %2466 = vst.msk [vmem:[%s2274 + $0x68] sm:$0xff] %vm2233, %v2448
  %2467 = vst.msk [vmem:[%s2274 + $0x70] sm:$0xff] %vm2233, %v2450
  %2468 = vst.msk [vmem:[%s2274 + $0x78] sm:$0xff] %vm2233, %v2452
  %v2469 = vld [vmem:[#allocation2 + $0x140] sm:$0xff]
  %v2470 = vld [vmem:[#allocation2 + $0x148] sm:$0xff]
  %v2471 = vld [vmem:[#allocation2 + $0x150] sm:$0xff]
  %v2472 = vld [vmem:[#allocation2 + $0x158] sm:$0xff]
  %v2473 = vld [vmem:[#allocation2 + $0x160] sm:$0xff]
  %v2474 = vld [vmem:[#allocation2 + $0x168] sm:$0xff]
  %v2475 = vld [vmem:[#allocation2 + $0x170] sm:$0xff]
  %v2476 = vld [vmem:[#allocation2 + $0x178] sm:$0xff]
  %v2477 = vld [vmem:[#allocation2 + $0x180] sm:$0xff]
  %v2478 = vld [vmem:[#allocation2 + $0x188] sm:$0xff]
  %v2479 = vld [vmem:[#allocation2 + $0x190] sm:$0xff]
  %v2480 = vld [vmem:[#allocation2 + $0x198] sm:$0xff]
  %v2481 = vld [vmem:[#allocation2 + $0x1a0] sm:$0xff]
  %v2482 = vld [vmem:[#allocation2 + $0x1a8] sm:$0xff]
  %v2483 = vld [vmem:[#allocation2 + $0x1b0] sm:$0xff]
  %v2484 = vld [vmem:[#allocation2 + $0x1b8] sm:$0xff]
  %v2485 = vld [vmem:[#allocation2 + $0x1c0] sm:$0xff]
  %v2486 = vld [vmem:[#allocation2 + $0x1c8] sm:$0xff]
  %v2487 = vld [vmem:[#allocation2 + $0x1d0] sm:$0xff]
  %v2488 = vld [vmem:[#allocation2 + $0x1d8] sm:$0xff]
  %v2489 = vld [vmem:[#allocation2 + $0x1e0] sm:$0xff]
  %v2490 = vld [vmem:[#allocation2 + $0x1e8] sm:$0xff]
  %v2491 = vld [vmem:[#allocation2 + $0x1f0] sm:$0xff]
  %v2492 = vld [vmem:[#allocation2 + $0x1f8] sm:$0xff]
  %v2493 = vld [vmem:[#allocation2 + $0x200] sm:$0xff]
  %2494 = vmatprep.subr.mxu0 0.0
  %2495 = vmatpush1.msra.mxu0 %v2484
  %2496 = vmatprep.subr.mxu0 0.0
  %2497 = vmatpush1.msra.mxu0 %v2483
  %2498 = vmatprep.subr.mxu0 0.0
  %2499 = vmatpush1.msra.mxu0 %v2482
  %2500 = vmatprep.subr.mxu0 0.0
  %2501 = vmatpush1.msra.mxu0 %v2481
  %2502 = vmatprep.subr.mxu0 0.0
  %2503 = vmatpush1.msra.mxu0 %v2480
  %2504 = vmatprep.subr.mxu0 0.0
  %2505 = vmatpush1.msra.mxu0 %v2479
  %2506 = vmatprep.subr.mxu0 0.0
  %2507 = vmatpush1.msra.mxu0 %v2478
  %2508 = vmatprep.subr.mxu0 0.0
  %2509 = vmatpush1.msra.mxu0 %v2477
  %2510 = vmatprep.subr.mxu0 0.0
  %2511 = vmatpush1.msra.mxu0 %v2476
  %2512 = vmatprep.subr.mxu0 0.0
  %2513 = vmatpush1.msra.mxu0 %v2475
  %2514 = vmatprep.subr.mxu0 0.0
  %2515 = vmatpush1.msra.mxu0 %v2474
  %2516 = vmatprep.subr.mxu0 0.0
  %2517 = vmatpush1.msra.mxu0 %v2473
  %2518 = vmatprep.subr.mxu0 0.0
  %2519 = vmatpush1.msra.mxu0 %v2472
  %2520 = vmatprep.subr.mxu0 0.0
  %2521 = vmatpush1.msra.mxu0 %v2471
  %2522 = vmatprep.subr.mxu0 0.0
  %2523 = vmatpush1.msra.mxu0 %v2470
  %2524 = vmatprep.subr.mxu0 0.0
  %2525 = vmatpush1.msra.mxu0 %v2469
  %2526 = vmatprep.subr.mxu0 0.0
  %2527 = vmatpush2.msra.mxu0 0.0
  %2528 = vmatprep.subr.mxu0 0.0
  %2529 = vmatpush2.msra.mxu0 0.0
  %2530 = vmatprep.subr.mxu0 0.0
  %2531 = vmatpush2.msra.mxu0 0.0
  %2532 = vmatprep.subr.mxu0 0.0
  %2533 = vmatpush2.msra.mxu0 0.0
  %2534 = vmatprep.subr.mxu0 0.0
  %2535 = vmatpush2.msra.mxu0 0.0
  %2536 = vmatprep.subr.mxu0 0.0
  %2537 = vmatpush2.msra.mxu0 0.0
  %2538 = vmatprep.subr.mxu0 0.0
  %2539 = vmatpush2.msra.mxu0 0.0
  %2540 = vmatprep.subr.mxu0 0.0
  %2541 = vmatpush2.msra.mxu0 %v2493
  %2542 = vmatprep.subr.mxu0 0.0
  %2543 = vmatpush2.msra.mxu0 %v2492
  %2544 = vmatprep.subr.mxu0 0.0
  %2545 = vmatpush2.msra.mxu0 %v2491
  %2546 = vmatprep.subr.mxu0 0.0
  %2547 = vmatpush2.msra.mxu0 %v2490
  %2548 = vmatprep.subr.mxu0 0.0
  %2549 = vmatpush2.msra.mxu0 %v2489
  %2550 = vmatprep.subr.mxu0 0.0
  %2551 = vmatpush2.msra.mxu0 %v2488
  %2552 = vmatprep.subr.mxu0 0.0
  %2553 = vmatpush2.msra.mxu0 %v2487
  %2554 = vmatprep.subr.mxu0 0.0
  %2555 = vmatpush2.msra.mxu0 %v2486
  %2556 = vmatprep.subr.mxu0 0.0
  %2557 = vmatpush2.msra.mxu0 %v2485
  %2558 = vmatprep.mubr.f32.mxu0 %v2097
  %2559 = vmatmul.mubr.f32.gmra.mxu0 %v2006
  %v2560 = vpop.f32.mrf.mxu0
  %v2561 = vadd.f32 %v2058, %v2560
  %v2562 = vpop.f32.mrf.mxu0
  %2563 = vmatprep.mubr.f32.mxu0 %v2100
  %2564 = vmatmul.mubr.f32.gmra.mxu0 %v2008
  %v2565 = vpop.f32.mrf.mxu0
  %v2566 = vadd.f32 %v2063, %v2565
  %v2567 = vpop.f32.mrf.mxu0
  %2568 = vmatprep.mubr.f32.mxu0 %v2103
  %2569 = vmatmul.mubr.f32.gmra.mxu0 %v2010
  %v2570 = vpop.f32.mrf.mxu0
  %v2571 = vadd.f32 %v2068, %v2570
  %v2572 = vpop.f32.mrf.mxu0
  %2573 = vmatprep.mubr.f32.mxu0 %v2106
  %2574 = vmatmul.mubr.f32.gmra.mxu0 %v2012
  %v2575 = vpop.f32.mrf.mxu0
  %v2576 = vadd.f32 %v2073, %v2575
  %v2577 = vpop.f32.mrf.mxu0
  %2578 = vmatprep.mubr.f32.mxu0 %v2109
  %2579 = vmatmul.mubr.f32.gmra.mxu0 %v2014
  %v2580 = vpop.f32.mrf.mxu0
  %v2581 = vadd.f32 %v2078, %v2580
  %v2582 = vpop.f32.mrf.mxu0
  %2583 = vmatprep.mubr.f32.mxu0 %v2112
  %2584 = vmatmul.mubr.f32.gmra.mxu0 %v2016
  %v2585 = vpop.f32.mrf.mxu0
  %v2586 = vadd.f32 %v2083, %v2585
  %v2587 = vpop.f32.mrf.mxu0
  %2588 = vmatprep.mubr.f32.mxu0 %v2115
  %2589 = vmatmul.mubr.f32.gmra.mxu0 %v2018
  %v2590 = vpop.f32.mrf.mxu0
  %v2591 = vadd.f32 %v2088, %v2590
  %v2592 = vpop.f32.mrf.mxu0
  %2593 = vmatprep.mubr.f32.mxu0 %v2118
  %2594 = vmatmul.mubr.f32.gmra.mxu0 %v2020
  %v2595 = vpop.f32.mrf.mxu0
  %v2596 = vadd.f32 %v2093, %v2595
  %v2597 = vpop.f32.mrf.mxu0
  %2598 = vdwg.mxu0
  %v2599 = vmax.f32 %v2561, 0.0
  %v2600 = vmax.f32 %v2566, 0.0
  %v2601 = vmax.f32 %v2571, 0.0
  %v2602 = vmax.f32 %v2576, 0.0
  %v2603 = vmax.f32 %v2581, 0.0
  %v2604 = vmax.f32 %v2586, 0.0
  %v2605 = vmax.f32 %v2591, 0.0
  %v2606 = vmax.f32 %v2596, 0.0
  %2607 = vst.msk [vmem:[%s5 + $0x80] sm:$0xff] %vm2233, %v2599
  %2608 = vst.msk [vmem:[%s5 + $0x88] sm:$0xff] %vm2233, %v2600
  %2609 = vst.msk [vmem:[%s5 + $0x90] sm:$0xff] %vm2233, %v2601
  %2610 = vst.msk [vmem:[%s5 + $0x98] sm:$0xff] %vm2233, %v2602
  %2611 = vst.msk [vmem:[%s5 + $0xa0] sm:$0xff] %vm2233, %v2603
  %2612 = vst.msk [vmem:[%s5 + $0xa8] sm:$0xff] %vm2233, %v2604
  %2613 = vst.msk [vmem:[%s5 + $0xb0] sm:$0xff] %vm2233, %v2605
  %2614 = vst.msk [vmem:[%s5 + $0xb8] sm:$0xff] %vm2233, %v2606
  %2623 = vrot.lane.b32.xlu0 %v2599, 64
  %v2624 = vpop.permute.xlu0 %2623
  %2625 = vrot.lane.b32.xlu0 %v2600, 64
  %v2626 = vpop.permute.xlu0 %2625
  %2627 = vrot.lane.b32.xlu0 %v2601, 64
  %v2628 = vpop.permute.xlu0 %2627
  %2629 = vrot.lane.b32.xlu0 %v2602, 64
  %v2630 = vpop.permute.xlu0 %2629
  %2631 = vrot.lane.b32.xlu0 %v2603, 64
  %v2632 = vpop.permute.xlu0 %2631
  %2633 = vrot.lane.b32.xlu0 %v2604, 64
  %v2634 = vpop.permute.xlu0 %2633
  %2635 = vrot.lane.b32.xlu0 %v2605, 64
  %v2636 = vpop.permute.xlu0 %2635
  %2637 = vrot.lane.b32.xlu0 %v2606, 64
  %v2638 = vpop.permute.xlu0 %2637
  %2647 = vst.msk [vmem:[%s2274 + $0x80] sm:$0xff] %vm2233, %v2624
  %2648 = vst.msk [vmem:[%s2274 + $0x88] sm:$0xff] %vm2233, %v2626
  %2649 = vst.msk [vmem:[%s2274 + $0x90] sm:$0xff] %vm2233, %v2628
  %2650 = vst.msk [vmem:[%s2274 + $0x98] sm:$0xff] %vm2233, %v2630
  %2651 = vst.msk [vmem:[%s2274 + $0xa0] sm:$0xff] %vm2233, %v2632
  %2652 = vst.msk [vmem:[%s2274 + $0xa8] sm:$0xff] %vm2233, %v2634
  %2653 = vst.msk [vmem:[%s2274 + $0xb0] sm:$0xff] %vm2233, %v2636
  %2654 = vst.msk [vmem:[%s2274 + $0xb8] sm:$0xff] %vm2233, %v2638
  %v2655 = vld [vmem:[#allocation2 + $0x1e0] sm:$0xff]
  %v2656 = vld [vmem:[#allocation2 + $0x1e8] sm:$0xff]
  %v2657 = vld [vmem:[#allocation2 + $0x1f0] sm:$0xff]
  %v2658 = vld [vmem:[#allocation2 + $0x1f8] sm:$0xff]
  %v2659 = vld [vmem:[#allocation2 + $0x200] sm:$0xff]
  %v2660 = vld [vmem:[#allocation2 + $0x208] sm:$0xff]
  %v2661 = vld [vmem:[#allocation2 + $0x210] sm:$0xff]
  %v2662 = vld [vmem:[#allocation2 + $0x218] sm:$0xff]
  %v2663 = vld [vmem:[#allocation2 + $0x220] sm:$0xff]
  %v2664 = vld [vmem:[#allocation2 + $0x228] sm:$0xff]
  %v2665 = vld [vmem:[#allocation2 + $0x230] sm:$0xff]
  %v2666 = vld [vmem:[#allocation2 + $0x238] sm:$0xff]
  %v2667 = vld [vmem:[#allocation2 + $0x240] sm:$0xff]
  %v2668 = vld [vmem:[#allocation2 + $0x248] sm:$0xff]
  %v2669 = vld [vmem:[#allocation2 + $0x250] sm:$0xff]
  %v2670 = vld [vmem:[#allocation2 + $0x258] sm:$0xff]
  %v2671 = vld [vmem:[#allocation2 + $0x260] sm:$0xff]
  %v2672 = vld [vmem:[#allocation2 + $0x268] sm:$0xff]
  %v2673 = vld [vmem:[#allocation2 + $0x270] sm:$0xff]
  %v2674 = vld [vmem:[#allocation2 + $0x278] sm:$0xff]
  %v2675 = vld [vmem:[#allocation2 + $0x280] sm:$0xff]
  %v2676 = vld [vmem:[#allocation2 + $0x288] sm:$0xff]
  %v2677 = vld [vmem:[#allocation2 + $0x290] sm:$0xff]
  %v2678 = vld [vmem:[#allocation2 + $0x298] sm:$0xff]
  %v2679 = vld [vmem:[#allocation2 + $0x2a0] sm:$0xff]
  %2680 = vmatprep.subr.mxu0 0.0
  %2681 = vmatpush1.msra.mxu0 %v2670
  %2682 = vmatprep.subr.mxu0 0.0
  %2683 = vmatpush1.msra.mxu0 %v2669
  %2684 = vmatprep.subr.mxu0 0.0
  %2685 = vmatpush1.msra.mxu0 %v2668
  %2686 = vmatprep.subr.mxu0 0.0
  %2687 = vmatpush1.msra.mxu0 %v2667
  %2688 = vmatprep.subr.mxu0 0.0
  %2689 = vmatpush1.msra.mxu0 %v2666
  %2690 = vmatprep.subr.mxu0 0.0
  %2691 = vmatpush1.msra.mxu0 %v2665
  %2692 = vmatprep.subr.mxu0 0.0
  %2693 = vmatpush1.msra.mxu0 %v2664
  %2694 = vmatprep.subr.mxu0 0.0
  %2695 = vmatpush1.msra.mxu0 %v2663
  %2696 = vmatprep.subr.mxu0 0.0
  %2697 = vmatpush1.msra.mxu0 %v2662
  %2698 = vmatprep.subr.mxu0 0.0
  %2699 = vmatpush1.msra.mxu0 %v2661
  %2700 = vmatprep.subr.mxu0 0.0
  %2701 = vmatpush1.msra.mxu0 %v2660
  %2702 = vmatprep.subr.mxu0 0.0
  %2703 = vmatpush1.msra.mxu0 %v2659
  %2704 = vmatprep.subr.mxu0 0.0
  %2705 = vmatpush1.msra.mxu0 %v2658
  %2706 = vmatprep.subr.mxu0 0.0
  %2707 = vmatpush1.msra.mxu0 %v2657
  %2708 = vmatprep.subr.mxu0 0.0
  %2709 = vmatpush1.msra.mxu0 %v2656
  %2710 = vmatprep.subr.mxu0 0.0
  %2711 = vmatpush1.msra.mxu0 %v2655
  %2712 = vmatprep.subr.mxu0 0.0
  %2713 = vmatpush2.msra.mxu0 0.0
  %2714 = vmatprep.subr.mxu0 0.0
  %2715 = vmatpush2.msra.mxu0 0.0
  %2716 = vmatprep.subr.mxu0 0.0
  %2717 = vmatpush2.msra.mxu0 0.0
  %2718 = vmatprep.subr.mxu0 0.0
  %2719 = vmatpush2.msra.mxu0 0.0
  %2720 = vmatprep.subr.mxu0 0.0
  %2721 = vmatpush2.msra.mxu0 0.0
  %2722 = vmatprep.subr.mxu0 0.0
  %2723 = vmatpush2.msra.mxu0 0.0
  %2724 = vmatprep.subr.mxu0 0.0
  %2725 = vmatpush2.msra.mxu0 0.0
  %2726 = vmatprep.subr.mxu0 0.0
  %2727 = vmatpush2.msra.mxu0 %v2679
  %2728 = vmatprep.subr.mxu0 0.0
  %2729 = vmatpush2.msra.mxu0 %v2678
  %2730 = vmatprep.subr.mxu0 0.0
  %2731 = vmatpush2.msra.mxu0 %v2677
  %2732 = vmatprep.subr.mxu0 0.0
  %2733 = vmatpush2.msra.mxu0 %v2676
  %2734 = vmatprep.subr.mxu0 0.0
  %2735 = vmatpush2.msra.mxu0 %v2675
  %2736 = vmatprep.subr.mxu0 0.0
  %2737 = vmatpush2.msra.mxu0 %v2674
  %2738 = vmatprep.subr.mxu0 0.0
  %2739 = vmatpush2.msra.mxu0 %v2673
  %2740 = vmatprep.subr.mxu0 0.0
  %2741 = vmatpush2.msra.mxu0 %v2672
  %2742 = vmatprep.subr.mxu0 0.0
  %2743 = vmatpush2.msra.mxu0 %v2671
  %2744 = vmatprep.mubr.f32.mxu0 %v2097
  %2745 = vmatmul.mubr.f32.gmra.mxu0 %v2006
  %v2746 = vpop.f32.mrf.mxu0
  %v2747 = vadd.f32 %v2058, %v2746
  %v2748 = vpop.f32.mrf.mxu0
  %2749 = vmatprep.mubr.f32.mxu0 %v2100
  %2750 = vmatmul.mubr.f32.gmra.mxu0 %v2008
  %v2751 = vpop.f32.mrf.mxu0
  %v2752 = vadd.f32 %v2063, %v2751
  %v2753 = vpop.f32.mrf.mxu0
  %2754 = vmatprep.mubr.f32.mxu0 %v2103
  %2755 = vmatmul.mubr.f32.gmra.mxu0 %v2010
  %v2756 = vpop.f32.mrf.mxu0
  %v2757 = vadd.f32 %v2068, %v2756
  %v2758 = vpop.f32.mrf.mxu0
  %2759 = vmatprep.mubr.f32.mxu0 %v2106
  %2760 = vmatmul.mubr.f32.gmra.mxu0 %v2012
  %v2761 = vpop.f32.mrf.mxu0
  %v2762 = vadd.f32 %v2073, %v2761
  %v2763 = vpop.f32.mrf.mxu0
  %2764 = vmatprep.mubr.f32.mxu0 %v2109
  %2765 = vmatmul.mubr.f32.gmra.mxu0 %v2014
  %v2766 = vpop.f32.mrf.mxu0
  %v2767 = vadd.f32 %v2078, %v2766
  %v2768 = vpop.f32.mrf.mxu0
  %2769 = vmatprep.mubr.f32.mxu0 %v2112
  %2770 = vmatmul.mubr.f32.gmra.mxu0 %v2016
  %v2771 = vpop.f32.mrf.mxu0
  %v2772 = vadd.f32 %v2083, %v2771
  %v2773 = vpop.f32.mrf.mxu0
  %2774 = vmatprep.mubr.f32.mxu0 %v2115
  %2775 = vmatmul.mubr.f32.gmra.mxu0 %v2018
  %v2776 = vpop.f32.mrf.mxu0
  %v2777 = vadd.f32 %v2088, %v2776
  %v2778 = vpop.f32.mrf.mxu0
  %2779 = vmatprep.mubr.f32.mxu0 %v2118
  %2780 = vmatmul.mubr.f32.gmra.mxu0 %v2020
  %v2781 = vpop.f32.mrf.mxu0
  %v2782 = vadd.f32 %v2093, %v2781
  %v2783 = vpop.f32.mrf.mxu0
  %2784 = vdwg.mxu0
  %v2785 = vmax.f32 %v2747, 0.0
  %v2786 = vmax.f32 %v2752, 0.0
  %v2787 = vmax.f32 %v2757, 0.0
  %v2788 = vmax.f32 %v2762, 0.0
  %v2789 = vmax.f32 %v2767, 0.0
  %v2790 = vmax.f32 %v2772, 0.0
  %v2791 = vmax.f32 %v2777, 0.0
  %v2792 = vmax.f32 %v2782, 0.0
  %2793 = vst.msk [vmem:[%s5 + $0xc0] sm:$0xff] %vm2233, %v2785
  %2794 = vst.msk [vmem:[%s5 + $0xc8] sm:$0xff] %vm2233, %v2786
  %2795 = vst.msk [vmem:[%s5 + $0xd0] sm:$0xff] %vm2233, %v2787
  %2796 = vst.msk [vmem:[%s5 + $0xd8] sm:$0xff] %vm2233, %v2788
  %2797 = vst.msk [vmem:[%s5 + $0xe0] sm:$0xff] %vm2233, %v2789
  %2798 = vst.msk [vmem:[%s5 + $0xe8] sm:$0xff] %vm2233, %v2790
  %2799 = vst.msk [vmem:[%s5 + $0xf0] sm:$0xff] %vm2233, %v2791
  %2800 = vst.msk [vmem:[%s5 + $0xf8] sm:$0xff] %vm2233, %v2792
  %2809 = vrot.lane.b32.xlu0 %v2785, 64
  %v2810 = vpop.permute.xlu0 %2809
  %2811 = vrot.lane.b32.xlu0 %v2786, 64
  %v2812 = vpop.permute.xlu0 %2811
  %2813 = vrot.lane.b32.xlu0 %v2787, 64
  %v2814 = vpop.permute.xlu0 %2813
  %2815 = vrot.lane.b32.xlu0 %v2788, 64
  %v2816 = vpop.permute.xlu0 %2815
  %2817 = vrot.lane.b32.xlu0 %v2789, 64
  %v2818 = vpop.permute.xlu0 %2817
  %2819 = vrot.lane.b32.xlu0 %v2790, 64
  %v2820 = vpop.permute.xlu0 %2819
  %2821 = vrot.lane.b32.xlu0 %v2791, 64
  %v2822 = vpop.permute.xlu0 %2821
  %2823 = vrot.lane.b32.xlu0 %v2792, 64
  %v2824 = vpop.permute.xlu0 %2823
  %2833 = vst.msk [vmem:[%s2274 + $0xc0] sm:$0xff] %vm2233, %v2810
  %2834 = vst.msk [vmem:[%s2274 + $0xc8] sm:$0xff] %vm2233, %v2812
  %2835 = vst.msk [vmem:[%s2274 + $0xd0] sm:$0xff] %vm2233, %v2814
  %2836 = vst.msk [vmem:[%s2274 + $0xd8] sm:$0xff] %vm2233, %v2816
  %2837 = vst.msk [vmem:[%s2274 + $0xe0] sm:$0xff] %vm2233, %v2818
  %2838 = vst.msk [vmem:[%s2274 + $0xe8] sm:$0xff] %vm2233, %v2820
  %2839 = vst.msk [vmem:[%s2274 + $0xf0] sm:$0xff] %vm2233, %v2822
  %2840 = vst.msk [vmem:[%s2274 + $0xf8] sm:$0xff] %vm2233, %v2824
  %v2841 = vld [vmem:[#allocation2 + $0x280] sm:$0xff]
  %v2842 = vld [vmem:[#allocation2 + $0x288] sm:$0xff]
  %v2843 = vld [vmem:[#allocation2 + $0x290] sm:$0xff]
  %v2844 = vld [vmem:[#allocation2 + $0x298] sm:$0xff]
  %v2845 = vld [vmem:[#allocation2 + $0x2a0] sm:$0xff]
  %v2846 = vld [vmem:[#allocation2 + $0x2a8] sm:$0xff]
  %v2847 = vld [vmem:[#allocation2 + $0x2b0] sm:$0xff]
  %v2848 = vld [vmem:[#allocation2 + $0x2b8] sm:$0xff]
  %v2849 = vld [vmem:[#allocation2 + $0x2c0] sm:$0xff]
  %v2850 = vld [vmem:[#allocation2 + $0x2c8] sm:$0xff]
  %v2851 = vld [vmem:[#allocation2 + $0x2d0] sm:$0xff]
  %v2852 = vld [vmem:[#allocation2 + $0x2d8] sm:$0xff]
  %v2853 = vld [vmem:[#allocation2 + $0x2e0] sm:$0xff]
  %v2854 = vld [vmem:[#allocation2 + $0x2e8] sm:$0xff]
  %v2855 = vld [vmem:[#allocation2 + $0x2f0] sm:$0xff]
  %v2856 = vld [vmem:[#allocation2 + $0x2f8] sm:$0xff]
  %v2857 = vld [vmem:[#allocation2 + $0x300] sm:$0xff]
  %v2858 = vld [vmem:[#allocation2 + $0x308] sm:$0xff]
  %v2859 = vld [vmem:[#allocation2 + $0x310] sm:$0xff]
  %v2860 = vld [vmem:[#allocation2 + $0x318] sm:$0xff]
  %v2861 = vld [vmem:[#allocation2 + $0x320] sm:$0xff]
  %v2862 = vld [vmem:[#allocation2 + $0x328] sm:$0xff]
  %v2863 = vld [vmem:[#allocation2 + $0x330] sm:$0xff]
  %v2864 = vld [vmem:[#allocation2 + $0x338] sm:$0xff]
  %v2865 = vld [vmem:[#allocation2 + $0x340] sm:$0xff]
  %2866 = vmatprep.subr.mxu0 0.0
  %2867 = vmatpush1.msra.mxu0 %v2856
  %2868 = vmatprep.subr.mxu0 0.0
  %2869 = vmatpush1.msra.mxu0 %v2855
  %2870 = vmatprep.subr.mxu0 0.0
  %2871 = vmatpush1.msra.mxu0 %v2854
  %2872 = vmatprep.subr.mxu0 0.0
  %2873 = vmatpush1.msra.mxu0 %v2853
  %2874 = vmatprep.subr.mxu0 0.0
  %2875 = vmatpush1.msra.mxu0 %v2852
  %2876 = vmatprep.subr.mxu0 0.0
  %2877 = vmatpush1.msra.mxu0 %v2851
  %2878 = vmatprep.subr.mxu0 0.0
  %2879 = vmatpush1.msra.mxu0 %v2850
  %2880 = vmatprep.subr.mxu0 0.0
  %2881 = vmatpush1.msra.mxu0 %v2849
  %2882 = vmatprep.subr.mxu0 0.0
  %2883 = vmatpush1.msra.mxu0 %v2848
  %2884 = vmatprep.subr.mxu0 0.0
  %2885 = vmatpush1.msra.mxu0 %v2847
  %2886 = vmatprep.subr.mxu0 0.0
  %2887 = vmatpush1.msra.mxu0 %v2846
  %2888 = vmatprep.subr.mxu0 0.0
  %2889 = vmatpush1.msra.mxu0 %v2845
  %2890 = vmatprep.subr.mxu0 0.0
  %2891 = vmatpush1.msra.mxu0 %v2844
  %2892 = vmatprep.subr.mxu0 0.0
  %2893 = vmatpush1.msra.mxu0 %v2843
  %2894 = vmatprep.subr.mxu0 0.0
  %2895 = vmatpush1.msra.mxu0 %v2842
  %2896 = vmatprep.subr.mxu0 0.0
  %2897 = vmatpush1.msra.mxu0 %v2841
  %2898 = vmatprep.subr.mxu0 0.0
  %2899 = vmatpush2.msra.mxu0 0.0
  %2900 = vmatprep.subr.mxu0 0.0
  %2901 = vmatpush2.msra.mxu0 0.0
  %2902 = vmatprep.subr.mxu0 0.0
  %2903 = vmatpush2.msra.mxu0 0.0
  %2904 = vmatprep.subr.mxu0 0.0
  %2905 = vmatpush2.msra.mxu0 0.0
  %2906 = vmatprep.subr.mxu0 0.0
  %2907 = vmatpush2.msra.mxu0 0.0
  %2908 = vmatprep.subr.mxu0 0.0
  %2909 = vmatpush2.msra.mxu0 0.0
  %2910 = vmatprep.subr.mxu0 0.0
  %2911 = vmatpush2.msra.mxu0 0.0
  %2912 = vmatprep.subr.mxu0 0.0
  %2913 = vmatpush2.msra.mxu0 %v2865
  %2914 = vmatprep.subr.mxu0 0.0
  %2915 = vmatpush2.msra.mxu0 %v2864
  %2916 = vmatprep.subr.mxu0 0.0
  %2917 = vmatpush2.msra.mxu0 %v2863
  %2918 = vmatprep.subr.mxu0 0.0
  %2919 = vmatpush2.msra.mxu0 %v2862
  %2920 = vmatprep.subr.mxu0 0.0
  %2921 = vmatpush2.msra.mxu0 %v2861
  %2922 = vmatprep.subr.mxu0 0.0
  %2923 = vmatpush2.msra.mxu0 %v2860
  %2924 = vmatprep.subr.mxu0 0.0
  %2925 = vmatpush2.msra.mxu0 %v2859
  %2926 = vmatprep.subr.mxu0 0.0
  %2927 = vmatpush2.msra.mxu0 %v2858
  %2928 = vmatprep.subr.mxu0 0.0
  %2929 = vmatpush2.msra.mxu0 %v2857
  %2930 = vmatprep.mubr.f32.mxu0 %v2097
  %2931 = vmatmul.mubr.f32.gmra.mxu0 %v2006
  %v2932 = vpop.f32.mrf.mxu0
  %v2933 = vadd.f32 %v2058, %v2932
  %v2934 = vpop.f32.mrf.mxu0
  %2935 = vmatprep.mubr.f32.mxu0 %v2100
  %2936 = vmatmul.mubr.f32.gmra.mxu0 %v2008
  %v2937 = vpop.f32.mrf.mxu0
  %v2938 = vadd.f32 %v2063, %v2937
  %v2939 = vpop.f32.mrf.mxu0
  %2940 = vmatprep.mubr.f32.mxu0 %v2103
  %2941 = vmatmul.mubr.f32.gmra.mxu0 %v2010
  %v2942 = vpop.f32.mrf.mxu0
  %v2943 = vadd.f32 %v2068, %v2942
  %v2944 = vpop.f32.mrf.mxu0
  %2945 = vmatprep.mubr.f32.mxu0 %v2106
  %2946 = vmatmul.mubr.f32.gmra.mxu0 %v2012
  %v2947 = vpop.f32.mrf.mxu0
  %v2948 = vadd.f32 %v2073, %v2947
  %v2949 = vpop.f32.mrf.mxu0
  %2950 = vmatprep.mubr.f32.mxu0 %v2109
  %2951 = vmatmul.mubr.f32.gmra.mxu0 %v2014
  %v2952 = vpop.f32.mrf.mxu0
  %v2953 = vadd.f32 %v2078, %v2952
  %v2954 = vpop.f32.mrf.mxu0
  %2955 = vmatprep.mubr.f32.mxu0 %v2112
  %2956 = vmatmul.mubr.f32.gmra.mxu0 %v2016
  %v2957 = vpop.f32.mrf.mxu0
  %v2958 = vadd.f32 %v2083, %v2957
  %v2959 = vpop.f32.mrf.mxu0
  %2960 = vmatprep.mubr.f32.mxu0 %v2115
  %2961 = vmatmul.mubr.f32.gmra.mxu0 %v2018
  %v2962 = vpop.f32.mrf.mxu0
  %v2963 = vadd.f32 %v2088, %v2962
  %v2964 = vpop.f32.mrf.mxu0
  %2965 = vmatprep.mubr.f32.mxu0 %v2118
  %2966 = vmatmul.mubr.f32.gmra.mxu0 %v2020
  %v2967 = vpop.f32.mrf.mxu0
  %v2968 = vadd.f32 %v2093, %v2967
  %v2969 = vpop.f32.mrf.mxu0
  %2970 = vdwg.mxu0
  %v2971 = vmax.f32 %v2933, 0.0
  %v2972 = vmax.f32 %v2938, 0.0
  %v2973 = vmax.f32 %v2943, 0.0
  %v2974 = vmax.f32 %v2948, 0.0
  %v2975 = vmax.f32 %v2953, 0.0
  %v2976 = vmax.f32 %v2958, 0.0
  %v2977 = vmax.f32 %v2963, 0.0
  %v2978 = vmax.f32 %v2968, 0.0
  %2979 = vst.msk [vmem:[%s5 + $0x100] sm:$0xff] %vm2233, %v2971
  %2980 = vst.msk [vmem:[%s5 + $0x108] sm:$0xff] %vm2233, %v2972
  %2981 = vst.msk [vmem:[%s5 + $0x110] sm:$0xff] %vm2233, %v2973
  %2982 = vst.msk [vmem:[%s5 + $0x118] sm:$0xff] %vm2233, %v2974
  %2983 = vst.msk [vmem:[%s5 + $0x120] sm:$0xff] %vm2233, %v2975
  %2984 = vst.msk [vmem:[%s5 + $0x128] sm:$0xff] %vm2233, %v2976
  %2985 = vst.msk [vmem:[%s5 + $0x130] sm:$0xff] %vm2233, %v2977
  %2986 = vst.msk [vmem:[%s5 + $0x138] sm:$0xff] %vm2233, %v2978
  %2995 = vrot.lane.b32.xlu0 %v2971, 64
  %v2996 = vpop.permute.xlu0 %2995
  %2997 = vrot.lane.b32.xlu0 %v2972, 64
  %v2998 = vpop.permute.xlu0 %2997
  %2999 = vrot.lane.b32.xlu0 %v2973, 64
  %v3000 = vpop.permute.xlu0 %2999
  %3001 = vrot.lane.b32.xlu0 %v2974, 64
  %v3002 = vpop.permute.xlu0 %3001
  %3003 = vrot.lane.b32.xlu0 %v2975, 64
  %v3004 = vpop.permute.xlu0 %3003
  %3005 = vrot.lane.b32.xlu0 %v2976, 64
  %v3006 = vpop.permute.xlu0 %3005
  %3007 = vrot.lane.b32.xlu0 %v2977, 64
  %v3008 = vpop.permute.xlu0 %3007
  %3009 = vrot.lane.b32.xlu0 %v2978, 64
  %v3010 = vpop.permute.xlu0 %3009
  %3019 = vst.msk [vmem:[%s2274 + $0x100] sm:$0xff] %vm2233, %v2996
  %3020 = vst.msk [vmem:[%s2274 + $0x108] sm:$0xff] %vm2233, %v2998
  %3021 = vst.msk [vmem:[%s2274 + $0x110] sm:$0xff] %vm2233, %v3000
  %3022 = vst.msk [vmem:[%s2274 + $0x118] sm:$0xff] %vm2233, %v3002
  %3023 = vst.msk [vmem:[%s2274 + $0x120] sm:$0xff] %vm2233, %v3004
  %3024 = vst.msk [vmem:[%s2274 + $0x128] sm:$0xff] %vm2233, %v3006
  %3025 = vst.msk [vmem:[%s2274 + $0x130] sm:$0xff] %vm2233, %v3008
  %3026 = vst.msk [vmem:[%s2274 + $0x138] sm:$0xff] %vm2233, %v3010
  // Predicated region
  $region22: #{cnn3d_forward.2} parent=0 // pred_check
    _
  $region23: #{cnn3d_forward.2} parent=0 // pred_check_branch
    %3028 = sbr.rel (0) target = $region25
  $region24: #{cnn3d_forward.2} parent=0 // pred_region
    _
  $region25: #{cnn3d_forward.2} parent=0 // pred_fallthru
    _
  // Predicated region
  $region26: #{cnn3d_forward.2} parent=0 // pred_check
    _
  $region27: #{cnn3d_forward.2} parent=0 // pred_check_branch
    %3030 = sbr.rel (0) target = $region29
  $region28: #{cnn3d_forward.2} parent=0 // pred_region
    _
  $region29: #{cnn3d_forward.2} parent=0 // pred_fallthru
    _

// kernel: cnn3d_forward.3
$region0: #{cnn3d_forward.3}
  #allocation0 [shape = 'u32[]', space=smem, size = 0x4, offset = 0x4, fixed_abs, tag = 'smem constant byte address 0x4 - core index']
  #allocation1 [shape = 'u32[144,128]{1,0:T(1,128)}', space=vmem, size = 0x12000, scoped, tag = 'internal scratch']
  #allocation2 [shape = 'f32[56,5120]{1,0:T(8,128)}', space=vmem, size = 0x118000, scoped, tag = 'scratch operand']
  %s0 = inlined_call_operand.vmem [shape: f32[2,20480], index: 0, kind: input, shape index: {}]
  %s1 = inlined_call_operand.vmem [shape: f32[5120,32], index: 1, kind: input, shape index: {}]
  %s2 = inlined_call_operand.vmem [shape: f32[1,32], index: 2, kind: input, shape index: {}]
  %s3 = inlined_call_operand.vmem [shape: f32[224,90], index: 3, kind: input, shape index: {}]
  %s4 = inlined_call_operand.vmem [shape: f32[1,90], index: 4, kind: input, shape index: {}]
  %s5 = inlined_call_operand.vmem [shape: f32[1,90], index: 5, kind: input, shape index: {}]
  %s6 = inlined_call_operand.vmem [shape: f32[1,90], index: 6, kind: input, shape index: {}]
  %s7 = inlined_call_operand.vmem [shape: f32[90,10], index: 7, kind: input, shape index: {}]
  %s8 = inlined_call_operand.vmem [shape: f32[1,10], index: 8, kind: input, shape index: {}]
  %s9 = inlined_call_operand.hbm [shape: f32[2,10], index: 9, kind: output, shape index: {}]
  %s10 = sld [smem:[#allocation0]]
  $region46: #{cnn3d_forward.3} parent=0
    _
  %s12 = ssub.s32 1, %s10
  %s13 = scalar_select 0, %s12, %s10
  $region1: #{cnn3d_forward.3} parent=0
    #allocation3 [shape = 'u8[1024]{0}', space=vmem, size = 0x400, scoped, tag = 'output window, operand 0, single buffered']
    #allocation4 [shape = 's32[1]{0}', space=sflag, size = 0x4, scoped, tag = 'scoped memory for cnn3d_forward.3']
    %14 = vsyncpa [#allocation4], 0
    // Predicated region
    $region2: #{cnn3d_forward.3} parent=1 // pred_check
      _
    $region3: #{cnn3d_forward.3} parent=1 // pred_check_branch
      %16 = sbr.rel (0) target = $region5
    $region4: #{cnn3d_forward.3} parent=1 // pred_region
      _
    $region5: #{cnn3d_forward.3} parent=1 // pred_fallthru
      _
    // Predicated region
    $region6: #{cnn3d_forward.3} parent=1 // pred_check
      _
    $region7: #{cnn3d_forward.3} parent=1 // pred_check_branch
      %18 = sbr.rel (0) target = $region9
    $region8: #{cnn3d_forward.3} parent=1 // pred_region
      _
    $region9: #{cnn3d_forward.3} parent=1 // pred_fallthru
      _
    // Predicated region
    $region10: #{cnn3d_forward.3} parent=1 // pred_check
      _
    $region11: #{cnn3d_forward.3} parent=1 // pred_check_branch
      %20 = sbr.rel (0) target = $region13
    $region12: #{cnn3d_forward.3} parent=1 // pred_region
      _
    $region13: #{cnn3d_forward.3} parent=1 // pred_fallthru
      _
    // Predicated region
    $region14: #{cnn3d_forward.3} parent=1 // pred_check
      _
    $region15: #{cnn3d_forward.3} parent=1 // pred_check_branch
      %22 = sbr.rel (0) target = $region17
    $region16: #{cnn3d_forward.3} parent=1 // pred_region
      _
    $region17: #{cnn3d_forward.3} parent=1 // pred_fallthru
      _
    // Predicated region
    $region18: #{cnn3d_forward.3} parent=1 // pred_check
      _
    $region19: #{cnn3d_forward.3} parent=1 // pred_check_branch
      %24 = sbr.rel (0) target = $region21
    $region20: #{cnn3d_forward.3} parent=1 // pred_region
      _
    $region21: #{cnn3d_forward.3} parent=1 // pred_fallthru
      _
    // Predicated region
    $region22: #{cnn3d_forward.3} parent=1 // pred_check
      _
    $region23: #{cnn3d_forward.3} parent=1 // pred_check_branch
      %26 = sbr.rel (0) target = $region25
    $region24: #{cnn3d_forward.3} parent=1 // pred_region
      _
    $region25: #{cnn3d_forward.3} parent=1 // pred_fallthru
      _
    // Predicated region
    $region26: #{cnn3d_forward.3} parent=1 // pred_check
      _
    $region27: #{cnn3d_forward.3} parent=1 // pred_check_branch
      %28 = sbr.rel (0) target = $region29
    $region28: #{cnn3d_forward.3} parent=1 // pred_region
      _
    $region29: #{cnn3d_forward.3} parent=1 // pred_fallthru
      _
    // Predicated region
    $region30: #{cnn3d_forward.3} parent=1 // pred_check
      _
    $region31: #{cnn3d_forward.3} parent=1 // pred_check_branch
      %30 = sbr.rel (0) target = $region33
    $region32: #{cnn3d_forward.3} parent=1 // pred_region
      _
    $region33: #{cnn3d_forward.3} parent=1 // pred_fallthru
      _
    // Predicated region
    $region34: #{cnn3d_forward.3} parent=1 // pred_check
      _
    $region35: #{cnn3d_forward.3} parent=1 // pred_check_branch
      %32 = sbr.rel (0) target = $region37
    $region36: #{cnn3d_forward.3} parent=1 // pred_region
      _
    $region37: #{cnn3d_forward.3} parent=1 // pred_fallthru
      _
    %v33 = vld [vmem:[%s0] sm:$0xff]
    %v34 = vld [vmem:[%s0 + $0x8] sm:$0xff]
    %v35 = vld [vmem:[%s0 + $0x10] sm:$0xff]
    %v36 = vld [vmem:[%s0 + $0x18] sm:$0xff]
    %v37 = vld [vmem:[%s0 + $0x20] sm:$0xff]
    %v38 = vld [vmem:[%s0 + $0x28] sm:$0xff]
    %v39 = vld [vmem:[%s0 + $0x30] sm:$0xff]
    %v40 = vld [vmem:[%s0 + $0x38] sm:$0xff]
    %v41 = vld [vmem:[%s0 + $0x40] sm:$0xff]
    %v42 = vld [vmem:[%s0 + $0x48] sm:$0xff]
    %v53 = vcombine.high %v33, %v33
    %v55 = vunpack.c.l.s4 1983009808
    %v56 = vunpack.c.0.s8 %v55
    %v57 = vlaneseq
    %v58 = vshrl.u32 %v57, 7
    %v59 = vsub.s32 %v56, %v58
    %v60 = vrot.slane %v33, %v59
    %v62 = vunpack.c.l.s4 1983009808
    %v63 = vunpack.c.0.s8 %v62
    %v64 = vlaneseq
    %v65 = vshrl.u32 %v64, 7
    %v66 = vsub.s32 %v63, %v65
    %v67 = vrot.slane %v53, %v66
    %v68 = vcombine.high %v60, %v60
    %v69 = vcombine.high %v67, %v67
    %v70 = vcombine.high %v34, %v34
    %v72 = vunpack.c.l.s4 1983009808
    %v73 = vunpack.c.0.s8 %v72
    %v74 = vlaneseq
    %v75 = vshrl.u32 %v74, 7
    %v76 = vsub.s32 %v73, %v75
    %v77 = vrot.slane %v34, %v76
    %v79 = vunpack.c.l.s4 1983009808
    %v80 = vunpack.c.0.s8 %v79
    %v81 = vlaneseq
    %v82 = vshrl.u32 %v81, 7
    %v83 = vsub.s32 %v80, %v82
    %v84 = vrot.slane %v70, %v83
    %v85 = vcombine.high %v77, %v77
    %v86 = vcombine.high %v84, %v84
    %v87 = vcombine.high %v35, %v35
    %v89 = vunpack.c.l.s4 1983009808
    %v90 = vunpack.c.0.s8 %v89
    %v91 = vlaneseq
    %v92 = vshrl.u32 %v91, 7
    %v93 = vsub.s32 %v90, %v92
    %v94 = vrot.slane %v35, %v93
    %v96 = vunpack.c.l.s4 1983009808
    %v97 = vunpack.c.0.s8 %v96
    %v98 = vlaneseq
    %v99 = vshrl.u32 %v98, 7
    %v100 = vsub.s32 %v97, %v99
    %v101 = vrot.slane %v87, %v100
    %v102 = vcombine.high %v94, %v94
    %v103 = vcombine.high %v101, %v101
    %v104 = vcombine.high %v36, %v36
    %v106 = vunpack.c.l.s4 1983009808
    %v107 = vunpack.c.0.s8 %v106
    %v108 = vlaneseq
    %v109 = vshrl.u32 %v108, 7
    %v110 = vsub.s32 %v107, %v109
    %v111 = vrot.slane %v36, %v110
    %v113 = vunpack.c.l.s4 1983009808
    %v114 = vunpack.c.0.s8 %v113
    %v115 = vlaneseq
    %v116 = vshrl.u32 %v115, 7
    %v117 = vsub.s32 %v114, %v116
    %v118 = vrot.slane %v104, %v117
    %v119 = vcombine.high %v111, %v111
    %v120 = vcombine.high %v118, %v118
    %v121 = vcombine.high %v37, %v37
    %v123 = vunpack.c.l.s4 1983009808
    %v124 = vunpack.c.0.s8 %v123
    %v125 = vlaneseq
    %v126 = vshrl.u32 %v125, 7
    %v127 = vsub.s32 %v124, %v126
    %v128 = vrot.slane %v37, %v127
    %v130 = vunpack.c.l.s4 1983009808
    %v131 = vunpack.c.0.s8 %v130
    %v132 = vlaneseq
    %v133 = vshrl.u32 %v132, 7
    %v134 = vsub.s32 %v131, %v133
    %v135 = vrot.slane %v121, %v134
    %v136 = vcombine.high %v128, %v128
    %v137 = vcombine.high %v135, %v135
    %v138 = vcombine.high %v38, %v38
    %v140 = vunpack.c.l.s4 1983009808
    %v141 = vunpack.c.0.s8 %v140
    %v142 = vlaneseq
    %v143 = vshrl.u32 %v142, 7
    %v144 = vsub.s32 %v141, %v143
    %v145 = vrot.slane %v38, %v144
    %v147 = vunpack.c.l.s4 1983009808
    %v148 = vunpack.c.0.s8 %v147
    %v149 = vlaneseq
    %v150 = vshrl.u32 %v149, 7
    %v151 = vsub.s32 %v148, %v150
    %v152 = vrot.slane %v138, %v151
    %v153 = vcombine.high %v145, %v145
    %v154 = vcombine.high %v152, %v152
    %v155 = vcombine.high %v39, %v39
    %v157 = vunpack.c.l.s4 1983009808
    %v158 = vunpack.c.0.s8 %v157
    %v159 = vlaneseq
    %v160 = vshrl.u32 %v159, 7
    %v161 = vsub.s32 %v158, %v160
    %v162 = vrot.slane %v39, %v161
    %v164 = vunpack.c.l.s4 1983009808
    %v165 = vunpack.c.0.s8 %v164
    %v166 = vlaneseq
    %v167 = vshrl.u32 %v166, 7
    %v168 = vsub.s32 %v165, %v167
    %v169 = vrot.slane %v155, %v168
    %v170 = vcombine.high %v162, %v162
    %v171 = vcombine.high %v169, %v169
    %v172 = vcombine.high %v40, %v40
    %v174 = vunpack.c.l.s4 1983009808
    %v175 = vunpack.c.0.s8 %v174
    %v176 = vlaneseq
    %v177 = vshrl.u32 %v176, 7
    %v178 = vsub.s32 %v175, %v177
    %v179 = vrot.slane %v40, %v178
    %v181 = vunpack.c.l.s4 1983009808
    %v182 = vunpack.c.0.s8 %v181
    %v183 = vlaneseq
    %v184 = vshrl.u32 %v183, 7
    %v185 = vsub.s32 %v182, %v184
    %v186 = vrot.slane %v172, %v185
    %v187 = vcombine.high %v179, %v179
    %v188 = vcombine.high %v186, %v186
    %v189 = vcombine.high %v41, %v41
    %v191 = vunpack.c.l.s4 1983009808
    %v192 = vunpack.c.0.s8 %v191
    %v193 = vlaneseq
    %v194 = vshrl.u32 %v193, 7
    %v195 = vsub.s32 %v192, %v194
    %v196 = vrot.slane %v41, %v195
    %v198 = vunpack.c.l.s4 1983009808
    %v199 = vunpack.c.0.s8 %v198
    %v200 = vlaneseq
    %v201 = vshrl.u32 %v200, 7
    %v202 = vsub.s32 %v199, %v201
    %v203 = vrot.slane %v189, %v202
    %v204 = vcombine.high %v196, %v196
    %v205 = vcombine.high %v203, %v203
    %v206 = vcombine.high %v42, %v42
    %v208 = vunpack.c.l.s4 1983009808
    %v209 = vunpack.c.0.s8 %v208
    %v210 = vlaneseq
    %v211 = vshrl.u32 %v210, 7
    %v212 = vsub.s32 %v209, %v211
    %v213 = vrot.slane %v42, %v212
    %v215 = vunpack.c.l.s4 1983009808
    %v216 = vunpack.c.0.s8 %v215
    %v217 = vlaneseq
    %v218 = vshrl.u32 %v217, 7
    %v219 = vsub.s32 %v216, %v218
    %v220 = vrot.slane %v206, %v219
    %v221 = vcombine.high %v213, %v213
    %v222 = vcombine.high %v220, %v220
    %263 = vst [vmem:[#allocation2] sm:$0x3] %v60
    %264 = vst [vmem:[#allocation2 + $0x8] sm:$0x3] %v68
    %265 = vst [vmem:[#allocation2 + $0x10] sm:$0x3] %v67
    %266 = vst [vmem:[#allocation2 + $0x18] sm:$0x3] %v69
    %267 = vst [vmem:[#allocation2 + $0x20] sm:$0x3] %v77
    %268 = vst [vmem:[#allocation2 + $0x28] sm:$0x3] %v85
    %269 = vst [vmem:[#allocation2 + $0x30] sm:$0x3] %v84
    %270 = vst [vmem:[#allocation2 + $0x38] sm:$0x3] %v86
    %271 = vst [vmem:[#allocation2 + $0x40] sm:$0x3] %v94
    %272 = vst [vmem:[#allocation2 + $0x48] sm:$0x3] %v102
    %273 = vst [vmem:[#allocation2 + $0x50] sm:$0x3] %v101
    %274 = vst [vmem:[#allocation2 + $0x58] sm:$0x3] %v103
    %275 = vst [vmem:[#allocation2 + $0x60] sm:$0x3] %v111
    %276 = vst [vmem:[#allocation2 + $0x68] sm:$0x3] %v119
    %277 = vst [vmem:[#allocation2 + $0x70] sm:$0x3] %v118
    %278 = vst [vmem:[#allocation2 + $0x78] sm:$0x3] %v120
    %279 = vst [vmem:[#allocation2 + $0x80] sm:$0x3] %v128
    %280 = vst [vmem:[#allocation2 + $0x88] sm:$0x3] %v136
    %281 = vst [vmem:[#allocation2 + $0x90] sm:$0x3] %v135
    %282 = vst [vmem:[#allocation2 + $0x98] sm:$0x3] %v137
    %283 = vst [vmem:[#allocation2 + $0xa0] sm:$0x3] %v145
    %284 = vst [vmem:[#allocation2 + $0xa8] sm:$0x3] %v153
    %285 = vst [vmem:[#allocation2 + $0xb0] sm:$0x3] %v152
    %286 = vst [vmem:[#allocation2 + $0xb8] sm:$0x3] %v154
    %287 = vst [vmem:[#allocation2 + $0xc0] sm:$0x3] %v162
    %288 = vst [vmem:[#allocation2 + $0xc8] sm:$0x3] %v170
    %289 = vst [vmem:[#allocation2 + $0xd0] sm:$0x3] %v169
    %290 = vst [vmem:[#allocation2 + $0xd8] sm:$0x3] %v171
    %291 = vst [vmem:[#allocation2 + $0xe0] sm:$0x3] %v179
    %292 = vst [vmem:[#allocation2 + $0xe8] sm:$0x3] %v187
    %293 = vst [vmem:[#allocation2 + $0xf0] sm:$0x3] %v186
    %294 = vst [vmem:[#allocation2 + $0xf8] sm:$0x3] %v188
    %295 = vst [vmem:[#allocation2 + $0x100] sm:$0x3] %v196
    %296 = vst [vmem:[#allocation2 + $0x108] sm:$0x3] %v204
    %297 = vst [vmem:[#allocation2 + $0x110] sm:$0x3] %v203
    %298 = vst [vmem:[#allocation2 + $0x118] sm:$0x3] %v205
    %299 = vst [vmem:[#allocation2 + $0x120] sm:$0x3] %v213
    %300 = vst [vmem:[#allocation2 + $0x128] sm:$0x3] %v221
    %301 = vst [vmem:[#allocation2 + $0x130] sm:$0x3] %v220
    %302 = vst [vmem:[#allocation2 + $0x138] sm:$0x3] %v222
    %v303 = vld [vmem:[%s0 + $0x20] sm:$0xff]
    %v304 = vld [vmem:[%s0 + $0x28] sm:$0xff]
    %v305 = vld [vmem:[%s0 + $0x30] sm:$0xff]
    %v306 = vld [vmem:[%s0 + $0x38] sm:$0xff]
    %v307 = vld [vmem:[%s0 + $0x40] sm:$0xff]
    %v308 = vld [vmem:[%s0 + $0x48] sm:$0xff]
    %v309 = vld [vmem:[%s0 + $0x50] sm:$0xff]
    %v310 = vld [vmem:[%s0 + $0x58] sm:$0xff]
    %v311 = vld [vmem:[%s0 + $0x60] sm:$0xff]
    %v312 = vld [vmem:[%s0 + $0x68] sm:$0xff]
    %v323 = vcombine.high %v303, %v303
    %v325 = vunpack.c.l.s4 1983009808
    %v326 = vunpack.c.0.s8 %v325
    %v327 = vlaneseq
    %v328 = vshrl.u32 %v327, 7
    %v329 = vsub.s32 %v326, %v328
    %v330 = vrot.slane %v303, %v329
    %v332 = vunpack.c.l.s4 1983009808
    %v333 = vunpack.c.0.s8 %v332
    %v334 = vlaneseq
    %v335 = vshrl.u32 %v334, 7
    %v336 = vsub.s32 %v333, %v335
    %v337 = vrot.slane %v323, %v336
    %v338 = vcombine.high %v330, %v330
    %v339 = vcombine.high %v337, %v337
    %v340 = vcombine.high %v304, %v304
    %v342 = vunpack.c.l.s4 1983009808
    %v343 = vunpack.c.0.s8 %v342
    %v344 = vlaneseq
    %v345 = vshrl.u32 %v344, 7
    %v346 = vsub.s32 %v343, %v345
    %v347 = vrot.slane %v304, %v346
    %v349 = vunpack.c.l.s4 1983009808
    %v350 = vunpack.c.0.s8 %v349
    %v351 = vlaneseq
    %v352 = vshrl.u32 %v351, 7
    %v353 = vsub.s32 %v350, %v352
    %v354 = vrot.slane %v340, %v353
    %v355 = vcombine.high %v347, %v347
    %v356 = vcombine.high %v354, %v354
    %v357 = vcombine.high %v305, %v305
    %v359 = vunpack.c.l.s4 1983009808
    %v360 = vunpack.c.0.s8 %v359
    %v361 = vlaneseq
    %v362 = vshrl.u32 %v361, 7
    %v363 = vsub.s32 %v360, %v362
    %v364 = vrot.slane %v305, %v363
    %v366 = vunpack.c.l.s4 1983009808
    %v367 = vunpack.c.0.s8 %v366
    %v368 = vlaneseq
    %v369 = vshrl.u32 %v368, 7
    %v370 = vsub.s32 %v367, %v369
    %v371 = vrot.slane %v357, %v370
    %v372 = vcombine.high %v364, %v364
    %v373 = vcombine.high %v371, %v371
    %v374 = vcombine.high %v306, %v306
    %v376 = vunpack.c.l.s4 1983009808
    %v377 = vunpack.c.0.s8 %v376
    %v378 = vlaneseq
    %v379 = vshrl.u32 %v378, 7
    %v380 = vsub.s32 %v377, %v379
    %v381 = vrot.slane %v306, %v380
    %v383 = vunpack.c.l.s4 1983009808
    %v384 = vunpack.c.0.s8 %v383
    %v385 = vlaneseq
    %v386 = vshrl.u32 %v385, 7
    %v387 = vsub.s32 %v384, %v386
    %v388 = vrot.slane %v374, %v387
    %v389 = vcombine.high %v381, %v381
    %v390 = vcombine.high %v388, %v388
    %v391 = vcombine.high %v307, %v307
    %v393 = vunpack.c.l.s4 1983009808
    %v394 = vunpack.c.0.s8 %v393
    %v395 = vlaneseq
    %v396 = vshrl.u32 %v395, 7
    %v397 = vsub.s32 %v394, %v396
    %v398 = vrot.slane %v307, %v397
    %v400 = vunpack.c.l.s4 1983009808
    %v401 = vunpack.c.0.s8 %v400
    %v402 = vlaneseq
    %v403 = vshrl.u32 %v402, 7
    %v404 = vsub.s32 %v401, %v403
    %v405 = vrot.slane %v391, %v404
    %v406 = vcombine.high %v398, %v398
    %v407 = vcombine.high %v405, %v405
    %v408 = vcombine.high %v308, %v308
    %v410 = vunpack.c.l.s4 1983009808
    %v411 = vunpack.c.0.s8 %v410
    %v412 = vlaneseq
    %v413 = vshrl.u32 %v412, 7
    %v414 = vsub.s32 %v411, %v413
    %v415 = vrot.slane %v308, %v414
    %v417 = vunpack.c.l.s4 1983009808
    %v418 = vunpack.c.0.s8 %v417
    %v419 = vlaneseq
    %v420 = vshrl.u32 %v419, 7
    %v421 = vsub.s32 %v418, %v420
    %v422 = vrot.slane %v408, %v421
    %v423 = vcombine.high %v415, %v415
    %v424 = vcombine.high %v422, %v422
    %v425 = vcombine.high %v309, %v309
    %v427 = vunpack.c.l.s4 1983009808
    %v428 = vunpack.c.0.s8 %v427
    %v429 = vlaneseq
    %v430 = vshrl.u32 %v429, 7
    %v431 = vsub.s32 %v428, %v430
    %v432 = vrot.slane %v309, %v431
    %v434 = vunpack.c.l.s4 1983009808
    %v435 = vunpack.c.0.s8 %v434
    %v436 = vlaneseq
    %v437 = vshrl.u32 %v436, 7
    %v438 = vsub.s32 %v435, %v437
    %v439 = vrot.slane %v425, %v438
    %v440 = vcombine.high %v432, %v432
    %v441 = vcombine.high %v439, %v439
    %v442 = vcombine.high %v310, %v310
    %v444 = vunpack.c.l.s4 1983009808
    %v445 = vunpack.c.0.s8 %v444
    %v446 = vlaneseq
    %v447 = vshrl.u32 %v446, 7
    %v448 = vsub.s32 %v445, %v447
    %v449 = vrot.slane %v310, %v448
    %v451 = vunpack.c.l.s4 1983009808
    %v452 = vunpack.c.0.s8 %v451
    %v453 = vlaneseq
    %v454 = vshrl.u32 %v453, 7
    %v455 = vsub.s32 %v452, %v454
    %v456 = vrot.slane %v442, %v455
    %v457 = vcombine.high %v449, %v449
    %v458 = vcombine.high %v456, %v456
    %v459 = vcombine.high %v311, %v311
    %v461 = vunpack.c.l.s4 1983009808
    %v462 = vunpack.c.0.s8 %v461
    %v463 = vlaneseq
    %v464 = vshrl.u32 %v463, 7
    %v465 = vsub.s32 %v462, %v464
    %v466 = vrot.slane %v311, %v465
    %v468 = vunpack.c.l.s4 1983009808
    %v469 = vunpack.c.0.s8 %v468
    %v470 = vlaneseq
    %v471 = vshrl.u32 %v470, 7
    %v472 = vsub.s32 %v469, %v471
    %v473 = vrot.slane %v459, %v472
    %v474 = vcombine.high %v466, %v466
    %v475 = vcombine.high %v473, %v473
    %v476 = vcombine.high %v312, %v312
    %v478 = vunpack.c.l.s4 1983009808
    %v479 = vunpack.c.0.s8 %v478
    %v480 = vlaneseq
    %v481 = vshrl.u32 %v480, 7
    %v482 = vsub.s32 %v479, %v481
    %v483 = vrot.slane %v312, %v482
    %v485 = vunpack.c.l.s4 1983009808
    %v486 = vunpack.c.0.s8 %v485
    %v487 = vlaneseq
    %v488 = vshrl.u32 %v487, 7
    %v489 = vsub.s32 %v486, %v488
    %v490 = vrot.slane %v476, %v489
    %v491 = vcombine.high %v483, %v483
    %v492 = vcombine.high %v490, %v490
    %533 = vst [vmem:[#allocation2 + $0x140] sm:$0x3] %v330
    %534 = vst [vmem:[#allocation2 + $0x148] sm:$0x3] %v338
    %535 = vst [vmem:[#allocation2 + $0x150] sm:$0x3] %v337
    %536 = vst [vmem:[#allocation2 + $0x158] sm:$0x3] %v339
    %537 = vst [vmem:[#allocation2 + $0x160] sm:$0x3] %v347
    %538 = vst [vmem:[#allocation2 + $0x168] sm:$0x3] %v355
    %539 = vst [vmem:[#allocation2 + $0x170] sm:$0x3] %v354
    %540 = vst [vmem:[#allocation2 + $0x178] sm:$0x3] %v356
    %541 = vst [vmem:[#allocation2 + $0x180] sm:$0x3] %v364
    %542 = vst [vmem:[#allocation2 + $0x188] sm:$0x3] %v372
    %543 = vst [vmem:[#allocation2 + $0x190] sm:$0x3] %v371
    %544 = vst [vmem:[#allocation2 + $0x198] sm:$0x3] %v373
    %545 = vst [vmem:[#allocation2 + $0x1a0] sm:$0x3] %v381
    %546 = vst [vmem:[#allocation2 + $0x1a8] sm:$0x3] %v389
    %547 = vst [vmem:[#allocation2 + $0x1b0] sm:$0x3] %v388
    %548 = vst [vmem:[#allocation2 + $0x1b8] sm:$0x3] %v390
    %549 = vst [vmem:[#allocation2 + $0x1c0] sm:$0x3] %v398
    %550 = vst [vmem:[#allocation2 + $0x1c8] sm:$0x3] %v406
    %551 = vst [vmem:[#allocation2 + $0x1d0] sm:$0x3] %v405
    %552 = vst [vmem:[#allocation2 + $0x1d8] sm:$0x3] %v407
    %553 = vst [vmem:[#allocation2 + $0x1e0] sm:$0x3] %v415
    %554 = vst [vmem:[#allocation2 + $0x1e8] sm:$0x3] %v423
    %555 = vst [vmem:[#allocation2 + $0x1f0] sm:$0x3] %v422
    %556 = vst [vmem:[#allocation2 + $0x1f8] sm:$0x3] %v424
    %557 = vst [vmem:[#allocation2 + $0x200] sm:$0x3] %v432
    %558 = vst [vmem:[#allocation2 + $0x208] sm:$0x3] %v440
    %559 = vst [vmem:[#allocation2 + $0x210] sm:$0x3] %v439
    %560 = vst [vmem:[#allocation2 + $0x218] sm:$0x3] %v441
    %561 = vst [vmem:[#allocation2 + $0x220] sm:$0x3] %v449
    %562 = vst [vmem:[#allocation2 + $0x228] sm:$0x3] %v457
    %563 = vst [vmem:[#allocation2 + $0x230] sm:$0x3] %v456
    %564 = vst [vmem:[#allocation2 + $0x238] sm:$0x3] %v458
    %565 = vst [vmem:[#allocation2 + $0x240] sm:$0x3] %v466
    %566 = vst [vmem:[#allocation2 + $0x248] sm:$0x3] %v474
    %567 = vst [vmem:[#allocation2 + $0x250] sm:$0x3] %v473
    %568 = vst [vmem:[#allocation2 + $0x258] sm:$0x3] %v475
    %569 = vst [vmem:[#allocation2 + $0x260] sm:$0x3] %v483
    %570 = vst [vmem:[#allocation2 + $0x268] sm:$0x3] %v491
    %571 = vst [vmem:[#allocation2 + $0x270] sm:$0x3] %v490
    %572 = vst [vmem:[#allocation2 + $0x278] sm:$0x3] %v492
    %v573 = vld [vmem:[%s0 + $0x40] sm:$0xff]
    %v574 = vld [vmem:[%s0 + $0x48] sm:$0xff]
    %v575 = vld [vmem:[%s0 + $0x50] sm:$0xff]
    %v576 = vld [vmem:[%s0 + $0x58] sm:$0xff]
    %v577 = vld [vmem:[%s0 + $0x60] sm:$0xff]
    %v578 = vld [vmem:[%s0 + $0x68] sm:$0xff]
    %v579 = vld [vmem:[%s0 + $0x70] sm:$0xff]
    %v580 = vld [vmem:[%s0 + $0x78] sm:$0xff]
    %v581 = vld [vmem:[%s0 + $0x80] sm:$0xff]
    %v582 = vld [vmem:[%s0 + $0x88] sm:$0xff]
    %v593 = vcombine.high %v573, %v573
    %v595 = vunpack.c.l.s4 1983009808
    %v596 = vunpack.c.0.s8 %v595
    %v597 = vlaneseq
    %v598 = vshrl.u32 %v597, 7
    %v599 = vsub.s32 %v596, %v598
    %v600 = vrot.slane %v573, %v599
    %v602 = vunpack.c.l.s4 1983009808
    %v603 = vunpack.c.0.s8 %v602
    %v604 = vlaneseq
    %v605 = vshrl.u32 %v604, 7
    %v606 = vsub.s32 %v603, %v605
    %v607 = vrot.slane %v593, %v606
    %v608 = vcombine.high %v600, %v600
    %v609 = vcombine.high %v607, %v607
    %v610 = vcombine.high %v574, %v574
    %v612 = vunpack.c.l.s4 1983009808
    %v613 = vunpack.c.0.s8 %v612
    %v614 = vlaneseq
    %v615 = vshrl.u32 %v614, 7
    %v616 = vsub.s32 %v613, %v615
    %v617 = vrot.slane %v574, %v616
    %v619 = vunpack.c.l.s4 1983009808
    %v620 = vunpack.c.0.s8 %v619
    %v621 = vlaneseq
    %v622 = vshrl.u32 %v621, 7
    %v623 = vsub.s32 %v620, %v622
    %v624 = vrot.slane %v610, %v623
    %v625 = vcombine.high %v617, %v617
    %v626 = vcombine.high %v624, %v624
    %v627 = vcombine.high %v575, %v575
    %v629 = vunpack.c.l.s4 1983009808
    %v630 = vunpack.c.0.s8 %v629
    %v631 = vlaneseq
    %v632 = vshrl.u32 %v631, 7
    %v633 = vsub.s32 %v630, %v632
    %v634 = vrot.slane %v575, %v633
    %v636 = vunpack.c.l.s4 1983009808
    %v637 = vunpack.c.0.s8 %v636
    %v638 = vlaneseq
    %v639 = vshrl.u32 %v638, 7
    %v640 = vsub.s32 %v637, %v639
    %v641 = vrot.slane %v627, %v640
    %v642 = vcombine.high %v634, %v634
    %v643 = vcombine.high %v641, %v641
    %v644 = vcombine.high %v576, %v576
    %v646 = vunpack.c.l.s4 1983009808
    %v647 = vunpack.c.0.s8 %v646
    %v648 = vlaneseq
    %v649 = vshrl.u32 %v648, 7
    %v650 = vsub.s32 %v647, %v649
    %v651 = vrot.slane %v576, %v650
    %v653 = vunpack.c.l.s4 1983009808
    %v654 = vunpack.c.0.s8 %v653
    %v655 = vlaneseq
    %v656 = vshrl.u32 %v655, 7
    %v657 = vsub.s32 %v654, %v656
    %v658 = vrot.slane %v644, %v657
    %v659 = vcombine.high %v651, %v651
    %v660 = vcombine.high %v658, %v658
    %v661 = vcombine.high %v577, %v577
    %v663 = vunpack.c.l.s4 1983009808
    %v664 = vunpack.c.0.s8 %v663
    %v665 = vlaneseq
    %v666 = vshrl.u32 %v665, 7
    %v667 = vsub.s32 %v664, %v666
    %v668 = vrot.slane %v577, %v667
    %v670 = vunpack.c.l.s4 1983009808
    %v671 = vunpack.c.0.s8 %v670
    %v672 = vlaneseq
    %v673 = vshrl.u32 %v672, 7
    %v674 = vsub.s32 %v671, %v673
    %v675 = vrot.slane %v661, %v674
    %v676 = vcombine.high %v668, %v668
    %v677 = vcombine.high %v675, %v675
    %v678 = vcombine.high %v578, %v578
    %v680 = vunpack.c.l.s4 1983009808
    %v681 = vunpack.c.0.s8 %v680
    %v682 = vlaneseq
    %v683 = vshrl.u32 %v682, 7
    %v684 = vsub.s32 %v681, %v683
    %v685 = vrot.slane %v578, %v684
    %v687 = vunpack.c.l.s4 1983009808
    %v688 = vunpack.c.0.s8 %v687
    %v689 = vlaneseq
    %v690 = vshrl.u32 %v689, 7
    %v691 = vsub.s32 %v688, %v690
    %v692 = vrot.slane %v678, %v691
    %v693 = vcombine.high %v685, %v685
    %v694 = vcombine.high %v692, %v692
    %v695 = vcombine.high %v579, %v579
    %v697 = vunpack.c.l.s4 1983009808
    %v698 = vunpack.c.0.s8 %v697
    %v699 = vlaneseq
    %v700 = vshrl.u32 %v699, 7
    %v701 = vsub.s32 %v698, %v700
    %v702 = vrot.slane %v579, %v701
    %v704 = vunpack.c.l.s4 1983009808
    %v705 = vunpack.c.0.s8 %v704
    %v706 = vlaneseq
    %v707 = vshrl.u32 %v706, 7
    %v708 = vsub.s32 %v705, %v707
    %v709 = vrot.slane %v695, %v708
    %v710 = vcombine.high %v702, %v702
    %v711 = vcombine.high %v709, %v709
    %v712 = vcombine.high %v580, %v580
    %v714 = vunpack.c.l.s4 1983009808
    %v715 = vunpack.c.0.s8 %v714
    %v716 = vlaneseq
    %v717 = vshrl.u32 %v716, 7
    %v718 = vsub.s32 %v715, %v717
    %v719 = vrot.slane %v580, %v718
    %v721 = vunpack.c.l.s4 1983009808
    %v722 = vunpack.c.0.s8 %v721
    %v723 = vlaneseq
    %v724 = vshrl.u32 %v723, 7
    %v725 = vsub.s32 %v722, %v724
    %v726 = vrot.slane %v712, %v725
    %v727 = vcombine.high %v719, %v719
    %v728 = vcombine.high %v726, %v726
    %v729 = vcombine.high %v581, %v581
    %v731 = vunpack.c.l.s4 1983009808
    %v732 = vunpack.c.0.s8 %v731
    %v733 = vlaneseq
    %v734 = vshrl.u32 %v733, 7
    %v735 = vsub.s32 %v732, %v734
    %v736 = vrot.slane %v581, %v735
    %v738 = vunpack.c.l.s4 1983009808
    %v739 = vunpack.c.0.s8 %v738
    %v740 = vlaneseq
    %v741 = vshrl.u32 %v740, 7
    %v742 = vsub.s32 %v739, %v741
    %v743 = vrot.slane %v729, %v742
    %v744 = vcombine.high %v736, %v736
    %v745 = vcombine.high %v743, %v743
    %v746 = vcombine.high %v582, %v582
    %v748 = vunpack.c.l.s4 1983009808
    %v749 = vunpack.c.0.s8 %v748
    %v750 = vlaneseq
    %v751 = vshrl.u32 %v750, 7
    %v752 = vsub.s32 %v749, %v751
    %v753 = vrot.slane %v582, %v752
    %v755 = vunpack.c.l.s4 1983009808
    %v756 = vunpack.c.0.s8 %v755
    %v757 = vlaneseq
    %v758 = vshrl.u32 %v757, 7
    %v759 = vsub.s32 %v756, %v758
    %v760 = vrot.slane %v746, %v759
    %v761 = vcombine.high %v753, %v753
    %v762 = vcombine.high %v760, %v760
    %803 = vst [vmem:[#allocation2 + $0x280] sm:$0x3] %v600
    %804 = vst [vmem:[#allocation2 + $0x288] sm:$0x3] %v608
    %805 = vst [vmem:[#allocation2 + $0x290] sm:$0x3] %v607
    %806 = vst [vmem:[#allocation2 + $0x298] sm:$0x3] %v609
    %807 = vst [vmem:[#allocation2 + $0x2a0] sm:$0x3] %v617
    %808 = vst [vmem:[#allocation2 + $0x2a8] sm:$0x3] %v625
    %809 = vst [vmem:[#allocation2 + $0x2b0] sm:$0x3] %v624
    %810 = vst [vmem:[#allocation2 + $0x2b8] sm:$0x3] %v626
    %811 = vst [vmem:[#allocation2 + $0x2c0] sm:$0x3] %v634
    %812 = vst [vmem:[#allocation2 + $0x2c8] sm:$0x3] %v642
    %813 = vst [vmem:[#allocation2 + $0x2d0] sm:$0x3] %v641
    %814 = vst [vmem:[#allocation2 + $0x2d8] sm:$0x3] %v643
    %815 = vst [vmem:[#allocation2 + $0x2e0] sm:$0x3] %v651
    %816 = vst [vmem:[#allocation2 + $0x2e8] sm:$0x3] %v659
    %817 = vst [vmem:[#allocation2 + $0x2f0] sm:$0x3] %v658
    %818 = vst [vmem:[#allocation2 + $0x2f8] sm:$0x3] %v660
    %819 = vst [vmem:[#allocation2 + $0x300] sm:$0x3] %v668
    %820 = vst [vmem:[#allocation2 + $0x308] sm:$0x3] %v676
    %821 = vst [vmem:[#allocation2 + $0x310] sm:$0x3] %v675
    %822 = vst [vmem:[#allocation2 + $0x318] sm:$0x3] %v677
    %823 = vst [vmem:[#allocation2 + $0x320] sm:$0x3] %v685
    %824 = vst [vmem:[#allocation2 + $0x328] sm:$0x3] %v693
    %825 = vst [vmem:[#allocation2 + $0x330] sm:$0x3] %v692
    %826 = vst [vmem:[#allocation2 + $0x338] sm:$0x3] %v694
    %827 = vst [vmem:[#allocation2 + $0x340] sm:$0x3] %v702
    %828 = vst [vmem:[#allocation2 + $0x348] sm:$0x3] %v710
    %829 = vst [vmem:[#allocation2 + $0x350] sm:$0x3] %v709
    %830 = vst [vmem:[#allocation2 + $0x358] sm:$0x3] %v711
    %831 = vst [vmem:[#allocation2 + $0x360] sm:$0x3] %v719
    %832 = vst [vmem:[#allocation2 + $0x368] sm:$0x3] %v727
    %833 = vst [vmem:[#allocation2 + $0x370] sm:$0x3] %v726
    %834 = vst [vmem:[#allocation2 + $0x378] sm:$0x3] %v728
    %835 = vst [vmem:[#allocation2 + $0x380] sm:$0x3] %v736
    %836 = vst [vmem:[#allocation2 + $0x388] sm:$0x3] %v744
    %837 = vst [vmem:[#allocation2 + $0x390] sm:$0x3] %v743
    %838 = vst [vmem:[#allocation2 + $0x398] sm:$0x3] %v745
    %839 = vst [vmem:[#allocation2 + $0x3a0] sm:$0x3] %v753
    %840 = vst [vmem:[#allocation2 + $0x3a8] sm:$0x3] %v761
    %841 = vst [vmem:[#allocation2 + $0x3b0] sm:$0x3] %v760
    %842 = vst [vmem:[#allocation2 + $0x3b8] sm:$0x3] %v762
    %v843 = vld [vmem:[%s0 + $0x60] sm:$0xff]
    %v844 = vld [vmem:[%s0 + $0x68] sm:$0xff]
    %v845 = vld [vmem:[%s0 + $0x70] sm:$0xff]
    %v846 = vld [vmem:[%s0 + $0x78] sm:$0xff]
    %v847 = vld [vmem:[%s0 + $0x80] sm:$0xff]
    %v848 = vld [vmem:[%s0 + $0x88] sm:$0xff]
    %v849 = vld [vmem:[%s0 + $0x90] sm:$0xff]
    %v850 = vld [vmem:[%s0 + $0x98] sm:$0xff]
    %v851 = vld [vmem:[%s0 + $0xa0] sm:$0xff]
    %v852 = vld [vmem:[%s0 + $0xa8] sm:$0xff]
    %v863 = vcombine.high %v843, %v843
    %v865 = vunpack.c.l.s4 1983009808
    %v866 = vunpack.c.0.s8 %v865
    %v867 = vlaneseq
    %v868 = vshrl.u32 %v867, 7
    %v869 = vsub.s32 %v866, %v868
    %v870 = vrot.slane %v843, %v869
    %v872 = vunpack.c.l.s4 1983009808
    %v873 = vunpack.c.0.s8 %v872
    %v874 = vlaneseq
    %v875 = vshrl.u32 %v874, 7
    %v876 = vsub.s32 %v873, %v875
    %v877 = vrot.slane %v863, %v876
    %v878 = vcombine.high %v870, %v870
    %v879 = vcombine.high %v877, %v877
    %v880 = vcombine.high %v844, %v844
    %v882 = vunpack.c.l.s4 1983009808
    %v883 = vunpack.c.0.s8 %v882
    %v884 = vlaneseq
    %v885 = vshrl.u32 %v884, 7
    %v886 = vsub.s32 %v883, %v885
    %v887 = vrot.slane %v844, %v886
    %v889 = vunpack.c.l.s4 1983009808
    %v890 = vunpack.c.0.s8 %v889
    %v891 = vlaneseq
    %v892 = vshrl.u32 %v891, 7
    %v893 = vsub.s32 %v890, %v892
    %v894 = vrot.slane %v880, %v893
    %v895 = vcombine.high %v887, %v887
    %v896 = vcombine.high %v894, %v894
    %v897 = vcombine.high %v845, %v845
    %v899 = vunpack.c.l.s4 1983009808
    %v900 = vunpack.c.0.s8 %v899
    %v901 = vlaneseq
    %v902 = vshrl.u32 %v901, 7
    %v903 = vsub.s32 %v900, %v902
    %v904 = vrot.slane %v845, %v903
    %v906 = vunpack.c.l.s4 1983009808
    %v907 = vunpack.c.0.s8 %v906
    %v908 = vlaneseq
    %v909 = vshrl.u32 %v908, 7
    %v910 = vsub.s32 %v907, %v909
    %v911 = vrot.slane %v897, %v910
    %v912 = vcombine.high %v904, %v904
    %v913 = vcombine.high %v911, %v911
    %v914 = vcombine.high %v846, %v846
    %v916 = vunpack.c.l.s4 1983009808
    %v917 = vunpack.c.0.s8 %v916
    %v918 = vlaneseq
    %v919 = vshrl.u32 %v918, 7
    %v920 = vsub.s32 %v917, %v919
    %v921 = vrot.slane %v846, %v920
    %v923 = vunpack.c.l.s4 1983009808
    %v924 = vunpack.c.0.s8 %v923
    %v925 = vlaneseq
    %v926 = vshrl.u32 %v925, 7
    %v927 = vsub.s32 %v924, %v926
    %v928 = vrot.slane %v914, %v927
    %v929 = vcombine.high %v921, %v921
    %v930 = vcombine.high %v928, %v928
    %v931 = vcombine.high %v847, %v847
    %v933 = vunpack.c.l.s4 1983009808
    %v934 = vunpack.c.0.s8 %v933
    %v935 = vlaneseq
    %v936 = vshrl.u32 %v935, 7
    %v937 = vsub.s32 %v934, %v936
    %v938 = vrot.slane %v847, %v937
    %v940 = vunpack.c.l.s4 1983009808
    %v941 = vunpack.c.0.s8 %v940
    %v942 = vlaneseq
    %v943 = vshrl.u32 %v942, 7
    %v944 = vsub.s32 %v941, %v943
    %v945 = vrot.slane %v931, %v944
    %v946 = vcombine.high %v938, %v938
    %v947 = vcombine.high %v945, %v945
    %v948 = vcombine.high %v848, %v848
    %v950 = vunpack.c.l.s4 1983009808
    %v951 = vunpack.c.0.s8 %v950
    %v952 = vlaneseq
    %v953 = vshrl.u32 %v952, 7
    %v954 = vsub.s32 %v951, %v953
    %v955 = vrot.slane %v848, %v954
    %v957 = vunpack.c.l.s4 1983009808
    %v958 = vunpack.c.0.s8 %v957
    %v959 = vlaneseq
    %v960 = vshrl.u32 %v959, 7
    %v961 = vsub.s32 %v958, %v960
    %v962 = vrot.slane %v948, %v961
    %v963 = vcombine.high %v955, %v955
    %v964 = vcombine.high %v962, %v962
    %v965 = vcombine.high %v849, %v849
    %v967 = vunpack.c.l.s4 1983009808
    %v968 = vunpack.c.0.s8 %v967
    %v969 = vlaneseq
    %v970 = vshrl.u32 %v969, 7
    %v971 = vsub.s32 %v968, %v970
    %v972 = vrot.slane %v849, %v971
    %v974 = vunpack.c.l.s4 1983009808
    %v975 = vunpack.c.0.s8 %v974
    %v976 = vlaneseq
    %v977 = vshrl.u32 %v976, 7
    %v978 = vsub.s32 %v975, %v977
    %v979 = vrot.slane %v965, %v978
    %v980 = vcombine.high %v972, %v972
    %v981 = vcombine.high %v979, %v979
    %v982 = vcombine.high %v850, %v850
    %v984 = vunpack.c.l.s4 1983009808
    %v985 = vunpack.c.0.s8 %v984
    %v986 = vlaneseq
    %v987 = vshrl.u32 %v986, 7
    %v988 = vsub.s32 %v985, %v987
    %v989 = vrot.slane %v850, %v988
    %v991 = vunpack.c.l.s4 1983009808
    %v992 = vunpack.c.0.s8 %v991
    %v993 = vlaneseq
    %v994 = vshrl.u32 %v993, 7
    %v995 = vsub.s32 %v992, %v994
    %v996 = vrot.slane %v982, %v995
    %v997 = vcombine.high %v989, %v989
    %v998 = vcombine.high %v996, %v996
    %v999 = vcombine.high %v851, %v851
    %v1001 = vunpack.c.l.s4 1983009808
    %v1002 = vunpack.c.0.s8 %v1001
    %v1003 = vlaneseq
    %v1004 = vshrl.u32 %v1003, 7
    %v1005 = vsub.s32 %v1002, %v1004
    %v1006 = vrot.slane %v851, %v1005
    %v1008 = vunpack.c.l.s4 1983009808
    %v1009 = vunpack.c.0.s8 %v1008
    %v1010 = vlaneseq
    %v1011 = vshrl.u32 %v1010, 7
    %v1012 = vsub.s32 %v1009, %v1011
    %v1013 = vrot.slane %v999, %v1012
    %v1014 = vcombine.high %v1006, %v1006
    %v1015 = vcombine.high %v1013, %v1013
    %v1016 = vcombine.high %v852, %v852
    %v1018 = vunpack.c.l.s4 1983009808
    %v1019 = vunpack.c.0.s8 %v1018
    %v1020 = vlaneseq
    %v1021 = vshrl.u32 %v1020, 7
    %v1022 = vsub.s32 %v1019, %v1021
    %v1023 = vrot.slane %v852, %v1022
    %v1025 = vunpack.c.l.s4 1983009808
    %v1026 = vunpack.c.0.s8 %v1025
    %v1027 = vlaneseq
    %v1028 = vshrl.u32 %v1027, 7
    %v1029 = vsub.s32 %v1026, %v1028
    %v1030 = vrot.slane %v1016, %v1029
    %v1031 = vcombine.high %v1023, %v1023
    %v1032 = vcombine.high %v1030, %v1030
    %1073 = vst [vmem:[#allocation2 + $0x3c0] sm:$0x3] %v870
    %1074 = vst [vmem:[#allocation2 + $0x3c8] sm:$0x3] %v878
    %1075 = vst [vmem:[#allocation2 + $0x3d0] sm:$0x3] %v877
    %1076 = vst [vmem:[#allocation2 + $0x3d8] sm:$0x3] %v879
    %1077 = vst [vmem:[#allocation2 + $0x3e0] sm:$0x3] %v887
    %1078 = vst [vmem:[#allocation2 + $0x3e8] sm:$0x3] %v895
    %1079 = vst [vmem:[#allocation2 + $0x3f0] sm:$0x3] %v894
    %1080 = vst [vmem:[#allocation2 + $0x3f8] sm:$0x3] %v896
    %1081 = vst [vmem:[#allocation2 + $0x400] sm:$0x3] %v904
    %1082 = vst [vmem:[#allocation2 + $0x408] sm:$0x3] %v912
    %1083 = vst [vmem:[#allocation2 + $0x410] sm:$0x3] %v911
    %1084 = vst [vmem:[#allocation2 + $0x418] sm:$0x3] %v913
    %1085 = vst [vmem:[#allocation2 + $0x420] sm:$0x3] %v921
    %1086 = vst [vmem:[#allocation2 + $0x428] sm:$0x3] %v929
    %1087 = vst [vmem:[#allocation2 + $0x430] sm:$0x3] %v928
    %1088 = vst [vmem:[#allocation2 + $0x438] sm:$0x3] %v930
    %1089 = vst [vmem:[#allocation2 + $0x440] sm:$0x3] %v938
    %1090 = vst [vmem:[#allocation2 + $0x448] sm:$0x3] %v946
    %1091 = vst [vmem:[#allocation2 + $0x450] sm:$0x3] %v945
    %1092 = vst [vmem:[#allocation2 + $0x458] sm:$0x3] %v947
    %1093 = vst [vmem:[#allocation2 + $0x460] sm:$0x3] %v955
    %1094 = vst [vmem:[#allocation2 + $0x468] sm:$0x3] %v963
    %1095 = vst [vmem:[#allocation2 + $0x470] sm:$0x3] %v962
    %1096 = vst [vmem:[#allocation2 + $0x478] sm:$0x3] %v964
    %1097 = vst [vmem:[#allocation2 + $0x480] sm:$0x3] %v972
    %1098 = vst [vmem:[#allocation2 + $0x488] sm:$0x3] %v980
    %1099 = vst [vmem:[#allocation2 + $0x490] sm:$0x3] %v979
    %1100 = vst [vmem:[#allocation2 + $0x498] sm:$0x3] %v981
    %1101 = vst [vmem:[#allocation2 + $0x4a0] sm:$0x3] %v989
    %1102 = vst [vmem:[#allocation2 + $0x4a8] sm:$0x3] %v997
    %1103 = vst [vmem:[#allocation2 + $0x4b0] sm:$0x3] %v996
    %1104 = vst [vmem:[#allocation2 + $0x4b8] sm:$0x3] %v998
    %1105 = vst [vmem:[#allocation2 + $0x4c0] sm:$0x3] %v1006
    %1106 = vst [vmem:[#allocation2 + $0x4c8] sm:$0x3] %v1014
    %1107 = vst [vmem:[#allocation2 + $0x4d0] sm:$0x3] %v1013
    %1108 = vst [vmem:[#allocation2 + $0x4d8] sm:$0x3] %v1015
    %1109 = vst [vmem:[#allocation2 + $0x4e0] sm:$0x3] %v1023
    %1110 = vst [vmem:[#allocation2 + $0x4e8] sm:$0x3] %v1031
    %1111 = vst [vmem:[#allocation2 + $0x4f0] sm:$0x3] %v1030
    %1112 = vst [vmem:[#allocation2 + $0x4f8] sm:$0x3] %v1032
    %v1113 = vld [vmem:[%s0 + $0x80] sm:$0xff]
    %v1114 = vld [vmem:[%s0 + $0x88] sm:$0xff]
    %v1115 = vld [vmem:[%s0 + $0x90] sm:$0xff]
    %v1116 = vld [vmem:[%s0 + $0x98] sm:$0xff]
    %v1117 = vld [vmem:[%s0 + $0xa0] sm:$0xff]
    %v1118 = vld [vmem:[%s0 + $0xa8] sm:$0xff]
    %v1119 = vld [vmem:[%s0 + $0xb0] sm:$0xff]
    %v1120 = vld [vmem:[%s0 + $0xb8] sm:$0xff]
    %v1121 = vld [vmem:[%s0 + $0xc0] sm:$0xff]
    %v1122 = vld [vmem:[%s0 + $0xc8] sm:$0xff]
    %v1133 = vcombine.high %v1113, %v1113
    %v1135 = vunpack.c.l.s4 1983009808
    %v1136 = vunpack.c.0.s8 %v1135
    %v1137 = vlaneseq
    %v1138 = vshrl.u32 %v1137, 7
    %v1139 = vsub.s32 %v1136, %v1138
    %v1140 = vrot.slane %v1113, %v1139
    %v1142 = vunpack.c.l.s4 1983009808
    %v1143 = vunpack.c.0.s8 %v1142
    %v1144 = vlaneseq
    %v1145 = vshrl.u32 %v1144, 7
    %v1146 = vsub.s32 %v1143, %v1145
    %v1147 = vrot.slane %v1133, %v1146
    %v1148 = vcombine.high %v1140, %v1140
    %v1149 = vcombine.high %v1147, %v1147
    %v1150 = vcombine.high %v1114, %v1114
    %v1152 = vunpack.c.l.s4 1983009808
    %v1153 = vunpack.c.0.s8 %v1152
    %v1154 = vlaneseq
    %v1155 = vshrl.u32 %v1154, 7
    %v1156 = vsub.s32 %v1153, %v1155
    %v1157 = vrot.slane %v1114, %v1156
    %v1159 = vunpack.c.l.s4 1983009808
    %v1160 = vunpack.c.0.s8 %v1159
    %v1161 = vlaneseq
    %v1162 = vshrl.u32 %v1161, 7
    %v1163 = vsub.s32 %v1160, %v1162
    %v1164 = vrot.slane %v1150, %v1163
    %v1165 = vcombine.high %v1157, %v1157
    %v1166 = vcombine.high %v1164, %v1164
    %v1167 = vcombine.high %v1115, %v1115
    %v1169 = vunpack.c.l.s4 1983009808
    %v1170 = vunpack.c.0.s8 %v1169
    %v1171 = vlaneseq
    %v1172 = vshrl.u32 %v1171, 7
    %v1173 = vsub.s32 %v1170, %v1172
    %v1174 = vrot.slane %v1115, %v1173
    %v1176 = vunpack.c.l.s4 1983009808
    %v1177 = vunpack.c.0.s8 %v1176
    %v1178 = vlaneseq
    %v1179 = vshrl.u32 %v1178, 7
    %v1180 = vsub.s32 %v1177, %v1179
    %v1181 = vrot.slane %v1167, %v1180
    %v1182 = vcombine.high %v1174, %v1174
    %v1183 = vcombine.high %v1181, %v1181
    %v1184 = vcombine.high %v1116, %v1116
    %v1186 = vunpack.c.l.s4 1983009808
    %v1187 = vunpack.c.0.s8 %v1186
    %v1188 = vlaneseq
    %v1189 = vshrl.u32 %v1188, 7
    %v1190 = vsub.s32 %v1187, %v1189
    %v1191 = vrot.slane %v1116, %v1190
    %v1193 = vunpack.c.l.s4 1983009808
    %v1194 = vunpack.c.0.s8 %v1193
    %v1195 = vlaneseq
    %v1196 = vshrl.u32 %v1195, 7
    %v1197 = vsub.s32 %v1194, %v1196
    %v1198 = vrot.slane %v1184, %v1197
    %v1199 = vcombine.high %v1191, %v1191
    %v1200 = vcombine.high %v1198, %v1198
    %v1201 = vcombine.high %v1117, %v1117
    %v1203 = vunpack.c.l.s4 1983009808
    %v1204 = vunpack.c.0.s8 %v1203
    %v1205 = vlaneseq
    %v1206 = vshrl.u32 %v1205, 7
    %v1207 = vsub.s32 %v1204, %v1206
    %v1208 = vrot.slane %v1117, %v1207
    %v1210 = vunpack.c.l.s4 1983009808
    %v1211 = vunpack.c.0.s8 %v1210
    %v1212 = vlaneseq
    %v1213 = vshrl.u32 %v1212, 7
    %v1214 = vsub.s32 %v1211, %v1213
    %v1215 = vrot.slane %v1201, %v1214
    %v1216 = vcombine.high %v1208, %v1208
    %v1217 = vcombine.high %v1215, %v1215
    %v1218 = vcombine.high %v1118, %v1118
    %v1220 = vunpack.c.l.s4 1983009808
    %v1221 = vunpack.c.0.s8 %v1220
    %v1222 = vlaneseq
    %v1223 = vshrl.u32 %v1222, 7
    %v1224 = vsub.s32 %v1221, %v1223
    %v1225 = vrot.slane %v1118, %v1224
    %v1227 = vunpack.c.l.s4 1983009808
    %v1228 = vunpack.c.0.s8 %v1227
    %v1229 = vlaneseq
    %v1230 = vshrl.u32 %v1229, 7
    %v1231 = vsub.s32 %v1228, %v1230
    %v1232 = vrot.slane %v1218, %v1231
    %v1233 = vcombine.high %v1225, %v1225
    %v1234 = vcombine.high %v1232, %v1232
    %v1235 = vcombine.high %v1119, %v1119
    %v1237 = vunpack.c.l.s4 1983009808
    %v1238 = vunpack.c.0.s8 %v1237
    %v1239 = vlaneseq
    %v1240 = vshrl.u32 %v1239, 7
    %v1241 = vsub.s32 %v1238, %v1240
    %v1242 = vrot.slane %v1119, %v1241
    %v1244 = vunpack.c.l.s4 1983009808
    %v1245 = vunpack.c.0.s8 %v1244
    %v1246 = vlaneseq
    %v1247 = vshrl.u32 %v1246, 7
    %v1248 = vsub.s32 %v1245, %v1247
    %v1249 = vrot.slane %v1235, %v1248
    %v1250 = vcombine.high %v1242, %v1242
    %v1251 = vcombine.high %v1249, %v1249
    %v1252 = vcombine.high %v1120, %v1120
    %v1254 = vunpack.c.l.s4 1983009808
    %v1255 = vunpack.c.0.s8 %v1254
    %v1256 = vlaneseq
    %v1257 = vshrl.u32 %v1256, 7
    %v1258 = vsub.s32 %v1255, %v1257
    %v1259 = vrot.slane %v1120, %v1258
    %v1261 = vunpack.c.l.s4 1983009808
    %v1262 = vunpack.c.0.s8 %v1261
    %v1263 = vlaneseq
    %v1264 = vshrl.u32 %v1263, 7
    %v1265 = vsub.s32 %v1262, %v1264
    %v1266 = vrot.slane %v1252, %v1265
    %v1267 = vcombine.high %v1259, %v1259
    %v1268 = vcombine.high %v1266, %v1266
    %v1269 = vcombine.high %v1121, %v1121
    %v1271 = vunpack.c.l.s4 1983009808
    %v1272 = vunpack.c.0.s8 %v1271
    %v1273 = vlaneseq
    %v1274 = vshrl.u32 %v1273, 7
    %v1275 = vsub.s32 %v1272, %v1274
    %v1276 = vrot.slane %v1121, %v1275
    %v1278 = vunpack.c.l.s4 1983009808
    %v1279 = vunpack.c.0.s8 %v1278
    %v1280 = vlaneseq
    %v1281 = vshrl.u32 %v1280, 7
    %v1282 = vsub.s32 %v1279, %v1281
    %v1283 = vrot.slane %v1269, %v1282
    %v1284 = vcombine.high %v1276, %v1276
    %v1285 = vcombine.high %v1283, %v1283
    %v1286 = vcombine.high %v1122, %v1122
    %v1288 = vunpack.c.l.s4 1983009808
    %v1289 = vunpack.c.0.s8 %v1288
    %v1290 = vlaneseq
    %v1291 = vshrl.u32 %v1290, 7
    %v1292 = vsub.s32 %v1289, %v1291
    %v1293 = vrot.slane %v1122, %v1292
    %v1295 = vunpack.c.l.s4 1983009808
    %v1296 = vunpack.c.0.s8 %v1295
    %v1297 = vlaneseq
    %v1298 = vshrl.u32 %v1297, 7
    %v1299 = vsub.s32 %v1296, %v1298
    %v1300 = vrot.slane %v1286, %v1299
    %v1301 = vcombine.high %v1293, %v1293
    %v1302 = vcombine.high %v1300, %v1300
    %1343 = vst [vmem:[#allocation2 + $0x500] sm:$0x3] %v1140
    %1344 = vst [vmem:[#allocation2 + $0x508] sm:$0x3] %v1148
    %1345 = vst [vmem:[#allocation2 + $0x510] sm:$0x3] %v1147
    %1346 = vst [vmem:[#allocation2 + $0x518] sm:$0x3] %v1149
    %1347 = vst [vmem:[#allocation2 + $0x520] sm:$0x3] %v1157
    %1348 = vst [vmem:[#allocation2 + $0x528] sm:$0x3] %v1165
    %1349 = vst [vmem:[#allocation2 + $0x530] sm:$0x3] %v1164
    %1350 = vst [vmem:[#allocation2 + $0x538] sm:$0x3] %v1166
    %1351 = vst [vmem:[#allocation2 + $0x540] sm:$0x3] %v1174
    %1352 = vst [vmem:[#allocation2 + $0x548] sm:$0x3] %v1182
    %1353 = vst [vmem:[#allocation2 + $0x550] sm:$0x3] %v1181
    %1354 = vst [vmem:[#allocation2 + $0x558] sm:$0x3] %v1183
    %1355 = vst [vmem:[#allocation2 + $0x560] sm:$0x3] %v1191
    %1356 = vst [vmem:[#allocation2 + $0x568] sm:$0x3] %v1199
    %1357 = vst [vmem:[#allocation2 + $0x570] sm:$0x3] %v1198
    %1358 = vst [vmem:[#allocation2 + $0x578] sm:$0x3] %v1200
    %1359 = vst [vmem:[#allocation2 + $0x580] sm:$0x3] %v1208
    %1360 = vst [vmem:[#allocation2 + $0x588] sm:$0x3] %v1216
    %1361 = vst [vmem:[#allocation2 + $0x590] sm:$0x3] %v1215
    %1362 = vst [vmem:[#allocation2 + $0x598] sm:$0x3] %v1217
    %1363 = vst [vmem:[#allocation2 + $0x5a0] sm:$0x3] %v1225
    %1364 = vst [vmem:[#allocation2 + $0x5a8] sm:$0x3] %v1233
    %1365 = vst [vmem:[#allocation2 + $0x5b0] sm:$0x3] %v1232
    %1366 = vst [vmem:[#allocation2 + $0x5b8] sm:$0x3] %v1234
    %1367 = vst [vmem:[#allocation2 + $0x5c0] sm:$0x3] %v1242
    %1368 = vst [vmem:[#allocation2 + $0x5c8] sm:$0x3] %v1250
    %1369 = vst [vmem:[#allocation2 + $0x5d0] sm:$0x3] %v1249
    %1370 = vst [vmem:[#allocation2 + $0x5d8] sm:$0x3] %v1251
    %1371 = vst [vmem:[#allocation2 + $0x5e0] sm:$0x3] %v1259
    %1372 = vst [vmem:[#allocation2 + $0x5e8] sm:$0x3] %v1267
    %1373 = vst [vmem:[#allocation2 + $0x5f0] sm:$0x3] %v1266
    %1374 = vst [vmem:[#allocation2 + $0x5f8] sm:$0x3] %v1268
    %1375 = vst [vmem:[#allocation2 + $0x600] sm:$0x3] %v1276
    %1376 = vst [vmem:[#allocation2 + $0x608] sm:$0x3] %v1284
    %1377 = vst [vmem:[#allocation2 + $0x610] sm:$0x3] %v1283
    %1378 = vst [vmem:[#allocation2 + $0x618] sm:$0x3] %v1285
    %1379 = vst [vmem:[#allocation2 + $0x620] sm:$0x3] %v1293
    %1380 = vst [vmem:[#allocation2 + $0x628] sm:$0x3] %v1301
    %1381 = vst [vmem:[#allocation2 + $0x630] sm:$0x3] %v1300
    %1382 = vst [vmem:[#allocation2 + $0x638] sm:$0x3] %v1302
    %v1383 = vld [vmem:[%s0 + $0xa0] sm:$0xff]
    %v1384 = vld [vmem:[%s0 + $0xa8] sm:$0xff]
    %v1385 = vld [vmem:[%s0 + $0xb0] sm:$0xff]
    %v1386 = vld [vmem:[%s0 + $0xb8] sm:$0xff]
    %v1387 = vld [vmem:[%s0 + $0xc0] sm:$0xff]
    %v1388 = vld [vmem:[%s0 + $0xc8] sm:$0xff]
    %v1389 = vld [vmem:[%s0 + $0xd0] sm:$0xff]
    %v1390 = vld [vmem:[%s0 + $0xd8] sm:$0xff]
    %v1391 = vld [vmem:[%s0 + $0xe0] sm:$0xff]
    %v1392 = vld [vmem:[%s0 + $0xe8] sm:$0xff]
    %v1403 = vcombine.high %v1383, %v1383
    %v1405 = vunpack.c.l.s4 1983009808
    %v1406 = vunpack.c.0.s8 %v1405
    %v1407 = vlaneseq
    %v1408 = vshrl.u32 %v1407, 7
    %v1409 = vsub.s32 %v1406, %v1408
    %v1410 = vrot.slane %v1383, %v1409
    %v1412 = vunpack.c.l.s4 1983009808
    %v1413 = vunpack.c.0.s8 %v1412
    %v1414 = vlaneseq
    %v1415 = vshrl.u32 %v1414, 7
    %v1416 = vsub.s32 %v1413, %v1415
    %v1417 = vrot.slane %v1403, %v1416
    %v1418 = vcombine.high %v1410, %v1410
    %v1419 = vcombine.high %v1417, %v1417
    %v1420 = vcombine.high %v1384, %v1384
    %v1422 = vunpack.c.l.s4 1983009808
    %v1423 = vunpack.c.0.s8 %v1422
    %v1424 = vlaneseq
    %v1425 = vshrl.u32 %v1424, 7
    %v1426 = vsub.s32 %v1423, %v1425
    %v1427 = vrot.slane %v1384, %v1426
    %v1429 = vunpack.c.l.s4 1983009808
    %v1430 = vunpack.c.0.s8 %v1429
    %v1431 = vlaneseq
    %v1432 = vshrl.u32 %v1431, 7
    %v1433 = vsub.s32 %v1430, %v1432
    %v1434 = vrot.slane %v1420, %v1433
    %v1435 = vcombine.high %v1427, %v1427
    %v1436 = vcombine.high %v1434, %v1434
    %v1437 = vcombine.high %v1385, %v1385
    %v1439 = vunpack.c.l.s4 1983009808
    %v1440 = vunpack.c.0.s8 %v1439
    %v1441 = vlaneseq
    %v1442 = vshrl.u32 %v1441, 7
    %v1443 = vsub.s32 %v1440, %v1442
    %v1444 = vrot.slane %v1385, %v1443
    %v1446 = vunpack.c.l.s4 1983009808
    %v1447 = vunpack.c.0.s8 %v1446
    %v1448 = vlaneseq
    %v1449 = vshrl.u32 %v1448, 7
    %v1450 = vsub.s32 %v1447, %v1449
    %v1451 = vrot.slane %v1437, %v1450
    %v1452 = vcombine.high %v1444, %v1444
    %v1453 = vcombine.high %v1451, %v1451
    %v1454 = vcombine.high %v1386, %v1386
    %v1456 = vunpack.c.l.s4 1983009808
    %v1457 = vunpack.c.0.s8 %v1456
    %v1458 = vlaneseq
    %v1459 = vshrl.u32 %v1458, 7
    %v1460 = vsub.s32 %v1457, %v1459
    %v1461 = vrot.slane %v1386, %v1460
    %v1463 = vunpack.c.l.s4 1983009808
    %v1464 = vunpack.c.0.s8 %v1463
    %v1465 = vlaneseq
    %v1466 = vshrl.u32 %v1465, 7
    %v1467 = vsub.s32 %v1464, %v1466
    %v1468 = vrot.slane %v1454, %v1467
    %v1469 = vcombine.high %v1461, %v1461
    %v1470 = vcombine.high %v1468, %v1468
    %v1471 = vcombine.high %v1387, %v1387
    %v1473 = vunpack.c.l.s4 1983009808
    %v1474 = vunpack.c.0.s8 %v1473
    %v1475 = vlaneseq
    %v1476 = vshrl.u32 %v1475, 7
    %v1477 = vsub.s32 %v1474, %v1476
    %v1478 = vrot.slane %v1387, %v1477
    %v1480 = vunpack.c.l.s4 1983009808
    %v1481 = vunpack.c.0.s8 %v1480
    %v1482 = vlaneseq
    %v1483 = vshrl.u32 %v1482, 7
    %v1484 = vsub.s32 %v1481, %v1483
    %v1485 = vrot.slane %v1471, %v1484
    %v1486 = vcombine.high %v1478, %v1478
    %v1487 = vcombine.high %v1485, %v1485
    %v1488 = vcombine.high %v1388, %v1388
    %v1490 = vunpack.c.l.s4 1983009808
    %v1491 = vunpack.c.0.s8 %v1490
    %v1492 = vlaneseq
    %v1493 = vshrl.u32 %v1492, 7
    %v1494 = vsub.s32 %v1491, %v1493
    %v1495 = vrot.slane %v1388, %v1494
    %v1497 = vunpack.c.l.s4 1983009808
    %v1498 = vunpack.c.0.s8 %v1497
    %v1499 = vlaneseq
    %v1500 = vshrl.u32 %v1499, 7
    %v1501 = vsub.s32 %v1498, %v1500
    %v1502 = vrot.slane %v1488, %v1501
    %v1503 = vcombine.high %v1495, %v1495
    %v1504 = vcombine.high %v1502, %v1502
    %v1505 = vcombine.high %v1389, %v1389
    %v1507 = vunpack.c.l.s4 1983009808
    %v1508 = vunpack.c.0.s8 %v1507
    %v1509 = vlaneseq
    %v1510 = vshrl.u32 %v1509, 7
    %v1511 = vsub.s32 %v1508, %v1510
    %v1512 = vrot.slane %v1389, %v1511
    %v1514 = vunpack.c.l.s4 1983009808
    %v1515 = vunpack.c.0.s8 %v1514
    %v1516 = vlaneseq
    %v1517 = vshrl.u32 %v1516, 7
    %v1518 = vsub.s32 %v1515, %v1517
    %v1519 = vrot.slane %v1505, %v1518
    %v1520 = vcombine.high %v1512, %v1512
    %v1521 = vcombine.high %v1519, %v1519
    %v1522 = vcombine.high %v1390, %v1390
    %v1524 = vunpack.c.l.s4 1983009808
    %v1525 = vunpack.c.0.s8 %v1524
    %v1526 = vlaneseq
    %v1527 = vshrl.u32 %v1526, 7
    %v1528 = vsub.s32 %v1525, %v1527
    %v1529 = vrot.slane %v1390, %v1528
    %v1531 = vunpack.c.l.s4 1983009808
    %v1532 = vunpack.c.0.s8 %v1531
    %v1533 = vlaneseq
    %v1534 = vshrl.u32 %v1533, 7
    %v1535 = vsub.s32 %v1532, %v1534
    %v1536 = vrot.slane %v1522, %v1535
    %v1537 = vcombine.high %v1529, %v1529
    %v1538 = vcombine.high %v1536, %v1536
    %v1539 = vcombine.high %v1391, %v1391
    %v1541 = vunpack.c.l.s4 1983009808
    %v1542 = vunpack.c.0.s8 %v1541
    %v1543 = vlaneseq
    %v1544 = vshrl.u32 %v1543, 7
    %v1545 = vsub.s32 %v1542, %v1544
    %v1546 = vrot.slane %v1391, %v1545
    %v1548 = vunpack.c.l.s4 1983009808
    %v1549 = vunpack.c.0.s8 %v1548
    %v1550 = vlaneseq
    %v1551 = vshrl.u32 %v1550, 7
    %v1552 = vsub.s32 %v1549, %v1551
    %v1553 = vrot.slane %v1539, %v1552
    %v1554 = vcombine.high %v1546, %v1546
    %v1555 = vcombine.high %v1553, %v1553
    %v1556 = vcombine.high %v1392, %v1392
    %v1558 = vunpack.c.l.s4 1983009808
    %v1559 = vunpack.c.0.s8 %v1558
    %v1560 = vlaneseq
    %v1561 = vshrl.u32 %v1560, 7
    %v1562 = vsub.s32 %v1559, %v1561
    %v1563 = vrot.slane %v1392, %v1562
    %v1565 = vunpack.c.l.s4 1983009808
    %v1566 = vunpack.c.0.s8 %v1565
    %v1567 = vlaneseq
    %v1568 = vshrl.u32 %v1567, 7
    %v1569 = vsub.s32 %v1566, %v1568
    %v1570 = vrot.slane %v1556, %v1569
    %v1571 = vcombine.high %v1563, %v1563
    %v1572 = vcombine.high %v1570, %v1570
    %1613 = vst [vmem:[#allocation2 + $0x640] sm:$0x3] %v1410
    %1614 = vst [vmem:[#allocation2 + $0x648] sm:$0x3] %v1418
    %1615 = vst [vmem:[#allocation2 + $0x650] sm:$0x3] %v1417
    %1616 = vst [vmem:[#allocation2 + $0x658] sm:$0x3] %v1419
    %1617 = vst [vmem:[#allocation2 + $0x660] sm:$0x3] %v1427
    %1618 = vst [vmem:[#allocation2 + $0x668] sm:$0x3] %v1435
    %1619 = vst [vmem:[#allocation2 + $0x670] sm:$0x3] %v1434
    %1620 = vst [vmem:[#allocation2 + $0x678] sm:$0x3] %v1436
    %1621 = vst [vmem:[#allocation2 + $0x680] sm:$0x3] %v1444
    %1622 = vst [vmem:[#allocation2 + $0x688] sm:$0x3] %v1452
    %1623 = vst [vmem:[#allocation2 + $0x690] sm:$0x3] %v1451
    %1624 = vst [vmem:[#allocation2 + $0x698] sm:$0x3] %v1453
    %1625 = vst [vmem:[#allocation2 + $0x6a0] sm:$0x3] %v1461
    %1626 = vst [vmem:[#allocation2 + $0x6a8] sm:$0x3] %v1469
    %1627 = vst [vmem:[#allocation2 + $0x6b0] sm:$0x3] %v1468
    %1628 = vst [vmem:[#allocation2 + $0x6b8] sm:$0x3] %v1470
    %1629 = vst [vmem:[#allocation2 + $0x6c0] sm:$0x3] %v1478
    %1630 = vst [vmem:[#allocation2 + $0x6c8] sm:$0x3] %v1486
    %1631 = vst [vmem:[#allocation2 + $0x6d0] sm:$0x3] %v1485
    %1632 = vst [vmem:[#allocation2 + $0x6d8] sm:$0x3] %v1487
    %1633 = vst [vmem:[#allocation2 + $0x6e0] sm:$0x3] %v1495
    %1634 = vst [vmem:[#allocation2 + $0x6e8] sm:$0x3] %v1503
    %1635 = vst [vmem:[#allocation2 + $0x6f0] sm:$0x3] %v1502
    %1636 = vst [vmem:[#allocation2 + $0x6f8] sm:$0x3] %v1504
    %1637 = vst [vmem:[#allocation2 + $0x700] sm:$0x3] %v1512
    %1638 = vst [vmem:[#allocation2 + $0x708] sm:$0x3] %v1520
    %1639 = vst [vmem:[#allocation2 + $0x710] sm:$0x3] %v1519
    %1640 = vst [vmem:[#allocation2 + $0x718] sm:$0x3] %v1521
    %1641 = vst [vmem:[#allocation2 + $0x720] sm:$0x3] %v1529
    %1642 = vst [vmem:[#allocation2 + $0x728] sm:$0x3] %v1537
    %1643 = vst [vmem:[#allocation2 + $0x730] sm:$0x3] %v1536
    %1644 = vst [vmem:[#allocation2 + $0x738] sm:$0x3] %v1538
    %1645 = vst [vmem:[#allocation2 + $0x740] sm:$0x3] %v1546
    %1646 = vst [vmem:[#allocation2 + $0x748] sm:$0x3] %v1554
    %1647 = vst [vmem:[#allocation2 + $0x750] sm:$0x3] %v1553
    %1648 = vst [vmem:[#allocation2 + $0x758] sm:$0x3] %v1555
    %1649 = vst [vmem:[#allocation2 + $0x760] sm:$0x3] %v1563
    %1650 = vst [vmem:[#allocation2 + $0x768] sm:$0x3] %v1571
    %1651 = vst [vmem:[#allocation2 + $0x770] sm:$0x3] %v1570
    %1652 = vst [vmem:[#allocation2 + $0x778] sm:$0x3] %v1572
    %v1653 = vld [vmem:[%s0 + $0xc0] sm:$0xff]
    %v1654 = vld [vmem:[%s0 + $0xc8] sm:$0xff]
    %v1655 = vld [vmem:[%s0 + $0xd0] sm:$0xff]
    %v1656 = vld [vmem:[%s0 + $0xd8] sm:$0xff]
    %v1657 = vld [vmem:[%s0 + $0xe0] sm:$0xff]
    %v1658 = vld [vmem:[%s0 + $0xe8] sm:$0xff]
    %v1659 = vld [vmem:[%s0 + $0xf0] sm:$0xff]
    %v1660 = vld [vmem:[%s0 + $0xf8] sm:$0xff]
    %v1661 = vld [vmem:[%s0 + $0x100] sm:$0xff]
    %v1662 = vld [vmem:[%s0 + $0x108] sm:$0xff]
    %v1673 = vcombine.high %v1653, %v1653
    %v1675 = vunpack.c.l.s4 1983009808
    %v1676 = vunpack.c.0.s8 %v1675
    %v1677 = vlaneseq
    %v1678 = vshrl.u32 %v1677, 7
    %v1679 = vsub.s32 %v1676, %v1678
    %v1680 = vrot.slane %v1653, %v1679
    %v1682 = vunpack.c.l.s4 1983009808
    %v1683 = vunpack.c.0.s8 %v1682
    %v1684 = vlaneseq
    %v1685 = vshrl.u32 %v1684, 7
    %v1686 = vsub.s32 %v1683, %v1685
    %v1687 = vrot.slane %v1673, %v1686
    %v1688 = vcombine.high %v1680, %v1680
    %v1689 = vcombine.high %v1687, %v1687
    %v1690 = vcombine.high %v1654, %v1654
    %v1692 = vunpack.c.l.s4 1983009808
    %v1693 = vunpack.c.0.s8 %v1692
    %v1694 = vlaneseq
    %v1695 = vshrl.u32 %v1694, 7
    %v1696 = vsub.s32 %v1693, %v1695
    %v1697 = vrot.slane %v1654, %v1696
    %v1699 = vunpack.c.l.s4 1983009808
    %v1700 = vunpack.c.0.s8 %v1699
    %v1701 = vlaneseq
    %v1702 = vshrl.u32 %v1701, 7
    %v1703 = vsub.s32 %v1700, %v1702
    %v1704 = vrot.slane %v1690, %v1703
    %v1705 = vcombine.high %v1697, %v1697
    %v1706 = vcombine.high %v1704, %v1704
    %v1707 = vcombine.high %v1655, %v1655
    %v1709 = vunpack.c.l.s4 1983009808
    %v1710 = vunpack.c.0.s8 %v1709
    %v1711 = vlaneseq
    %v1712 = vshrl.u32 %v1711, 7
    %v1713 = vsub.s32 %v1710, %v1712
    %v1714 = vrot.slane %v1655, %v1713
    %v1716 = vunpack.c.l.s4 1983009808
    %v1717 = vunpack.c.0.s8 %v1716
    %v1718 = vlaneseq
    %v1719 = vshrl.u32 %v1718, 7
    %v1720 = vsub.s32 %v1717, %v1719
    %v1721 = vrot.slane %v1707, %v1720
    %v1722 = vcombine.high %v1714, %v1714
    %v1723 = vcombine.high %v1721, %v1721
    %v1724 = vcombine.high %v1656, %v1656
    %v1726 = vunpack.c.l.s4 1983009808
    %v1727 = vunpack.c.0.s8 %v1726
    %v1728 = vlaneseq
    %v1729 = vshrl.u32 %v1728, 7
    %v1730 = vsub.s32 %v1727, %v1729
    %v1731 = vrot.slane %v1656, %v1730
    %v1733 = vunpack.c.l.s4 1983009808
    %v1734 = vunpack.c.0.s8 %v1733
    %v1735 = vlaneseq
    %v1736 = vshrl.u32 %v1735, 7
    %v1737 = vsub.s32 %v1734, %v1736
    %v1738 = vrot.slane %v1724, %v1737
    %v1739 = vcombine.high %v1731, %v1731
    %v1740 = vcombine.high %v1738, %v1738
    %v1741 = vcombine.high %v1657, %v1657
    %v1743 = vunpack.c.l.s4 1983009808
    %v1744 = vunpack.c.0.s8 %v1743
    %v1745 = vlaneseq
    %v1746 = vshrl.u32 %v1745, 7
    %v1747 = vsub.s32 %v1744, %v1746
    %v1748 = vrot.slane %v1657, %v1747
    %v1750 = vunpack.c.l.s4 1983009808
    %v1751 = vunpack.c.0.s8 %v1750
    %v1752 = vlaneseq
    %v1753 = vshrl.u32 %v1752, 7
    %v1754 = vsub.s32 %v1751, %v1753
    %v1755 = vrot.slane %v1741, %v1754
    %v1756 = vcombine.high %v1748, %v1748
    %v1757 = vcombine.high %v1755, %v1755
    %v1758 = vcombine.high %v1658, %v1658
    %v1760 = vunpack.c.l.s4 1983009808
    %v1761 = vunpack.c.0.s8 %v1760
    %v1762 = vlaneseq
    %v1763 = vshrl.u32 %v1762, 7
    %v1764 = vsub.s32 %v1761, %v1763
    %v1765 = vrot.slane %v1658, %v1764
    %v1767 = vunpack.c.l.s4 1983009808
    %v1768 = vunpack.c.0.s8 %v1767
    %v1769 = vlaneseq
    %v1770 = vshrl.u32 %v1769, 7
    %v1771 = vsub.s32 %v1768, %v1770
    %v1772 = vrot.slane %v1758, %v1771
    %v1773 = vcombine.high %v1765, %v1765
    %v1774 = vcombine.high %v1772, %v1772
    %v1775 = vcombine.high %v1659, %v1659
    %v1777 = vunpack.c.l.s4 1983009808
    %v1778 = vunpack.c.0.s8 %v1777
    %v1779 = vlaneseq
    %v1780 = vshrl.u32 %v1779, 7
    %v1781 = vsub.s32 %v1778, %v1780
    %v1782 = vrot.slane %v1659, %v1781
    %v1784 = vunpack.c.l.s4 1983009808
    %v1785 = vunpack.c.0.s8 %v1784
    %v1786 = vlaneseq
    %v1787 = vshrl.u32 %v1786, 7
    %v1788 = vsub.s32 %v1785, %v1787
    %v1789 = vrot.slane %v1775, %v1788
    %v1790 = vcombine.high %v1782, %v1782
    %v1791 = vcombine.high %v1789, %v1789
    %v1792 = vcombine.high %v1660, %v1660
    %v1794 = vunpack.c.l.s4 1983009808
    %v1795 = vunpack.c.0.s8 %v1794
    %v1796 = vlaneseq
    %v1797 = vshrl.u32 %v1796, 7
    %v1798 = vsub.s32 %v1795, %v1797
    %v1799 = vrot.slane %v1660, %v1798
    %v1801 = vunpack.c.l.s4 1983009808
    %v1802 = vunpack.c.0.s8 %v1801
    %v1803 = vlaneseq
    %v1804 = vshrl.u32 %v1803, 7
    %v1805 = vsub.s32 %v1802, %v1804
    %v1806 = vrot.slane %v1792, %v1805
    %v1807 = vcombine.high %v1799, %v1799
    %v1808 = vcombine.high %v1806, %v1806
    %v1809 = vcombine.high %v1661, %v1661
    %v1811 = vunpack.c.l.s4 1983009808
    %v1812 = vunpack.c.0.s8 %v1811
    %v1813 = vlaneseq
    %v1814 = vshrl.u32 %v1813, 7
    %v1815 = vsub.s32 %v1812, %v1814
    %v1816 = vrot.slane %v1661, %v1815
    %v1818 = vunpack.c.l.s4 1983009808
    %v1819 = vunpack.c.0.s8 %v1818
    %v1820 = vlaneseq
    %v1821 = vshrl.u32 %v1820, 7
    %v1822 = vsub.s32 %v1819, %v1821
    %v1823 = vrot.slane %v1809, %v1822
    %v1824 = vcombine.high %v1816, %v1816
    %v1825 = vcombine.high %v1823, %v1823
    %v1826 = vcombine.high %v1662, %v1662
    %v1828 = vunpack.c.l.s4 1983009808
    %v1829 = vunpack.c.0.s8 %v1828
    %v1830 = vlaneseq
    %v1831 = vshrl.u32 %v1830, 7
    %v1832 = vsub.s32 %v1829, %v1831
    %v1833 = vrot.slane %v1662, %v1832
    %v1835 = vunpack.c.l.s4 1983009808
    %v1836 = vunpack.c.0.s8 %v1835
    %v1837 = vlaneseq
    %v1838 = vshrl.u32 %v1837, 7
    %v1839 = vsub.s32 %v1836, %v1838
    %v1840 = vrot.slane %v1826, %v1839
    %v1841 = vcombine.high %v1833, %v1833
    %v1842 = vcombine.high %v1840, %v1840
    %1883 = vst [vmem:[#allocation2 + $0x780] sm:$0x3] %v1680
    %1884 = vst [vmem:[#allocation2 + $0x788] sm:$0x3] %v1688
    %1885 = vst [vmem:[#allocation2 + $0x790] sm:$0x3] %v1687
    %1886 = vst [vmem:[#allocation2 + $0x798] sm:$0x3] %v1689
    %1887 = vst [vmem:[#allocation2 + $0x7a0] sm:$0x3] %v1697
    %1888 = vst [vmem:[#allocation2 + $0x7a8] sm:$0x3] %v1705
    %1889 = vst [vmem:[#allocation2 + $0x7b0] sm:$0x3] %v1704
    %1890 = vst [vmem:[#allocation2 + $0x7b8] sm:$0x3] %v1706
    %1891 = vst [vmem:[#allocation2 + $0x7c0] sm:$0x3] %v1714
    %1892 = vst [vmem:[#allocation2 + $0x7c8] sm:$0x3] %v1722
    %1893 = vst [vmem:[#allocation2 + $0x7d0] sm:$0x3] %v1721
    %1894 = vst [vmem:[#allocation2 + $0x7d8] sm:$0x3] %v1723
    %1895 = vst [vmem:[#allocation2 + $0x7e0] sm:$0x3] %v1731
    %1896 = vst [vmem:[#allocation2 + $0x7e8] sm:$0x3] %v1739
    %1897 = vst [vmem:[#allocation2 + $0x7f0] sm:$0x3] %v1738
    %1898 = vst [vmem:[#allocation2 + $0x7f8] sm:$0x3] %v1740
    %1899 = vst [vmem:[#allocation2 + $0x800] sm:$0x3] %v1748
    %1900 = vst [vmem:[#allocation2 + $0x808] sm:$0x3] %v1756
    %1901 = vst [vmem:[#allocation2 + $0x810] sm:$0x3] %v1755
    %1902 = vst [vmem:[#allocation2 + $0x818] sm:$0x3] %v1757
    %1903 = vst [vmem:[#allocation2 + $0x820] sm:$0x3] %v1765
    %1904 = vst [vmem:[#allocation2 + $0x828] sm:$0x3] %v1773
    %1905 = vst [vmem:[#allocation2 + $0x830] sm:$0x3] %v1772
    %1906 = vst [vmem:[#allocation2 + $0x838] sm:$0x3] %v1774
    %1907 = vst [vmem:[#allocation2 + $0x840] sm:$0x3] %v1782
    %1908 = vst [vmem:[#allocation2 + $0x848] sm:$0x3] %v1790
    %1909 = vst [vmem:[#allocation2 + $0x850] sm:$0x3] %v1789
    %1910 = vst [vmem:[#allocation2 + $0x858] sm:$0x3] %v1791
    %1911 = vst [vmem:[#allocation2 + $0x860] sm:$0x3] %v1799
    %1912 = vst [vmem:[#allocation2 + $0x868] sm:$0x3] %v1807
    %1913 = vst [vmem:[#allocation2 + $0x870] sm:$0x3] %v1806
    %1914 = vst [vmem:[#allocation2 + $0x878] sm:$0x3] %v1808
    %1915 = vst [vmem:[#allocation2 + $0x880] sm:$0x3] %v1816
    %1916 = vst [vmem:[#allocation2 + $0x888] sm:$0x3] %v1824
    %1917 = vst [vmem:[#allocation2 + $0x890] sm:$0x3] %v1823
    %1918 = vst [vmem:[#allocation2 + $0x898] sm:$0x3] %v1825
    %1919 = vst [vmem:[#allocation2 + $0x8a0] sm:$0x3] %v1833
    %1920 = vst [vmem:[#allocation2 + $0x8a8] sm:$0x3] %v1841
    %1921 = vst [vmem:[#allocation2 + $0x8b0] sm:$0x3] %v1840
    %1922 = vst [vmem:[#allocation2 + $0x8b8] sm:$0x3] %v1842
    %v1923 = vld [vmem:[#allocation2] sm:$0xff]
    %v1924 = vld [vmem:[#allocation2 + $0x8] sm:$0xff]
    %v1925 = vld [vmem:[#allocation2 + $0x10] sm:$0xff]
    %v1926 = vld [vmem:[#allocation2 + $0x18] sm:$0xff]
    %v1927 = vld [vmem:[#allocation2 + $0x20] sm:$0xff]
    %v1928 = vld [vmem:[#allocation2 + $0x28] sm:$0xff]
    %v1929 = vld [vmem:[#allocation2 + $0x30] sm:$0xff]
    %v1930 = vld [vmem:[#allocation2 + $0x38] sm:$0xff]
    %v1931 = vld [vmem:[#allocation2 + $0x40] sm:$0xff]
    %v1932 = vld [vmem:[#allocation2 + $0x48] sm:$0xff]
    %v1933 = vld [vmem:[#allocation2 + $0x50] sm:$0xff]
    %v1934 = vld [vmem:[#allocation2 + $0x58] sm:$0xff]
    %v1935 = vld [vmem:[#allocation2 + $0x60] sm:$0xff]
    %v1936 = vld [vmem:[#allocation2 + $0x68] sm:$0xff]
    %v1937 = vld [vmem:[#allocation2 + $0x70] sm:$0xff]
    %v1938 = vld [vmem:[#allocation2 + $0x78] sm:$0xff]
    %v1939 = vld [vmem:[#allocation2 + $0x80] sm:$0xff]
    %v1940 = vld [vmem:[#allocation2 + $0x88] sm:$0xff]
    %v1941 = vld [vmem:[#allocation2 + $0x90] sm:$0xff]
    %v1942 = vld [vmem:[#allocation2 + $0x98] sm:$0xff]
    %v1943 = vld [vmem:[#allocation2 + $0xa0] sm:$0xff]
    %v1944 = vld [vmem:[#allocation2 + $0xa8] sm:$0xff]
    %v1945 = vld [vmem:[#allocation2 + $0xb0] sm:$0xff]
    %v1946 = vld [vmem:[#allocation2 + $0xb8] sm:$0xff]
    %v1947 = vld [vmem:[#allocation2 + $0xc0] sm:$0xff]
    %v1948 = vld [vmem:[#allocation2 + $0xc8] sm:$0xff]
    %v1949 = vld [vmem:[#allocation2 + $0xd0] sm:$0xff]
    %v1950 = vld [vmem:[#allocation2 + $0xd8] sm:$0xff]
    %v1951 = vld [vmem:[#allocation2 + $0xe0] sm:$0xff]
    %v1952 = vld [vmem:[#allocation2 + $0xe8] sm:$0xff]
    %v1953 = vld [vmem:[#allocation2 + $0xf0] sm:$0xff]
    %v1954 = vld [vmem:[#allocation2 + $0xf8] sm:$0xff]
    %v1955 = vld [vmem:[#allocation2 + $0x100] sm:$0xff]
    %v1956 = vld [vmem:[#allocation2 + $0x108] sm:$0xff]
    %v1957 = vld [vmem:[#allocation2 + $0x110] sm:$0xff]
    %v1958 = vld [vmem:[#allocation2 + $0x118] sm:$0xff]
    %v1959 = vld [vmem:[#allocation2 + $0x120] sm:$0xff]
    %v1960 = vld [vmem:[#allocation2 + $0x128] sm:$0xff]
    %v1961 = vld [vmem:[#allocation2 + $0x130] sm:$0xff]
    %v1962 = vld [vmem:[#allocation2 + $0x138] sm:$0xff]
    %v1963 = vld [vmem:[#allocation2 + $0x140] sm:$0xff]
    %v1964 = vld [vmem:[#allocation2 + $0x148] sm:$0xff]
    %v1965 = vld [vmem:[#allocation2 + $0x150] sm:$0xff]
    %v1966 = vld [vmem:[#allocation2 + $0x158] sm:$0xff]
    %v1967 = vld [vmem:[#allocation2 + $0x160] sm:$0xff]
    %v1968 = vld [vmem:[#allocation2 + $0x168] sm:$0xff]
    %v1969 = vld [vmem:[#allocation2 + $0x170] sm:$0xff]
    %v1970 = vld [vmem:[#allocation2 + $0x178] sm:$0xff]
    %v1971 = vld [vmem:[#allocation2 + $0x180] sm:$0xff]
    %v1972 = vld [vmem:[#allocation2 + $0x188] sm:$0xff]
    %v1973 = vld [vmem:[#allocation2 + $0x190] sm:$0xff]
    %v1974 = vld [vmem:[#allocation2 + $0x198] sm:$0xff]
    %v1975 = vld [vmem:[#allocation2 + $0x1a0] sm:$0xff]
    %v1976 = vld [vmem:[#allocation2 + $0x1a8] sm:$0xff]
    %v1977 = vld [vmem:[#allocation2 + $0x1b0] sm:$0xff]
    %v1978 = vld [vmem:[#allocation2 + $0x1b8] sm:$0xff]
    %v1979 = vld [vmem:[#allocation2 + $0x1c0] sm:$0xff]
    %v1980 = vld [vmem:[#allocation2 + $0x1c8] sm:$0xff]
    %v1981 = vld [vmem:[#allocation2 + $0x1d0] sm:$0xff]
    %v1982 = vld [vmem:[#allocation2 + $0x1d8] sm:$0xff]
    %v1983 = vld [vmem:[#allocation2 + $0x1e0] sm:$0xff]
    %v1984 = vld [vmem:[#allocation2 + $0x1e8] sm:$0xff]
    %v1985 = vld [vmem:[#allocation2 + $0x1f0] sm:$0xff]
    %v1986 = vld [vmem:[#allocation2 + $0x1f8] sm:$0xff]
    %v1987 = vld [vmem:[#allocation2 + $0x200] sm:$0xff]
    %v1988 = vld [vmem:[#allocation2 + $0x208] sm:$0xff]
    %v1989 = vld [vmem:[#allocation2 + $0x210] sm:$0xff]
    %v1990 = vld [vmem:[#allocation2 + $0x218] sm:$0xff]
    %v1991 = vld [vmem:[#allocation2 + $0x220] sm:$0xff]
    %v1992 = vld [vmem:[#allocation2 + $0x228] sm:$0xff]
    %v1993 = vld [vmem:[#allocation2 + $0x230] sm:$0xff]
    %v1994 = vld [vmem:[#allocation2 + $0x238] sm:$0xff]
    %v1995 = vld [vmem:[#allocation2 + $0x240] sm:$0xff]
    %v1996 = vld [vmem:[#allocation2 + $0x248] sm:$0xff]
    %v1997 = vld [vmem:[#allocation2 + $0x250] sm:$0xff]
    %v1998 = vld [vmem:[#allocation2 + $0x258] sm:$0xff]
    %v1999 = vld [vmem:[#allocation2 + $0x260] sm:$0xff]
    %v2000 = vld [vmem:[#allocation2 + $0x268] sm:$0xff]
    %v2001 = vld [vmem:[#allocation2 + $0x270] sm:$0xff]
    %v2002 = vld [vmem:[#allocation2 + $0x278] sm:$0xff]
    %v2003 = vld [vmem:[#allocation2 + $0x280] sm:$0xff]
    %v2004 = vld [vmem:[#allocation2 + $0x288] sm:$0xff]
    %v2005 = vld [vmem:[#allocation2 + $0x290] sm:$0xff]
    %v2006 = vld [vmem:[#allocation2 + $0x298] sm:$0xff]
    %v2007 = vld [vmem:[#allocation2 + $0x2a0] sm:$0xff]
    %v2008 = vld [vmem:[#allocation2 + $0x2a8] sm:$0xff]
    %v2009 = vld [vmem:[#allocation2 + $0x2b0] sm:$0xff]
    %v2010 = vld [vmem:[#allocation2 + $0x2b8] sm:$0xff]
    %v2011 = vld [vmem:[#allocation2 + $0x2c0] sm:$0xff]
    %v2012 = vld [vmem:[#allocation2 + $0x2c8] sm:$0xff]
    %v2013 = vld [vmem:[#allocation2 + $0x2d0] sm:$0xff]
    %v2014 = vld [vmem:[#allocation2 + $0x2d8] sm:$0xff]
    %v2015 = vld [vmem:[#allocation2 + $0x2e0] sm:$0xff]
    %v2016 = vld [vmem:[#allocation2 + $0x2e8] sm:$0xff]
    %v2017 = vld [vmem:[#allocation2 + $0x2f0] sm:$0xff]
    %v2018 = vld [vmem:[#allocation2 + $0x2f8] sm:$0xff]
    %v2019 = vld [vmem:[#allocation2 + $0x300] sm:$0xff]
    %v2020 = vld [vmem:[#allocation2 + $0x308] sm:$0xff]
    %v2021 = vld [vmem:[#allocation2 + $0x310] sm:$0xff]
    %v2022 = vld [vmem:[#allocation2 + $0x318] sm:$0xff]
    %v2023 = vld [vmem:[#allocation2 + $0x320] sm:$0xff]
    %v2024 = vld [vmem:[#allocation2 + $0x328] sm:$0xff]
    %v2025 = vld [vmem:[#allocation2 + $0x330] sm:$0xff]
    %v2026 = vld [vmem:[#allocation2 + $0x338] sm:$0xff]
    %v2027 = vld [vmem:[#allocation2 + $0x340] sm:$0xff]
    %v2028 = vld [vmem:[#allocation2 + $0x348] sm:$0xff]
    %v2029 = vld [vmem:[#allocation2 + $0x350] sm:$0xff]
    %v2030 = vld [vmem:[#allocation2 + $0x358] sm:$0xff]
    %v2031 = vld [vmem:[#allocation2 + $0x360] sm:$0xff]
    %v2032 = vld [vmem:[#allocation2 + $0x368] sm:$0xff]
    %v2033 = vld [vmem:[#allocation2 + $0x370] sm:$0xff]
    %v2034 = vld [vmem:[#allocation2 + $0x378] sm:$0xff]
    %v2035 = vld [vmem:[#allocation2 + $0x380] sm:$0xff]
    %v2036 = vld [vmem:[#allocation2 + $0x388] sm:$0xff]
    %v2037 = vld [vmem:[#allocation2 + $0x390] sm:$0xff]
    %v2038 = vld [vmem:[#allocation2 + $0x398] sm:$0xff]
    %v2039 = vld [vmem:[#allocation2 + $0x3a0] sm:$0xff]
    %v2040 = vld [vmem:[#allocation2 + $0x3a8] sm:$0xff]
    %v2041 = vld [vmem:[#allocation2 + $0x3b0] sm:$0xff]
    %v2042 = vld [vmem:[#allocation2 + $0x3b8] sm:$0xff]
    %v2043 = vld [vmem:[#allocation2 + $0x3c0] sm:$0xff]
    %v2044 = vld [vmem:[#allocation2 + $0x3c8] sm:$0xff]
    %v2045 = vld [vmem:[#allocation2 + $0x3d0] sm:$0xff]
    %v2046 = vld [vmem:[#allocation2 + $0x3d8] sm:$0xff]
    %v2047 = vld [vmem:[#allocation2 + $0x3e0] sm:$0xff]
    %v2048 = vld [vmem:[#allocation2 + $0x3e8] sm:$0xff]
    %v2049 = vld [vmem:[#allocation2 + $0x3f0] sm:$0xff]
    %v2050 = vld [vmem:[#allocation2 + $0x3f8] sm:$0xff]
    %v2051 = vld [vmem:[#allocation2 + $0x400] sm:$0xff]
    %v2052 = vld [vmem:[#allocation2 + $0x408] sm:$0xff]
    %v2053 = vld [vmem:[#allocation2 + $0x410] sm:$0xff]
    %v2054 = vld [vmem:[#allocation2 + $0x418] sm:$0xff]
    %v2055 = vld [vmem:[#allocation2 + $0x420] sm:$0xff]
    %v2056 = vld [vmem:[#allocation2 + $0x428] sm:$0xff]
    %v2057 = vld [vmem:[#allocation2 + $0x430] sm:$0xff]
    %v2058 = vld [vmem:[#allocation2 + $0x438] sm:$0xff]
    %v2059 = vld [vmem:[#allocation2 + $0x440] sm:$0xff]
    %v2060 = vld [vmem:[#allocation2 + $0x448] sm:$0xff]
    %v2061 = vld [vmem:[#allocation2 + $0x450] sm:$0xff]
    %v2062 = vld [vmem:[#allocation2 + $0x458] sm:$0xff]
    %v2063 = vld [vmem:[#allocation2 + $0x460] sm:$0xff]
    %v2064 = vld [vmem:[#allocation2 + $0x468] sm:$0xff]
    %v2065 = vld [vmem:[#allocation2 + $0x470] sm:$0xff]
    %v2066 = vld [vmem:[#allocation2 + $0x478] sm:$0xff]
    %v2067 = vld [vmem:[#allocation2 + $0x480] sm:$0xff]
    %v2068 = vld [vmem:[#allocation2 + $0x488] sm:$0xff]
    %v2069 = vld [vmem:[#allocation2 + $0x490] sm:$0xff]
    %v2070 = vld [vmem:[#allocation2 + $0x498] sm:$0xff]
    %v2071 = vld [vmem:[#allocation2 + $0x4a0] sm:$0xff]
    %v2072 = vld [vmem:[#allocation2 + $0x4a8] sm:$0xff]
    %v2073 = vld [vmem:[#allocation2 + $0x4b0] sm:$0xff]
    %v2074 = vld [vmem:[#allocation2 + $0x4b8] sm:$0xff]
    %v2075 = vld [vmem:[#allocation2 + $0x4c0] sm:$0xff]
    %v2076 = vld [vmem:[#allocation2 + $0x4c8] sm:$0xff]
    %v2077 = vld [vmem:[#allocation2 + $0x4d0] sm:$0xff]
    %v2078 = vld [vmem:[#allocation2 + $0x4d8] sm:$0xff]
    %v2079 = vld [vmem:[#allocation2 + $0x4e0] sm:$0xff]
    %v2080 = vld [vmem:[#allocation2 + $0x4e8] sm:$0xff]
    %v2081 = vld [vmem:[#allocation2 + $0x4f0] sm:$0xff]
    %v2082 = vld [vmem:[#allocation2 + $0x4f8] sm:$0xff]
    %v2083 = vld [vmem:[#allocation2 + $0x500] sm:$0xff]
    %v2084 = vld [vmem:[#allocation2 + $0x508] sm:$0xff]
    %v2085 = vld [vmem:[#allocation2 + $0x510] sm:$0xff]
    %v2086 = vld [vmem:[#allocation2 + $0x518] sm:$0xff]
    %v2087 = vld [vmem:[#allocation2 + $0x520] sm:$0xff]
    %v2088 = vld [vmem:[#allocation2 + $0x528] sm:$0xff]
    %v2089 = vld [vmem:[#allocation2 + $0x530] sm:$0xff]
    %v2090 = vld [vmem:[#allocation2 + $0x538] sm:$0xff]
    %v2091 = vld [vmem:[#allocation2 + $0x540] sm:$0xff]
    %v2092 = vld [vmem:[#allocation2 + $0x548] sm:$0xff]
    %v2093 = vld [vmem:[#allocation2 + $0x550] sm:$0xff]
    %v2094 = vld [vmem:[#allocation2 + $0x558] sm:$0xff]
    %v2095 = vld [vmem:[#allocation2 + $0x560] sm:$0xff]
    %v2096 = vld [vmem:[#allocation2 + $0x568] sm:$0xff]
    %v2097 = vld [vmem:[#allocation2 + $0x570] sm:$0xff]
    %v2098 = vld [vmem:[#allocation2 + $0x578] sm:$0xff]
    %v2099 = vld [vmem:[#allocation2 + $0x580] sm:$0xff]
    %v2100 = vld [vmem:[#allocation2 + $0x588] sm:$0xff]
    %v2101 = vld [vmem:[#allocation2 + $0x590] sm:$0xff]
    %v2102 = vld [vmem:[#allocation2 + $0x598] sm:$0xff]
    %v2103 = vld [vmem:[#allocation2 + $0x5a0] sm:$0xff]
    %v2104 = vld [vmem:[#allocation2 + $0x5a8] sm:$0xff]
    %v2105 = vld [vmem:[#allocation2 + $0x5b0] sm:$0xff]
    %v2106 = vld [vmem:[#allocation2 + $0x5b8] sm:$0xff]
    %v2107 = vld [vmem:[#allocation2 + $0x5c0] sm:$0xff]
    %v2108 = vld [vmem:[#allocation2 + $0x5c8] sm:$0xff]
    %v2109 = vld [vmem:[#allocation2 + $0x5d0] sm:$0xff]
    %v2110 = vld [vmem:[#allocation2 + $0x5d8] sm:$0xff]
    %v2111 = vld [vmem:[#allocation2 + $0x5e0] sm:$0xff]
    %v2112 = vld [vmem:[#allocation2 + $0x5e8] sm:$0xff]
    %v2113 = vld [vmem:[#allocation2 + $0x5f0] sm:$0xff]
    %v2114 = vld [vmem:[#allocation2 + $0x5f8] sm:$0xff]
    %v2115 = vld [vmem:[#allocation2 + $0x600] sm:$0xff]
    %v2116 = vld [vmem:[#allocation2 + $0x608] sm:$0xff]
    %v2117 = vld [vmem:[#allocation2 + $0x610] sm:$0xff]
    %v2118 = vld [vmem:[#allocation2 + $0x618] sm:$0xff]
    %v2119 = vld [vmem:[#allocation2 + $0x620] sm:$0xff]
    %v2120 = vld [vmem:[#allocation2 + $0x628] sm:$0xff]
    %v2121 = vld [vmem:[#allocation2 + $0x630] sm:$0xff]
    %v2122 = vld [vmem:[#allocation2 + $0x638] sm:$0xff]
    %v2123 = vld [vmem:[#allocation2 + $0x640] sm:$0xff]
    %v2124 = vld [vmem:[#allocation2 + $0x648] sm:$0xff]
    %v2125 = vld [vmem:[#allocation2 + $0x650] sm:$0xff]
    %v2126 = vld [vmem:[#allocation2 + $0x658] sm:$0xff]
    %v2127 = vld [vmem:[#allocation2 + $0x660] sm:$0xff]
    %v2128 = vld [vmem:[#allocation2 + $0x668] sm:$0xff]
    %v2129 = vld [vmem:[#allocation2 + $0x670] sm:$0xff]
    %v2130 = vld [vmem:[#allocation2 + $0x678] sm:$0xff]
    %v2131 = vld [vmem:[#allocation2 + $0x680] sm:$0xff]
    %v2132 = vld [vmem:[#allocation2 + $0x688] sm:$0xff]
    %v2133 = vld [vmem:[#allocation2 + $0x690] sm:$0xff]
    %v2134 = vld [vmem:[#allocation2 + $0x698] sm:$0xff]
    %v2135 = vld [vmem:[#allocation2 + $0x6a0] sm:$0xff]
    %v2136 = vld [vmem:[#allocation2 + $0x6a8] sm:$0xff]
    %v2137 = vld [vmem:[#allocation2 + $0x6b0] sm:$0xff]
    %v2138 = vld [vmem:[#allocation2 + $0x6b8] sm:$0xff]
    %v2139 = vld [vmem:[#allocation2 + $0x6c0] sm:$0xff]
    %v2140 = vld [vmem:[#allocation2 + $0x6c8] sm:$0xff]
    %v2141 = vld [vmem:[#allocation2 + $0x6d0] sm:$0xff]
    %v2142 = vld [vmem:[#allocation2 + $0x6d8] sm:$0xff]
    %v2143 = vld [vmem:[#allocation2 + $0x6e0] sm:$0xff]
    %v2144 = vld [vmem:[#allocation2 + $0x6e8] sm:$0xff]
    %v2145 = vld [vmem:[#allocation2 + $0x6f0] sm:$0xff]
    %v2146 = vld [vmem:[#allocation2 + $0x6f8] sm:$0xff]
    %v2147 = vld [vmem:[#allocation2 + $0x700] sm:$0xff]
    %v2148 = vld [vmem:[#allocation2 + $0x708] sm:$0xff]
    %v2149 = vld [vmem:[#allocation2 + $0x710] sm:$0xff]
    %v2150 = vld [vmem:[#allocation2 + $0x718] sm:$0xff]
    %v2151 = vld [vmem:[#allocation2 + $0x720] sm:$0xff]
    %v2152 = vld [vmem:[#allocation2 + $0x728] sm:$0xff]
    %v2153 = vld [vmem:[#allocation2 + $0x730] sm:$0xff]
    %v2154 = vld [vmem:[#allocation2 + $0x738] sm:$0xff]
    %v2155 = vld [vmem:[#allocation2 + $0x740] sm:$0xff]
    %v2156 = vld [vmem:[#allocation2 + $0x748] sm:$0xff]
    %v2157 = vld [vmem:[#allocation2 + $0x750] sm:$0xff]
    %v2158 = vld [vmem:[#allocation2 + $0x758] sm:$0xff]
    %v2159 = vld [vmem:[#allocation2 + $0x760] sm:$0xff]
    %v2160 = vld [vmem:[#allocation2 + $0x768] sm:$0xff]
    %v2161 = vld [vmem:[#allocation2 + $0x770] sm:$0xff]
    %v2162 = vld [vmem:[#allocation2 + $0x778] sm:$0xff]
    %v2163 = vld [vmem:[#allocation2 + $0x780] sm:$0xff]
    %v2164 = vld [vmem:[#allocation2 + $0x788] sm:$0xff]
    %v2165 = vld [vmem:[#allocation2 + $0x790] sm:$0xff]
    %v2166 = vld [vmem:[#allocation2 + $0x798] sm:$0xff]
    %v2167 = vld [vmem:[#allocation2 + $0x7a0] sm:$0xff]
    %v2168 = vld [vmem:[#allocation2 + $0x7a8] sm:$0xff]
    %v2169 = vld [vmem:[#allocation2 + $0x7b0] sm:$0xff]
    %v2170 = vld [vmem:[#allocation2 + $0x7b8] sm:$0xff]
    %v2171 = vld [vmem:[#allocation2 + $0x7c0] sm:$0xff]
    %v2172 = vld [vmem:[#allocation2 + $0x7c8] sm:$0xff]
    %v2173 = vld [vmem:[#allocation2 + $0x7d0] sm:$0xff]
    %v2174 = vld [vmem:[#allocation2 + $0x7d8] sm:$0xff]
    %v2175 = vld [vmem:[#allocation2 + $0x7e0] sm:$0xff]
    %v2176 = vld [vmem:[#allocation2 + $0x7e8] sm:$0xff]
    %v2177 = vld [vmem:[#allocation2 + $0x7f0] sm:$0xff]
    %v2178 = vld [vmem:[#allocation2 + $0x7f8] sm:$0xff]
    %v2179 = vld [vmem:[#allocation2 + $0x800] sm:$0xff]
    %v2180 = vld [vmem:[#allocation2 + $0x808] sm:$0xff]
    %v2181 = vld [vmem:[#allocation2 + $0x810] sm:$0xff]
    %v2182 = vld [vmem:[#allocation2 + $0x818] sm:$0xff]
    %v2183 = vld [vmem:[#allocation2 + $0x820] sm:$0xff]
    %v2184 = vld [vmem:[#allocation2 + $0x828] sm:$0xff]
    %v2185 = vld [vmem:[#allocation2 + $0x830] sm:$0xff]
    %v2186 = vld [vmem:[#allocation2 + $0x838] sm:$0xff]
    %v2187 = vld [vmem:[#allocation2 + $0x840] sm:$0xff]
    %v2188 = vld [vmem:[#allocation2 + $0x848] sm:$0xff]
    %v2189 = vld [vmem:[#allocation2 + $0x850] sm:$0xff]
    %v2190 = vld [vmem:[#allocation2 + $0x858] sm:$0xff]
    %v2191 = vld [vmem:[#allocation2 + $0x860] sm:$0xff]
    %v2192 = vld [vmem:[#allocation2 + $0x868] sm:$0xff]
    %v2193 = vld [vmem:[#allocation2 + $0x870] sm:$0xff]
    %v2194 = vld [vmem:[#allocation2 + $0x878] sm:$0xff]
    %v2195 = vld [vmem:[#allocation2 + $0x880] sm:$0xff]
    %v2196 = vld [vmem:[#allocation2 + $0x888] sm:$0xff]
    %v2197 = vld [vmem:[#allocation2 + $0x890] sm:$0xff]
    %v2198 = vld [vmem:[#allocation2 + $0x898] sm:$0xff]
    %v2199 = vld [vmem:[#allocation2 + $0x8a0] sm:$0xff]
    %v2200 = vld [vmem:[#allocation2 + $0x8a8] sm:$0xff]
    %v2201 = vld [vmem:[#allocation2 + $0x8b0] sm:$0xff]
    %v2202 = vld [vmem:[#allocation2 + $0x8b8] sm:$0xff]
    %v2203 = vld [vmem:[%s1] sm:$0xff]
    %v2204 = vld [vmem:[%s1 + $0x8] sm:$0xff]
    %v2205 = vld [vmem:[%s1 + $0x10] sm:$0xff]
    %v2206 = vld [vmem:[%s1 + $0x18] sm:$0xff]
    %v2207 = vld [vmem:[%s1 + $0x20] sm:$0xff]
    %v2208 = vld [vmem:[%s1 + $0x28] sm:$0xff]
    %v2209 = vld [vmem:[%s1 + $0x30] sm:$0xff]
    %v2210 = vld [vmem:[%s1 + $0x38] sm:$0xff]
    %v2211 = vld [vmem:[%s1 + $0x40] sm:$0xff]
    %v2212 = vld [vmem:[%s1 + $0x48] sm:$0xff]
    %v2213 = vld [vmem:[%s1 + $0x50] sm:$0xff]
    %v2214 = vld [vmem:[%s1 + $0x58] sm:$0xff]
    %v2215 = vld [vmem:[%s1 + $0x60] sm:$0xff]
    %v2216 = vld [vmem:[%s1 + $0x68] sm:$0xff]
    %v2217 = vld [vmem:[%s1 + $0x70] sm:$0xff]
    %v2218 = vld [vmem:[%s1 + $0x78] sm:$0xff]
    %v2219 = vld [vmem:[%s1 + $0x80] sm:$0xff]
    %v2220 = vld [vmem:[%s1 + $0x88] sm:$0xff]
    %v2221 = vld [vmem:[%s1 + $0x90] sm:$0xff]
    %v2222 = vld [vmem:[%s1 + $0x98] sm:$0xff]
    %v2223 = vld [vmem:[%s1 + $0xa0] sm:$0xff]
    %v2224 = vld [vmem:[%s1 + $0xa8] sm:$0xff]
    %v2225 = vld [vmem:[%s1 + $0xb0] sm:$0xff]
    %v2226 = vld [vmem:[%s1 + $0xb8] sm:$0xff]
    %v2227 = vld [vmem:[%s1 + $0xc0] sm:$0xff]
    %v2228 = vld [vmem:[%s1 + $0xc8] sm:$0xff]
    %v2229 = vld [vmem:[%s1 + $0xd0] sm:$0xff]
    %v2230 = vld [vmem:[%s1 + $0xd8] sm:$0xff]
    %v2231 = vld [vmem:[%s1 + $0xe0] sm:$0xff]
    %v2232 = vld [vmem:[%s1 + $0xe8] sm:$0xff]
    %v2233 = vld [vmem:[%s1 + $0xf0] sm:$0xff]
    %v2234 = vld [vmem:[%s1 + $0xf8] sm:$0xff]
    %v2235 = vld [vmem:[%s1 + $0x100] sm:$0xff]
    %v2236 = vld [vmem:[%s1 + $0x108] sm:$0xff]
    %v2237 = vld [vmem:[%s1 + $0x110] sm:$0xff]
    %v2238 = vld [vmem:[%s1 + $0x118] sm:$0xff]
    %v2239 = vld [vmem:[%s1 + $0x120] sm:$0xff]
    %v2240 = vld [vmem:[%s1 + $0x128] sm:$0xff]
    %v2241 = vld [vmem:[%s1 + $0x130] sm:$0xff]
    %v2242 = vld [vmem:[%s1 + $0x138] sm:$0xff]
    %v2243 = vld [vmem:[%s1 + $0x140] sm:$0xff]
    %v2244 = vld [vmem:[%s1 + $0x148] sm:$0xff]
    %v2245 = vld [vmem:[%s1 + $0x150] sm:$0xff]
    %v2246 = vld [vmem:[%s1 + $0x158] sm:$0xff]
    %v2247 = vld [vmem:[%s1 + $0x160] sm:$0xff]
    %v2248 = vld [vmem:[%s1 + $0x168] sm:$0xff]
    %v2249 = vld [vmem:[%s1 + $0x170] sm:$0xff]
    %v2250 = vld [vmem:[%s1 + $0x178] sm:$0xff]
    %v2251 = vld [vmem:[%s1 + $0x180] sm:$0xff]
    %v2252 = vld [vmem:[%s1 + $0x188] sm:$0xff]
    %v2253 = vld [vmem:[%s1 + $0x190] sm:$0xff]
    %v2254 = vld [vmem:[%s1 + $0x198] sm:$0xff]
    %v2255 = vld [vmem:[%s1 + $0x1a0] sm:$0xff]
    %v2256 = vld [vmem:[%s1 + $0x1a8] sm:$0xff]
    %v2257 = vld [vmem:[%s1 + $0x1b0] sm:$0xff]
    %v2258 = vld [vmem:[%s1 + $0x1b8] sm:$0xff]
    %v2259 = vld [vmem:[%s1 + $0x1c0] sm:$0xff]
    %v2260 = vld [vmem:[%s1 + $0x1c8] sm:$0xff]
    %v2261 = vld [vmem:[%s1 + $0x1d0] sm:$0xff]
    %v2262 = vld [vmem:[%s1 + $0x1d8] sm:$0xff]
    %v2263 = vld [vmem:[%s1 + $0x1e0] sm:$0xff]
    %v2264 = vld [vmem:[%s1 + $0x1e8] sm:$0xff]
    %v2265 = vld [vmem:[%s1 + $0x1f0] sm:$0xff]
    %v2266 = vld [vmem:[%s1 + $0x1f8] sm:$0xff]
    %v2267 = vld [vmem:[%s1 + $0x200] sm:$0xff]
    %v2268 = vld [vmem:[%s1 + $0x208] sm:$0xff]
    %v2269 = vld [vmem:[%s1 + $0x210] sm:$0xff]
    %v2270 = vld [vmem:[%s1 + $0x218] sm:$0xff]
    %v2271 = vld [vmem:[%s1 + $0x220] sm:$0xff]
    %v2272 = vld [vmem:[%s1 + $0x228] sm:$0xff]
    %v2273 = vld [vmem:[%s1 + $0x230] sm:$0xff]
    %v2274 = vld [vmem:[%s1 + $0x238] sm:$0xff]
    %v2275 = vld [vmem:[%s1 + $0x240] sm:$0xff]
    %v2276 = vld [vmem:[%s1 + $0x248] sm:$0xff]
    %v2277 = vld [vmem:[%s1 + $0x250] sm:$0xff]
    %v2278 = vld [vmem:[%s1 + $0x258] sm:$0xff]
    %v2279 = vld [vmem:[%s1 + $0x260] sm:$0xff]
    %v2280 = vld [vmem:[%s1 + $0x268] sm:$0xff]
    %v2281 = vld [vmem:[%s1 + $0x270] sm:$0xff]
    %v2282 = vld [vmem:[%s1 + $0x278] sm:$0xff]
    %v2283 = vld [vmem:[%s1 + $0x280] sm:$0xff]
    %v2284 = vld [vmem:[%s1 + $0x288] sm:$0xff]
    %v2285 = vld [vmem:[%s1 + $0x290] sm:$0xff]
    %v2286 = vld [vmem:[%s1 + $0x298] sm:$0xff]
    %v2287 = vld [vmem:[%s1 + $0x2a0] sm:$0xff]
    %v2288 = vld [vmem:[%s1 + $0x2a8] sm:$0xff]
    %v2289 = vld [vmem:[%s1 + $0x2b0] sm:$0xff]
    %v2290 = vld [vmem:[%s1 + $0x2b8] sm:$0xff]
    %v2291 = vld [vmem:[%s1 + $0x2c0] sm:$0xff]
    %v2292 = vld [vmem:[%s1 + $0x2c8] sm:$0xff]
    %v2293 = vld [vmem:[%s1 + $0x2d0] sm:$0xff]
    %v2294 = vld [vmem:[%s1 + $0x2d8] sm:$0xff]
    %v2295 = vld [vmem:[%s1 + $0x2e0] sm:$0xff]
    %v2296 = vld [vmem:[%s1 + $0x2e8] sm:$0xff]
    %v2297 = vld [vmem:[%s1 + $0x2f0] sm:$0xff]
    %v2298 = vld [vmem:[%s1 + $0x2f8] sm:$0xff]
    %v2299 = vld [vmem:[%s1 + $0x300] sm:$0xff]
    %v2300 = vld [vmem:[%s1 + $0x308] sm:$0xff]
    %v2301 = vld [vmem:[%s1 + $0x310] sm:$0xff]
    %v2302 = vld [vmem:[%s1 + $0x318] sm:$0xff]
    %v2303 = vld [vmem:[%s1 + $0x320] sm:$0xff]
    %v2304 = vld [vmem:[%s1 + $0x328] sm:$0xff]
    %v2305 = vld [vmem:[%s1 + $0x330] sm:$0xff]
    %v2306 = vld [vmem:[%s1 + $0x338] sm:$0xff]
    %v2307 = vld [vmem:[%s1 + $0x340] sm:$0xff]
    %v2308 = vld [vmem:[%s1 + $0x348] sm:$0xff]
    %v2309 = vld [vmem:[%s1 + $0x350] sm:$0xff]
    %v2310 = vld [vmem:[%s1 + $0x358] sm:$0xff]
    %v2311 = vld [vmem:[%s1 + $0x360] sm:$0xff]
    %v2312 = vld [vmem:[%s1 + $0x368] sm:$0xff]
    %v2313 = vld [vmem:[%s1 + $0x370] sm:$0xff]
    %v2314 = vld [vmem:[%s1 + $0x378] sm:$0xff]
    %v2315 = vld [vmem:[%s1 + $0x380] sm:$0xff]
    %v2316 = vld [vmem:[%s1 + $0x388] sm:$0xff]
    %v2317 = vld [vmem:[%s1 + $0x390] sm:$0xff]
    %v2318 = vld [vmem:[%s1 + $0x398] sm:$0xff]
    %v2319 = vld [vmem:[%s1 + $0x3a0] sm:$0xff]
    %v2320 = vld [vmem:[%s1 + $0x3a8] sm:$0xff]
    %v2321 = vld [vmem:[%s1 + $0x3b0] sm:$0xff]
    %v2322 = vld [vmem:[%s1 + $0x3b8] sm:$0xff]
    %v2323 = vld [vmem:[%s1 + $0x3c0] sm:$0xff]
    %v2324 = vld [vmem:[%s1 + $0x3c8] sm:$0xff]
    %v2325 = vld [vmem:[%s1 + $0x3d0] sm:$0xff]
    %v2326 = vld [vmem:[%s1 + $0x3d8] sm:$0xff]
    %v2327 = vld [vmem:[%s1 + $0x3e0] sm:$0xff]
    %v2328 = vld [vmem:[%s1 + $0x3e8] sm:$0xff]
    %v2329 = vld [vmem:[%s1 + $0x3f0] sm:$0xff]
    %v2330 = vld [vmem:[%s1 + $0x3f8] sm:$0xff]
    %v2331 = vld [vmem:[%s1 + $0x400] sm:$0xff]
    %v2332 = vld [vmem:[%s1 + $0x408] sm:$0xff]
    %v2333 = vld [vmem:[%s1 + $0x410] sm:$0xff]
    %v2334 = vld [vmem:[%s1 + $0x418] sm:$0xff]
    %v2335 = vld [vmem:[%s1 + $0x420] sm:$0xff]
    %v2336 = vld [vmem:[%s1 + $0x428] sm:$0xff]
    %v2337 = vld [vmem:[%s1 + $0x430] sm:$0xff]
    %v2338 = vld [vmem:[%s1 + $0x438] sm:$0xff]
    %v2339 = vld [vmem:[%s1 + $0x440] sm:$0xff]
    %v2340 = vld [vmem:[%s1 + $0x448] sm:$0xff]
    %v2341 = vld [vmem:[%s1 + $0x450] sm:$0xff]
    %v2342 = vld [vmem:[%s1 + $0x458] sm:$0xff]
    %v2343 = vld [vmem:[%s1 + $0x460] sm:$0xff]
    %v2344 = vld [vmem:[%s1 + $0x468] sm:$0xff]
    %v2345 = vld [vmem:[%s1 + $0x470] sm:$0xff]
    %v2346 = vld [vmem:[%s1 + $0x478] sm:$0xff]
    %v2347 = vld [vmem:[%s1 + $0x480] sm:$0xff]
    %v2348 = vld [vmem:[%s1 + $0x488] sm:$0xff]
    %v2349 = vld [vmem:[%s1 + $0x490] sm:$0xff]
    %v2350 = vld [vmem:[%s1 + $0x498] sm:$0xff]
    %v2351 = vld [vmem:[%s1 + $0x4a0] sm:$0xff]
    %v2352 = vld [vmem:[%s1 + $0x4a8] sm:$0xff]
    %v2353 = vld [vmem:[%s1 + $0x4b0] sm:$0xff]
    %v2354 = vld [vmem:[%s1 + $0x4b8] sm:$0xff]
    %v2355 = vld [vmem:[%s1 + $0x4c0] sm:$0xff]
    %v2356 = vld [vmem:[%s1 + $0x4c8] sm:$0xff]
    %v2357 = vld [vmem:[%s1 + $0x4d0] sm:$0xff]
    %v2358 = vld [vmem:[%s1 + $0x4d8] sm:$0xff]
    %v2359 = vld [vmem:[%s1 + $0x4e0] sm:$0xff]
    %v2360 = vld [vmem:[%s1 + $0x4e8] sm:$0xff]
    %v2361 = vld [vmem:[%s1 + $0x4f0] sm:$0xff]
    %v2362 = vld [vmem:[%s1 + $0x4f8] sm:$0xff]
    %v2363 = vld [vmem:[%s1 + $0x500] sm:$0xff]
    %v2364 = vld [vmem:[%s1 + $0x508] sm:$0xff]
    %v2365 = vld [vmem:[%s1 + $0x510] sm:$0xff]
    %v2366 = vld [vmem:[%s1 + $0x518] sm:$0xff]
    %v2367 = vld [vmem:[%s1 + $0x520] sm:$0xff]
    %v2368 = vld [vmem:[%s1 + $0x528] sm:$0xff]
    %v2369 = vld [vmem:[%s1 + $0x530] sm:$0xff]
    %v2370 = vld [vmem:[%s1 + $0x538] sm:$0xff]
    %v2371 = vld [vmem:[%s1 + $0x540] sm:$0xff]
    %v2372 = vld [vmem:[%s1 + $0x548] sm:$0xff]
    %v2373 = vld [vmem:[%s1 + $0x550] sm:$0xff]
    %v2374 = vld [vmem:[%s1 + $0x558] sm:$0xff]
    %v2375 = vld [vmem:[%s1 + $0x560] sm:$0xff]
    %v2376 = vld [vmem:[%s1 + $0x568] sm:$0xff]
    %v2377 = vld [vmem:[%s1 + $0x570] sm:$0xff]
    %v2378 = vld [vmem:[%s1 + $0x578] sm:$0xff]
    %v2379 = vld [vmem:[%s1 + $0x580] sm:$0xff]
    %v2380 = vld [vmem:[%s1 + $0x588] sm:$0xff]
    %v2381 = vld [vmem:[%s1 + $0x590] sm:$0xff]
    %v2382 = vld [vmem:[%s1 + $0x598] sm:$0xff]
    %v2383 = vld [vmem:[%s1 + $0x5a0] sm:$0xff]
    %v2384 = vld [vmem:[%s1 + $0x5a8] sm:$0xff]
    %v2385 = vld [vmem:[%s1 + $0x5b0] sm:$0xff]
    %v2386 = vld [vmem:[%s1 + $0x5b8] sm:$0xff]
    %v2387 = vld [vmem:[%s1 + $0x5c0] sm:$0xff]
    %v2388 = vld [vmem:[%s1 + $0x5c8] sm:$0xff]
    %v2389 = vld [vmem:[%s1 + $0x5d0] sm:$0xff]
    %v2390 = vld [vmem:[%s1 + $0x5d8] sm:$0xff]
    %v2391 = vld [vmem:[%s1 + $0x5e0] sm:$0xff]
    %v2392 = vld [vmem:[%s1 + $0x5e8] sm:$0xff]
    %v2393 = vld [vmem:[%s1 + $0x5f0] sm:$0xff]
    %v2394 = vld [vmem:[%s1 + $0x5f8] sm:$0xff]
    %v2395 = vld [vmem:[%s1 + $0x600] sm:$0xff]
    %v2396 = vld [vmem:[%s1 + $0x608] sm:$0xff]
    %v2397 = vld [vmem:[%s1 + $0x610] sm:$0xff]
    %v2398 = vld [vmem:[%s1 + $0x618] sm:$0xff]
    %v2399 = vld [vmem:[%s1 + $0x620] sm:$0xff]
    %v2400 = vld [vmem:[%s1 + $0x628] sm:$0xff]
    %v2401 = vld [vmem:[%s1 + $0x630] sm:$0xff]
    %v2402 = vld [vmem:[%s1 + $0x638] sm:$0xff]
    %v2403 = vld [vmem:[%s1 + $0x640] sm:$0xff]
    %v2404 = vld [vmem:[%s1 + $0x648] sm:$0xff]
    %v2405 = vld [vmem:[%s1 + $0x650] sm:$0xff]
    %v2406 = vld [vmem:[%s1 + $0x658] sm:$0xff]
    %v2407 = vld [vmem:[%s1 + $0x660] sm:$0xff]
    %v2408 = vld [vmem:[%s1 + $0x668] sm:$0xff]
    %v2409 = vld [vmem:[%s1 + $0x670] sm:$0xff]
    %v2410 = vld [vmem:[%s1 + $0x678] sm:$0xff]
    %v2411 = vld [vmem:[%s1 + $0x680] sm:$0xff]
    %v2412 = vld [vmem:[%s1 + $0x688] sm:$0xff]
    %v2413 = vld [vmem:[%s1 + $0x690] sm:$0xff]
    %v2414 = vld [vmem:[%s1 + $0x698] sm:$0xff]
    %v2415 = vld [vmem:[%s1 + $0x6a0] sm:$0xff]
    %v2416 = vld [vmem:[%s1 + $0x6a8] sm:$0xff]
    %v2417 = vld [vmem:[%s1 + $0x6b0] sm:$0xff]
    %v2418 = vld [vmem:[%s1 + $0x6b8] sm:$0xff]
    %v2419 = vld [vmem:[%s1 + $0x6c0] sm:$0xff]
    %v2420 = vld [vmem:[%s1 + $0x6c8] sm:$0xff]
    %v2421 = vld [vmem:[%s1 + $0x6d0] sm:$0xff]
    %v2422 = vld [vmem:[%s1 + $0x6d8] sm:$0xff]
    %v2423 = vld [vmem:[%s1 + $0x6e0] sm:$0xff]
    %v2424 = vld [vmem:[%s1 + $0x6e8] sm:$0xff]
    %v2425 = vld [vmem:[%s1 + $0x6f0] sm:$0xff]
    %v2426 = vld [vmem:[%s1 + $0x6f8] sm:$0xff]
    %v2427 = vld [vmem:[%s1 + $0x700] sm:$0xff]
    %v2428 = vld [vmem:[%s1 + $0x708] sm:$0xff]
    %v2429 = vld [vmem:[%s1 + $0x710] sm:$0xff]
    %v2430 = vld [vmem:[%s1 + $0x718] sm:$0xff]
    %v2431 = vld [vmem:[%s1 + $0x720] sm:$0xff]
    %v2432 = vld [vmem:[%s1 + $0x728] sm:$0xff]
    %v2433 = vld [vmem:[%s1 + $0x730] sm:$0xff]
    %v2434 = vld [vmem:[%s1 + $0x738] sm:$0xff]
    %v2435 = vld [vmem:[%s1 + $0x740] sm:$0xff]
    %v2436 = vld [vmem:[%s1 + $0x748] sm:$0xff]
    %v2437 = vld [vmem:[%s1 + $0x750] sm:$0xff]
    %v2438 = vld [vmem:[%s1 + $0x758] sm:$0xff]
    %v2439 = vld [vmem:[%s1 + $0x760] sm:$0xff]
    %v2440 = vld [vmem:[%s1 + $0x768] sm:$0xff]
    %v2441 = vld [vmem:[%s1 + $0x770] sm:$0xff]
    %v2442 = vld [vmem:[%s1 + $0x778] sm:$0xff]
    %v2443 = vld [vmem:[%s1 + $0x780] sm:$0xff]
    %v2444 = vld [vmem:[%s1 + $0x788] sm:$0xff]
    %v2445 = vld [vmem:[%s1 + $0x790] sm:$0xff]
    %v2446 = vld [vmem:[%s1 + $0x798] sm:$0xff]
    %v2447 = vld [vmem:[%s1 + $0x7a0] sm:$0xff]
    %v2448 = vld [vmem:[%s1 + $0x7a8] sm:$0xff]
    %v2449 = vld [vmem:[%s1 + $0x7b0] sm:$0xff]
    %v2450 = vld [vmem:[%s1 + $0x7b8] sm:$0xff]
    %v2451 = vld [vmem:[%s1 + $0x7c0] sm:$0xff]
    %v2452 = vld [vmem:[%s1 + $0x7c8] sm:$0xff]
    %v2453 = vld [vmem:[%s1 + $0x7d0] sm:$0xff]
    %v2454 = vld [vmem:[%s1 + $0x7d8] sm:$0xff]
    %v2455 = vld [vmem:[%s1 + $0x7e0] sm:$0xff]
    %v2456 = vld [vmem:[%s1 + $0x7e8] sm:$0xff]
    %v2457 = vld [vmem:[%s1 + $0x7f0] sm:$0xff]
    %v2458 = vld [vmem:[%s1 + $0x7f8] sm:$0xff]
    %v2459 = vld [vmem:[%s1 + $0x800] sm:$0xff]
    %v2460 = vld [vmem:[%s1 + $0x808] sm:$0xff]
    %v2461 = vld [vmem:[%s1 + $0x810] sm:$0xff]
    %v2462 = vld [vmem:[%s1 + $0x818] sm:$0xff]
    %v2463 = vld [vmem:[%s1 + $0x820] sm:$0xff]
    %v2464 = vld [vmem:[%s1 + $0x828] sm:$0xff]
    %v2465 = vld [vmem:[%s1 + $0x830] sm:$0xff]
    %v2466 = vld [vmem:[%s1 + $0x838] sm:$0xff]
    %v2467 = vld [vmem:[%s1 + $0x840] sm:$0xff]
    %v2468 = vld [vmem:[%s1 + $0x848] sm:$0xff]
    %v2469 = vld [vmem:[%s1 + $0x850] sm:$0xff]
    %v2470 = vld [vmem:[%s1 + $0x858] sm:$0xff]
    %v2471 = vld [vmem:[%s1 + $0x860] sm:$0xff]
    %v2472 = vld [vmem:[%s1 + $0x868] sm:$0xff]
    %v2473 = vld [vmem:[%s1 + $0x870] sm:$0xff]
    %v2474 = vld [vmem:[%s1 + $0x878] sm:$0xff]
    %v2475 = vld [vmem:[%s1 + $0x880] sm:$0xff]
    %v2476 = vld [vmem:[%s1 + $0x888] sm:$0xff]
    %v2477 = vld [vmem:[%s1 + $0x890] sm:$0xff]
    %v2478 = vld [vmem:[%s1 + $0x898] sm:$0xff]
    %v2479 = vld [vmem:[%s1 + $0x8a0] sm:$0xff]
    %v2480 = vld [vmem:[%s1 + $0x8a8] sm:$0xff]
    %v2481 = vld [vmem:[%s1 + $0x8b0] sm:$0xff]
    %v2482 = vld [vmem:[%s1 + $0x8b8] sm:$0xff]
    %v2483 = vld [vmem:[%s1 + $0x8c0] sm:$0xff]
    %v2484 = vld [vmem:[%s1 + $0x8c8] sm:$0xff]
    %v2485 = vld [vmem:[%s1 + $0x8d0] sm:$0xff]
    %v2486 = vld [vmem:[%s1 + $0x8d8] sm:$0xff]
    %v2487 = vld [vmem:[%s1 + $0x8e0] sm:$0xff]
    %v2488 = vld [vmem:[%s1 + $0x8e8] sm:$0xff]
    %v2489 = vld [vmem:[%s1 + $0x8f0] sm:$0xff]
    %v2490 = vld [vmem:[%s1 + $0x8f8] sm:$0xff]
    %v2491 = vld [vmem:[%s1 + $0x900] sm:$0xff]
    %v2492 = vld [vmem:[%s1 + $0x908] sm:$0xff]
    %v2493 = vld [vmem:[%s1 + $0x910] sm:$0xff]
    %v2494 = vld [vmem:[%s1 + $0x918] sm:$0xff]
    %v2495 = vld [vmem:[%s1 + $0x920] sm:$0xff]
    %v2496 = vld [vmem:[%s1 + $0x928] sm:$0xff]
    %v2497 = vld [vmem:[%s1 + $0x930] sm:$0xff]
    %v2498 = vld [vmem:[%s1 + $0x938] sm:$0xff]
    %v2499 = vld [vmem:[%s1 + $0x940] sm:$0xff]
    %v2500 = vld [vmem:[%s1 + $0x948] sm:$0xff]
    %v2501 = vld [vmem:[%s1 + $0x950] sm:$0xff]
    %v2502 = vld [vmem:[%s1 + $0x958] sm:$0xff]
    %v2503 = vld [vmem:[%s1 + $0x960] sm:$0xff]
    %v2504 = vld [vmem:[%s1 + $0x968] sm:$0xff]
    %v2505 = vld [vmem:[%s1 + $0x970] sm:$0xff]
    %v2506 = vld [vmem:[%s1 + $0x978] sm:$0xff]
    %v2507 = vld [vmem:[%s1 + $0x980] sm:$0xff]
    %v2508 = vld [vmem:[%s1 + $0x988] sm:$0xff]
    %v2509 = vld [vmem:[%s1 + $0x990] sm:$0xff]
    %v2510 = vld [vmem:[%s1 + $0x998] sm:$0xff]
    %v2511 = vld [vmem:[%s1 + $0x9a0] sm:$0xff]
    %v2512 = vld [vmem:[%s1 + $0x9a8] sm:$0xff]
    %v2513 = vld [vmem:[%s1 + $0x9b0] sm:$0xff]
    %v2514 = vld [vmem:[%s1 + $0x9b8] sm:$0xff]
    %v2515 = vld [vmem:[%s1 + $0x9c0] sm:$0xff]
    %v2516 = vld [vmem:[%s1 + $0x9c8] sm:$0xff]
    %v2517 = vld [vmem:[%s1 + $0x9d0] sm:$0xff]
    %v2518 = vld [vmem:[%s1 + $0x9d8] sm:$0xff]
    %v2519 = vld [vmem:[%s1 + $0x9e0] sm:$0xff]
    %v2520 = vld [vmem:[%s1 + $0x9e8] sm:$0xff]
    %v2521 = vld [vmem:[%s1 + $0x9f0] sm:$0xff]
    %v2522 = vld [vmem:[%s1 + $0x9f8] sm:$0xff]
    %v2523 = vld [vmem:[%s1 + $0xa00] sm:$0xff]
    %v2524 = vld [vmem:[%s1 + $0xa08] sm:$0xff]
    %v2525 = vld [vmem:[%s1 + $0xa10] sm:$0xff]
    %v2526 = vld [vmem:[%s1 + $0xa18] sm:$0xff]
    %v2527 = vld [vmem:[%s1 + $0xa20] sm:$0xff]
    %v2528 = vld [vmem:[%s1 + $0xa28] sm:$0xff]
    %v2529 = vld [vmem:[%s1 + $0xa30] sm:$0xff]
    %v2530 = vld [vmem:[%s1 + $0xa38] sm:$0xff]
    %v2531 = vld [vmem:[%s1 + $0xa40] sm:$0xff]
    %v2532 = vld [vmem:[%s1 + $0xa48] sm:$0xff]
    %v2533 = vld [vmem:[%s1 + $0xa50] sm:$0xff]
    %v2534 = vld [vmem:[%s1 + $0xa58] sm:$0xff]
    %v2535 = vld [vmem:[%s1 + $0xa60] sm:$0xff]
    %v2536 = vld [vmem:[%s1 + $0xa68] sm:$0xff]
    %v2537 = vld [vmem:[%s1 + $0xa70] sm:$0xff]
    %v2538 = vld [vmem:[%s1 + $0xa78] sm:$0xff]
    %v2539 = vld [vmem:[%s1 + $0xa80] sm:$0xff]
    %v2540 = vld [vmem:[%s1 + $0xa88] sm:$0xff]
    %v2541 = vld [vmem:[%s1 + $0xa90] sm:$0xff]
    %v2542 = vld [vmem:[%s1 + $0xa98] sm:$0xff]
    %v2543 = vld [vmem:[%s1 + $0xaa0] sm:$0xff]
    %v2544 = vld [vmem:[%s1 + $0xaa8] sm:$0xff]
    %v2545 = vld [vmem:[%s1 + $0xab0] sm:$0xff]
    %v2546 = vld [vmem:[%s1 + $0xab8] sm:$0xff]
    %v2547 = vld [vmem:[%s1 + $0xac0] sm:$0xff]
    %v2548 = vld [vmem:[%s1 + $0xac8] sm:$0xff]
    %v2549 = vld [vmem:[%s1 + $0xad0] sm:$0xff]
    %v2550 = vld [vmem:[%s1 + $0xad8] sm:$0xff]
    %v2551 = vld [vmem:[%s1 + $0xae0] sm:$0xff]
    %v2552 = vld [vmem:[%s1 + $0xae8] sm:$0xff]
    %v2553 = vld [vmem:[%s1 + $0xaf0] sm:$0xff]
    %v2554 = vld [vmem:[%s1 + $0xaf8] sm:$0xff]
    %v2555 = vld [vmem:[%s1 + $0xb00] sm:$0xff]
    %v2556 = vld [vmem:[%s1 + $0xb08] sm:$0xff]
    %v2557 = vld [vmem:[%s1 + $0xb10] sm:$0xff]
    %v2558 = vld [vmem:[%s1 + $0xb18] sm:$0xff]
    %v2559 = vld [vmem:[%s1 + $0xb20] sm:$0xff]
    %v2560 = vld [vmem:[%s1 + $0xb28] sm:$0xff]
    %v2561 = vld [vmem:[%s1 + $0xb30] sm:$0xff]
    %v2562 = vld [vmem:[%s1 + $0xb38] sm:$0xff]
    %v2563 = vld [vmem:[%s1 + $0xb40] sm:$0xff]
    %v2564 = vld [vmem:[%s1 + $0xb48] sm:$0xff]
    %v2565 = vld [vmem:[%s1 + $0xb50] sm:$0xff]
    %v2566 = vld [vmem:[%s1 + $0xb58] sm:$0xff]
    %v2567 = vld [vmem:[%s1 + $0xb60] sm:$0xff]
    %v2568 = vld [vmem:[%s1 + $0xb68] sm:$0xff]
    %v2569 = vld [vmem:[%s1 + $0xb70] sm:$0xff]
    %v2570 = vld [vmem:[%s1 + $0xb78] sm:$0xff]
    %v2571 = vld [vmem:[%s1 + $0xb80] sm:$0xff]
    %v2572 = vld [vmem:[%s1 + $0xb88] sm:$0xff]
    %v2573 = vld [vmem:[%s1 + $0xb90] sm:$0xff]
    %v2574 = vld [vmem:[%s1 + $0xb98] sm:$0xff]
    %v2575 = vld [vmem:[%s1 + $0xba0] sm:$0xff]
    %v2576 = vld [vmem:[%s1 + $0xba8] sm:$0xff]
    %v2577 = vld [vmem:[%s1 + $0xbb0] sm:$0xff]
    %v2578 = vld [vmem:[%s1 + $0xbb8] sm:$0xff]
    %v2579 = vld [vmem:[%s1 + $0xbc0] sm:$0xff]
    %v2580 = vld [vmem:[%s1 + $0xbc8] sm:$0xff]
    %v2581 = vld [vmem:[%s1 + $0xbd0] sm:$0xff]
    %v2582 = vld [vmem:[%s1 + $0xbd8] sm:$0xff]
    %v2583 = vld [vmem:[%s1 + $0xbe0] sm:$0xff]
    %v2584 = vld [vmem:[%s1 + $0xbe8] sm:$0xff]
    %v2585 = vld [vmem:[%s1 + $0xbf0] sm:$0xff]
    %v2586 = vld [vmem:[%s1 + $0xbf8] sm:$0xff]
    %v2587 = vld [vmem:[%s1 + $0xc00] sm:$0xff]
    %v2588 = vld [vmem:[%s1 + $0xc08] sm:$0xff]
    %v2589 = vld [vmem:[%s1 + $0xc10] sm:$0xff]
    %v2590 = vld [vmem:[%s1 + $0xc18] sm:$0xff]
    %v2591 = vld [vmem:[%s1 + $0xc20] sm:$0xff]
    %v2592 = vld [vmem:[%s1 + $0xc28] sm:$0xff]
    %v2593 = vld [vmem:[%s1 + $0xc30] sm:$0xff]
    %v2594 = vld [vmem:[%s1 + $0xc38] sm:$0xff]
    %v2595 = vld [vmem:[%s1 + $0xc40] sm:$0xff]
    %v2596 = vld [vmem:[%s1 + $0xc48] sm:$0xff]
    %v2597 = vld [vmem:[%s1 + $0xc50] sm:$0xff]
    %v2598 = vld [vmem:[%s1 + $0xc58] sm:$0xff]
    %v2599 = vld [vmem:[%s1 + $0xc60] sm:$0xff]
    %v2600 = vld [vmem:[%s1 + $0xc68] sm:$0xff]
    %v2601 = vld [vmem:[%s1 + $0xc70] sm:$0xff]
    %v2602 = vld [vmem:[%s1 + $0xc78] sm:$0xff]
    %v2603 = vld [vmem:[%s1 + $0xc80] sm:$0xff]
    %v2604 = vld [vmem:[%s1 + $0xc88] sm:$0xff]
    %v2605 = vld [vmem:[%s1 + $0xc90] sm:$0xff]
    %v2606 = vld [vmem:[%s1 + $0xc98] sm:$0xff]
    %v2607 = vld [vmem:[%s1 + $0xca0] sm:$0xff]
    %v2608 = vld [vmem:[%s1 + $0xca8] sm:$0xff]
    %v2609 = vld [vmem:[%s1 + $0xcb0] sm:$0xff]
    %v2610 = vld [vmem:[%s1 + $0xcb8] sm:$0xff]
    %v2611 = vld [vmem:[%s1 + $0xcc0] sm:$0xff]
    %v2612 = vld [vmem:[%s1 + $0xcc8] sm:$0xff]
    %v2613 = vld [vmem:[%s1 + $0xcd0] sm:$0xff]
    %v2614 = vld [vmem:[%s1 + $0xcd8] sm:$0xff]
    %v2615 = vld [vmem:[%s1 + $0xce0] sm:$0xff]
    %v2616 = vld [vmem:[%s1 + $0xce8] sm:$0xff]
    %v2617 = vld [vmem:[%s1 + $0xcf0] sm:$0xff]
    %v2618 = vld [vmem:[%s1 + $0xcf8] sm:$0xff]
    %v2619 = vld [vmem:[%s1 + $0xd00] sm:$0xff]
    %v2620 = vld [vmem:[%s1 + $0xd08] sm:$0xff]
    %v2621 = vld [vmem:[%s1 + $0xd10] sm:$0xff]
    %v2622 = vld [vmem:[%s1 + $0xd18] sm:$0xff]
    %v2623 = vld [vmem:[%s1 + $0xd20] sm:$0xff]
    %v2624 = vld [vmem:[%s1 + $0xd28] sm:$0xff]
    %v2625 = vld [vmem:[%s1 + $0xd30] sm:$0xff]
    %v2626 = vld [vmem:[%s1 + $0xd38] sm:$0xff]
    %v2627 = vld [vmem:[%s1 + $0xd40] sm:$0xff]
    %v2628 = vld [vmem:[%s1 + $0xd48] sm:$0xff]
    %v2629 = vld [vmem:[%s1 + $0xd50] sm:$0xff]
    %v2630 = vld [vmem:[%s1 + $0xd58] sm:$0xff]
    %v2631 = vld [vmem:[%s1 + $0xd60] sm:$0xff]
    %v2632 = vld [vmem:[%s1 + $0xd68] sm:$0xff]
    %v2633 = vld [vmem:[%s1 + $0xd70] sm:$0xff]
    %v2634 = vld [vmem:[%s1 + $0xd78] sm:$0xff]
    %v2635 = vld [vmem:[%s1 + $0xd80] sm:$0xff]
    %v2636 = vld [vmem:[%s1 + $0xd88] sm:$0xff]
    %v2637 = vld [vmem:[%s1 + $0xd90] sm:$0xff]
    %v2638 = vld [vmem:[%s1 + $0xd98] sm:$0xff]
    %v2639 = vld [vmem:[%s1 + $0xda0] sm:$0xff]
    %v2640 = vld [vmem:[%s1 + $0xda8] sm:$0xff]
    %v2641 = vld [vmem:[%s1 + $0xdb0] sm:$0xff]
    %v2642 = vld [vmem:[%s1 + $0xdb8] sm:$0xff]
    %v2643 = vld [vmem:[%s1 + $0xdc0] sm:$0xff]
    %v2644 = vld [vmem:[%s1 + $0xdc8] sm:$0xff]
    %v2645 = vld [vmem:[%s1 + $0xdd0] sm:$0xff]
    %v2646 = vld [vmem:[%s1 + $0xdd8] sm:$0xff]
    %v2647 = vld [vmem:[%s1 + $0xde0] sm:$0xff]
    %v2648 = vld [vmem:[%s1 + $0xde8] sm:$0xff]
    %v2649 = vld [vmem:[%s1 + $0xdf0] sm:$0xff]
    %v2650 = vld [vmem:[%s1 + $0xdf8] sm:$0xff]
    %v2651 = vld [vmem:[%s1 + $0xe00] sm:$0xff]
    %v2652 = vld [vmem:[%s1 + $0xe08] sm:$0xff]
    %v2653 = vld [vmem:[%s1 + $0xe10] sm:$0xff]
    %v2654 = vld [vmem:[%s1 + $0xe18] sm:$0xff]
    %v2655 = vld [vmem:[%s1 + $0xe20] sm:$0xff]
    %v2656 = vld [vmem:[%s1 + $0xe28] sm:$0xff]
    %v2657 = vld [vmem:[%s1 + $0xe30] sm:$0xff]
    %v2658 = vld [vmem:[%s1 + $0xe38] sm:$0xff]
    %v2659 = vld [vmem:[%s1 + $0xe40] sm:$0xff]
    %v2660 = vld [vmem:[%s1 + $0xe48] sm:$0xff]
    %v2661 = vld [vmem:[%s1 + $0xe50] sm:$0xff]
    %v2662 = vld [vmem:[%s1 + $0xe58] sm:$0xff]
    %v2663 = vld [vmem:[%s1 + $0xe60] sm:$0xff]
    %v2664 = vld [vmem:[%s1 + $0xe68] sm:$0xff]
    %v2665 = vld [vmem:[%s1 + $0xe70] sm:$0xff]
    %v2666 = vld [vmem:[%s1 + $0xe78] sm:$0xff]
    %v2667 = vld [vmem:[%s1 + $0xe80] sm:$0xff]
    %v2668 = vld [vmem:[%s1 + $0xe88] sm:$0xff]
    %v2669 = vld [vmem:[%s1 + $0xe90] sm:$0xff]
    %v2670 = vld [vmem:[%s1 + $0xe98] sm:$0xff]
    %v2671 = vld [vmem:[%s1 + $0xea0] sm:$0xff]
    %v2672 = vld [vmem:[%s1 + $0xea8] sm:$0xff]
    %v2673 = vld [vmem:[%s1 + $0xeb0] sm:$0xff]
    %v2674 = vld [vmem:[%s1 + $0xeb8] sm:$0xff]
    %v2675 = vld [vmem:[%s1 + $0xec0] sm:$0xff]
    %v2676 = vld [vmem:[%s1 + $0xec8] sm:$0xff]
    %v2677 = vld [vmem:[%s1 + $0xed0] sm:$0xff]
    %v2678 = vld [vmem:[%s1 + $0xed8] sm:$0xff]
    %v2679 = vld [vmem:[%s1 + $0xee0] sm:$0xff]
    %v2680 = vld [vmem:[%s1 + $0xee8] sm:$0xff]
    %v2681 = vld [vmem:[%s1 + $0xef0] sm:$0xff]
    %v2682 = vld [vmem:[%s1 + $0xef8] sm:$0xff]
    %v2683 = vld [vmem:[%s1 + $0xf00] sm:$0xff]
    %v2684 = vld [vmem:[%s1 + $0xf08] sm:$0xff]
    %v2685 = vld [vmem:[%s1 + $0xf10] sm:$0xff]
    %v2686 = vld [vmem:[%s1 + $0xf18] sm:$0xff]
    %v2687 = vld [vmem:[%s1 + $0xf20] sm:$0xff]
    %v2688 = vld [vmem:[%s1 + $0xf28] sm:$0xff]
    %v2689 = vld [vmem:[%s1 + $0xf30] sm:$0xff]
    %v2690 = vld [vmem:[%s1 + $0xf38] sm:$0xff]
    %v2691 = vld [vmem:[%s1 + $0xf40] sm:$0xff]
    %v2692 = vld [vmem:[%s1 + $0xf48] sm:$0xff]
    %v2693 = vld [vmem:[%s1 + $0xf50] sm:$0xff]
    %v2694 = vld [vmem:[%s1 + $0xf58] sm:$0xff]
    %v2695 = vld [vmem:[%s1 + $0xf60] sm:$0xff]
    %v2696 = vld [vmem:[%s1 + $0xf68] sm:$0xff]
    %v2697 = vld [vmem:[%s1 + $0xf70] sm:$0xff]
    %v2698 = vld [vmem:[%s1 + $0xf78] sm:$0xff]
    %v2699 = vld [vmem:[%s1 + $0xf80] sm:$0xff]
    %v2700 = vld [vmem:[%s1 + $0xf88] sm:$0xff]
    %v2701 = vld [vmem:[%s1 + $0xf90] sm:$0xff]
    %v2702 = vld [vmem:[%s1 + $0xf98] sm:$0xff]
    %v2703 = vld [vmem:[%s1 + $0xfa0] sm:$0xff]
    %v2704 = vld [vmem:[%s1 + $0xfa8] sm:$0xff]
    %v2705 = vld [vmem:[%s1 + $0xfb0] sm:$0xff]
    %v2706 = vld [vmem:[%s1 + $0xfb8] sm:$0xff]
    %v2707 = vld [vmem:[%s1 + $0xfc0] sm:$0xff]
    %v2708 = vld [vmem:[%s1 + $0xfc8] sm:$0xff]
    %v2709 = vld [vmem:[%s1 + $0xfd0] sm:$0xff]
    %v2710 = vld [vmem:[%s1 + $0xfd8] sm:$0xff]
    %v2711 = vld [vmem:[%s1 + $0xfe0] sm:$0xff]
    %v2712 = vld [vmem:[%s1 + $0xfe8] sm:$0xff]
    %v2713 = vld [vmem:[%s1 + $0xff0] sm:$0xff]
    %v2714 = vld [vmem:[%s1 + $0xff8] sm:$0xff]
    %v2715 = vld [vmem:[%s1 + $0x1000] sm:$0xff]
    %v2716 = vld [vmem:[%s1 + $0x1008] sm:$0xff]
    %v2717 = vld [vmem:[%s1 + $0x1010] sm:$0xff]
    %v2718 = vld [vmem:[%s1 + $0x1018] sm:$0xff]
    %v2719 = vld [vmem:[%s1 + $0x1020] sm:$0xff]
    %v2720 = vld [vmem:[%s1 + $0x1028] sm:$0xff]
    %v2721 = vld [vmem:[%s1 + $0x1030] sm:$0xff]
    %v2722 = vld [vmem:[%s1 + $0x1038] sm:$0xff]
    %v2723 = vld [vmem:[%s1 + $0x1040] sm:$0xff]
    %v2724 = vld [vmem:[%s1 + $0x1048] sm:$0xff]
    %v2725 = vld [vmem:[%s1 + $0x1050] sm:$0xff]
    %v2726 = vld [vmem:[%s1 + $0x1058] sm:$0xff]
    %v2727 = vld [vmem:[%s1 + $0x1060] sm:$0xff]
    %v2728 = vld [vmem:[%s1 + $0x1068] sm:$0xff]
    %v2729 = vld [vmem:[%s1 + $0x1070] sm:$0xff]
    %v2730 = vld [vmem:[%s1 + $0x1078] sm:$0xff]
    %v2731 = vld [vmem:[%s1 + $0x1080] sm:$0xff]
    %v2732 = vld [vmem:[%s1 + $0x1088] sm:$0xff]
    %v2733 = vld [vmem:[%s1 + $0x1090] sm:$0xff]
    %v2734 = vld [vmem:[%s1 + $0x1098] sm:$0xff]
    %v2735 = vld [vmem:[%s1 + $0x10a0] sm:$0xff]
    %v2736 = vld [vmem:[%s1 + $0x10a8] sm:$0xff]
    %v2737 = vld [vmem:[%s1 + $0x10b0] sm:$0xff]
    %v2738 = vld [vmem:[%s1 + $0x10b8] sm:$0xff]
    %v2739 = vld [vmem:[%s1 + $0x10c0] sm:$0xff]
    %v2740 = vld [vmem:[%s1 + $0x10c8] sm:$0xff]
    %v2741 = vld [vmem:[%s1 + $0x10d0] sm:$0xff]
    %v2742 = vld [vmem:[%s1 + $0x10d8] sm:$0xff]
    %v2743 = vld [vmem:[%s1 + $0x10e0] sm:$0xff]
    %v2744 = vld [vmem:[%s1 + $0x10e8] sm:$0xff]
    %v2745 = vld [vmem:[%s1 + $0x10f0] sm:$0xff]
    %v2746 = vld [vmem:[%s1 + $0x10f8] sm:$0xff]
    %v2747 = vld [vmem:[%s1 + $0x1100] sm:$0xff]
    %v2748 = vld [vmem:[%s1 + $0x1108] sm:$0xff]
    %v2749 = vld [vmem:[%s1 + $0x1110] sm:$0xff]
    %v2750 = vld [vmem:[%s1 + $0x1118] sm:$0xff]
    %v2751 = vld [vmem:[%s1 + $0x1120] sm:$0xff]
    %v2752 = vld [vmem:[%s1 + $0x1128] sm:$0xff]
    %v2753 = vld [vmem:[%s1 + $0x1130] sm:$0xff]
    %v2754 = vld [vmem:[%s1 + $0x1138] sm:$0xff]
    %v2755 = vld [vmem:[%s1 + $0x1140] sm:$0xff]
    %v2756 = vld [vmem:[%s1 + $0x1148] sm:$0xff]
    %v2757 = vld [vmem:[%s1 + $0x1150] sm:$0xff]
    %v2758 = vld [vmem:[%s1 + $0x1158] sm:$0xff]
    %v2759 = vld [vmem:[%s1 + $0x1160] sm:$0xff]
    %v2760 = vld [vmem:[%s1 + $0x1168] sm:$0xff]
    %v2761 = vld [vmem:[%s1 + $0x1170] sm:$0xff]
    %v2762 = vld [vmem:[%s1 + $0x1178] sm:$0xff]
    %v2763 = vld [vmem:[%s1 + $0x1180] sm:$0xff]
    %v2764 = vld [vmem:[%s1 + $0x1188] sm:$0xff]
    %v2765 = vld [vmem:[%s1 + $0x1190] sm:$0xff]
    %v2766 = vld [vmem:[%s1 + $0x1198] sm:$0xff]
    %v2767 = vld [vmem:[%s1 + $0x11a0] sm:$0xff]
    %v2768 = vld [vmem:[%s1 + $0x11a8] sm:$0xff]
    %v2769 = vld [vmem:[%s1 + $0x11b0] sm:$0xff]
    %v2770 = vld [vmem:[%s1 + $0x11b8] sm:$0xff]
    %v2771 = vld [vmem:[%s1 + $0x11c0] sm:$0xff]
    %v2772 = vld [vmem:[%s1 + $0x11c8] sm:$0xff]
    %v2773 = vld [vmem:[%s1 + $0x11d0] sm:$0xff]
    %v2774 = vld [vmem:[%s1 + $0x11d8] sm:$0xff]
    %v2775 = vld [vmem:[%s1 + $0x11e0] sm:$0xff]
    %v2776 = vld [vmem:[%s1 + $0x11e8] sm:$0xff]
    %v2777 = vld [vmem:[%s1 + $0x11f0] sm:$0xff]
    %v2778 = vld [vmem:[%s1 + $0x11f8] sm:$0xff]
    %v2779 = vld [vmem:[%s1 + $0x1200] sm:$0xff]
    %v2780 = vld [vmem:[%s1 + $0x1208] sm:$0xff]
    %v2781 = vld [vmem:[%s1 + $0x1210] sm:$0xff]
    %v2782 = vld [vmem:[%s1 + $0x1218] sm:$0xff]
    %v2783 = vld [vmem:[%s1 + $0x1220] sm:$0xff]
    %v2784 = vld [vmem:[%s1 + $0x1228] sm:$0xff]
    %v2785 = vld [vmem:[%s1 + $0x1230] sm:$0xff]
    %v2786 = vld [vmem:[%s1 + $0x1238] sm:$0xff]
    %v2787 = vld [vmem:[%s1 + $0x1240] sm:$0xff]
    %v2788 = vld [vmem:[%s1 + $0x1248] sm:$0xff]
    %v2789 = vld [vmem:[%s1 + $0x1250] sm:$0xff]
    %v2790 = vld [vmem:[%s1 + $0x1258] sm:$0xff]
    %v2791 = vld [vmem:[%s1 + $0x1260] sm:$0xff]
    %v2792 = vld [vmem:[%s1 + $0x1268] sm:$0xff]
    %v2793 = vld [vmem:[%s1 + $0x1270] sm:$0xff]
    %v2794 = vld [vmem:[%s1 + $0x1278] sm:$0xff]
    %v2795 = vld [vmem:[%s1 + $0x1280] sm:$0xff]
    %v2796 = vld [vmem:[%s1 + $0x1288] sm:$0xff]
    %v2797 = vld [vmem:[%s1 + $0x1290] sm:$0xff]
    %v2798 = vld [vmem:[%s1 + $0x1298] sm:$0xff]
    %v2799 = vld [vmem:[%s1 + $0x12a0] sm:$0xff]
    %v2800 = vld [vmem:[%s1 + $0x12a8] sm:$0xff]
    %v2801 = vld [vmem:[%s1 + $0x12b0] sm:$0xff]
    %v2802 = vld [vmem:[%s1 + $0x12b8] sm:$0xff]
    %v2803 = vld [vmem:[%s1 + $0x12c0] sm:$0xff]
    %v2804 = vld [vmem:[%s1 + $0x12c8] sm:$0xff]
    %v2805 = vld [vmem:[%s1 + $0x12d0] sm:$0xff]
    %v2806 = vld [vmem:[%s1 + $0x12d8] sm:$0xff]
    %v2807 = vld [vmem:[%s1 + $0x12e0] sm:$0xff]
    %v2808 = vld [vmem:[%s1 + $0x12e8] sm:$0xff]
    %v2809 = vld [vmem:[%s1 + $0x12f0] sm:$0xff]
    %v2810 = vld [vmem:[%s1 + $0x12f8] sm:$0xff]
    %v2811 = vld [vmem:[%s1 + $0x1300] sm:$0xff]
    %v2812 = vld [vmem:[%s1 + $0x1308] sm:$0xff]
    %v2813 = vld [vmem:[%s1 + $0x1310] sm:$0xff]
    %v2814 = vld [vmem:[%s1 + $0x1318] sm:$0xff]
    %v2815 = vld [vmem:[%s1 + $0x1320] sm:$0xff]
    %v2816 = vld [vmem:[%s1 + $0x1328] sm:$0xff]
    %v2817 = vld [vmem:[%s1 + $0x1330] sm:$0xff]
    %v2818 = vld [vmem:[%s1 + $0x1338] sm:$0xff]
    %v2819 = vld [vmem:[%s1 + $0x1340] sm:$0xff]
    %v2820 = vld [vmem:[%s1 + $0x1348] sm:$0xff]
    %v2821 = vld [vmem:[%s1 + $0x1350] sm:$0xff]
    %v2822 = vld [vmem:[%s1 + $0x1358] sm:$0xff]
    %v2823 = vld [vmem:[%s1 + $0x1360] sm:$0xff]
    %v2824 = vld [vmem:[%s1 + $0x1368] sm:$0xff]
    %v2825 = vld [vmem:[%s1 + $0x1370] sm:$0xff]
    %v2826 = vld [vmem:[%s1 + $0x1378] sm:$0xff]
    %v2827 = vld [vmem:[%s1 + $0x1380] sm:$0xff]
    %v2828 = vld [vmem:[%s1 + $0x1388] sm:$0xff]
    %v2829 = vld [vmem:[%s1 + $0x1390] sm:$0xff]
    %v2830 = vld [vmem:[%s1 + $0x1398] sm:$0xff]
    %v2831 = vld [vmem:[%s1 + $0x13a0] sm:$0xff]
    %v2832 = vld [vmem:[%s1 + $0x13a8] sm:$0xff]
    %v2833 = vld [vmem:[%s1 + $0x13b0] sm:$0xff]
    %v2834 = vld [vmem:[%s1 + $0x13b8] sm:$0xff]
    %v2835 = vld [vmem:[%s1 + $0x13c0] sm:$0xff]
    %v2836 = vld [vmem:[%s1 + $0x13c8] sm:$0xff]
    %v2837 = vld [vmem:[%s1 + $0x13d0] sm:$0xff]
    %v2838 = vld [vmem:[%s1 + $0x13d8] sm:$0xff]
    %v2839 = vld [vmem:[%s1 + $0x13e0] sm:$0xff]
    %v2840 = vld [vmem:[%s1 + $0x13e8] sm:$0xff]
    %v2841 = vld [vmem:[%s1 + $0x13f0] sm:$0xff]
    %v2842 = vld [vmem:[%s1 + $0x13f8] sm:$0xff]
    %v2843 = vld [vmem:[%s2] sm:$0x1]
    %v2845 = vlaneseq
    %v2846 = vshrl.u32 %v2845, 7
    %v2847 = vsub.s32 0, %v2846
    %v2848 = vrot.slane %v2843, %v2847
    %2850 = vmatprep.subr.mxu0 0.0
    %2851 = vmatpush1.msra.mxu0 %v2218
    %2852 = vmatprep.subr.mxu0 0.0
    %2853 = vmatpush1.msra.mxu0 %v2217
    %2854 = vmatprep.subr.mxu0 0.0
    %2855 = vmatpush1.msra.mxu0 %v2216
    %2856 = vmatprep.subr.mxu0 0.0
    %2857 = vmatpush1.msra.mxu0 %v2215
    %2858 = vmatprep.subr.mxu0 0.0
    %2859 = vmatpush1.msra.mxu0 %v2214
    %2860 = vmatprep.subr.mxu0 0.0
    %2861 = vmatpush1.msra.mxu0 %v2213
    %2862 = vmatprep.subr.mxu0 0.0
    %2863 = vmatpush1.msra.mxu0 %v2212
    %2864 = vmatprep.subr.mxu0 0.0
    %2865 = vmatpush1.msra.mxu0 %v2211
    %2866 = vmatprep.subr.mxu0 0.0
    %2867 = vmatpush1.msra.mxu0 %v2210
    %2868 = vmatprep.subr.mxu0 0.0
    %2869 = vmatpush1.msra.mxu0 %v2209
    %2870 = vmatprep.subr.mxu0 0.0
    %2871 = vmatpush1.msra.mxu0 %v2208
    %2872 = vmatprep.subr.mxu0 0.0
    %2873 = vmatpush1.msra.mxu0 %v2207
    %2874 = vmatprep.subr.mxu0 0.0
    %2875 = vmatpush1.msra.mxu0 %v2206
    %2876 = vmatprep.subr.mxu0 0.0
    %2877 = vmatpush1.msra.mxu0 %v2205
    %2878 = vmatprep.subr.mxu0 0.0
    %2879 = vmatpush1.msra.mxu0 %v2204
    %2880 = vmatprep.subr.mxu0 0.0
    %2881 = vmatpush1.msra.mxu0 %v2203
    %2882 = vmatprep.subr.mxu0 0.0
    %2883 = vmatpush2.msra.mxu0 %v2234
    %2884 = vmatprep.subr.mxu0 0.0
    %2885 = vmatpush2.msra.mxu0 %v2233
    %2886 = vmatprep.subr.mxu0 0.0
    %2887 = vmatpush2.msra.mxu0 %v2232
    %2888 = vmatprep.subr.mxu0 0.0
    %2889 = vmatpush2.msra.mxu0 %v2231
    %2890 = vmatprep.subr.mxu0 0.0
    %2891 = vmatpush2.msra.mxu0 %v2230
    %2892 = vmatprep.subr.mxu0 0.0
    %2893 = vmatpush2.msra.mxu0 %v2229
    %2894 = vmatprep.subr.mxu0 0.0
    %2895 = vmatpush2.msra.mxu0 %v2228
    %2896 = vmatprep.subr.mxu0 0.0
    %2897 = vmatpush2.msra.mxu0 %v2227
    %2898 = vmatprep.subr.mxu0 0.0
    %2899 = vmatpush2.msra.mxu0 %v2226
    %2900 = vmatprep.subr.mxu0 0.0
    %2901 = vmatpush2.msra.mxu0 %v2225
    %2902 = vmatprep.subr.mxu0 0.0
    %2903 = vmatpush2.msra.mxu0 %v2224
    %2904 = vmatprep.subr.mxu0 0.0
    %2905 = vmatpush2.msra.mxu0 %v2223
    %2906 = vmatprep.subr.mxu0 0.0
    %2907 = vmatpush2.msra.mxu0 %v2222
    %2908 = vmatprep.subr.mxu0 0.0
    %2909 = vmatpush2.msra.mxu0 %v2221
    %2910 = vmatprep.subr.mxu0 0.0
    %2911 = vmatpush2.msra.mxu0 %v2220
    %2912 = vmatprep.subr.mxu0 0.0
    %2913 = vmatpush2.msra.mxu0 %v2219
    %2914 = vmatprep.mubr.f32.mxu0 %v1924
    %2915 = vmatmul.mubr.f32.gmra.mxu0 %v1923
    %v2916 = vpop.f32.mrf.mxu0
    %v2917 = vadd.f32 %v2848, %v2916
    %v2918 = vpop.f32.mrf.mxu0
    %2919 = vmatprep.mubr.f32.mxu0 %v1964
    %2920 = vmatmul.mubr.f32.gmra.mxu0 %v1963
    %v2921 = vpop.f32.mrf.mxu0
    %v2922 = vadd.f32 %v2848, %v2921
    %v2923 = vpop.f32.mrf.mxu0
    %2924 = vmatprep.mubr.f32.mxu0 %v2004
    %2925 = vmatmul.mubr.f32.gmra.mxu0 %v2003
    %v2926 = vpop.f32.mrf.mxu0
    %v2927 = vadd.f32 %v2848, %v2926
    %v2928 = vpop.f32.mrf.mxu0
    %2929 = vmatprep.mubr.f32.mxu0 %v2044
    %2930 = vmatmul.mubr.f32.gmra.mxu0 %v2043
    %v2931 = vpop.f32.mrf.mxu0
    %v2932 = vadd.f32 %v2848, %v2931
    %v2933 = vpop.f32.mrf.mxu0
    %2934 = vmatprep.mubr.f32.mxu0 %v2084
    %2935 = vmatmul.mubr.f32.gmra.mxu0 %v2083
    %v2936 = vpop.f32.mrf.mxu0
    %v2937 = vadd.f32 %v2848, %v2936
    %v2938 = vpop.f32.mrf.mxu0
    %2939 = vmatprep.mubr.f32.mxu0 %v2124
    %2940 = vmatmul.mubr.f32.gmra.mxu0 %v2123
    %v2941 = vpop.f32.mrf.mxu0
    %v2942 = vadd.f32 %v2848, %v2941
    %v2943 = vpop.f32.mrf.mxu0
    %2944 = vmatprep.mubr.f32.mxu0 %v2164
    %2945 = vmatmul.mubr.f32.gmra.mxu0 %v2163
    %v2946 = vpop.f32.mrf.mxu0
    %v2947 = vadd.f32 %v2848, %v2946
    %v2948 = vpop.f32.mrf.mxu0
    %2949 = vdwg.mxu0
    %2950 = vmatprep.subr.mxu0 0.0
    %2951 = vmatpush1.msra.mxu0 %v2250
    %2952 = vmatprep.subr.mxu0 0.0
    %2953 = vmatpush1.msra.mxu0 %v2249
    %2954 = vmatprep.subr.mxu0 0.0
    %2955 = vmatpush1.msra.mxu0 %v2248
    %2956 = vmatprep.subr.mxu0 0.0
    %2957 = vmatpush1.msra.mxu0 %v2247
    %2958 = vmatprep.subr.mxu0 0.0
    %2959 = vmatpush1.msra.mxu0 %v2246
    %2960 = vmatprep.subr.mxu0 0.0
    %2961 = vmatpush1.msra.mxu0 %v2245
    %2962 = vmatprep.subr.mxu0 0.0
    %2963 = vmatpush1.msra.mxu0 %v2244
    %2964 = vmatprep.subr.mxu0 0.0
    %2965 = vmatpush1.msra.mxu0 %v2243
    %2966 = vmatprep.subr.mxu0 0.0
    %2967 = vmatpush1.msra.mxu0 %v2242
    %2968 = vmatprep.subr.mxu0 0.0
    %2969 = vmatpush1.msra.mxu0 %v2241
    %2970 = vmatprep.subr.mxu0 0.0
    %2971 = vmatpush1.msra.mxu0 %v2240
    %2972 = vmatprep.subr.mxu0 0.0
    %2973 = vmatpush1.msra.mxu0 %v2239
    %2974 = vmatprep.subr.mxu0 0.0
    %2975 = vmatpush1.msra.mxu0 %v2238
    %2976 = vmatprep.subr.mxu0 0.0
    %2977 = vmatpush1.msra.mxu0 %v2237
    %2978 = vmatprep.subr.mxu0 0.0
    %2979 = vmatpush1.msra.mxu0 %v2236
    %2980 = vmatprep.subr.mxu0 0.0
    %2981 = vmatpush1.msra.mxu0 %v2235
    %2982 = vmatprep.subr.mxu0 0.0
    %2983 = vmatpush2.msra.mxu0 %v2266
    %2984 = vmatprep.subr.mxu0 0.0
    %2985 = vmatpush2.msra.mxu0 %v2265
    %2986 = vmatprep.subr.mxu0 0.0
    %2987 = vmatpush2.msra.mxu0 %v2264
    %2988 = vmatprep.subr.mxu0 0.0
    %2989 = vmatpush2.msra.mxu0 %v2263
    %2990 = vmatprep.subr.mxu0 0.0
    %2991 = vmatpush2.msra.mxu0 %v2262
    %2992 = vmatprep.subr.mxu0 0.0
    %2993 = vmatpush2.msra.mxu0 %v2261
    %2994 = vmatprep.subr.mxu0 0.0
    %2995 = vmatpush2.msra.mxu0 %v2260
    %2996 = vmatprep.subr.mxu0 0.0
    %2997 = vmatpush2.msra.mxu0 %v2259
    %2998 = vmatprep.subr.mxu0 0.0
    %2999 = vmatpush2.msra.mxu0 %v2258
    %3000 = vmatprep.subr.mxu0 0.0
    %3001 = vmatpush2.msra.mxu0 %v2257
    %3002 = vmatprep.subr.mxu0 0.0
    %3003 = vmatpush2.msra.mxu0 %v2256
    %3004 = vmatprep.subr.mxu0 0.0
    %3005 = vmatpush2.msra.mxu0 %v2255
    %3006 = vmatprep.subr.mxu0 0.0
    %3007 = vmatpush2.msra.mxu0 %v2254
    %3008 = vmatprep.subr.mxu0 0.0
    %3009 = vmatpush2.msra.mxu0 %v2253
    %3010 = vmatprep.subr.mxu0 0.0
    %3011 = vmatpush2.msra.mxu0 %v2252
    %3012 = vmatprep.subr.mxu0 0.0
    %3013 = vmatpush2.msra.mxu0 %v2251
    %3014 = vmatprep.mubr.f32.mxu0 %v1926
    %3015 = vmatmul.mubr.f32.gmra.mxu0 %v1925
    %v3016 = vpop.f32.mrf.mxu0
    %v3017 = vadd.f32 %v2917, %v3016
    %v3018 = vpop.f32.mrf.mxu0
    %3019 = vmatprep.mubr.f32.mxu0 %v1966
    %3020 = vmatmul.mubr.f32.gmra.mxu0 %v1965
    %v3021 = vpop.f32.mrf.mxu0
    %v3022 = vadd.f32 %v2922, %v3021
    %v3023 = vpop.f32.mrf.mxu0
    %3024 = vmatprep.mubr.f32.mxu0 %v2006
    %3025 = vmatmul.mubr.f32.gmra.mxu0 %v2005
    %v3026 = vpop.f32.mrf.mxu0
    %v3027 = vadd.f32 %v2927, %v3026
    %v3028 = vpop.f32.mrf.mxu0
    %3029 = vmatprep.mubr.f32.mxu0 %v2046
    %3030 = vmatmul.mubr.f32.gmra.mxu0 %v2045
    %v3031 = vpop.f32.mrf.mxu0
    %v3032 = vadd.f32 %v2932, %v3031
    %v3033 = vpop.f32.mrf.mxu0
    %3034 = vmatprep.mubr.f32.mxu0 %v2086
    %3035 = vmatmul.mubr.f32.gmra.mxu0 %v2085
    %v3036 = vpop.f32.mrf.mxu0
    %v3037 = vadd.f32 %v2937, %v3036
    %v3038 = vpop.f32.mrf.mxu0
    %3039 = vmatprep.mubr.f32.mxu0 %v2126
    %3040 = vmatmul.mubr.f32.gmra.mxu0 %v2125
    %v3041 = vpop.f32.mrf.mxu0
    %v3042 = vadd.f32 %v2942, %v3041
    %v3043 = vpop.f32.mrf.mxu0
    %3044 = vmatprep.mubr.f32.mxu0 %v2166
    %3045 = vmatmul.mubr.f32.gmra.mxu0 %v2165
    %v3046 = vpop.f32.mrf.mxu0
    %v3047 = vadd.f32 %v2947, %v3046
    %v3048 = vpop.f32.mrf.mxu0
    %3049 = vdwg.mxu0
    %3050 = vmatprep.subr.mxu0 0.0
    %3051 = vmatpush1.msra.mxu0 %v2282
    %3052 = vmatprep.subr.mxu0 0.0
    %3053 = vmatpush1.msra.mxu0 %v2281
    %3054 = vmatprep.subr.mxu0 0.0
    %3055 = vmatpush1.msra.mxu0 %v2280
    %3056 = vmatprep.subr.mxu0 0.0
    %3057 = vmatpush1.msra.mxu0 %v2279
    %3058 = vmatprep.subr.mxu0 0.0
    %3059 = vmatpush1.msra.mxu0 %v2278
    %3060 = vmatprep.subr.mxu0 0.0
    %3061 = vmatpush1.msra.mxu0 %v2277
    %3062 = vmatprep.subr.mxu0 0.0
    %3063 = vmatpush1.msra.mxu0 %v2276
    %3064 = vmatprep.subr.mxu0 0.0
    %3065 = vmatpush1.msra.mxu0 %v2275
    %3066 = vmatprep.subr.mxu0 0.0
    %3067 = vmatpush1.msra.mxu0 %v2274
    %3068 = vmatprep.subr.mxu0 0.0
    %3069 = vmatpush1.msra.mxu0 %v2273
    %3070 = vmatprep.subr.mxu0 0.0
    %3071 = vmatpush1.msra.mxu0 %v2272
    %3072 = vmatprep.subr.mxu0 0.0
    %3073 = vmatpush1.msra.mxu0 %v2271
    %3074 = vmatprep.subr.mxu0 0.0
    %3075 = vmatpush1.msra.mxu0 %v2270
    %3076 = vmatprep.subr.mxu0 0.0
    %3077 = vmatpush1.msra.mxu0 %v2269
    %3078 = vmatprep.subr.mxu0 0.0
    %3079 = vmatpush1.msra.mxu0 %v2268
    %3080 = vmatprep.subr.mxu0 0.0
    %3081 = vmatpush1.msra.mxu0 %v2267
    %3082 = vmatprep.subr.mxu0 0.0
    %3083 = vmatpush2.msra.mxu0 %v2298
    %3084 = vmatprep.subr.mxu0 0.0
    %3085 = vmatpush2.msra.mxu0 %v2297
    %3086 = vmatprep.subr.mxu0 0.0
    %3087 = vmatpush2.msra.mxu0 %v2296
    %3088 = vmatprep.subr.mxu0 0.0
    %3089 = vmatpush2.msra.mxu0 %v2295
    %3090 = vmatprep.subr.mxu0 0.0
    %3091 = vmatpush2.msra.mxu0 %v2294
    %3092 = vmatprep.subr.mxu0 0.0
    %3093 = vmatpush2.msra.mxu0 %v2293
    %3094 = vmatprep.subr.mxu0 0.0
    %3095 = vmatpush2.msra.mxu0 %v2292
    %3096 = vmatprep.subr.mxu0 0.0
    %3097 = vmatpush2.msra.mxu0 %v2291
    %3098 = vmatprep.subr.mxu0 0.0
    %3099 = vmatpush2.msra.mxu0 %v2290
    %3100 = vmatprep.subr.mxu0 0.0
    %3101 = vmatpush2.msra.mxu0 %v2289
    %3102 = vmatprep.subr.mxu0 0.0
    %3103 = vmatpush2.msra.mxu0 %v2288
    %3104 = vmatprep.subr.mxu0 0.0
    %3105 = vmatpush2.msra.mxu0 %v2287
    %3106 = vmatprep.subr.mxu0 0.0
    %3107 = vmatpush2.msra.mxu0 %v2286
    %3108 = vmatprep.subr.mxu0 0.0
    %3109 = vmatpush2.msra.mxu0 %v2285
    %3110 = vmatprep.subr.mxu0 0.0
    %3111 = vmatpush2.msra.mxu0 %v2284
    %3112 = vmatprep.subr.mxu0 0.0
    %3113 = vmatpush2.msra.mxu0 %v2283
    %3114 = vmatprep.mubr.f32.mxu0 %v1928
    %3115 = vmatmul.mubr.f32.gmra.mxu0 %v1927
    %v3116 = vpop.f32.mrf.mxu0
    %v3117 = vadd.f32 %v3017, %v3116
    %v3118 = vpop.f32.mrf.mxu0
    %3119 = vmatprep.mubr.f32.mxu0 %v1968
    %3120 = vmatmul.mubr.f32.gmra.mxu0 %v1967
    %v3121 = vpop.f32.mrf.mxu0
    %v3122 = vadd.f32 %v3022, %v3121
    %v3123 = vpop.f32.mrf.mxu0
    %3124 = vmatprep.mubr.f32.mxu0 %v2008
    %3125 = vmatmul.mubr.f32.gmra.mxu0 %v2007
    %v3126 = vpop.f32.mrf.mxu0
    %v3127 = vadd.f32 %v3027, %v3126
    %v3128 = vpop.f32.mrf.mxu0
    %3129 = vmatprep.mubr.f32.mxu0 %v2048
    %3130 = vmatmul.mubr.f32.gmra.mxu0 %v2047
    %v3131 = vpop.f32.mrf.mxu0
    %v3132 = vadd.f32 %v3032, %v3131
    %v3133 = vpop.f32.mrf.mxu0
    %3134 = vmatprep.mubr.f32.mxu0 %v2088
    %3135 = vmatmul.mubr.f32.gmra.mxu0 %v2087
    %v3136 = vpop.f32.mrf.mxu0
    %v3137 = vadd.f32 %v3037, %v3136
    %v3138 = vpop.f32.mrf.mxu0
    %3139 = vmatprep.mubr.f32.mxu0 %v2128
    %3140 = vmatmul.mubr.f32.gmra.mxu0 %v2127
    %v3141 = vpop.f32.mrf.mxu0
    %v3142 = vadd.f32 %v3042, %v3141
    %v3143 = vpop.f32.mrf.mxu0
    %3144 = vmatprep.mubr.f32.mxu0 %v2168
    %3145 = vmatmul.mubr.f32.gmra.mxu0 %v2167
    %v3146 = vpop.f32.mrf.mxu0
    %v3147 = vadd.f32 %v3047, %v3146
    %v3148 = vpop.f32.mrf.mxu0
    %3149 = vdwg.mxu0
    %3150 = vmatprep.subr.mxu0 0.0
    %3151 = vmatpush1.msra.mxu0 %v2314
    %3152 = vmatprep.subr.mxu0 0.0
    %3153 = vmatpush1.msra.mxu0 %v2313
    %3154 = vmatprep.subr.mxu0 0.0
    %3155 = vmatpush1.msra.mxu0 %v2312
    %3156 = vmatprep.subr.mxu0 0.0
    %3157 = vmatpush1.msra.mxu0 %v2311
    %3158 = vmatprep.subr.mxu0 0.0
    %3159 = vmatpush1.msra.mxu0 %v2310
    %3160 = vmatprep.subr.mxu0 0.0
    %3161 = vmatpush1.msra.mxu0 %v2309
    %3162 = vmatprep.subr.mxu0 0.0
    %3163 = vmatpush1.msra.mxu0 %v2308
    %3164 = vmatprep.subr.mxu0 0.0
    %3165 = vmatpush1.msra.mxu0 %v2307
    %3166 = vmatprep.subr.mxu0 0.0
    %3167 = vmatpush1.msra.mxu0 %v2306
    %3168 = vmatprep.subr.mxu0 0.0
    %3169 = vmatpush1.msra.mxu0 %v2305
    %3170 = vmatprep.subr.mxu0 0.0
    %3171 = vmatpush1.msra.mxu0 %v2304
    %3172 = vmatprep.subr.mxu0 0.0
    %3173 = vmatpush1.msra.mxu0 %v2303
    %3174 = vmatprep.subr.mxu0 0.0
    %3175 = vmatpush1.msra.mxu0 %v2302
    %3176 = vmatprep.subr.mxu0 0.0
    %3177 = vmatpush1.msra.mxu0 %v2301
    %3178 = vmatprep.subr.mxu0 0.0
    %3179 = vmatpush1.msra.mxu0 %v2300
    %3180 = vmatprep.subr.mxu0 0.0
    %3181 = vmatpush1.msra.mxu0 %v2299
    %3182 = vmatprep.subr.mxu0 0.0
    %3183 = vmatpush2.msra.mxu0 %v2330
    %3184 = vmatprep.subr.mxu0 0.0
    %3185 = vmatpush2.msra.mxu0 %v2329
    %3186 = vmatprep.subr.mxu0 0.0
    %3187 = vmatpush2.msra.mxu0 %v2328
    %3188 = vmatprep.subr.mxu0 0.0
    %3189 = vmatpush2.msra.mxu0 %v2327
    %3190 = vmatprep.subr.mxu0 0.0
    %3191 = vmatpush2.msra.mxu0 %v2326
    %3192 = vmatprep.subr.mxu0 0.0
    %3193 = vmatpush2.msra.mxu0 %v2325
    %3194 = vmatprep.subr.mxu0 0.0
    %3195 = vmatpush2.msra.mxu0 %v2324
    %3196 = vmatprep.subr.mxu0 0.0
    %3197 = vmatpush2.msra.mxu0 %v2323
    %3198 = vmatprep.subr.mxu0 0.0
    %3199 = vmatpush2.msra.mxu0 %v2322
    %3200 = vmatprep.subr.mxu0 0.0
    %3201 = vmatpush2.msra.mxu0 %v2321
    %3202 = vmatprep.subr.mxu0 0.0
    %3203 = vmatpush2.msra.mxu0 %v2320
    %3204 = vmatprep.subr.mxu0 0.0
    %3205 = vmatpush2.msra.mxu0 %v2319
    %3206 = vmatprep.subr.mxu0 0.0
    %3207 = vmatpush2.msra.mxu0 %v2318
    %3208 = vmatprep.subr.mxu0 0.0
    %3209 = vmatpush2.msra.mxu0 %v2317
    %3210 = vmatprep.subr.mxu0 0.0
    %3211 = vmatpush2.msra.mxu0 %v2316
    %3212 = vmatprep.subr.mxu0 0.0
    %3213 = vmatpush2.msra.mxu0 %v2315
    %3214 = vmatprep.mubr.f32.mxu0 %v1930
    %3215 = vmatmul.mubr.f32.gmra.mxu0 %v1929
    %v3216 = vpop.f32.mrf.mxu0
    %v3217 = vadd.f32 %v3117, %v3216
    %v3218 = vpop.f32.mrf.mxu0
    %3219 = vmatprep.mubr.f32.mxu0 %v1970
    %3220 = vmatmul.mubr.f32.gmra.mxu0 %v1969
    %v3221 = vpop.f32.mrf.mxu0
    %v3222 = vadd.f32 %v3122, %v3221
    %v3223 = vpop.f32.mrf.mxu0
    %3224 = vmatprep.mubr.f32.mxu0 %v2010
    %3225 = vmatmul.mubr.f32.gmra.mxu0 %v2009
    %v3226 = vpop.f32.mrf.mxu0
    %v3227 = vadd.f32 %v3127, %v3226
    %v3228 = vpop.f32.mrf.mxu0
    %3229 = vmatprep.mubr.f32.mxu0 %v2050
    %3230 = vmatmul.mubr.f32.gmra.mxu0 %v2049
    %v3231 = vpop.f32.mrf.mxu0
    %v3232 = vadd.f32 %v3132, %v3231
    %v3233 = vpop.f32.mrf.mxu0
    %3234 = vmatprep.mubr.f32.mxu0 %v2090
    %3235 = vmatmul.mubr.f32.gmra.mxu0 %v2089
    %v3236 = vpop.f32.mrf.mxu0
    %v3237 = vadd.f32 %v3137, %v3236
    %v3238 = vpop.f32.mrf.mxu0
    %3239 = vmatprep.mubr.f32.mxu0 %v2130
    %3240 = vmatmul.mubr.f32.gmra.mxu0 %v2129
    %v3241 = vpop.f32.mrf.mxu0
    %v3242 = vadd.f32 %v3142, %v3241
    %v3243 = vpop.f32.mrf.mxu0
    %3244 = vmatprep.mubr.f32.mxu0 %v2170
    %3245 = vmatmul.mubr.f32.gmra.mxu0 %v2169
    %v3246 = vpop.f32.mrf.mxu0
    %v3247 = vadd.f32 %v3147, %v3246
    %v3248 = vpop.f32.mrf.mxu0
    %3249 = vdwg.mxu0
    %3250 = vmatprep.subr.mxu0 0.0
    %3251 = vmatpush1.msra.mxu0 %v2346
    %3252 = vmatprep.subr.mxu0 0.0
    %3253 = vmatpush1.msra.mxu0 %v2345
    %3254 = vmatprep.subr.mxu0 0.0
    %3255 = vmatpush1.msra.mxu0 %v2344
    %3256 = vmatprep.subr.mxu0 0.0
    %3257 = vmatpush1.msra.mxu0 %v2343
    %3258 = vmatprep.subr.mxu0 0.0
    %3259 = vmatpush1.msra.mxu0 %v2342
    %3260 = vmatprep.subr.mxu0 0.0
    %3261 = vmatpush1.msra.mxu0 %v2341
    %3262 = vmatprep.subr.mxu0 0.0
    %3263 = vmatpush1.msra.mxu0 %v2340
    %3264 = vmatprep.subr.mxu0 0.0
    %3265 = vmatpush1.msra.mxu0 %v2339
    %3266 = vmatprep.subr.mxu0 0.0
    %3267 = vmatpush1.msra.mxu0 %v2338
    %3268 = vmatprep.subr.mxu0 0.0
    %3269 = vmatpush1.msra.mxu0 %v2337
    %3270 = vmatprep.subr.mxu0 0.0
    %3271 = vmatpush1.msra.mxu0 %v2336
    %3272 = vmatprep.subr.mxu0 0.0
    %3273 = vmatpush1.msra.mxu0 %v2335
    %3274 = vmatprep.subr.mxu0 0.0
    %3275 = vmatpush1.msra.mxu0 %v2334
    %3276 = vmatprep.subr.mxu0 0.0
    %3277 = vmatpush1.msra.mxu0 %v2333
    %3278 = vmatprep.subr.mxu0 0.0
    %3279 = vmatpush1.msra.mxu0 %v2332
    %3280 = vmatprep.subr.mxu0 0.0
    %3281 = vmatpush1.msra.mxu0 %v2331
    %3282 = vmatprep.subr.mxu0 0.0
    %3283 = vmatpush2.msra.mxu0 %v2362
    %3284 = vmatprep.subr.mxu0 0.0
    %3285 = vmatpush2.msra.mxu0 %v2361
    %3286 = vmatprep.subr.mxu0 0.0
    %3287 = vmatpush2.msra.mxu0 %v2360
    %3288 = vmatprep.subr.mxu0 0.0
    %3289 = vmatpush2.msra.mxu0 %v2359
    %3290 = vmatprep.subr.mxu0 0.0
    %3291 = vmatpush2.msra.mxu0 %v2358
    %3292 = vmatprep.subr.mxu0 0.0
    %3293 = vmatpush2.msra.mxu0 %v2357
    %3294 = vmatprep.subr.mxu0 0.0
    %3295 = vmatpush2.msra.mxu0 %v2356
    %3296 = vmatprep.subr.mxu0 0.0
    %3297 = vmatpush2.msra.mxu0 %v2355
    %3298 = vmatprep.subr.mxu0 0.0
    %3299 = vmatpush2.msra.mxu0 %v2354
    %3300 = vmatprep.subr.mxu0 0.0
    %3301 = vmatpush2.msra.mxu0 %v2353
    %3302 = vmatprep.subr.mxu0 0.0
    %3303 = vmatpush2.msra.mxu0 %v2352
    %3304 = vmatprep.subr.mxu0 0.0
    %3305 = vmatpush2.msra.mxu0 %v2351
    %3306 = vmatprep.subr.mxu0 0.0
    %3307 = vmatpush2.msra.mxu0 %v2350
    %3308 = vmatprep.subr.mxu0 0.0
    %3309 = vmatpush2.msra.mxu0 %v2349
    %3310 = vmatprep.subr.mxu0 0.0
    %3311 = vmatpush2.msra.mxu0 %v2348
    %3312 = vmatprep.subr.mxu0 0.0
    %3313 = vmatpush2.msra.mxu0 %v2347
    %3314 = vmatprep.mubr.f32.mxu0 %v1932
    %3315 = vmatmul.mubr.f32.gmra.mxu0 %v1931
    %v3316 = vpop.f32.mrf.mxu0
    %v3317 = vadd.f32 %v3217, %v3316
    %v3318 = vpop.f32.mrf.mxu0
    %3319 = vmatprep.mubr.f32.mxu0 %v1972
    %3320 = vmatmul.mubr.f32.gmra.mxu0 %v1971
    %v3321 = vpop.f32.mrf.mxu0
    %v3322 = vadd.f32 %v3222, %v3321
    %v3323 = vpop.f32.mrf.mxu0
    %3324 = vmatprep.mubr.f32.mxu0 %v2012
    %3325 = vmatmul.mubr.f32.gmra.mxu0 %v2011
    %v3326 = vpop.f32.mrf.mxu0
    %v3327 = vadd.f32 %v3227, %v3326
    %v3328 = vpop.f32.mrf.mxu0
    %3329 = vmatprep.mubr.f32.mxu0 %v2052
    %3330 = vmatmul.mubr.f32.gmra.mxu0 %v2051
    %v3331 = vpop.f32.mrf.mxu0
    %v3332 = vadd.f32 %v3232, %v3331
    %v3333 = vpop.f32.mrf.mxu0
    %3334 = vmatprep.mubr.f32.mxu0 %v2092
    %3335 = vmatmul.mubr.f32.gmra.mxu0 %v2091
    %v3336 = vpop.f32.mrf.mxu0
    %v3337 = vadd.f32 %v3237, %v3336
    %v3338 = vpop.f32.mrf.mxu0
    %3339 = vmatprep.mubr.f32.mxu0 %v2132
    %3340 = vmatmul.mubr.f32.gmra.mxu0 %v2131
    %v3341 = vpop.f32.mrf.mxu0
    %v3342 = vadd.f32 %v3242, %v3341
    %v3343 = vpop.f32.mrf.mxu0
    %3344 = vmatprep.mubr.f32.mxu0 %v2172
    %3345 = vmatmul.mubr.f32.gmra.mxu0 %v2171
    %v3346 = vpop.f32.mrf.mxu0
    %v3347 = vadd.f32 %v3247, %v3346
    %v3348 = vpop.f32.mrf.mxu0
    %3349 = vdwg.mxu0
    %3350 = vmatprep.subr.mxu0 0.0
    %3351 = vmatpush1.msra.mxu0 %v2378
    %3352 = vmatprep.subr.mxu0 0.0
    %3353 = vmatpush1.msra.mxu0 %v2377
    %3354 = vmatprep.subr.mxu0 0.0
    %3355 = vmatpush1.msra.mxu0 %v2376
    %3356 = vmatprep.subr.mxu0 0.0
    %3357 = vmatpush1.msra.mxu0 %v2375
    %3358 = vmatprep.subr.mxu0 0.0
    %3359 = vmatpush1.msra.mxu0 %v2374
    %3360 = vmatprep.subr.mxu0 0.0
    %3361 = vmatpush1.msra.mxu0 %v2373
    %3362 = vmatprep.subr.mxu0 0.0
    %3363 = vmatpush1.msra.mxu0 %v2372
    %3364 = vmatprep.subr.mxu0 0.0
    %3365 = vmatpush1.msra.mxu0 %v2371
    %3366 = vmatprep.subr.mxu0 0.0
    %3367 = vmatpush1.msra.mxu0 %v2370
    %3368 = vmatprep.subr.mxu0 0.0
    %3369 = vmatpush1.msra.mxu0 %v2369
    %3370 = vmatprep.subr.mxu0 0.0
    %3371 = vmatpush1.msra.mxu0 %v2368
    %3372 = vmatprep.subr.mxu0 0.0
    %3373 = vmatpush1.msra.mxu0 %v2367
    %3374 = vmatprep.subr.mxu0 0.0
    %3375 = vmatpush1.msra.mxu0 %v2366
    %3376 = vmatprep.subr.mxu0 0.0
    %3377 = vmatpush1.msra.mxu0 %v2365
    %3378 = vmatprep.subr.mxu0 0.0
    %3379 = vmatpush1.msra.mxu0 %v2364
    %3380 = vmatprep.subr.mxu0 0.0
    %3381 = vmatpush1.msra.mxu0 %v2363
    %3382 = vmatprep.subr.mxu0 0.0
    %3383 = vmatpush2.msra.mxu0 %v2394
    %3384 = vmatprep.subr.mxu0 0.0
    %3385 = vmatpush2.msra.mxu0 %v2393
    %3386 = vmatprep.subr.mxu0 0.0
    %3387 = vmatpush2.msra.mxu0 %v2392
    %3388 = vmatprep.subr.mxu0 0.0
    %3389 = vmatpush2.msra.mxu0 %v2391
    %3390 = vmatprep.subr.mxu0 0.0
    %3391 = vmatpush2.msra.mxu0 %v2390
    %3392 = vmatprep.subr.mxu0 0.0
    %3393 = vmatpush2.msra.mxu0 %v2389
    %3394 = vmatprep.subr.mxu0 0.0
    %3395 = vmatpush2.msra.mxu0 %v2388
    %3396 = vmatprep.subr.mxu0 0.0
    %3397 = vmatpush2.msra.mxu0 %v2387
    %3398 = vmatprep.subr.mxu0 0.0
    %3399 = vmatpush2.msra.mxu0 %v2386
    %3400 = vmatprep.subr.mxu0 0.0
    %3401 = vmatpush2.msra.mxu0 %v2385
    %3402 = vmatprep.subr.mxu0 0.0
    %3403 = vmatpush2.msra.mxu0 %v2384
    %3404 = vmatprep.subr.mxu0 0.0
    %3405 = vmatpush2.msra.mxu0 %v2383
    %3406 = vmatprep.subr.mxu0 0.0
    %3407 = vmatpush2.msra.mxu0 %v2382
    %3408 = vmatprep.subr.mxu0 0.0
    %3409 = vmatpush2.msra.mxu0 %v2381
    %3410 = vmatprep.subr.mxu0 0.0
    %3411 = vmatpush2.msra.mxu0 %v2380
    %3412 = vmatprep.subr.mxu0 0.0
    %3413 = vmatpush2.msra.mxu0 %v2379
    %3414 = vmatprep.mubr.f32.mxu0 %v1934
    %3415 = vmatmul.mubr.f32.gmra.mxu0 %v1933
    %v3416 = vpop.f32.mrf.mxu0
    %v3417 = vadd.f32 %v3317, %v3416
    %v3418 = vpop.f32.mrf.mxu0
    %3419 = vmatprep.mubr.f32.mxu0 %v1974
    %3420 = vmatmul.mubr.f32.gmra.mxu0 %v1973
    %v3421 = vpop.f32.mrf.mxu0
    %v3422 = vadd.f32 %v3322, %v3421
    %v3423 = vpop.f32.mrf.mxu0
    %3424 = vmatprep.mubr.f32.mxu0 %v2014
    %3425 = vmatmul.mubr.f32.gmra.mxu0 %v2013
    %v3426 = vpop.f32.mrf.mxu0
    %v3427 = vadd.f32 %v3327, %v3426
    %v3428 = vpop.f32.mrf.mxu0
    %3429 = vmatprep.mubr.f32.mxu0 %v2054
    %3430 = vmatmul.mubr.f32.gmra.mxu0 %v2053
    %v3431 = vpop.f32.mrf.mxu0
    %v3432 = vadd.f32 %v3332, %v3431
    %v3433 = vpop.f32.mrf.mxu0
    %3434 = vmatprep.mubr.f32.mxu0 %v2094
    %3435 = vmatmul.mubr.f32.gmra.mxu0 %v2093
    %v3436 = vpop.f32.mrf.mxu0
    %v3437 = vadd.f32 %v3337, %v3436
    %v3438 = vpop.f32.mrf.mxu0
    %3439 = vmatprep.mubr.f32.mxu0 %v2134
    %3440 = vmatmul.mubr.f32.gmra.mxu0 %v2133
    %v3441 = vpop.f32.mrf.mxu0
    %v3442 = vadd.f32 %v3342, %v3441
    %v3443 = vpop.f32.mrf.mxu0
    %3444 = vmatprep.mubr.f32.mxu0 %v2174
    %3445 = vmatmul.mubr.f32.gmra.mxu0 %v2173
    %v3446 = vpop.f32.mrf.mxu0
    %v3447 = vadd.f32 %v3347, %v3446
    %v3448 = vpop.f32.mrf.mxu0
    %3449 = vdwg.mxu0
    %3450 = vmatprep.subr.mxu0 0.0
    %3451 = vmatpush1.msra.mxu0 %v2410
    %3452 = vmatprep.subr.mxu0 0.0
    %3453 = vmatpush1.msra.mxu0 %v2409
    %3454 = vmatprep.subr.mxu0 0.0
    %3455 = vmatpush1.msra.mxu0 %v2408
    %3456 = vmatprep.subr.mxu0 0.0
    %3457 = vmatpush1.msra.mxu0 %v2407
    %3458 = vmatprep.subr.mxu0 0.0
    %3459 = vmatpush1.msra.mxu0 %v2406
    %3460 = vmatprep.subr.mxu0 0.0
    %3461 = vmatpush1.msra.mxu0 %v2405
    %3462 = vmatprep.subr.mxu0 0.0
    %3463 = vmatpush1.msra.mxu0 %v2404
    %3464 = vmatprep.subr.mxu0 0.0
    %3465 = vmatpush1.msra.mxu0 %v2403
    %3466 = vmatprep.subr.mxu0 0.0
    %3467 = vmatpush1.msra.mxu0 %v2402
    %3468 = vmatprep.subr.mxu0 0.0
    %3469 = vmatpush1.msra.mxu0 %v2401
    %3470 = vmatprep.subr.mxu0 0.0
    %3471 = vmatpush1.msra.mxu0 %v2400
    %3472 = vmatprep.subr.mxu0 0.0
    %3473 = vmatpush1.msra.mxu0 %v2399
    %3474 = vmatprep.subr.mxu0 0.0
    %3475 = vmatpush1.msra.mxu0 %v2398
    %3476 = vmatprep.subr.mxu0 0.0
    %3477 = vmatpush1.msra.mxu0 %v2397
    %3478 = vmatprep.subr.mxu0 0.0
    %3479 = vmatpush1.msra.mxu0 %v2396
    %3480 = vmatprep.subr.mxu0 0.0
    %3481 = vmatpush1.msra.mxu0 %v2395
    %3482 = vmatprep.subr.mxu0 0.0
    %3483 = vmatpush2.msra.mxu0 %v2426
    %3484 = vmatprep.subr.mxu0 0.0
    %3485 = vmatpush2.msra.mxu0 %v2425
    %3486 = vmatprep.subr.mxu0 0.0
    %3487 = vmatpush2.msra.mxu0 %v2424
    %3488 = vmatprep.subr.mxu0 0.0
    %3489 = vmatpush2.msra.mxu0 %v2423
    %3490 = vmatprep.subr.mxu0 0.0
    %3491 = vmatpush2.msra.mxu0 %v2422
    %3492 = vmatprep.subr.mxu0 0.0
    %3493 = vmatpush2.msra.mxu0 %v2421
    %3494 = vmatprep.subr.mxu0 0.0
    %3495 = vmatpush2.msra.mxu0 %v2420
    %3496 = vmatprep.subr.mxu0 0.0
    %3497 = vmatpush2.msra.mxu0 %v2419
    %3498 = vmatprep.subr.mxu0 0.0
    %3499 = vmatpush2.msra.mxu0 %v2418
    %3500 = vmatprep.subr.mxu0 0.0
    %3501 = vmatpush2.msra.mxu0 %v2417
    %3502 = vmatprep.subr.mxu0 0.0
    %3503 = vmatpush2.msra.mxu0 %v2416
    %3504 = vmatprep.subr.mxu0 0.0
    %3505 = vmatpush2.msra.mxu0 %v2415
    %3506 = vmatprep.subr.mxu0 0.0
    %3507 = vmatpush2.msra.mxu0 %v2414
    %3508 = vmatprep.subr.mxu0 0.0
    %3509 = vmatpush2.msra.mxu0 %v2413
    %3510 = vmatprep.subr.mxu0 0.0
    %3511 = vmatpush2.msra.mxu0 %v2412
    %3512 = vmatprep.subr.mxu0 0.0
    %3513 = vmatpush2.msra.mxu0 %v2411
    %3514 = vmatprep.mubr.f32.mxu0 %v1936
    %3515 = vmatmul.mubr.f32.gmra.mxu0 %v1935
    %v3516 = vpop.f32.mrf.mxu0
    %v3517 = vadd.f32 %v3417, %v3516
    %v3518 = vpop.f32.mrf.mxu0
    %3519 = vmatprep.mubr.f32.mxu0 %v1976
    %3520 = vmatmul.mubr.f32.gmra.mxu0 %v1975
    %v3521 = vpop.f32.mrf.mxu0
    %v3522 = vadd.f32 %v3422, %v3521
    %v3523 = vpop.f32.mrf.mxu0
    %3524 = vmatprep.mubr.f32.mxu0 %v2016
    %3525 = vmatmul.mubr.f32.gmra.mxu0 %v2015
    %v3526 = vpop.f32.mrf.mxu0
    %v3527 = vadd.f32 %v3427, %v3526
    %v3528 = vpop.f32.mrf.mxu0
    %3529 = vmatprep.mubr.f32.mxu0 %v2056
    %3530 = vmatmul.mubr.f32.gmra.mxu0 %v2055
    %v3531 = vpop.f32.mrf.mxu0
    %v3532 = vadd.f32 %v3432, %v3531
    %v3533 = vpop.f32.mrf.mxu0
    %3534 = vmatprep.mubr.f32.mxu0 %v2096
    %3535 = vmatmul.mubr.f32.gmra.mxu0 %v2095
    %v3536 = vpop.f32.mrf.mxu0
    %v3537 = vadd.f32 %v3437, %v3536
    %v3538 = vpop.f32.mrf.mxu0
    %3539 = vmatprep.mubr.f32.mxu0 %v2136
    %3540 = vmatmul.mubr.f32.gmra.mxu0 %v2135
    %v3541 = vpop.f32.mrf.mxu0
    %v3542 = vadd.f32 %v3442, %v3541
    %v3543 = vpop.f32.mrf.mxu0
    %3544 = vmatprep.mubr.f32.mxu0 %v2176
    %3545 = vmatmul.mubr.f32.gmra.mxu0 %v2175
    %v3546 = vpop.f32.mrf.mxu0
    %v3547 = vadd.f32 %v3447, %v3546
    %v3548 = vpop.f32.mrf.mxu0
    %3549 = vdwg.mxu0
    %3550 = vmatprep.subr.mxu0 0.0
    %3551 = vmatpush1.msra.mxu0 %v2442
    %3552 = vmatprep.subr.mxu0 0.0
    %3553 = vmatpush1.msra.mxu0 %v2441
    %3554 = vmatprep.subr.mxu0 0.0
    %3555 = vmatpush1.msra.mxu0 %v2440
    %3556 = vmatprep.subr.mxu0 0.0
    %3557 = vmatpush1.msra.mxu0 %v2439
    %3558 = vmatprep.subr.mxu0 0.0
    %3559 = vmatpush1.msra.mxu0 %v2438
    %3560 = vmatprep.subr.mxu0 0.0
    %3561 = vmatpush1.msra.mxu0 %v2437
    %3562 = vmatprep.subr.mxu0 0.0
    %3563 = vmatpush1.msra.mxu0 %v2436
    %3564 = vmatprep.subr.mxu0 0.0
    %3565 = vmatpush1.msra.mxu0 %v2435
    %3566 = vmatprep.subr.mxu0 0.0
    %3567 = vmatpush1.msra.mxu0 %v2434
    %3568 = vmatprep.subr.mxu0 0.0
    %3569 = vmatpush1.msra.mxu0 %v2433
    %3570 = vmatprep.subr.mxu0 0.0
    %3571 = vmatpush1.msra.mxu0 %v2432
    %3572 = vmatprep.subr.mxu0 0.0
    %3573 = vmatpush1.msra.mxu0 %v2431
    %3574 = vmatprep.subr.mxu0 0.0
    %3575 = vmatpush1.msra.mxu0 %v2430
    %3576 = vmatprep.subr.mxu0 0.0
    %3577 = vmatpush1.msra.mxu0 %v2429
    %3578 = vmatprep.subr.mxu0 0.0
    %3579 = vmatpush1.msra.mxu0 %v2428
    %3580 = vmatprep.subr.mxu0 0.0
    %3581 = vmatpush1.msra.mxu0 %v2427
    %3582 = vmatprep.subr.mxu0 0.0
    %3583 = vmatpush2.msra.mxu0 %v2458
    %3584 = vmatprep.subr.mxu0 0.0
    %3585 = vmatpush2.msra.mxu0 %v2457
    %3586 = vmatprep.subr.mxu0 0.0
    %3587 = vmatpush2.msra.mxu0 %v2456
    %3588 = vmatprep.subr.mxu0 0.0
    %3589 = vmatpush2.msra.mxu0 %v2455
    %3590 = vmatprep.subr.mxu0 0.0
    %3591 = vmatpush2.msra.mxu0 %v2454
    %3592 = vmatprep.subr.mxu0 0.0
    %3593 = vmatpush2.msra.mxu0 %v2453
    %3594 = vmatprep.subr.mxu0 0.0
    %3595 = vmatpush2.msra.mxu0 %v2452
    %3596 = vmatprep.subr.mxu0 0.0
    %3597 = vmatpush2.msra.mxu0 %v2451
    %3598 = vmatprep.subr.mxu0 0.0
    %3599 = vmatpush2.msra.mxu0 %v2450
    %3600 = vmatprep.subr.mxu0 0.0
    %3601 = vmatpush2.msra.mxu0 %v2449
    %3602 = vmatprep.subr.mxu0 0.0
    %3603 = vmatpush2.msra.mxu0 %v2448
    %3604 = vmatprep.subr.mxu0 0.0
    %3605 = vmatpush2.msra.mxu0 %v2447
    %3606 = vmatprep.subr.mxu0 0.0
    %3607 = vmatpush2.msra.mxu0 %v2446
    %3608 = vmatprep.subr.mxu0 0.0
    %3609 = vmatpush2.msra.mxu0 %v2445
    %3610 = vmatprep.subr.mxu0 0.0
    %3611 = vmatpush2.msra.mxu0 %v2444
    %3612 = vmatprep.subr.mxu0 0.0
    %3613 = vmatpush2.msra.mxu0 %v2443
    %3614 = vmatprep.mubr.f32.mxu0 %v1938
    %3615 = vmatmul.mubr.f32.gmra.mxu0 %v1937
    %v3616 = vpop.f32.mrf.mxu0
    %v3617 = vadd.f32 %v3517, %v3616
    %v3618 = vpop.f32.mrf.mxu0
    %3619 = vmatprep.mubr.f32.mxu0 %v1978
    %3620 = vmatmul.mubr.f32.gmra.mxu0 %v1977
    %v3621 = vpop.f32.mrf.mxu0
    %v3622 = vadd.f32 %v3522, %v3621
    %v3623 = vpop.f32.mrf.mxu0
    %3624 = vmatprep.mubr.f32.mxu0 %v2018
    %3625 = vmatmul.mubr.f32.gmra.mxu0 %v2017
    %v3626 = vpop.f32.mrf.mxu0
    %v3627 = vadd.f32 %v3527, %v3626
    %v3628 = vpop.f32.mrf.mxu0
    %3629 = vmatprep.mubr.f32.mxu0 %v2058
    %3630 = vmatmul.mubr.f32.gmra.mxu0 %v2057
    %v3631 = vpop.f32.mrf.mxu0
    %v3632 = vadd.f32 %v3532, %v3631
    %v3633 = vpop.f32.mrf.mxu0
    %3634 = vmatprep.mubr.f32.mxu0 %v2098
    %3635 = vmatmul.mubr.f32.gmra.mxu0 %v2097
    %v3636 = vpop.f32.mrf.mxu0
    %v3637 = vadd.f32 %v3537, %v3636
    %v3638 = vpop.f32.mrf.mxu0
    %3639 = vmatprep.mubr.f32.mxu0 %v2138
    %3640 = vmatmul.mubr.f32.gmra.mxu0 %v2137
    %v3641 = vpop.f32.mrf.mxu0
    %v3642 = vadd.f32 %v3542, %v3641
    %v3643 = vpop.f32.mrf.mxu0
    %3644 = vmatprep.mubr.f32.mxu0 %v2178
    %3645 = vmatmul.mubr.f32.gmra.mxu0 %v2177
    %v3646 = vpop.f32.mrf.mxu0
    %v3647 = vadd.f32 %v3547, %v3646
    %v3648 = vpop.f32.mrf.mxu0
    %3649 = vdwg.mxu0
    %3650 = vmatprep.subr.mxu0 0.0
    %3651 = vmatpush1.msra.mxu0 %v2474
    %3652 = vmatprep.subr.mxu0 0.0
    %3653 = vmatpush1.msra.mxu0 %v2473
    %3654 = vmatprep.subr.mxu0 0.0
    %3655 = vmatpush1.msra.mxu0 %v2472
    %3656 = vmatprep.subr.mxu0 0.0
    %3657 = vmatpush1.msra.mxu0 %v2471
    %3658 = vmatprep.subr.mxu0 0.0
    %3659 = vmatpush1.msra.mxu0 %v2470
    %3660 = vmatprep.subr.mxu0 0.0
    %3661 = vmatpush1.msra.mxu0 %v2469
    %3662 = vmatprep.subr.mxu0 0.0
    %3663 = vmatpush1.msra.mxu0 %v2468
    %3664 = vmatprep.subr.mxu0 0.0
    %3665 = vmatpush1.msra.mxu0 %v2467
    %3666 = vmatprep.subr.mxu0 0.0
    %3667 = vmatpush1.msra.mxu0 %v2466
    %3668 = vmatprep.subr.mxu0 0.0
    %3669 = vmatpush1.msra.mxu0 %v2465
    %3670 = vmatprep.subr.mxu0 0.0
    %3671 = vmatpush1.msra.mxu0 %v2464
    %3672 = vmatprep.subr.mxu0 0.0
    %3673 = vmatpush1.msra.mxu0 %v2463
    %3674 = vmatprep.subr.mxu0 0.0
    %3675 = vmatpush1.msra.mxu0 %v2462
    %3676 = vmatprep.subr.mxu0 0.0
    %3677 = vmatpush1.msra.mxu0 %v2461
    %3678 = vmatprep.subr.mxu0 0.0
    %3679 = vmatpush1.msra.mxu0 %v2460
    %3680 = vmatprep.subr.mxu0 0.0
    %3681 = vmatpush1.msra.mxu0 %v2459
    %3682 = vmatprep.subr.mxu0 0.0
    %3683 = vmatpush2.msra.mxu0 %v2490
    %3684 = vmatprep.subr.mxu0 0.0
    %3685 = vmatpush2.msra.mxu0 %v2489
    %3686 = vmatprep.subr.mxu0 0.0
    %3687 = vmatpush2.msra.mxu0 %v2488
    %3688 = vmatprep.subr.mxu0 0.0
    %3689 = vmatpush2.msra.mxu0 %v2487
    %3690 = vmatprep.subr.mxu0 0.0
    %3691 = vmatpush2.msra.mxu0 %v2486
    %3692 = vmatprep.subr.mxu0 0.0
    %3693 = vmatpush2.msra.mxu0 %v2485
    %3694 = vmatprep.subr.mxu0 0.0
    %3695 = vmatpush2.msra.mxu0 %v2484
    %3696 = vmatprep.subr.mxu0 0.0
    %3697 = vmatpush2.msra.mxu0 %v2483
    %3698 = vmatprep.subr.mxu0 0.0
    %3699 = vmatpush2.msra.mxu0 %v2482
    %3700 = vmatprep.subr.mxu0 0.0
    %3701 = vmatpush2.msra.mxu0 %v2481
    %3702 = vmatprep.subr.mxu0 0.0
    %3703 = vmatpush2.msra.mxu0 %v2480
    %3704 = vmatprep.subr.mxu0 0.0
    %3705 = vmatpush2.msra.mxu0 %v2479
    %3706 = vmatprep.subr.mxu0 0.0
    %3707 = vmatpush2.msra.mxu0 %v2478
    %3708 = vmatprep.subr.mxu0 0.0
    %3709 = vmatpush2.msra.mxu0 %v2477
    %3710 = vmatprep.subr.mxu0 0.0
    %3711 = vmatpush2.msra.mxu0 %v2476
    %3712 = vmatprep.subr.mxu0 0.0
    %3713 = vmatpush2.msra.mxu0 %v2475
    %3714 = vmatprep.mubr.f32.mxu0 %v1940
    %3715 = vmatmul.mubr.f32.gmra.mxu0 %v1939
    %v3716 = vpop.f32.mrf.mxu0
    %v3717 = vadd.f32 %v3617, %v3716
    %v3718 = vpop.f32.mrf.mxu0
    %3719 = vmatprep.mubr.f32.mxu0 %v1980
    %3720 = vmatmul.mubr.f32.gmra.mxu0 %v1979
    %v3721 = vpop.f32.mrf.mxu0
    %v3722 = vadd.f32 %v3622, %v3721
    %v3723 = vpop.f32.mrf.mxu0
    %3724 = vmatprep.mubr.f32.mxu0 %v2020
    %3725 = vmatmul.mubr.f32.gmra.mxu0 %v2019
    %v3726 = vpop.f32.mrf.mxu0
    %v3727 = vadd.f32 %v3627, %v3726
    %v3728 = vpop.f32.mrf.mxu0
    %3729 = vmatprep.mubr.f32.mxu0 %v2060
    %3730 = vmatmul.mubr.f32.gmra.mxu0 %v2059
    %v3731 = vpop.f32.mrf.mxu0
    %v3732 = vadd.f32 %v3632, %v3731
    %v3733 = vpop.f32.mrf.mxu0
    %3734 = vmatprep.mubr.f32.mxu0 %v2100
    %3735 = vmatmul.mubr.f32.gmra.mxu0 %v2099
    %v3736 = vpop.f32.mrf.mxu0
    %v3737 = vadd.f32 %v3637, %v3736
    %v3738 = vpop.f32.mrf.mxu0
    %3739 = vmatprep.mubr.f32.mxu0 %v2140
    %3740 = vmatmul.mubr.f32.gmra.mxu0 %v2139
    %v3741 = vpop.f32.mrf.mxu0
    %v3742 = vadd.f32 %v3642, %v3741
    %v3743 = vpop.f32.mrf.mxu0
    %3744 = vmatprep.mubr.f32.mxu0 %v2180
    %3745 = vmatmul.mubr.f32.gmra.mxu0 %v2179
    %v3746 = vpop.f32.mrf.mxu0
    %v3747 = vadd.f32 %v3647, %v3746
    %v3748 = vpop.f32.mrf.mxu0
    %3749 = vdwg.mxu0
    %3750 = vmatprep.subr.mxu0 0.0
    %3751 = vmatpush1.msra.mxu0 %v2506
    %3752 = vmatprep.subr.mxu0 0.0
    %3753 = vmatpush1.msra.mxu0 %v2505
    %3754 = vmatprep.subr.mxu0 0.0
    %3755 = vmatpush1.msra.mxu0 %v2504
    %3756 = vmatprep.subr.mxu0 0.0
    %3757 = vmatpush1.msra.mxu0 %v2503
    %3758 = vmatprep.subr.mxu0 0.0
    %3759 = vmatpush1.msra.mxu0 %v2502
    %3760 = vmatprep.subr.mxu0 0.0
    %3761 = vmatpush1.msra.mxu0 %v2501
    %3762 = vmatprep.subr.mxu0 0.0
    %3763 = vmatpush1.msra.mxu0 %v2500
    %3764 = vmatprep.subr.mxu0 0.0
    %3765 = vmatpush1.msra.mxu0 %v2499
    %3766 = vmatprep.subr.mxu0 0.0
    %3767 = vmatpush1.msra.mxu0 %v2498
    %3768 = vmatprep.subr.mxu0 0.0
    %3769 = vmatpush1.msra.mxu0 %v2497
    %3770 = vmatprep.subr.mxu0 0.0
    %3771 = vmatpush1.msra.mxu0 %v2496
    %3772 = vmatprep.subr.mxu0 0.0
    %3773 = vmatpush1.msra.mxu0 %v2495
    %3774 = vmatprep.subr.mxu0 0.0
    %3775 = vmatpush1.msra.mxu0 %v2494
    %3776 = vmatprep.subr.mxu0 0.0
    %3777 = vmatpush1.msra.mxu0 %v2493
    %3778 = vmatprep.subr.mxu0 0.0
    %3779 = vmatpush1.msra.mxu0 %v2492
    %3780 = vmatprep.subr.mxu0 0.0
    %3781 = vmatpush1.msra.mxu0 %v2491
    %3782 = vmatprep.subr.mxu0 0.0
    %3783 = vmatpush2.msra.mxu0 %v2522
    %3784 = vmatprep.subr.mxu0 0.0
    %3785 = vmatpush2.msra.mxu0 %v2521
    %3786 = vmatprep.subr.mxu0 0.0
    %3787 = vmatpush2.msra.mxu0 %v2520
    %3788 = vmatprep.subr.mxu0 0.0
    %3789 = vmatpush2.msra.mxu0 %v2519
    %3790 = vmatprep.subr.mxu0 0.0
    %3791 = vmatpush2.msra.mxu0 %v2518
    %3792 = vmatprep.subr.mxu0 0.0
    %3793 = vmatpush2.msra.mxu0 %v2517
    %3794 = vmatprep.subr.mxu0 0.0
    %3795 = vmatpush2.msra.mxu0 %v2516
    %3796 = vmatprep.subr.mxu0 0.0
    %3797 = vmatpush2.msra.mxu0 %v2515
    %3798 = vmatprep.subr.mxu0 0.0
    %3799 = vmatpush2.msra.mxu0 %v2514
    %3800 = vmatprep.subr.mxu0 0.0
    %3801 = vmatpush2.msra.mxu0 %v2513
    %3802 = vmatprep.subr.mxu0 0.0
    %3803 = vmatpush2.msra.mxu0 %v2512
    %3804 = vmatprep.subr.mxu0 0.0
    %3805 = vmatpush2.msra.mxu0 %v2511
    %3806 = vmatprep.subr.mxu0 0.0
    %3807 = vmatpush2.msra.mxu0 %v2510
    %3808 = vmatprep.subr.mxu0 0.0
    %3809 = vmatpush2.msra.mxu0 %v2509
    %3810 = vmatprep.subr.mxu0 0.0
    %3811 = vmatpush2.msra.mxu0 %v2508
    %3812 = vmatprep.subr.mxu0 0.0
    %3813 = vmatpush2.msra.mxu0 %v2507
    %3814 = vmatprep.mubr.f32.mxu0 %v1942
    %3815 = vmatmul.mubr.f32.gmra.mxu0 %v1941
    %v3816 = vpop.f32.mrf.mxu0
    %v3817 = vadd.f32 %v3717, %v3816
    %v3818 = vpop.f32.mrf.mxu0
    %3819 = vmatprep.mubr.f32.mxu0 %v1982
    %3820 = vmatmul.mubr.f32.gmra.mxu0 %v1981
    %v3821 = vpop.f32.mrf.mxu0
    %v3822 = vadd.f32 %v3722, %v3821
    %v3823 = vpop.f32.mrf.mxu0
    %3824 = vmatprep.mubr.f32.mxu0 %v2022
    %3825 = vmatmul.mubr.f32.gmra.mxu0 %v2021
    %v3826 = vpop.f32.mrf.mxu0
    %v3827 = vadd.f32 %v3727, %v3826
    %v3828 = vpop.f32.mrf.mxu0
    %3829 = vmatprep.mubr.f32.mxu0 %v2062
    %3830 = vmatmul.mubr.f32.gmra.mxu0 %v2061
    %v3831 = vpop.f32.mrf.mxu0
    %v3832 = vadd.f32 %v3732, %v3831
    %v3833 = vpop.f32.mrf.mxu0
    %3834 = vmatprep.mubr.f32.mxu0 %v2102
    %3835 = vmatmul.mubr.f32.gmra.mxu0 %v2101
    %v3836 = vpop.f32.mrf.mxu0
    %v3837 = vadd.f32 %v3737, %v3836
    %v3838 = vpop.f32.mrf.mxu0
    %3839 = vmatprep.mubr.f32.mxu0 %v2142
    %3840 = vmatmul.mubr.f32.gmra.mxu0 %v2141
    %v3841 = vpop.f32.mrf.mxu0
    %v3842 = vadd.f32 %v3742, %v3841
    %v3843 = vpop.f32.mrf.mxu0
    %3844 = vmatprep.mubr.f32.mxu0 %v2182
    %3845 = vmatmul.mubr.f32.gmra.mxu0 %v2181
    %v3846 = vpop.f32.mrf.mxu0
    %v3847 = vadd.f32 %v3747, %v3846
    %v3848 = vpop.f32.mrf.mxu0
    %3849 = vdwg.mxu0
    %3850 = vmatprep.subr.mxu0 0.0
    %3851 = vmatpush1.msra.mxu0 %v2538
    %3852 = vmatprep.subr.mxu0 0.0
    %3853 = vmatpush1.msra.mxu0 %v2537
    %3854 = vmatprep.subr.mxu0 0.0
    %3855 = vmatpush1.msra.mxu0 %v2536
    %3856 = vmatprep.subr.mxu0 0.0
    %3857 = vmatpush1.msra.mxu0 %v2535
    %3858 = vmatprep.subr.mxu0 0.0
    %3859 = vmatpush1.msra.mxu0 %v2534
    %3860 = vmatprep.subr.mxu0 0.0
    %3861 = vmatpush1.msra.mxu0 %v2533
    %3862 = vmatprep.subr.mxu0 0.0
    %3863 = vmatpush1.msra.mxu0 %v2532
    %3864 = vmatprep.subr.mxu0 0.0
    %3865 = vmatpush1.msra.mxu0 %v2531
    %3866 = vmatprep.subr.mxu0 0.0
    %3867 = vmatpush1.msra.mxu0 %v2530
    %3868 = vmatprep.subr.mxu0 0.0
    %3869 = vmatpush1.msra.mxu0 %v2529
    %3870 = vmatprep.subr.mxu0 0.0
    %3871 = vmatpush1.msra.mxu0 %v2528
    %3872 = vmatprep.subr.mxu0 0.0
    %3873 = vmatpush1.msra.mxu0 %v2527
    %3874 = vmatprep.subr.mxu0 0.0
    %3875 = vmatpush1.msra.mxu0 %v2526
    %3876 = vmatprep.subr.mxu0 0.0
    %3877 = vmatpush1.msra.mxu0 %v2525
    %3878 = vmatprep.subr.mxu0 0.0
    %3879 = vmatpush1.msra.mxu0 %v2524
    %3880 = vmatprep.subr.mxu0 0.0
    %3881 = vmatpush1.msra.mxu0 %v2523
    %3882 = vmatprep.subr.mxu0 0.0
    %3883 = vmatpush2.msra.mxu0 %v2554
    %3884 = vmatprep.subr.mxu0 0.0
    %3885 = vmatpush2.msra.mxu0 %v2553
    %3886 = vmatprep.subr.mxu0 0.0
    %3887 = vmatpush2.msra.mxu0 %v2552
    %3888 = vmatprep.subr.mxu0 0.0
    %3889 = vmatpush2.msra.mxu0 %v2551
    %3890 = vmatprep.subr.mxu0 0.0
    %3891 = vmatpush2.msra.mxu0 %v2550
    %3892 = vmatprep.subr.mxu0 0.0
    %3893 = vmatpush2.msra.mxu0 %v2549
    %3894 = vmatprep.subr.mxu0 0.0
    %3895 = vmatpush2.msra.mxu0 %v2548
    %3896 = vmatprep.subr.mxu0 0.0
    %3897 = vmatpush2.msra.mxu0 %v2547
    %3898 = vmatprep.subr.mxu0 0.0
    %3899 = vmatpush2.msra.mxu0 %v2546
    %3900 = vmatprep.subr.mxu0 0.0
    %3901 = vmatpush2.msra.mxu0 %v2545
    %3902 = vmatprep.subr.mxu0 0.0
    %3903 = vmatpush2.msra.mxu0 %v2544
    %3904 = vmatprep.subr.mxu0 0.0
    %3905 = vmatpush2.msra.mxu0 %v2543
    %3906 = vmatprep.subr.mxu0 0.0
    %3907 = vmatpush2.msra.mxu0 %v2542
    %3908 = vmatprep.subr.mxu0 0.0
    %3909 = vmatpush2.msra.mxu0 %v2541
    %3910 = vmatprep.subr.mxu0 0.0
    %3911 = vmatpush2.msra.mxu0 %v2540
    %3912 = vmatprep.subr.mxu0 0.0
    %3913 = vmatpush2.msra.mxu0 %v2539
    %3914 = vmatprep.mubr.f32.mxu0 %v1944
    %3915 = vmatmul.mubr.f32.gmra.mxu0 %v1943
    %v3916 = vpop.f32.mrf.mxu0
    %v3917 = vadd.f32 %v3817, %v3916
    %v3918 = vpop.f32.mrf.mxu0
    %3919 = vmatprep.mubr.f32.mxu0 %v1984
    %3920 = vmatmul.mubr.f32.gmra.mxu0 %v1983
    %v3921 = vpop.f32.mrf.mxu0
    %v3922 = vadd.f32 %v3822, %v3921
    %v3923 = vpop.f32.mrf.mxu0
    %3924 = vmatprep.mubr.f32.mxu0 %v2024
    %3925 = vmatmul.mubr.f32.gmra.mxu0 %v2023
    %v3926 = vpop.f32.mrf.mxu0
    %v3927 = vadd.f32 %v3827, %v3926
    %v3928 = vpop.f32.mrf.mxu0
    %3929 = vmatprep.mubr.f32.mxu0 %v2064
    %3930 = vmatmul.mubr.f32.gmra.mxu0 %v2063
    %v3931 = vpop.f32.mrf.mxu0
    %v3932 = vadd.f32 %v3832, %v3931
    %v3933 = vpop.f32.mrf.mxu0
    %3934 = vmatprep.mubr.f32.mxu0 %v2104
    %3935 = vmatmul.mubr.f32.gmra.mxu0 %v2103
    %v3936 = vpop.f32.mrf.mxu0
    %v3937 = vadd.f32 %v3837, %v3936
    %v3938 = vpop.f32.mrf.mxu0
    %3939 = vmatprep.mubr.f32.mxu0 %v2144
    %3940 = vmatmul.mubr.f32.gmra.mxu0 %v2143
    %v3941 = vpop.f32.mrf.mxu0
    %v3942 = vadd.f32 %v3842, %v3941
    %v3943 = vpop.f32.mrf.mxu0
    %3944 = vmatprep.mubr.f32.mxu0 %v2184
    %3945 = vmatmul.mubr.f32.gmra.mxu0 %v2183
    %v3946 = vpop.f32.mrf.mxu0
    %v3947 = vadd.f32 %v3847, %v3946
    %v3948 = vpop.f32.mrf.mxu0
    %3949 = vdwg.mxu0
    %3950 = vmatprep.subr.mxu0 0.0
    %3951 = vmatpush1.msra.mxu0 %v2570
    %3952 = vmatprep.subr.mxu0 0.0
    %3953 = vmatpush1.msra.mxu0 %v2569
    %3954 = vmatprep.subr.mxu0 0.0
    %3955 = vmatpush1.msra.mxu0 %v2568
    %3956 = vmatprep.subr.mxu0 0.0
    %3957 = vmatpush1.msra.mxu0 %v2567
    %3958 = vmatprep.subr.mxu0 0.0
    %3959 = vmatpush1.msra.mxu0 %v2566
    %3960 = vmatprep.subr.mxu0 0.0
    %3961 = vmatpush1.msra.mxu0 %v2565
    %3962 = vmatprep.subr.mxu0 0.0
    %3963 = vmatpush1.msra.mxu0 %v2564
    %3964 = vmatprep.subr.mxu0 0.0
    %3965 = vmatpush1.msra.mxu0 %v2563
    %3966 = vmatprep.subr.mxu0 0.0
    %3967 = vmatpush1.msra.mxu0 %v2562
    %3968 = vmatprep.subr.mxu0 0.0
    %3969 = vmatpush1.msra.mxu0 %v2561
    %3970 = vmatprep.subr.mxu0 0.0
    %3971 = vmatpush1.msra.mxu0 %v2560
    %3972 = vmatprep.subr.mxu0 0.0
    %3973 = vmatpush1.msra.mxu0 %v2559
    %3974 = vmatprep.subr.mxu0 0.0
    %3975 = vmatpush1.msra.mxu0 %v2558
    %3976 = vmatprep.subr.mxu0 0.0
    %3977 = vmatpush1.msra.mxu0 %v2557
    %3978 = vmatprep.subr.mxu0 0.0
    %3979 = vmatpush1.msra.mxu0 %v2556
    %3980 = vmatprep.subr.mxu0 0.0
    %3981 = vmatpush1.msra.mxu0 %v2555
    %3982 = vmatprep.subr.mxu0 0.0
    %3983 = vmatpush2.msra.mxu0 %v2586
    %3984 = vmatprep.subr.mxu0 0.0
    %3985 = vmatpush2.msra.mxu0 %v2585
    %3986 = vmatprep.subr.mxu0 0.0
    %3987 = vmatpush2.msra.mxu0 %v2584
    %3988 = vmatprep.subr.mxu0 0.0
    %3989 = vmatpush2.msra.mxu0 %v2583
    %3990 = vmatprep.subr.mxu0 0.0
    %3991 = vmatpush2.msra.mxu0 %v2582
    %3992 = vmatprep.subr.mxu0 0.0
    %3993 = vmatpush2.msra.mxu0 %v2581
    %3994 = vmatprep.subr.mxu0 0.0
    %3995 = vmatpush2.msra.mxu0 %v2580
    %3996 = vmatprep.subr.mxu0 0.0
    %3997 = vmatpush2.msra.mxu0 %v2579
    %3998 = vmatprep.subr.mxu0 0.0
    %3999 = vmatpush2.msra.mxu0 %v2578
    %4000 = vmatprep.subr.mxu0 0.0
    %4001 = vmatpush2.msra.mxu0 %v2577
    %4002 = vmatprep.subr.mxu0 0.0
    %4003 = vmatpush2.msra.mxu0 %v2576
    %4004 = vmatprep.subr.mxu0 0.0
    %4005 = vmatpush2.msra.mxu0 %v2575
    %4006 = vmatprep.subr.mxu0 0.0
    %4007 = vmatpush2.msra.mxu0 %v2574
    %4008 = vmatprep.subr.mxu0 0.0
    %4009 = vmatpush2.msra.mxu0 %v2573
    %4010 = vmatprep.subr.mxu0 0.0
    %4011 = vmatpush2.msra.mxu0 %v2572
    %4012 = vmatprep.subr.mxu0 0.0
    %4013 = vmatpush2.msra.mxu0 %v2571
    %4014 = vmatprep.mubr.f32.mxu0 %v1946
    %4015 = vmatmul.mubr.f32.gmra.mxu0 %v1945
    %v4016 = vpop.f32.mrf.mxu0
    %v4017 = vadd.f32 %v3917, %v4016
    %v4018 = vpop.f32.mrf.mxu0
    %4019 = vmatprep.mubr.f32.mxu0 %v1986
    %4020 = vmatmul.mubr.f32.gmra.mxu0 %v1985
    %v4021 = vpop.f32.mrf.mxu0
    %v4022 = vadd.f32 %v3922, %v4021
    %v4023 = vpop.f32.mrf.mxu0
    %4024 = vmatprep.mubr.f32.mxu0 %v2026
    %4025 = vmatmul.mubr.f32.gmra.mxu0 %v2025
    %v4026 = vpop.f32.mrf.mxu0
    %v4027 = vadd.f32 %v3927, %v4026
    %v4028 = vpop.f32.mrf.mxu0
    %4029 = vmatprep.mubr.f32.mxu0 %v2066
    %4030 = vmatmul.mubr.f32.gmra.mxu0 %v2065
    %v4031 = vpop.f32.mrf.mxu0
    %v4032 = vadd.f32 %v3932, %v4031
    %v4033 = vpop.f32.mrf.mxu0
    %4034 = vmatprep.mubr.f32.mxu0 %v2106
    %4035 = vmatmul.mubr.f32.gmra.mxu0 %v2105
    %v4036 = vpop.f32.mrf.mxu0
    %v4037 = vadd.f32 %v3937, %v4036
    %v4038 = vpop.f32.mrf.mxu0
    %4039 = vmatprep.mubr.f32.mxu0 %v2146
    %4040 = vmatmul.mubr.f32.gmra.mxu0 %v2145
    %v4041 = vpop.f32.mrf.mxu0
    %v4042 = vadd.f32 %v3942, %v4041
    %v4043 = vpop.f32.mrf.mxu0
    %4044 = vmatprep.mubr.f32.mxu0 %v2186
    %4045 = vmatmul.mubr.f32.gmra.mxu0 %v2185
    %v4046 = vpop.f32.mrf.mxu0
    %v4047 = vadd.f32 %v3947, %v4046
    %v4048 = vpop.f32.mrf.mxu0
    %4049 = vdwg.mxu0
    %4050 = vmatprep.subr.mxu0 0.0
    %4051 = vmatpush1.msra.mxu0 %v2602
    %4052 = vmatprep.subr.mxu0 0.0
    %4053 = vmatpush1.msra.mxu0 %v2601
    %4054 = vmatprep.subr.mxu0 0.0
    %4055 = vmatpush1.msra.mxu0 %v2600
    %4056 = vmatprep.subr.mxu0 0.0
    %4057 = vmatpush1.msra.mxu0 %v2599
    %4058 = vmatprep.subr.mxu0 0.0
    %4059 = vmatpush1.msra.mxu0 %v2598
    %4060 = vmatprep.subr.mxu0 0.0
    %4061 = vmatpush1.msra.mxu0 %v2597
    %4062 = vmatprep.subr.mxu0 0.0
    %4063 = vmatpush1.msra.mxu0 %v2596
    %4064 = vmatprep.subr.mxu0 0.0
    %4065 = vmatpush1.msra.mxu0 %v2595
    %4066 = vmatprep.subr.mxu0 0.0
    %4067 = vmatpush1.msra.mxu0 %v2594
    %4068 = vmatprep.subr.mxu0 0.0
    %4069 = vmatpush1.msra.mxu0 %v2593
    %4070 = vmatprep.subr.mxu0 0.0
    %4071 = vmatpush1.msra.mxu0 %v2592
    %4072 = vmatprep.subr.mxu0 0.0
    %4073 = vmatpush1.msra.mxu0 %v2591
    %4074 = vmatprep.subr.mxu0 0.0
    %4075 = vmatpush1.msra.mxu0 %v2590
    %4076 = vmatprep.subr.mxu0 0.0
    %4077 = vmatpush1.msra.mxu0 %v2589
    %4078 = vmatprep.subr.mxu0 0.0
    %4079 = vmatpush1.msra.mxu0 %v2588
    %4080 = vmatprep.subr.mxu0 0.0
    %4081 = vmatpush1.msra.mxu0 %v2587
    %4082 = vmatprep.subr.mxu0 0.0
    %4083 = vmatpush2.msra.mxu0 %v2618
    %4084 = vmatprep.subr.mxu0 0.0
    %4085 = vmatpush2.msra.mxu0 %v2617
    %4086 = vmatprep.subr.mxu0 0.0
    %4087 = vmatpush2.msra.mxu0 %v2616
    %4088 = vmatprep.subr.mxu0 0.0
    %4089 = vmatpush2.msra.mxu0 %v2615
    %4090 = vmatprep.subr.mxu0 0.0
    %4091 = vmatpush2.msra.mxu0 %v2614
    %4092 = vmatprep.subr.mxu0 0.0
    %4093 = vmatpush2.msra.mxu0 %v2613
    %4094 = vmatprep.subr.mxu0 0.0
    %4095 = vmatpush2.msra.mxu0 %v2612
    %4096 = vmatprep.subr.mxu0 0.0
    %4097 = vmatpush2.msra.mxu0 %v2611
    %4098 = vmatprep.subr.mxu0 0.0
    %4099 = vmatpush2.msra.mxu0 %v2610
    %4100 = vmatprep.subr.mxu0 0.0
    %4101 = vmatpush2.msra.mxu0 %v2609
    %4102 = vmatprep.subr.mxu0 0.0
    %4103 = vmatpush2.msra.mxu0 %v2608
    %4104 = vmatprep.subr.mxu0 0.0
    %4105 = vmatpush2.msra.mxu0 %v2607
    %4106 = vmatprep.subr.mxu0 0.0
    %4107 = vmatpush2.msra.mxu0 %v2606
    %4108 = vmatprep.subr.mxu0 0.0
    %4109 = vmatpush2.msra.mxu0 %v2605
    %4110 = vmatprep.subr.mxu0 0.0
    %4111 = vmatpush2.msra.mxu0 %v2604
    %4112 = vmatprep.subr.mxu0 0.0
    %4113 = vmatpush2.msra.mxu0 %v2603
    %4114 = vmatprep.mubr.f32.mxu0 %v1948
    %4115 = vmatmul.mubr.f32.gmra.mxu0 %v1947
    %v4116 = vpop.f32.mrf.mxu0
    %v4117 = vadd.f32 %v4017, %v4116
    %v4118 = vpop.f32.mrf.mxu0
    %4119 = vmatprep.mubr.f32.mxu0 %v1988
    %4120 = vmatmul.mubr.f32.gmra.mxu0 %v1987
    %v4121 = vpop.f32.mrf.mxu0
    %v4122 = vadd.f32 %v4022, %v4121
    %v4123 = vpop.f32.mrf.mxu0
    %4124 = vmatprep.mubr.f32.mxu0 %v2028
    %4125 = vmatmul.mubr.f32.gmra.mxu0 %v2027
    %v4126 = vpop.f32.mrf.mxu0
    %v4127 = vadd.f32 %v4027, %v4126
    %v4128 = vpop.f32.mrf.mxu0
    %4129 = vmatprep.mubr.f32.mxu0 %v2068
    %4130 = vmatmul.mubr.f32.gmra.mxu0 %v2067
    %v4131 = vpop.f32.mrf.mxu0
    %v4132 = vadd.f32 %v4032, %v4131
    %v4133 = vpop.f32.mrf.mxu0
    %4134 = vmatprep.mubr.f32.mxu0 %v2108
    %4135 = vmatmul.mubr.f32.gmra.mxu0 %v2107
    %v4136 = vpop.f32.mrf.mxu0
    %v4137 = vadd.f32 %v4037, %v4136
    %v4138 = vpop.f32.mrf.mxu0
    %4139 = vmatprep.mubr.f32.mxu0 %v2148
    %4140 = vmatmul.mubr.f32.gmra.mxu0 %v2147
    %v4141 = vpop.f32.mrf.mxu0
    %v4142 = vadd.f32 %v4042, %v4141
    %v4143 = vpop.f32.mrf.mxu0
    %4144 = vmatprep.mubr.f32.mxu0 %v2188
    %4145 = vmatmul.mubr.f32.gmra.mxu0 %v2187
    %v4146 = vpop.f32.mrf.mxu0
    %v4147 = vadd.f32 %v4047, %v4146
    %v4148 = vpop.f32.mrf.mxu0
    %4149 = vdwg.mxu0
    %4150 = vmatprep.subr.mxu0 0.0
    %4151 = vmatpush1.msra.mxu0 %v2634
    %4152 = vmatprep.subr.mxu0 0.0
    %4153 = vmatpush1.msra.mxu0 %v2633
    %4154 = vmatprep.subr.mxu0 0.0
    %4155 = vmatpush1.msra.mxu0 %v2632
    %4156 = vmatprep.subr.mxu0 0.0
    %4157 = vmatpush1.msra.mxu0 %v2631
    %4158 = vmatprep.subr.mxu0 0.0
    %4159 = vmatpush1.msra.mxu0 %v2630
    %4160 = vmatprep.subr.mxu0 0.0
    %4161 = vmatpush1.msra.mxu0 %v2629
    %4162 = vmatprep.subr.mxu0 0.0
    %4163 = vmatpush1.msra.mxu0 %v2628
    %4164 = vmatprep.subr.mxu0 0.0
    %4165 = vmatpush1.msra.mxu0 %v2627
    %4166 = vmatprep.subr.mxu0 0.0
    %4167 = vmatpush1.msra.mxu0 %v2626
    %4168 = vmatprep.subr.mxu0 0.0
    %4169 = vmatpush1.msra.mxu0 %v2625
    %4170 = vmatprep.subr.mxu0 0.0
    %4171 = vmatpush1.msra.mxu0 %v2624
    %4172 = vmatprep.subr.mxu0 0.0
    %4173 = vmatpush1.msra.mxu0 %v2623
    %4174 = vmatprep.subr.mxu0 0.0
    %4175 = vmatpush1.msra.mxu0 %v2622
    %4176 = vmatprep.subr.mxu0 0.0
    %4177 = vmatpush1.msra.mxu0 %v2621
    %4178 = vmatprep.subr.mxu0 0.0
    %4179 = vmatpush1.msra.mxu0 %v2620
    %4180 = vmatprep.subr.mxu0 0.0
    %4181 = vmatpush1.msra.mxu0 %v2619
    %4182 = vmatprep.subr.mxu0 0.0
    %4183 = vmatpush2.msra.mxu0 %v2650
    %4184 = vmatprep.subr.mxu0 0.0
    %4185 = vmatpush2.msra.mxu0 %v2649
    %4186 = vmatprep.subr.mxu0 0.0
    %4187 = vmatpush2.msra.mxu0 %v2648
    %4188 = vmatprep.subr.mxu0 0.0
    %4189 = vmatpush2.msra.mxu0 %v2647
    %4190 = vmatprep.subr.mxu0 0.0
    %4191 = vmatpush2.msra.mxu0 %v2646
    %4192 = vmatprep.subr.mxu0 0.0
    %4193 = vmatpush2.msra.mxu0 %v2645
    %4194 = vmatprep.subr.mxu0 0.0
    %4195 = vmatpush2.msra.mxu0 %v2644
    %4196 = vmatprep.subr.mxu0 0.0
    %4197 = vmatpush2.msra.mxu0 %v2643
    %4198 = vmatprep.subr.mxu0 0.0
    %4199 = vmatpush2.msra.mxu0 %v2642
    %4200 = vmatprep.subr.mxu0 0.0
    %4201 = vmatpush2.msra.mxu0 %v2641
    %4202 = vmatprep.subr.mxu0 0.0
    %4203 = vmatpush2.msra.mxu0 %v2640
    %4204 = vmatprep.subr.mxu0 0.0
    %4205 = vmatpush2.msra.mxu0 %v2639
    %4206 = vmatprep.subr.mxu0 0.0
    %4207 = vmatpush2.msra.mxu0 %v2638
    %4208 = vmatprep.subr.mxu0 0.0
    %4209 = vmatpush2.msra.mxu0 %v2637
    %4210 = vmatprep.subr.mxu0 0.0
    %4211 = vmatpush2.msra.mxu0 %v2636
    %4212 = vmatprep.subr.mxu0 0.0
    %4213 = vmatpush2.msra.mxu0 %v2635
    %4214 = vmatprep.mubr.f32.mxu0 %v1950
    %4215 = vmatmul.mubr.f32.gmra.mxu0 %v1949
    %v4216 = vpop.f32.mrf.mxu0
    %v4217 = vadd.f32 %v4117, %v4216
    %v4218 = vpop.f32.mrf.mxu0
    %4219 = vmatprep.mubr.f32.mxu0 %v1990
    %4220 = vmatmul.mubr.f32.gmra.mxu0 %v1989
    %v4221 = vpop.f32.mrf.mxu0
    %v4222 = vadd.f32 %v4122, %v4221
    %v4223 = vpop.f32.mrf.mxu0
    %4224 = vmatprep.mubr.f32.mxu0 %v2030
    %4225 = vmatmul.mubr.f32.gmra.mxu0 %v2029
    %v4226 = vpop.f32.mrf.mxu0
    %v4227 = vadd.f32 %v4127, %v4226
    %v4228 = vpop.f32.mrf.mxu0
    %4229 = vmatprep.mubr.f32.mxu0 %v2070
    %4230 = vmatmul.mubr.f32.gmra.mxu0 %v2069
    %v4231 = vpop.f32.mrf.mxu0
    %v4232 = vadd.f32 %v4132, %v4231
    %v4233 = vpop.f32.mrf.mxu0
    %4234 = vmatprep.mubr.f32.mxu0 %v2110
    %4235 = vmatmul.mubr.f32.gmra.mxu0 %v2109
    %v4236 = vpop.f32.mrf.mxu0
    %v4237 = vadd.f32 %v4137, %v4236
    %v4238 = vpop.f32.mrf.mxu0
    %4239 = vmatprep.mubr.f32.mxu0 %v2150
    %4240 = vmatmul.mubr.f32.gmra.mxu0 %v2149
    %v4241 = vpop.f32.mrf.mxu0
    %v4242 = vadd.f32 %v4142, %v4241
    %v4243 = vpop.f32.mrf.mxu0
    %4244 = vmatprep.mubr.f32.mxu0 %v2190
    %4245 = vmatmul.mubr.f32.gmra.mxu0 %v2189
    %v4246 = vpop.f32.mrf.mxu0
    %v4247 = vadd.f32 %v4147, %v4246
    %v4248 = vpop.f32.mrf.mxu0
    %4249 = vdwg.mxu0
    %4250 = vmatprep.subr.mxu0 0.0
    %4251 = vmatpush1.msra.mxu0 %v2666
    %4252 = vmatprep.subr.mxu0 0.0
    %4253 = vmatpush1.msra.mxu0 %v2665
    %4254 = vmatprep.subr.mxu0 0.0
    %4255 = vmatpush1.msra.mxu0 %v2664
    %4256 = vmatprep.subr.mxu0 0.0
    %4257 = vmatpush1.msra.mxu0 %v2663
    %4258 = vmatprep.subr.mxu0 0.0
    %4259 = vmatpush1.msra.mxu0 %v2662
    %4260 = vmatprep.subr.mxu0 0.0
    %4261 = vmatpush1.msra.mxu0 %v2661
    %4262 = vmatprep.subr.mxu0 0.0
    %4263 = vmatpush1.msra.mxu0 %v2660
    %4264 = vmatprep.subr.mxu0 0.0
    %4265 = vmatpush1.msra.mxu0 %v2659
    %4266 = vmatprep.subr.mxu0 0.0
    %4267 = vmatpush1.msra.mxu0 %v2658
    %4268 = vmatprep.subr.mxu0 0.0
    %4269 = vmatpush1.msra.mxu0 %v2657
    %4270 = vmatprep.subr.mxu0 0.0
    %4271 = vmatpush1.msra.mxu0 %v2656
    %4272 = vmatprep.subr.mxu0 0.0
    %4273 = vmatpush1.msra.mxu0 %v2655
    %4274 = vmatprep.subr.mxu0 0.0
    %4275 = vmatpush1.msra.mxu0 %v2654
    %4276 = vmatprep.subr.mxu0 0.0
    %4277 = vmatpush1.msra.mxu0 %v2653
    %4278 = vmatprep.subr.mxu0 0.0
    %4279 = vmatpush1.msra.mxu0 %v2652
    %4280 = vmatprep.subr.mxu0 0.0
    %4281 = vmatpush1.msra.mxu0 %v2651
    %4282 = vmatprep.subr.mxu0 0.0
    %4283 = vmatpush2.msra.mxu0 %v2682
    %4284 = vmatprep.subr.mxu0 0.0
    %4285 = vmatpush2.msra.mxu0 %v2681
    %4286 = vmatprep.subr.mxu0 0.0
    %4287 = vmatpush2.msra.mxu0 %v2680
    %4288 = vmatprep.subr.mxu0 0.0
    %4289 = vmatpush2.msra.mxu0 %v2679
    %4290 = vmatprep.subr.mxu0 0.0
    %4291 = vmatpush2.msra.mxu0 %v2678
    %4292 = vmatprep.subr.mxu0 0.0
    %4293 = vmatpush2.msra.mxu0 %v2677
    %4294 = vmatprep.subr.mxu0 0.0
    %4295 = vmatpush2.msra.mxu0 %v2676
    %4296 = vmatprep.subr.mxu0 0.0
    %4297 = vmatpush2.msra.mxu0 %v2675
    %4298 = vmatprep.subr.mxu0 0.0
    %4299 = vmatpush2.msra.mxu0 %v2674
    %4300 = vmatprep.subr.mxu0 0.0
    %4301 = vmatpush2.msra.mxu0 %v2673
    %4302 = vmatprep.subr.mxu0 0.0
    %4303 = vmatpush2.msra.mxu0 %v2672
    %4304 = vmatprep.subr.mxu0 0.0
    %4305 = vmatpush2.msra.mxu0 %v2671
    %4306 = vmatprep.subr.mxu0 0.0
    %4307 = vmatpush2.msra.mxu0 %v2670
    %4308 = vmatprep.subr.mxu0 0.0
    %4309 = vmatpush2.msra.mxu0 %v2669
    %4310 = vmatprep.subr.mxu0 0.0
    %4311 = vmatpush2.msra.mxu0 %v2668
    %4312 = vmatprep.subr.mxu0 0.0
    %4313 = vmatpush2.msra.mxu0 %v2667
    %4314 = vmatprep.mubr.f32.mxu0 %v1952
    %4315 = vmatmul.mubr.f32.gmra.mxu0 %v1951
    %v4316 = vpop.f32.mrf.mxu0
    %v4317 = vadd.f32 %v4217, %v4316
    %v4318 = vpop.f32.mrf.mxu0
    %4319 = vmatprep.mubr.f32.mxu0 %v1992
    %4320 = vmatmul.mubr.f32.gmra.mxu0 %v1991
    %v4321 = vpop.f32.mrf.mxu0
    %v4322 = vadd.f32 %v4222, %v4321
    %v4323 = vpop.f32.mrf.mxu0
    %4324 = vmatprep.mubr.f32.mxu0 %v2032
    %4325 = vmatmul.mubr.f32.gmra.mxu0 %v2031
    %v4326 = vpop.f32.mrf.mxu0
    %v4327 = vadd.f32 %v4227, %v4326
    %v4328 = vpop.f32.mrf.mxu0
    %4329 = vmatprep.mubr.f32.mxu0 %v2072
    %4330 = vmatmul.mubr.f32.gmra.mxu0 %v2071
    %v4331 = vpop.f32.mrf.mxu0
    %v4332 = vadd.f32 %v4232, %v4331
    %v4333 = vpop.f32.mrf.mxu0
    %4334 = vmatprep.mubr.f32.mxu0 %v2112
    %4335 = vmatmul.mubr.f32.gmra.mxu0 %v2111
    %v4336 = vpop.f32.mrf.mxu0
    %v4337 = vadd.f32 %v4237, %v4336
    %v4338 = vpop.f32.mrf.mxu0
    %4339 = vmatprep.mubr.f32.mxu0 %v2152
    %4340 = vmatmul.mubr.f32.gmra.mxu0 %v2151
    %v4341 = vpop.f32.mrf.mxu0
    %v4342 = vadd.f32 %v4242, %v4341
    %v4343 = vpop.f32.mrf.mxu0
    %4344 = vmatprep.mubr.f32.mxu0 %v2192
    %4345 = vmatmul.mubr.f32.gmra.mxu0 %v2191
    %v4346 = vpop.f32.mrf.mxu0
    %v4347 = vadd.f32 %v4247, %v4346
    %v4348 = vpop.f32.mrf.mxu0
    %4349 = vdwg.mxu0
    %4350 = vmatprep.subr.mxu0 0.0
    %4351 = vmatpush1.msra.mxu0 %v2698
    %4352 = vmatprep.subr.mxu0 0.0
    %4353 = vmatpush1.msra.mxu0 %v2697
    %4354 = vmatprep.subr.mxu0 0.0
    %4355 = vmatpush1.msra.mxu0 %v2696
    %4356 = vmatprep.subr.mxu0 0.0
    %4357 = vmatpush1.msra.mxu0 %v2695
    %4358 = vmatprep.subr.mxu0 0.0
    %4359 = vmatpush1.msra.mxu0 %v2694
    %4360 = vmatprep.subr.mxu0 0.0
    %4361 = vmatpush1.msra.mxu0 %v2693
    %4362 = vmatprep.subr.mxu0 0.0
    %4363 = vmatpush1.msra.mxu0 %v2692
    %4364 = vmatprep.subr.mxu0 0.0
    %4365 = vmatpush1.msra.mxu0 %v2691
    %4366 = vmatprep.subr.mxu0 0.0
    %4367 = vmatpush1.msra.mxu0 %v2690
    %4368 = vmatprep.subr.mxu0 0.0
    %4369 = vmatpush1.msra.mxu0 %v2689
    %4370 = vmatprep.subr.mxu0 0.0
    %4371 = vmatpush1.msra.mxu0 %v2688
    %4372 = vmatprep.subr.mxu0 0.0
    %4373 = vmatpush1.msra.mxu0 %v2687
    %4374 = vmatprep.subr.mxu0 0.0
    %4375 = vmatpush1.msra.mxu0 %v2686
    %4376 = vmatprep.subr.mxu0 0.0
    %4377 = vmatpush1.msra.mxu0 %v2685
    %4378 = vmatprep.subr.mxu0 0.0
    %4379 = vmatpush1.msra.mxu0 %v2684
    %4380 = vmatprep.subr.mxu0 0.0
    %4381 = vmatpush1.msra.mxu0 %v2683
    %4382 = vmatprep.subr.mxu0 0.0
    %4383 = vmatpush2.msra.mxu0 %v2714
    %4384 = vmatprep.subr.mxu0 0.0
    %4385 = vmatpush2.msra.mxu0 %v2713
    %4386 = vmatprep.subr.mxu0 0.0
    %4387 = vmatpush2.msra.mxu0 %v2712
    %4388 = vmatprep.subr.mxu0 0.0
    %4389 = vmatpush2.msra.mxu0 %v2711
    %4390 = vmatprep.subr.mxu0 0.0
    %4391 = vmatpush2.msra.mxu0 %v2710
    %4392 = vmatprep.subr.mxu0 0.0
    %4393 = vmatpush2.msra.mxu0 %v2709
    %4394 = vmatprep.subr.mxu0 0.0
    %4395 = vmatpush2.msra.mxu0 %v2708
    %4396 = vmatprep.subr.mxu0 0.0
    %4397 = vmatpush2.msra.mxu0 %v2707
    %4398 = vmatprep.subr.mxu0 0.0
    %4399 = vmatpush2.msra.mxu0 %v2706
    %4400 = vmatprep.subr.mxu0 0.0
    %4401 = vmatpush2.msra.mxu0 %v2705
    %4402 = vmatprep.subr.mxu0 0.0
    %4403 = vmatpush2.msra.mxu0 %v2704
    %4404 = vmatprep.subr.mxu0 0.0
    %4405 = vmatpush2.msra.mxu0 %v2703
    %4406 = vmatprep.subr.mxu0 0.0
    %4407 = vmatpush2.msra.mxu0 %v2702
    %4408 = vmatprep.subr.mxu0 0.0
    %4409 = vmatpush2.msra.mxu0 %v2701
    %4410 = vmatprep.subr.mxu0 0.0
    %4411 = vmatpush2.msra.mxu0 %v2700
    %4412 = vmatprep.subr.mxu0 0.0
    %4413 = vmatpush2.msra.mxu0 %v2699
    %4414 = vmatprep.mubr.f32.mxu0 %v1954
    %4415 = vmatmul.mubr.f32.gmra.mxu0 %v1953
    %v4416 = vpop.f32.mrf.mxu0
    %v4417 = vadd.f32 %v4317, %v4416
    %v4418 = vpop.f32.mrf.mxu0
    %4419 = vmatprep.mubr.f32.mxu0 %v1994
    %4420 = vmatmul.mubr.f32.gmra.mxu0 %v1993
    %v4421 = vpop.f32.mrf.mxu0
    %v4422 = vadd.f32 %v4322, %v4421
    %v4423 = vpop.f32.mrf.mxu0
    %4424 = vmatprep.mubr.f32.mxu0 %v2034
    %4425 = vmatmul.mubr.f32.gmra.mxu0 %v2033
    %v4426 = vpop.f32.mrf.mxu0
    %v4427 = vadd.f32 %v4327, %v4426
    %v4428 = vpop.f32.mrf.mxu0
    %4429 = vmatprep.mubr.f32.mxu0 %v2074
    %4430 = vmatmul.mubr.f32.gmra.mxu0 %v2073
    %v4431 = vpop.f32.mrf.mxu0
    %v4432 = vadd.f32 %v4332, %v4431
    %v4433 = vpop.f32.mrf.mxu0
    %4434 = vmatprep.mubr.f32.mxu0 %v2114
    %4435 = vmatmul.mubr.f32.gmra.mxu0 %v2113
    %v4436 = vpop.f32.mrf.mxu0
    %v4437 = vadd.f32 %v4337, %v4436
    %v4438 = vpop.f32.mrf.mxu0
    %4439 = vmatprep.mubr.f32.mxu0 %v2154
    %4440 = vmatmul.mubr.f32.gmra.mxu0 %v2153
    %v4441 = vpop.f32.mrf.mxu0
    %v4442 = vadd.f32 %v4342, %v4441
    %v4443 = vpop.f32.mrf.mxu0
    %4444 = vmatprep.mubr.f32.mxu0 %v2194
    %4445 = vmatmul.mubr.f32.gmra.mxu0 %v2193
    %v4446 = vpop.f32.mrf.mxu0
    %v4447 = vadd.f32 %v4347, %v4446
    %v4448 = vpop.f32.mrf.mxu0
    %4449 = vdwg.mxu0
    %4450 = vmatprep.subr.mxu0 0.0
    %4451 = vmatpush1.msra.mxu0 %v2730
    %4452 = vmatprep.subr.mxu0 0.0
    %4453 = vmatpush1.msra.mxu0 %v2729
    %4454 = vmatprep.subr.mxu0 0.0
    %4455 = vmatpush1.msra.mxu0 %v2728
    %4456 = vmatprep.subr.mxu0 0.0
    %4457 = vmatpush1.msra.mxu0 %v2727
    %4458 = vmatprep.subr.mxu0 0.0
    %4459 = vmatpush1.msra.mxu0 %v2726
    %4460 = vmatprep.subr.mxu0 0.0
    %4461 = vmatpush1.msra.mxu0 %v2725
    %4462 = vmatprep.subr.mxu0 0.0
    %4463 = vmatpush1.msra.mxu0 %v2724
    %4464 = vmatprep.subr.mxu0 0.0
    %4465 = vmatpush1.msra.mxu0 %v2723
    %4466 = vmatprep.subr.mxu0 0.0
    %4467 = vmatpush1.msra.mxu0 %v2722
    %4468 = vmatprep.subr.mxu0 0.0
    %4469 = vmatpush1.msra.mxu0 %v2721
    %4470 = vmatprep.subr.mxu0 0.0
    %4471 = vmatpush1.msra.mxu0 %v2720
    %4472 = vmatprep.subr.mxu0 0.0
    %4473 = vmatpush1.msra.mxu0 %v2719
    %4474 = vmatprep.subr.mxu0 0.0
    %4475 = vmatpush1.msra.mxu0 %v2718
    %4476 = vmatprep.subr.mxu0 0.0
    %4477 = vmatpush1.msra.mxu0 %v2717
    %4478 = vmatprep.subr.mxu0 0.0
    %4479 = vmatpush1.msra.mxu0 %v2716
    %4480 = vmatprep.subr.mxu0 0.0
    %4481 = vmatpush1.msra.mxu0 %v2715
    %4482 = vmatprep.subr.mxu0 0.0
    %4483 = vmatpush2.msra.mxu0 %v2746
    %4484 = vmatprep.subr.mxu0 0.0
    %4485 = vmatpush2.msra.mxu0 %v2745
    %4486 = vmatprep.subr.mxu0 0.0
    %4487 = vmatpush2.msra.mxu0 %v2744
    %4488 = vmatprep.subr.mxu0 0.0
    %4489 = vmatpush2.msra.mxu0 %v2743
    %4490 = vmatprep.subr.mxu0 0.0
    %4491 = vmatpush2.msra.mxu0 %v2742
    %4492 = vmatprep.subr.mxu0 0.0
    %4493 = vmatpush2.msra.mxu0 %v2741
    %4494 = vmatprep.subr.mxu0 0.0
    %4495 = vmatpush2.msra.mxu0 %v2740
    %4496 = vmatprep.subr.mxu0 0.0
    %4497 = vmatpush2.msra.mxu0 %v2739
    %4498 = vmatprep.subr.mxu0 0.0
    %4499 = vmatpush2.msra.mxu0 %v2738
    %4500 = vmatprep.subr.mxu0 0.0
    %4501 = vmatpush2.msra.mxu0 %v2737
    %4502 = vmatprep.subr.mxu0 0.0
    %4503 = vmatpush2.msra.mxu0 %v2736
    %4504 = vmatprep.subr.mxu0 0.0
    %4505 = vmatpush2.msra.mxu0 %v2735
    %4506 = vmatprep.subr.mxu0 0.0
    %4507 = vmatpush2.msra.mxu0 %v2734
    %4508 = vmatprep.subr.mxu0 0.0
    %4509 = vmatpush2.msra.mxu0 %v2733
    %4510 = vmatprep.subr.mxu0 0.0
    %4511 = vmatpush2.msra.mxu0 %v2732
    %4512 = vmatprep.subr.mxu0 0.0
    %4513 = vmatpush2.msra.mxu0 %v2731
    %4514 = vmatprep.mubr.f32.mxu0 %v1956
    %4515 = vmatmul.mubr.f32.gmra.mxu0 %v1955
    %v4516 = vpop.f32.mrf.mxu0
    %v4517 = vadd.f32 %v4417, %v4516
    %v4518 = vpop.f32.mrf.mxu0
    %4519 = vmatprep.mubr.f32.mxu0 %v1996
    %4520 = vmatmul.mubr.f32.gmra.mxu0 %v1995
    %v4521 = vpop.f32.mrf.mxu0
    %v4522 = vadd.f32 %v4422, %v4521
    %v4523 = vpop.f32.mrf.mxu0
    %4524 = vmatprep.mubr.f32.mxu0 %v2036
    %4525 = vmatmul.mubr.f32.gmra.mxu0 %v2035
    %v4526 = vpop.f32.mrf.mxu0
    %v4527 = vadd.f32 %v4427, %v4526
    %v4528 = vpop.f32.mrf.mxu0
    %4529 = vmatprep.mubr.f32.mxu0 %v2076
    %4530 = vmatmul.mubr.f32.gmra.mxu0 %v2075
    %v4531 = vpop.f32.mrf.mxu0
    %v4532 = vadd.f32 %v4432, %v4531
    %v4533 = vpop.f32.mrf.mxu0
    %4534 = vmatprep.mubr.f32.mxu0 %v2116
    %4535 = vmatmul.mubr.f32.gmra.mxu0 %v2115
    %v4536 = vpop.f32.mrf.mxu0
    %v4537 = vadd.f32 %v4437, %v4536
    %v4538 = vpop.f32.mrf.mxu0
    %4539 = vmatprep.mubr.f32.mxu0 %v2156
    %4540 = vmatmul.mubr.f32.gmra.mxu0 %v2155
    %v4541 = vpop.f32.mrf.mxu0
    %v4542 = vadd.f32 %v4442, %v4541
    %v4543 = vpop.f32.mrf.mxu0
    %4544 = vmatprep.mubr.f32.mxu0 %v2196
    %4545 = vmatmul.mubr.f32.gmra.mxu0 %v2195
    %v4546 = vpop.f32.mrf.mxu0
    %v4547 = vadd.f32 %v4447, %v4546
    %v4548 = vpop.f32.mrf.mxu0
    %4549 = vdwg.mxu0
    %4550 = vmatprep.subr.mxu0 0.0
    %4551 = vmatpush1.msra.mxu0 %v2762
    %4552 = vmatprep.subr.mxu0 0.0
    %4553 = vmatpush1.msra.mxu0 %v2761
    %4554 = vmatprep.subr.mxu0 0.0
    %4555 = vmatpush1.msra.mxu0 %v2760
    %4556 = vmatprep.subr.mxu0 0.0
    %4557 = vmatpush1.msra.mxu0 %v2759
    %4558 = vmatprep.subr.mxu0 0.0
    %4559 = vmatpush1.msra.mxu0 %v2758
    %4560 = vmatprep.subr.mxu0 0.0
    %4561 = vmatpush1.msra.mxu0 %v2757
    %4562 = vmatprep.subr.mxu0 0.0
    %4563 = vmatpush1.msra.mxu0 %v2756
    %4564 = vmatprep.subr.mxu0 0.0
    %4565 = vmatpush1.msra.mxu0 %v2755
    %4566 = vmatprep.subr.mxu0 0.0
    %4567 = vmatpush1.msra.mxu0 %v2754
    %4568 = vmatprep.subr.mxu0 0.0
    %4569 = vmatpush1.msra.mxu0 %v2753
    %4570 = vmatprep.subr.mxu0 0.0
    %4571 = vmatpush1.msra.mxu0 %v2752
    %4572 = vmatprep.subr.mxu0 0.0
    %4573 = vmatpush1.msra.mxu0 %v2751
    %4574 = vmatprep.subr.mxu0 0.0
    %4575 = vmatpush1.msra.mxu0 %v2750
    %4576 = vmatprep.subr.mxu0 0.0
    %4577 = vmatpush1.msra.mxu0 %v2749
    %4578 = vmatprep.subr.mxu0 0.0
    %4579 = vmatpush1.msra.mxu0 %v2748
    %4580 = vmatprep.subr.mxu0 0.0
    %4581 = vmatpush1.msra.mxu0 %v2747
    %4582 = vmatprep.subr.mxu0 0.0
    %4583 = vmatpush2.msra.mxu0 %v2778
    %4584 = vmatprep.subr.mxu0 0.0
    %4585 = vmatpush2.msra.mxu0 %v2777
    %4586 = vmatprep.subr.mxu0 0.0
    %4587 = vmatpush2.msra.mxu0 %v2776
    %4588 = vmatprep.subr.mxu0 0.0
    %4589 = vmatpush2.msra.mxu0 %v2775
    %4590 = vmatprep.subr.mxu0 0.0
    %4591 = vmatpush2.msra.mxu0 %v2774
    %4592 = vmatprep.subr.mxu0 0.0
    %4593 = vmatpush2.msra.mxu0 %v2773
    %4594 = vmatprep.subr.mxu0 0.0
    %4595 = vmatpush2.msra.mxu0 %v2772
    %4596 = vmatprep.subr.mxu0 0.0
    %4597 = vmatpush2.msra.mxu0 %v2771
    %4598 = vmatprep.subr.mxu0 0.0
    %4599 = vmatpush2.msra.mxu0 %v2770
    %4600 = vmatprep.subr.mxu0 0.0
    %4601 = vmatpush2.msra.mxu0 %v2769
    %4602 = vmatprep.subr.mxu0 0.0
    %4603 = vmatpush2.msra.mxu0 %v2768
    %4604 = vmatprep.subr.mxu0 0.0
    %4605 = vmatpush2.msra.mxu0 %v2767
    %4606 = vmatprep.subr.mxu0 0.0
    %4607 = vmatpush2.msra.mxu0 %v2766
    %4608 = vmatprep.subr.mxu0 0.0
    %4609 = vmatpush2.msra.mxu0 %v2765
    %4610 = vmatprep.subr.mxu0 0.0
    %4611 = vmatpush2.msra.mxu0 %v2764
    %4612 = vmatprep.subr.mxu0 0.0
    %4613 = vmatpush2.msra.mxu0 %v2763
    %4614 = vmatprep.mubr.f32.mxu0 %v1958
    %4615 = vmatmul.mubr.f32.gmra.mxu0 %v1957
    %v4616 = vpop.f32.mrf.mxu0
    %v4617 = vadd.f32 %v4517, %v4616
    %v4618 = vpop.f32.mrf.mxu0
    %4619 = vmatprep.mubr.f32.mxu0 %v1998
    %4620 = vmatmul.mubr.f32.gmra.mxu0 %v1997
    %v4621 = vpop.f32.mrf.mxu0
    %v4622 = vadd.f32 %v4522, %v4621
    %v4623 = vpop.f32.mrf.mxu0
    %4624 = vmatprep.mubr.f32.mxu0 %v2038
    %4625 = vmatmul.mubr.f32.gmra.mxu0 %v2037
    %v4626 = vpop.f32.mrf.mxu0
    %v4627 = vadd.f32 %v4527, %v4626
    %v4628 = vpop.f32.mrf.mxu0
    %4629 = vmatprep.mubr.f32.mxu0 %v2078
    %4630 = vmatmul.mubr.f32.gmra.mxu0 %v2077
    %v4631 = vpop.f32.mrf.mxu0
    %v4632 = vadd.f32 %v4532, %v4631
    %v4633 = vpop.f32.mrf.mxu0
    %4634 = vmatprep.mubr.f32.mxu0 %v2118
    %4635 = vmatmul.mubr.f32.gmra.mxu0 %v2117
    %v4636 = vpop.f32.mrf.mxu0
    %v4637 = vadd.f32 %v4537, %v4636
    %v4638 = vpop.f32.mrf.mxu0
    %4639 = vmatprep.mubr.f32.mxu0 %v2158
    %4640 = vmatmul.mubr.f32.gmra.mxu0 %v2157
    %v4641 = vpop.f32.mrf.mxu0
    %v4642 = vadd.f32 %v4542, %v4641
    %v4643 = vpop.f32.mrf.mxu0
    %4644 = vmatprep.mubr.f32.mxu0 %v2198
    %4645 = vmatmul.mubr.f32.gmra.mxu0 %v2197
    %v4646 = vpop.f32.mrf.mxu0
    %v4647 = vadd.f32 %v4547, %v4646
    %v4648 = vpop.f32.mrf.mxu0
    %4649 = vdwg.mxu0
    %4650 = vmatprep.subr.mxu0 0.0
    %4651 = vmatpush1.msra.mxu0 %v2794
    %4652 = vmatprep.subr.mxu0 0.0
    %4653 = vmatpush1.msra.mxu0 %v2793
    %4654 = vmatprep.subr.mxu0 0.0
    %4655 = vmatpush1.msra.mxu0 %v2792
    %4656 = vmatprep.subr.mxu0 0.0
    %4657 = vmatpush1.msra.mxu0 %v2791
    %4658 = vmatprep.subr.mxu0 0.0
    %4659 = vmatpush1.msra.mxu0 %v2790
    %4660 = vmatprep.subr.mxu0 0.0
    %4661 = vmatpush1.msra.mxu0 %v2789
    %4662 = vmatprep.subr.mxu0 0.0
    %4663 = vmatpush1.msra.mxu0 %v2788
    %4664 = vmatprep.subr.mxu0 0.0
    %4665 = vmatpush1.msra.mxu0 %v2787
    %4666 = vmatprep.subr.mxu0 0.0
    %4667 = vmatpush1.msra.mxu0 %v2786
    %4668 = vmatprep.subr.mxu0 0.0
    %4669 = vmatpush1.msra.mxu0 %v2785
    %4670 = vmatprep.subr.mxu0 0.0
    %4671 = vmatpush1.msra.mxu0 %v2784
    %4672 = vmatprep.subr.mxu0 0.0
    %4673 = vmatpush1.msra.mxu0 %v2783
    %4674 = vmatprep.subr.mxu0 0.0
    %4675 = vmatpush1.msra.mxu0 %v2782
    %4676 = vmatprep.subr.mxu0 0.0
    %4677 = vmatpush1.msra.mxu0 %v2781
    %4678 = vmatprep.subr.mxu0 0.0
    %4679 = vmatpush1.msra.mxu0 %v2780
    %4680 = vmatprep.subr.mxu0 0.0
    %4681 = vmatpush1.msra.mxu0 %v2779
    %4682 = vmatprep.subr.mxu0 0.0
    %4683 = vmatpush2.msra.mxu0 %v2810
    %4684 = vmatprep.subr.mxu0 0.0
    %4685 = vmatpush2.msra.mxu0 %v2809
    %4686 = vmatprep.subr.mxu0 0.0
    %4687 = vmatpush2.msra.mxu0 %v2808
    %4688 = vmatprep.subr.mxu0 0.0
    %4689 = vmatpush2.msra.mxu0 %v2807
    %4690 = vmatprep.subr.mxu0 0.0
    %4691 = vmatpush2.msra.mxu0 %v2806
    %4692 = vmatprep.subr.mxu0 0.0
    %4693 = vmatpush2.msra.mxu0 %v2805
    %4694 = vmatprep.subr.mxu0 0.0
    %4695 = vmatpush2.msra.mxu0 %v2804
    %4696 = vmatprep.subr.mxu0 0.0
    %4697 = vmatpush2.msra.mxu0 %v2803
    %4698 = vmatprep.subr.mxu0 0.0
    %4699 = vmatpush2.msra.mxu0 %v2802
    %4700 = vmatprep.subr.mxu0 0.0
    %4701 = vmatpush2.msra.mxu0 %v2801
    %4702 = vmatprep.subr.mxu0 0.0
    %4703 = vmatpush2.msra.mxu0 %v2800
    %4704 = vmatprep.subr.mxu0 0.0
    %4705 = vmatpush2.msra.mxu0 %v2799
    %4706 = vmatprep.subr.mxu0 0.0
    %4707 = vmatpush2.msra.mxu0 %v2798
    %4708 = vmatprep.subr.mxu0 0.0
    %4709 = vmatpush2.msra.mxu0 %v2797
    %4710 = vmatprep.subr.mxu0 0.0
    %4711 = vmatpush2.msra.mxu0 %v2796
    %4712 = vmatprep.subr.mxu0 0.0
    %4713 = vmatpush2.msra.mxu0 %v2795
    %4714 = vmatprep.mubr.f32.mxu0 %v1960
    %4715 = vmatmul.mubr.f32.gmra.mxu0 %v1959
    %v4716 = vpop.f32.mrf.mxu0
    %v4717 = vadd.f32 %v4617, %v4716
    %v4718 = vpop.f32.mrf.mxu0
    %4719 = vmatprep.mubr.f32.mxu0 %v2000
    %4720 = vmatmul.mubr.f32.gmra.mxu0 %v1999
    %v4721 = vpop.f32.mrf.mxu0
    %v4722 = vadd.f32 %v4622, %v4721
    %v4723 = vpop.f32.mrf.mxu0
    %4724 = vmatprep.mubr.f32.mxu0 %v2040
    %4725 = vmatmul.mubr.f32.gmra.mxu0 %v2039
    %v4726 = vpop.f32.mrf.mxu0
    %v4727 = vadd.f32 %v4627, %v4726
    %v4728 = vpop.f32.mrf.mxu0
    %4729 = vmatprep.mubr.f32.mxu0 %v2080
    %4730 = vmatmul.mubr.f32.gmra.mxu0 %v2079
    %v4731 = vpop.f32.mrf.mxu0
    %v4732 = vadd.f32 %v4632, %v4731
    %v4733 = vpop.f32.mrf.mxu0
    %4734 = vmatprep.mubr.f32.mxu0 %v2120
    %4735 = vmatmul.mubr.f32.gmra.mxu0 %v2119
    %v4736 = vpop.f32.mrf.mxu0
    %v4737 = vadd.f32 %v4637, %v4736
    %v4738 = vpop.f32.mrf.mxu0
    %4739 = vmatprep.mubr.f32.mxu0 %v2160
    %4740 = vmatmul.mubr.f32.gmra.mxu0 %v2159
    %v4741 = vpop.f32.mrf.mxu0
    %v4742 = vadd.f32 %v4642, %v4741
    %v4743 = vpop.f32.mrf.mxu0
    %4744 = vmatprep.mubr.f32.mxu0 %v2200
    %4745 = vmatmul.mubr.f32.gmra.mxu0 %v2199
    %v4746 = vpop.f32.mrf.mxu0
    %v4747 = vadd.f32 %v4647, %v4746
    %v4748 = vpop.f32.mrf.mxu0
    %4749 = vdwg.mxu0
    %4750 = vmatprep.subr.mxu0 0.0
    %4751 = vmatpush1.msra.mxu0 %v2826
    %4752 = vmatprep.subr.mxu0 0.0
    %4753 = vmatpush1.msra.mxu0 %v2825
    %4754 = vmatprep.subr.mxu0 0.0
    %4755 = vmatpush1.msra.mxu0 %v2824
    %4756 = vmatprep.subr.mxu0 0.0
    %4757 = vmatpush1.msra.mxu0 %v2823
    %4758 = vmatprep.subr.mxu0 0.0
    %4759 = vmatpush1.msra.mxu0 %v2822
    %4760 = vmatprep.subr.mxu0 0.0
    %4761 = vmatpush1.msra.mxu0 %v2821
    %4762 = vmatprep.subr.mxu0 0.0
    %4763 = vmatpush1.msra.mxu0 %v2820
    %4764 = vmatprep.subr.mxu0 0.0
    %4765 = vmatpush1.msra.mxu0 %v2819
    %4766 = vmatprep.subr.mxu0 0.0
    %4767 = vmatpush1.msra.mxu0 %v2818
    %4768 = vmatprep.subr.mxu0 0.0
    %4769 = vmatpush1.msra.mxu0 %v2817
    %4770 = vmatprep.subr.mxu0 0.0
    %4771 = vmatpush1.msra.mxu0 %v2816
    %4772 = vmatprep.subr.mxu0 0.0
    %4773 = vmatpush1.msra.mxu0 %v2815
    %4774 = vmatprep.subr.mxu0 0.0
    %4775 = vmatpush1.msra.mxu0 %v2814
    %4776 = vmatprep.subr.mxu0 0.0
    %4777 = vmatpush1.msra.mxu0 %v2813
    %4778 = vmatprep.subr.mxu0 0.0
    %4779 = vmatpush1.msra.mxu0 %v2812
    %4780 = vmatprep.subr.mxu0 0.0
    %4781 = vmatpush1.msra.mxu0 %v2811
    %4782 = vmatprep.subr.mxu0 0.0
    %4783 = vmatpush2.msra.mxu0 %v2842
    %4784 = vmatprep.subr.mxu0 0.0
    %4785 = vmatpush2.msra.mxu0 %v2841
    %4786 = vmatprep.subr.mxu0 0.0
    %4787 = vmatpush2.msra.mxu0 %v2840
    %4788 = vmatprep.subr.mxu0 0.0
    %4789 = vmatpush2.msra.mxu0 %v2839
    %4790 = vmatprep.subr.mxu0 0.0
    %4791 = vmatpush2.msra.mxu0 %v2838
    %4792 = vmatprep.subr.mxu0 0.0
    %4793 = vmatpush2.msra.mxu0 %v2837
    %4794 = vmatprep.subr.mxu0 0.0
    %4795 = vmatpush2.msra.mxu0 %v2836
    %4796 = vmatprep.subr.mxu0 0.0
    %4797 = vmatpush2.msra.mxu0 %v2835
    %4798 = vmatprep.subr.mxu0 0.0
    %4799 = vmatpush2.msra.mxu0 %v2834
    %4800 = vmatprep.subr.mxu0 0.0
    %4801 = vmatpush2.msra.mxu0 %v2833
    %4802 = vmatprep.subr.mxu0 0.0
    %4803 = vmatpush2.msra.mxu0 %v2832
    %4804 = vmatprep.subr.mxu0 0.0
    %4805 = vmatpush2.msra.mxu0 %v2831
    %4806 = vmatprep.subr.mxu0 0.0
    %4807 = vmatpush2.msra.mxu0 %v2830
    %4808 = vmatprep.subr.mxu0 0.0
    %4809 = vmatpush2.msra.mxu0 %v2829
    %4810 = vmatprep.subr.mxu0 0.0
    %4811 = vmatpush2.msra.mxu0 %v2828
    %4812 = vmatprep.subr.mxu0 0.0
    %4813 = vmatpush2.msra.mxu0 %v2827
    %4814 = vmatprep.mubr.f32.mxu0 %v1962
    %4815 = vmatmul.mubr.f32.gmra.mxu0 %v1961
    %v4816 = vpop.f32.mrf.mxu0
    %v4817 = vadd.f32 %v4717, %v4816
    %v4818 = vpop.f32.mrf.mxu0
    %4819 = vmatprep.mubr.f32.mxu0 %v2002
    %4820 = vmatmul.mubr.f32.gmra.mxu0 %v2001
    %v4821 = vpop.f32.mrf.mxu0
    %v4822 = vadd.f32 %v4722, %v4821
    %v4823 = vpop.f32.mrf.mxu0
    %4824 = vmatprep.mubr.f32.mxu0 %v2042
    %4825 = vmatmul.mubr.f32.gmra.mxu0 %v2041
    %v4826 = vpop.f32.mrf.mxu0
    %v4827 = vadd.f32 %v4727, %v4826
    %v4828 = vpop.f32.mrf.mxu0
    %4829 = vmatprep.mubr.f32.mxu0 %v2082
    %4830 = vmatmul.mubr.f32.gmra.mxu0 %v2081
    %v4831 = vpop.f32.mrf.mxu0
    %v4832 = vadd.f32 %v4732, %v4831
    %v4833 = vpop.f32.mrf.mxu0
    %4834 = vmatprep.mubr.f32.mxu0 %v2122
    %4835 = vmatmul.mubr.f32.gmra.mxu0 %v2121
    %v4836 = vpop.f32.mrf.mxu0
    %v4837 = vadd.f32 %v4737, %v4836
    %v4838 = vpop.f32.mrf.mxu0
    %4839 = vmatprep.mubr.f32.mxu0 %v2162
    %4840 = vmatmul.mubr.f32.gmra.mxu0 %v2161
    %v4841 = vpop.f32.mrf.mxu0
    %v4842 = vadd.f32 %v4742, %v4841
    %v4843 = vpop.f32.mrf.mxu0
    %4844 = vmatprep.mubr.f32.mxu0 %v2202
    %4845 = vmatmul.mubr.f32.gmra.mxu0 %v2201
    %v4846 = vpop.f32.mrf.mxu0
    %v4847 = vadd.f32 %v4747, %v4846
    %v4848 = vpop.f32.mrf.mxu0
    %4849 = vdwg.mxu0
    %v4850 = vmax.f32 %v4817, 0.0
    %v4851 = vmax.f32 %v4822, 0.0
    %v4852 = vmax.f32 %v4827, 0.0
    %v4853 = vmax.f32 %v4832, 0.0
    %v4854 = vmax.f32 %v4837, 0.0
    %v4855 = vmax.f32 %v4842, 0.0
    %v4856 = vmax.f32 %v4847, 0.0
    %v4857 = vld [vmem:[%s3] sm:$0xff]
    %v4858 = vld [vmem:[%s3 + $0x8] sm:$0xff]
    %v4859 = vld [vmem:[%s3 + $0x10] sm:$0xff]
    %v4860 = vld [vmem:[%s3 + $0x18] sm:$0xff]
    %v4861 = vld [vmem:[%s3 + $0x20] sm:$0xff]
    %v4862 = vld [vmem:[%s3 + $0x28] sm:$0xff]
    %v4863 = vld [vmem:[%s3 + $0x30] sm:$0xff]
    %v4864 = vld [vmem:[%s3 + $0x38] sm:$0xff]
    %v4865 = vld [vmem:[%s3 + $0x40] sm:$0xff]
    %v4866 = vld [vmem:[%s3 + $0x48] sm:$0xff]
    %v4867 = vld [vmem:[%s3 + $0x50] sm:$0xff]
    %v4868 = vld [vmem:[%s3 + $0x58] sm:$0xff]
    %v4869 = vld [vmem:[%s3 + $0x60] sm:$0xff]
    %v4870 = vld [vmem:[%s3 + $0x68] sm:$0xff]
    %v4871 = vld [vmem:[%s3 + $0x70] sm:$0xff]
    %v4872 = vld [vmem:[%s3 + $0x78] sm:$0xff]
    %v4873 = vld [vmem:[%s3 + $0x80] sm:$0xff]
    %v4874 = vld [vmem:[%s3 + $0x88] sm:$0xff]
    %v4875 = vld [vmem:[%s3 + $0x90] sm:$0xff]
    %v4876 = vld [vmem:[%s3 + $0x98] sm:$0xff]
    %v4877 = vld [vmem:[%s3 + $0xa0] sm:$0xff]
    %v4878 = vld [vmem:[%s3 + $0xa8] sm:$0xff]
    %v4879 = vld [vmem:[%s3 + $0xb0] sm:$0xff]
    %v4880 = vld [vmem:[%s3 + $0xb8] sm:$0xff]
    %v4881 = vld [vmem:[%s3 + $0xc0] sm:$0xff]
    %v4882 = vld [vmem:[%s3 + $0xc8] sm:$0xff]
    %v4883 = vld [vmem:[%s3 + $0xd0] sm:$0xff]
    %v4884 = vld [vmem:[%s3 + $0xd8] sm:$0xff]
    %vm4885 = vcmask 261120
    %v4887 = vsel %vm4885, %v4851, 0
    %4889 = vmatprep.subr.mxu0 0.0
    %4890 = vmatpush1.msra.mxu0 0.0
    %4891 = vmatprep.subr.mxu0 0.0
    %4892 = vmatpush1.msra.mxu0 0.0
    %4893 = vmatprep.subr.mxu0 0.0
    %4894 = vmatpush1.msra.mxu0 0.0
    %4895 = vmatprep.subr.mxu0 0.0
    %4896 = vmatpush1.msra.mxu0 0.0
    %4897 = vmatprep.subr.mxu0 0.0
    %4898 = vmatpush1.msra.mxu0 0.0
    %4899 = vmatprep.subr.mxu0 0.0
    %4900 = vmatpush1.msra.mxu0 0.0
    %4901 = vmatprep.subr.mxu0 0.0
    %4902 = vmatpush1.msra.mxu0 0.0
    %4903 = vmatprep.subr.mxu0 0.0
    %4904 = vmatpush1.msra.mxu0 0.0
    %4905 = vmatprep.subr.mxu0 0.0
    %4906 = vmatpush1.msra.mxu0 0.0
    %4907 = vmatprep.subr.mxu0 0.0
    %4908 = vmatpush1.msra.mxu0 0.0
    %4909 = vmatprep.subr.mxu0 0.0
    %4910 = vmatpush1.msra.mxu0 0.0
    %4911 = vmatprep.subr.mxu0 0.0
    %4912 = vmatpush1.msra.mxu0 0.0
    %4913 = vmatprep.subr.mxu0 0.0
    %4914 = vmatpush1.msra.mxu0 %v4864
    %4915 = vmatprep.subr.mxu0 0.0
    %4916 = vmatpush1.msra.mxu0 %v4863
    %4917 = vmatprep.subr.mxu0 0.0
    %4918 = vmatpush1.msra.mxu0 %v4862
    %4919 = vmatprep.subr.mxu0 0.0
    %4920 = vmatpush1.msra.mxu0 %v4861
    %4921 = vmatprep.subr.mxu0 0.0
    %4922 = vmatpush2.msra.mxu0 0.0
    %4923 = vmatprep.subr.mxu0 0.0
    %4924 = vmatpush2.msra.mxu0 0.0
    %4925 = vmatprep.subr.mxu0 0.0
    %4926 = vmatpush2.msra.mxu0 0.0
    %4927 = vmatprep.subr.mxu0 0.0
    %4928 = vmatpush2.msra.mxu0 0.0
    %4929 = vmatprep.subr.mxu0 0.0
    %4930 = vmatpush2.msra.mxu0 0.0
    %4931 = vmatprep.subr.mxu0 0.0
    %4932 = vmatpush2.msra.mxu0 0.0
    %4933 = vmatprep.subr.mxu0 0.0
    %4934 = vmatpush2.msra.mxu0 0.0
    %4935 = vmatprep.subr.mxu0 0.0
    %4936 = vmatpush2.msra.mxu0 0.0
    %4937 = vmatprep.subr.mxu0 0.0
    %4938 = vmatpush2.msra.mxu0 0.0
    %4939 = vmatprep.subr.mxu0 0.0
    %4940 = vmatpush2.msra.mxu0 0.0
    %4941 = vmatprep.subr.mxu0 0.0
    %4942 = vmatpush2.msra.mxu0 0.0
    %4943 = vmatprep.subr.mxu0 0.0
    %4944 = vmatpush2.msra.mxu0 0.0
    %4945 = vmatprep.subr.mxu0 0.0
    %4946 = vmatpush2.msra.mxu0 0.0
    %4947 = vmatprep.subr.mxu0 0.0
    %4948 = vmatpush2.msra.mxu0 0.0
    %4949 = vmatprep.subr.mxu0 0.0
    %4950 = vmatpush2.msra.mxu0 0.0
    %4951 = vmatprep.subr.mxu0 0.0
    %4952 = vmatpush2.msra.mxu0 0.0
    %4953 = vmatprep.mubr.f32.mxu0 0.0
    %4954 = vmatmul.mubr.f32.gmra.mxu0 %v4887
    %v4955 = vpop.f32.mrf.mxu0
    %v4956 = vadd.f32 0.0, %v4955
    %v4957 = vpop.f32.mrf.mxu0
    %4958 = vdwg.mxu0
    %v4960 = vsel %vm4885, %v4850, 0
    %4962 = vmatprep.subr.mxu0 0.0
    %4963 = vmatpush1.msra.mxu0 0.0
    %4964 = vmatprep.subr.mxu0 0.0
    %4965 = vmatpush1.msra.mxu0 0.0
    %4966 = vmatprep.subr.mxu0 0.0
    %4967 = vmatpush1.msra.mxu0 0.0
    %4968 = vmatprep.subr.mxu0 0.0
    %4969 = vmatpush1.msra.mxu0 0.0
    %4970 = vmatprep.subr.mxu0 0.0
    %4971 = vmatpush1.msra.mxu0 0.0
    %4972 = vmatprep.subr.mxu0 0.0
    %4973 = vmatpush1.msra.mxu0 0.0
    %4974 = vmatprep.subr.mxu0 0.0
    %4975 = vmatpush1.msra.mxu0 0.0
    %4976 = vmatprep.subr.mxu0 0.0
    %4977 = vmatpush1.msra.mxu0 0.0
    %4978 = vmatprep.subr.mxu0 0.0
    %4979 = vmatpush1.msra.mxu0 0.0
    %4980 = vmatprep.subr.mxu0 0.0
    %4981 = vmatpush1.msra.mxu0 0.0
    %4982 = vmatprep.subr.mxu0 0.0
    %4983 = vmatpush1.msra.mxu0 0.0
    %4984 = vmatprep.subr.mxu0 0.0
    %4985 = vmatpush1.msra.mxu0 0.0
    %4986 = vmatprep.subr.mxu0 0.0
    %4987 = vmatpush1.msra.mxu0 %v4860
    %4988 = vmatprep.subr.mxu0 0.0
    %4989 = vmatpush1.msra.mxu0 %v4859
    %4990 = vmatprep.subr.mxu0 0.0
    %4991 = vmatpush1.msra.mxu0 %v4858
    %4992 = vmatprep.subr.mxu0 0.0
    %4993 = vmatpush1.msra.mxu0 %v4857
    %4994 = vmatprep.subr.mxu0 0.0
    %4995 = vmatpush2.msra.mxu0 0.0
    %4996 = vmatprep.subr.mxu0 0.0
    %4997 = vmatpush2.msra.mxu0 0.0
    %4998 = vmatprep.subr.mxu0 0.0
    %4999 = vmatpush2.msra.mxu0 0.0
    %5000 = vmatprep.subr.mxu0 0.0
    %5001 = vmatpush2.msra.mxu0 0.0
    %5002 = vmatprep.subr.mxu0 0.0
    %5003 = vmatpush2.msra.mxu0 0.0
    %5004 = vmatprep.subr.mxu0 0.0
    %5005 = vmatpush2.msra.mxu0 0.0
    %5006 = vmatprep.subr.mxu0 0.0
    %5007 = vmatpush2.msra.mxu0 0.0
    %5008 = vmatprep.subr.mxu0 0.0
    %5009 = vmatpush2.msra.mxu0 0.0
    %5010 = vmatprep.subr.mxu0 0.0
    %5011 = vmatpush2.msra.mxu0 0.0
    %5012 = vmatprep.subr.mxu0 0.0
    %5013 = vmatpush2.msra.mxu0 0.0
    %5014 = vmatprep.subr.mxu0 0.0
    %5015 = vmatpush2.msra.mxu0 0.0
    %5016 = vmatprep.subr.mxu0 0.0
    %5017 = vmatpush2.msra.mxu0 0.0
    %5018 = vmatprep.subr.mxu0 0.0
    %5019 = vmatpush2.msra.mxu0 0.0
    %5020 = vmatprep.subr.mxu0 0.0
    %5021 = vmatpush2.msra.mxu0 0.0
    %5022 = vmatprep.subr.mxu0 0.0
    %5023 = vmatpush2.msra.mxu0 0.0
    %5024 = vmatprep.subr.mxu0 0.0
    %5025 = vmatpush2.msra.mxu0 0.0
    %5026 = vmatprep.mubr.f32.mxu0 0.0
    %5027 = vmatmul.mubr.f32.gmra.mxu0 %v4960
    %v5028 = vpop.f32.mrf.mxu0
    %v5029 = vadd.f32 %v4956, %v5028
    %v5030 = vpop.f32.mrf.mxu0
    %5031 = vdwg.mxu0
    %v5033 = vsel %vm4885, %v4852, 0
    %5035 = vmatprep.subr.mxu0 0.0
    %5036 = vmatpush1.msra.mxu0 0.0
    %5037 = vmatprep.subr.mxu0 0.0
    %5038 = vmatpush1.msra.mxu0 0.0
    %5039 = vmatprep.subr.mxu0 0.0
    %5040 = vmatpush1.msra.mxu0 0.0
    %5041 = vmatprep.subr.mxu0 0.0
    %5042 = vmatpush1.msra.mxu0 0.0
    %5043 = vmatprep.subr.mxu0 0.0
    %5044 = vmatpush1.msra.mxu0 0.0
    %5045 = vmatprep.subr.mxu0 0.0
    %5046 = vmatpush1.msra.mxu0 0.0
    %5047 = vmatprep.subr.mxu0 0.0
    %5048 = vmatpush1.msra.mxu0 0.0
    %5049 = vmatprep.subr.mxu0 0.0
    %5050 = vmatpush1.msra.mxu0 0.0
    %5051 = vmatprep.subr.mxu0 0.0
    %5052 = vmatpush1.msra.mxu0 0.0
    %5053 = vmatprep.subr.mxu0 0.0
    %5054 = vmatpush1.msra.mxu0 0.0
    %5055 = vmatprep.subr.mxu0 0.0
    %5056 = vmatpush1.msra.mxu0 0.0
    %5057 = vmatprep.subr.mxu0 0.0
    %5058 = vmatpush1.msra.mxu0 0.0
    %5059 = vmatprep.subr.mxu0 0.0
    %5060 = vmatpush1.msra.mxu0 %v4868
    %5061 = vmatprep.subr.mxu0 0.0
    %5062 = vmatpush1.msra.mxu0 %v4867
    %5063 = vmatprep.subr.mxu0 0.0
    %5064 = vmatpush1.msra.mxu0 %v4866
    %5065 = vmatprep.subr.mxu0 0.0
    %5066 = vmatpush1.msra.mxu0 %v4865
    %5067 = vmatprep.subr.mxu0 0.0
    %5068 = vmatpush2.msra.mxu0 0.0
    %5069 = vmatprep.subr.mxu0 0.0
    %5070 = vmatpush2.msra.mxu0 0.0
    %5071 = vmatprep.subr.mxu0 0.0
    %5072 = vmatpush2.msra.mxu0 0.0
    %5073 = vmatprep.subr.mxu0 0.0
    %5074 = vmatpush2.msra.mxu0 0.0
    %5075 = vmatprep.subr.mxu0 0.0
    %5076 = vmatpush2.msra.mxu0 0.0
    %5077 = vmatprep.subr.mxu0 0.0
    %5078 = vmatpush2.msra.mxu0 0.0
    %5079 = vmatprep.subr.mxu0 0.0
    %5080 = vmatpush2.msra.mxu0 0.0
    %5081 = vmatprep.subr.mxu0 0.0
    %5082 = vmatpush2.msra.mxu0 0.0
    %5083 = vmatprep.subr.mxu0 0.0
    %5084 = vmatpush2.msra.mxu0 0.0
    %5085 = vmatprep.subr.mxu0 0.0
    %5086 = vmatpush2.msra.mxu0 0.0
    %5087 = vmatprep.subr.mxu0 0.0
    %5088 = vmatpush2.msra.mxu0 0.0
    %5089 = vmatprep.subr.mxu0 0.0
    %5090 = vmatpush2.msra.mxu0 0.0
    %5091 = vmatprep.subr.mxu0 0.0
    %5092 = vmatpush2.msra.mxu0 0.0
    %5093 = vmatprep.subr.mxu0 0.0
    %5094 = vmatpush2.msra.mxu0 0.0
    %5095 = vmatprep.subr.mxu0 0.0
    %5096 = vmatpush2.msra.mxu0 0.0
    %5097 = vmatprep.subr.mxu0 0.0
    %5098 = vmatpush2.msra.mxu0 0.0
    %5099 = vmatprep.mubr.f32.mxu0 0.0
    %5100 = vmatmul.mubr.f32.gmra.mxu0 %v5033
    %v5101 = vpop.f32.mrf.mxu0
    %v5102 = vadd.f32 0.0, %v5101
    %v5103 = vpop.f32.mrf.mxu0
    %5104 = vdwg.mxu0
    %v5105 = vadd.f32 %v5029, %v5102
    %v5107 = vsel %vm4885, %v4853, 0
    %5109 = vmatprep.subr.mxu0 0.0
    %5110 = vmatpush1.msra.mxu0 0.0
    %5111 = vmatprep.subr.mxu0 0.0
    %5112 = vmatpush1.msra.mxu0 0.0
    %5113 = vmatprep.subr.mxu0 0.0
    %5114 = vmatpush1.msra.mxu0 0.0
    %5115 = vmatprep.subr.mxu0 0.0
    %5116 = vmatpush1.msra.mxu0 0.0
    %5117 = vmatprep.subr.mxu0 0.0
    %5118 = vmatpush1.msra.mxu0 0.0
    %5119 = vmatprep.subr.mxu0 0.0
    %5120 = vmatpush1.msra.mxu0 0.0
    %5121 = vmatprep.subr.mxu0 0.0
    %5122 = vmatpush1.msra.mxu0 0.0
    %5123 = vmatprep.subr.mxu0 0.0
    %5124 = vmatpush1.msra.mxu0 0.0
    %5125 = vmatprep.subr.mxu0 0.0
    %5126 = vmatpush1.msra.mxu0 0.0
    %5127 = vmatprep.subr.mxu0 0.0
    %5128 = vmatpush1.msra.mxu0 0.0
    %5129 = vmatprep.subr.mxu0 0.0
    %5130 = vmatpush1.msra.mxu0 0.0
    %5131 = vmatprep.subr.mxu0 0.0
    %5132 = vmatpush1.msra.mxu0 0.0
    %5133 = vmatprep.subr.mxu0 0.0
    %5134 = vmatpush1.msra.mxu0 %v4872
    %5135 = vmatprep.subr.mxu0 0.0
    %5136 = vmatpush1.msra.mxu0 %v4871
    %5137 = vmatprep.subr.mxu0 0.0
    %5138 = vmatpush1.msra.mxu0 %v4870
    %5139 = vmatprep.subr.mxu0 0.0
    %5140 = vmatpush1.msra.mxu0 %v4869
    %5141 = vmatprep.subr.mxu0 0.0
    %5142 = vmatpush2.msra.mxu0 0.0
    %5143 = vmatprep.subr.mxu0 0.0
    %5144 = vmatpush2.msra.mxu0 0.0
    %5145 = vmatprep.subr.mxu0 0.0
    %5146 = vmatpush2.msra.mxu0 0.0
    %5147 = vmatprep.subr.mxu0 0.0
    %5148 = vmatpush2.msra.mxu0 0.0
    %5149 = vmatprep.subr.mxu0 0.0
    %5150 = vmatpush2.msra.mxu0 0.0
    %5151 = vmatprep.subr.mxu0 0.0
    %5152 = vmatpush2.msra.mxu0 0.0
    %5153 = vmatprep.subr.mxu0 0.0
    %5154 = vmatpush2.msra.mxu0 0.0
    %5155 = vmatprep.subr.mxu0 0.0
    %5156 = vmatpush2.msra.mxu0 0.0
    %5157 = vmatprep.subr.mxu0 0.0
    %5158 = vmatpush2.msra.mxu0 0.0
    %5159 = vmatprep.subr.mxu0 0.0
    %5160 = vmatpush2.msra.mxu0 0.0
    %5161 = vmatprep.subr.mxu0 0.0
    %5162 = vmatpush2.msra.mxu0 0.0
    %5163 = vmatprep.subr.mxu0 0.0
    %5164 = vmatpush2.msra.mxu0 0.0
    %5165 = vmatprep.subr.mxu0 0.0
    %5166 = vmatpush2.msra.mxu0 0.0
    %5167 = vmatprep.subr.mxu0 0.0
    %5168 = vmatpush2.msra.mxu0 0.0
    %5169 = vmatprep.subr.mxu0 0.0
    %5170 = vmatpush2.msra.mxu0 0.0
    %5171 = vmatprep.subr.mxu0 0.0
    %5172 = vmatpush2.msra.mxu0 0.0
    %5173 = vmatprep.mubr.f32.mxu0 0.0
    %5174 = vmatmul.mubr.f32.gmra.mxu0 %v5107
    %v5175 = vpop.f32.mrf.mxu0
    %v5176 = vadd.f32 0.0, %v5175
    %v5177 = vpop.f32.mrf.mxu0
    %5178 = vdwg.mxu0
    %v5179 = vadd.f32 %v5105, %v5176
    %v5181 = vsel %vm4885, %v4854, 0
    %5183 = vmatprep.subr.mxu0 0.0
    %5184 = vmatpush1.msra.mxu0 0.0
    %5185 = vmatprep.subr.mxu0 0.0
    %5186 = vmatpush1.msra.mxu0 0.0
    %5187 = vmatprep.subr.mxu0 0.0
    %5188 = vmatpush1.msra.mxu0 0.0
    %5189 = vmatprep.subr.mxu0 0.0
    %5190 = vmatpush1.msra.mxu0 0.0
    %5191 = vmatprep.subr.mxu0 0.0
    %5192 = vmatpush1.msra.mxu0 0.0
    %5193 = vmatprep.subr.mxu0 0.0
    %5194 = vmatpush1.msra.mxu0 0.0
    %5195 = vmatprep.subr.mxu0 0.0
    %5196 = vmatpush1.msra.mxu0 0.0
    %5197 = vmatprep.subr.mxu0 0.0
    %5198 = vmatpush1.msra.mxu0 0.0
    %5199 = vmatprep.subr.mxu0 0.0
    %5200 = vmatpush1.msra.mxu0 0.0
    %5201 = vmatprep.subr.mxu0 0.0
    %5202 = vmatpush1.msra.mxu0 0.0
    %5203 = vmatprep.subr.mxu0 0.0
    %5204 = vmatpush1.msra.mxu0 0.0
    %5205 = vmatprep.subr.mxu0 0.0
    %5206 = vmatpush1.msra.mxu0 0.0
    %5207 = vmatprep.subr.mxu0 0.0
    %5208 = vmatpush1.msra.mxu0 %v4876
    %5209 = vmatprep.subr.mxu0 0.0
    %5210 = vmatpush1.msra.mxu0 %v4875
    %5211 = vmatprep.subr.mxu0 0.0
    %5212 = vmatpush1.msra.mxu0 %v4874
    %5213 = vmatprep.subr.mxu0 0.0
    %5214 = vmatpush1.msra.mxu0 %v4873
    %5215 = vmatprep.subr.mxu0 0.0
    %5216 = vmatpush2.msra.mxu0 0.0
    %5217 = vmatprep.subr.mxu0 0.0
    %5218 = vmatpush2.msra.mxu0 0.0
    %5219 = vmatprep.subr.mxu0 0.0
    %5220 = vmatpush2.msra.mxu0 0.0
    %5221 = vmatprep.subr.mxu0 0.0
    %5222 = vmatpush2.msra.mxu0 0.0
    %5223 = vmatprep.subr.mxu0 0.0
    %5224 = vmatpush2.msra.mxu0 0.0
    %5225 = vmatprep.subr.mxu0 0.0
    %5226 = vmatpush2.msra.mxu0 0.0
    %5227 = vmatprep.subr.mxu0 0.0
    %5228 = vmatpush2.msra.mxu0 0.0
    %5229 = vmatprep.subr.mxu0 0.0
    %5230 = vmatpush2.msra.mxu0 0.0
    %5231 = vmatprep.subr.mxu0 0.0
    %5232 = vmatpush2.msra.mxu0 0.0
    %5233 = vmatprep.subr.mxu0 0.0
    %5234 = vmatpush2.msra.mxu0 0.0
    %5235 = vmatprep.subr.mxu0 0.0
    %5236 = vmatpush2.msra.mxu0 0.0
    %5237 = vmatprep.subr.mxu0 0.0
    %5238 = vmatpush2.msra.mxu0 0.0
    %5239 = vmatprep.subr.mxu0 0.0
    %5240 = vmatpush2.msra.mxu0 0.0
    %5241 = vmatprep.subr.mxu0 0.0
    %5242 = vmatpush2.msra.mxu0 0.0
    %5243 = vmatprep.subr.mxu0 0.0
    %5244 = vmatpush2.msra.mxu0 0.0
    %5245 = vmatprep.subr.mxu0 0.0
    %5246 = vmatpush2.msra.mxu0 0.0
    %5247 = vmatprep.mubr.f32.mxu0 0.0
    %5248 = vmatmul.mubr.f32.gmra.mxu0 %v5181
    %v5249 = vpop.f32.mrf.mxu0
    %v5250 = vadd.f32 0.0, %v5249
    %v5251 = vpop.f32.mrf.mxu0
    %5252 = vdwg.mxu0
    %v5253 = vadd.f32 %v5179, %v5250
    %v5255 = vsel %vm4885, %v4855, 0
    %5257 = vmatprep.subr.mxu0 0.0
    %5258 = vmatpush1.msra.mxu0 0.0
    %5259 = vmatprep.subr.mxu0 0.0
    %5260 = vmatpush1.msra.mxu0 0.0
    %5261 = vmatprep.subr.mxu0 0.0
    %5262 = vmatpush1.msra.mxu0 0.0
    %5263 = vmatprep.subr.mxu0 0.0
    %5264 = vmatpush1.msra.mxu0 0.0
    %5265 = vmatprep.subr.mxu0 0.0
    %5266 = vmatpush1.msra.mxu0 0.0
    %5267 = vmatprep.subr.mxu0 0.0
    %5268 = vmatpush1.msra.mxu0 0.0
    %5269 = vmatprep.subr.mxu0 0.0
    %5270 = vmatpush1.msra.mxu0 0.0
    %5271 = vmatprep.subr.mxu0 0.0
    %5272 = vmatpush1.msra.mxu0 0.0
    %5273 = vmatprep.subr.mxu0 0.0
    %5274 = vmatpush1.msra.mxu0 0.0
    %5275 = vmatprep.subr.mxu0 0.0
    %5276 = vmatpush1.msra.mxu0 0.0
    %5277 = vmatprep.subr.mxu0 0.0
    %5278 = vmatpush1.msra.mxu0 0.0
    %5279 = vmatprep.subr.mxu0 0.0
    %5280 = vmatpush1.msra.mxu0 0.0
    %5281 = vmatprep.subr.mxu0 0.0
    %5282 = vmatpush1.msra.mxu0 %v4880
    %5283 = vmatprep.subr.mxu0 0.0
    %5284 = vmatpush1.msra.mxu0 %v4879
    %5285 = vmatprep.subr.mxu0 0.0
    %5286 = vmatpush1.msra.mxu0 %v4878
    %5287 = vmatprep.subr.mxu0 0.0
    %5288 = vmatpush1.msra.mxu0 %v4877
    %5289 = vmatprep.subr.mxu0 0.0
    %5290 = vmatpush2.msra.mxu0 0.0
    %5291 = vmatprep.subr.mxu0 0.0
    %5292 = vmatpush2.msra.mxu0 0.0
    %5293 = vmatprep.subr.mxu0 0.0
    %5294 = vmatpush2.msra.mxu0 0.0
    %5295 = vmatprep.subr.mxu0 0.0
    %5296 = vmatpush2.msra.mxu0 0.0
    %5297 = vmatprep.subr.mxu0 0.0
    %5298 = vmatpush2.msra.mxu0 0.0
    %5299 = vmatprep.subr.mxu0 0.0
    %5300 = vmatpush2.msra.mxu0 0.0
    %5301 = vmatprep.subr.mxu0 0.0
    %5302 = vmatpush2.msra.mxu0 0.0
    %5303 = vmatprep.subr.mxu0 0.0
    %5304 = vmatpush2.msra.mxu0 0.0
    %5305 = vmatprep.subr.mxu0 0.0
    %5306 = vmatpush2.msra.mxu0 0.0
    %5307 = vmatprep.subr.mxu0 0.0
    %5308 = vmatpush2.msra.mxu0 0.0
    %5309 = vmatprep.subr.mxu0 0.0
    %5310 = vmatpush2.msra.mxu0 0.0
    %5311 = vmatprep.subr.mxu0 0.0
    %5312 = vmatpush2.msra.mxu0 0.0
    %5313 = vmatprep.subr.mxu0 0.0
    %5314 = vmatpush2.msra.mxu0 0.0
    %5315 = vmatprep.subr.mxu0 0.0
    %5316 = vmatpush2.msra.mxu0 0.0
    %5317 = vmatprep.subr.mxu0 0.0
    %5318 = vmatpush2.msra.mxu0 0.0
    %5319 = vmatprep.subr.mxu0 0.0
    %5320 = vmatpush2.msra.mxu0 0.0
    %5321 = vmatprep.mubr.f32.mxu0 0.0
    %5322 = vmatmul.mubr.f32.gmra.mxu0 %v5255
    %v5323 = vpop.f32.mrf.mxu0
    %v5324 = vadd.f32 0.0, %v5323
    %v5325 = vpop.f32.mrf.mxu0
    %5326 = vdwg.mxu0
    %v5327 = vadd.f32 %v5253, %v5324
    %v5329 = vsel %vm4885, %v4856, 0
    %5331 = vmatprep.subr.mxu0 0.0
    %5332 = vmatpush1.msra.mxu0 0.0
    %5333 = vmatprep.subr.mxu0 0.0
    %5334 = vmatpush1.msra.mxu0 0.0
    %5335 = vmatprep.subr.mxu0 0.0
    %5336 = vmatpush1.msra.mxu0 0.0
    %5337 = vmatprep.subr.mxu0 0.0
    %5338 = vmatpush1.msra.mxu0 0.0
    %5339 = vmatprep.subr.mxu0 0.0
    %5340 = vmatpush1.msra.mxu0 0.0
    %5341 = vmatprep.subr.mxu0 0.0
    %5342 = vmatpush1.msra.mxu0 0.0
    %5343 = vmatprep.subr.mxu0 0.0
    %5344 = vmatpush1.msra.mxu0 0.0
    %5345 = vmatprep.subr.mxu0 0.0
    %5346 = vmatpush1.msra.mxu0 0.0
    %5347 = vmatprep.subr.mxu0 0.0
    %5348 = vmatpush1.msra.mxu0 0.0
    %5349 = vmatprep.subr.mxu0 0.0
    %5350 = vmatpush1.msra.mxu0 0.0
    %5351 = vmatprep.subr.mxu0 0.0
    %5352 = vmatpush1.msra.mxu0 0.0
    %5353 = vmatprep.subr.mxu0 0.0
    %5354 = vmatpush1.msra.mxu0 0.0
    %5355 = vmatprep.subr.mxu0 0.0
    %5356 = vmatpush1.msra.mxu0 %v4884
    %5357 = vmatprep.subr.mxu0 0.0
    %5358 = vmatpush1.msra.mxu0 %v4883
    %5359 = vmatprep.subr.mxu0 0.0
    %5360 = vmatpush1.msra.mxu0 %v4882
    %5361 = vmatprep.subr.mxu0 0.0
    %5362 = vmatpush1.msra.mxu0 %v4881
    %5363 = vmatprep.subr.mxu0 0.0
    %5364 = vmatpush2.msra.mxu0 0.0
    %5365 = vmatprep.subr.mxu0 0.0
    %5366 = vmatpush2.msra.mxu0 0.0
    %5367 = vmatprep.subr.mxu0 0.0
    %5368 = vmatpush2.msra.mxu0 0.0
    %5369 = vmatprep.subr.mxu0 0.0
    %5370 = vmatpush2.msra.mxu0 0.0
    %5371 = vmatprep.subr.mxu0 0.0
    %5372 = vmatpush2.msra.mxu0 0.0
    %5373 = vmatprep.subr.mxu0 0.0
    %5374 = vmatpush2.msra.mxu0 0.0
    %5375 = vmatprep.subr.mxu0 0.0
    %5376 = vmatpush2.msra.mxu0 0.0
    %5377 = vmatprep.subr.mxu0 0.0
    %5378 = vmatpush2.msra.mxu0 0.0
    %5379 = vmatprep.subr.mxu0 0.0
    %5380 = vmatpush2.msra.mxu0 0.0
    %5381 = vmatprep.subr.mxu0 0.0
    %5382 = vmatpush2.msra.mxu0 0.0
    %5383 = vmatprep.subr.mxu0 0.0
    %5384 = vmatpush2.msra.mxu0 0.0
    %5385 = vmatprep.subr.mxu0 0.0
    %5386 = vmatpush2.msra.mxu0 0.0
    %5387 = vmatprep.subr.mxu0 0.0
    %5388 = vmatpush2.msra.mxu0 0.0
    %5389 = vmatprep.subr.mxu0 0.0
    %5390 = vmatpush2.msra.mxu0 0.0
    %5391 = vmatprep.subr.mxu0 0.0
    %5392 = vmatpush2.msra.mxu0 0.0
    %5393 = vmatprep.subr.mxu0 0.0
    %5394 = vmatpush2.msra.mxu0 0.0
    %5395 = vmatprep.mubr.f32.mxu0 0.0
    %5396 = vmatmul.mubr.f32.gmra.mxu0 %v5329
    %v5397 = vpop.f32.mrf.mxu0
    %v5398 = vadd.f32 0.0, %v5397
    %v5399 = vpop.f32.mrf.mxu0
    %5400 = vdwg.mxu0
    %v5401 = vadd.f32 %v5327, %v5398
    %v5402 = vld [vmem:[%s4] sm:$0x1]
    %v5404 = vlaneseq
    %v5405 = vshrl.u32 %v5404, 7
    %v5406 = vsub.s32 0, %v5405
    %v5407 = vrot.slane %v5402, %v5406
    %v5409 = vadd.f32 %v5401, %v5407
    %v5410 = vmax.f32 %v5409, 0.0
    %vm5411 = vcmask 730112
    %v5412 = vsel %vm5411, %v5410, 0.0
    %v5413 = vrot.slane %v5412, 4
    %v5414 = vadd.f32 %v5412, %v5413
    %v5415 = vrot.slane %v5414, 2
    %v5416 = vadd.f32 %v5414, %v5415
    %v5417 = vrot.slane %v5416, 1
    %v5418 = vadd.f32 %v5416, %v5417
    %v5419 = vrcp.pop 2.0
    %v5420 = vmul.f32 %v5418, %v5419
    %v5421 = vsub.f32 %v5410, %v5420
    %v5422 = vmul.f32 %v5421, %v5421
    %v5423 = vsel %vm5411, %v5422, 0.0
    %v5424 = vrot.slane %v5423, 4
    %v5425 = vadd.f32 %v5423, %v5424
    %v5426 = vrot.slane %v5425, 2
    %v5427 = vadd.f32 %v5425, %v5426
    %v5428 = vrot.slane %v5427, 1
    %v5429 = vadd.f32 %v5427, %v5428
    %v5430 = vmul.f32 %v5429, %v5419
    %v5431 = vadd.f32 %v5430, 1e-05
    %v5432 = vrsqrt.pop %v5431
    %v5433 = vmul.f32 %v5421, %v5432
    %v5434 = vld [vmem:[%s5] sm:$0x1]
    %v5436 = vlaneseq
    %v5437 = vshrl.u32 %v5436, 7
    %v5438 = vsub.s32 0, %v5437
    %v5439 = vrot.slane %v5434, %v5438
    %v5441 = vmul.f32 %v5433, %v5439
    %v5442 = vld [vmem:[%s6] sm:$0x1]
    %v5444 = vlaneseq
    %v5445 = vshrl.u32 %v5444, 7
    %v5446 = vsub.s32 0, %v5445
    %v5447 = vrot.slane %v5442, %v5446
    %v5449 = vadd.f32 %v5441, %v5447
    %v5450 = vld [vmem:[%s7] sm:$0xff]
    %v5451 = vld [vmem:[%s7 + $0x8] sm:$0xff]
    %v5452 = vld [vmem:[%s7 + $0x10] sm:$0xff]
    %v5453 = vld [vmem:[%s7 + $0x18] sm:$0xff]
    %v5454 = vld [vmem:[%s7 + $0x20] sm:$0xff]
    %v5455 = vld [vmem:[%s7 + $0x28] sm:$0xff]
    %v5456 = vld [vmem:[%s7 + $0x30] sm:$0xff]
    %v5457 = vld [vmem:[%s7 + $0x38] sm:$0xff]
    %v5458 = vld [vmem:[%s7 + $0x40] sm:$0xff]
    %v5459 = vld [vmem:[%s7 + $0x48] sm:$0xff]
    %v5460 = vld [vmem:[%s7 + $0x50] sm:$0xff]
    %v5461 = vld [vmem:[%s7 + $0x58] sm:$0x3]
    %v5462 = vld [vmem:[%s8] sm:$0x1]
    %v5464 = vlaneseq
    %v5465 = vshrl.u32 %v5464, 7
    %v5466 = vsub.s32 0, %v5465
    %v5467 = vrot.slane %v5462, %v5466
    %vm5469 = vcmask 736256
    %v5471 = vsel %vm5469, %v5449, 0
    %vm5473 = vcmask 1041408
    %v5475 = vsel %vm5473, %v5461, 0
    %5477 = vmatprep.subr.mxu0 0.0
    %5478 = vmatpush1.msra.mxu0 0.0
    %5479 = vmatprep.subr.mxu0 0.0
    %5480 = vmatpush1.msra.mxu0 0.0
    %5481 = vmatprep.subr.mxu0 0.0
    %5482 = vmatpush1.msra.mxu0 0.0
    %5483 = vmatprep.subr.mxu0 0.0
    %5484 = vmatpush1.msra.mxu0 0.0
    %5485 = vmatprep.subr.mxu0 0.0
    %5486 = vmatpush1.msra.mxu0 %v5475
    %5487 = vmatprep.subr.mxu0 0.0
    %5488 = vmatpush1.msra.mxu0 %v5460
    %5489 = vmatprep.subr.mxu0 0.0
    %5490 = vmatpush1.msra.mxu0 %v5459
    %5491 = vmatprep.subr.mxu0 0.0
    %5492 = vmatpush1.msra.mxu0 %v5458
    %5493 = vmatprep.subr.mxu0 0.0
    %5494 = vmatpush1.msra.mxu0 %v5457
    %5495 = vmatprep.subr.mxu0 0.0
    %5496 = vmatpush1.msra.mxu0 %v5456
    %5497 = vmatprep.subr.mxu0 0.0
    %5498 = vmatpush1.msra.mxu0 %v5455
    %5499 = vmatprep.subr.mxu0 0.0
    %5500 = vmatpush1.msra.mxu0 %v5454
    %5501 = vmatprep.subr.mxu0 0.0
    %5502 = vmatpush1.msra.mxu0 %v5453
    %5503 = vmatprep.subr.mxu0 0.0
    %5504 = vmatpush1.msra.mxu0 %v5452
    %5505 = vmatprep.subr.mxu0 0.0
    %5506 = vmatpush1.msra.mxu0 %v5451
    %5507 = vmatprep.subr.mxu0 0.0
    %5508 = vmatpush1.msra.mxu0 %v5450
    %5509 = vmatprep.subr.mxu0 0.0
    %5510 = vmatpush2.msra.mxu0 0.0
    %5511 = vmatprep.subr.mxu0 0.0
    %5512 = vmatpush2.msra.mxu0 0.0
    %5513 = vmatprep.subr.mxu0 0.0
    %5514 = vmatpush2.msra.mxu0 0.0
    %5515 = vmatprep.subr.mxu0 0.0
    %5516 = vmatpush2.msra.mxu0 0.0
    %5517 = vmatprep.subr.mxu0 0.0
    %5518 = vmatpush2.msra.mxu0 0.0
    %5519 = vmatprep.subr.mxu0 0.0
    %5520 = vmatpush2.msra.mxu0 0.0
    %5521 = vmatprep.subr.mxu0 0.0
    %5522 = vmatpush2.msra.mxu0 0.0
    %5523 = vmatprep.subr.mxu0 0.0
    %5524 = vmatpush2.msra.mxu0 0.0
    %5525 = vmatprep.subr.mxu0 0.0
    %5526 = vmatpush2.msra.mxu0 0.0
    %5527 = vmatprep.subr.mxu0 0.0
    %5528 = vmatpush2.msra.mxu0 0.0
    %5529 = vmatprep.subr.mxu0 0.0
    %5530 = vmatpush2.msra.mxu0 0.0
    %5531 = vmatprep.subr.mxu0 0.0
    %5532 = vmatpush2.msra.mxu0 0.0
    %5533 = vmatprep.subr.mxu0 0.0
    %5534 = vmatpush2.msra.mxu0 0.0
    %5535 = vmatprep.subr.mxu0 0.0
    %5536 = vmatpush2.msra.mxu0 0.0
    %5537 = vmatprep.subr.mxu0 0.0
    %5538 = vmatpush2.msra.mxu0 0.0
    %5539 = vmatprep.subr.mxu0 0.0
    %5540 = vmatpush2.msra.mxu0 0.0
    %5541 = vmatprep.mubr.f32.mxu0 0.0
    %5542 = vmatmul.mubr.f32.gmra.mxu0 %v5471
    %v5543 = vpop.f32.mrf.mxu0
    %v5544 = vadd.f32 %v5467, %v5543
    %v5545 = vpop.f32.mrf.mxu0
    %5546 = vdwg.mxu0
    %vm5547 = vcmask 74752
    %v5548 = vsel %vm5547, %v5544, -inf
    %5549 = vmax.xlane.f32.xlu0 %v5548
    %v5550 = vpop.xlane.xlu0 %5549
    %v5551 = vsub.f32 %v5544, %v5550
    %v5552 = vmul.f32 %v5551, 1.442695
    %v5553 = vpow.pop %v5552
    %v5554 = vsel %vm5547, %v5553, 0.0
    %5555 = vadd.xlane.f32.xlu0 %v5554
    %v5556 = vpop.xlane.xlu0 %5555
    %v5557 = vrcp.pop %v5556
    %v5558 = vmul.f32 %v5556, %v5557
    %v5559 = vsub.f32 2.0, %v5558
    %v5560 = vmul.f32 %v5557, %v5559
    %v5561 = vmul.f32 %v5553, %v5560
    %5562 = vst.msk [vmem:[#allocation3] sm:$0x3] %vm5547, %v5561
    // Predicated region
    $region38: #{cnn3d_forward.3} parent=1 // pred_check
      _
    $region39: #{cnn3d_forward.3} parent=1 // pred_check_branch
      %5564 = sbr.rel (0) target = $region41
    $region40: #{cnn3d_forward.3} parent=1 // pred_region
      %s5566 = ssub.s32 32, 32
      %5567 = vsyncadd [#allocation4], %s5566
      %s5569 = sshll.u32 [#allocation3], 4
      %s5570 = int_to_ptr.vmem [resolvable:$true] %s5569
      %5572 = dma.vmem_to_hbm [thread:$0]  %s5570, 32, %s9, [#allocation4]
    $region41: #{cnn3d_forward.3} parent=1 // pred_fallthru
      _
    // Predicated region
    $region42: #{cnn3d_forward.3} parent=1 // pred_check
      _
    $region43: #{cnn3d_forward.3} parent=1 // pred_check_branch
      %5574 = sbr.rel (0) target = $region45
    $region44: #{cnn3d_forward.3} parent=1 // pred_region
      %5575 = dma.done [#allocation4], 32
    $region45: #{cnn3d_forward.3} parent=1 // pred_fallthru
      _
    %5576 = vsyncpa [#allocation4], 1

</llo_original>
